<compile_context>
chip_gen: v6e
topology: v6e:2x2x1
jax: 0.10.0
libtpu: 0.0.40
codegen_flags: <defaults>
</compile_context>

<pallas_src>
import jax
import jax.numpy as jnp
from jax import lax
from jax.experimental import pallas as pl
from jax.experimental.pallas import tpu as pltpu


# ------------------------------------------------------------------
# In-kernel helpers (operate on batch-folded (B*H, W, C) activations)
# ------------------------------------------------------------------
def _pool2x2_relu(y):
    """y: (B*H, W, C) -> (B*H//2, W//2, C); 2x2/stride-2 max pool + ReLU."""
    bh, w, c = y.shape
    y = y.reshape(bh // 2, 2, w, c).max(axis=1)        # pool rows (leading dim)
    y = y.reshape(bh // 2, w // 2, 2, c).max(axis=2)   # pool columns
    return jnp.maximum(y, 0.0)


def _conv_pool_relu_mxu(pad_ref, w_ref, b_ref):
    """conv3x3(pad already applied) + bias + pool + relu, via one im2col matmul.

    pad_ref : (B, H+2, W+2, Cin)  zero-padded input (VMEM scratch)
    w_ref   : (9*Cin, Cout)       im2col weight matrix
    b_ref   : (1, Cout)
    returns : (B*H//2, W//2, Cout)
    """
    B, Hp, Wp, Cin = pad_ref.shape
    H, W = Hp - 2, Wp - 2
    Cout = w_ref.shape[1]
    # im2col: 9 shifted taps concatenated on the lane axis -> K = 9*Cin.
    cols = jnp.concatenate(
        [pad_ref[:, ky:ky + H, kx:kx + W, :]
         for ky in range(3) for kx in range(3)], axis=-1)     # (B,H,W,9*Cin)
    cols = cols.reshape(B * H * W, 9 * Cin)
    conv = jnp.dot(cols, w_ref[...], preferred_element_type=jnp.float32)
    conv = conv + b_ref[...]                                  # (BHW,Cout)+(1,Cout)
    return _pool2x2_relu(conv.reshape(B * H, W, Cout))


# ------------------------------------------------------------------
# Fused kernel: 4x (conv+pool+relu) + flatten + L2 normalize
# ------------------------------------------------------------------
def _fused_cnn_kernel(x_ref, w1_ref, b1_ref, w2_ref, b2_ref, w3_ref, b3_ref,
                      w4_ref, b4_ref, o_ref, p1_ref, p2_ref, p3_ref):
    B = x_ref.shape[0]
    H1, W1 = x_ref.shape[1] - 2, x_ref.shape[2] - 2
    C1 = w1_ref.shape[3]

    # ---- layer 1 (Cin=1): 9 VPU broadcast-FMAs, skip the MXU -------------
    acc = jnp.zeros((B * H1, W1, C1), jnp.float32)
    for ky in range(3):
        for kx in range(3):
            patch = x_ref[:, ky:ky + H1, kx:kx + W1, :]       # (B,H,W,1)
            patch = patch.reshape(B * H1, W1, 1)
            acc = acc + patch * w1_ref[ky, kx]                # (1,C1) broadcast
    acc = acc + b1_ref[...]
    y = _pool2x2_relu(acc)                                    # (B*H/2, W/2, 16)

    # park layer-1 output (zero-padded) in VMEM scratch for layer 2
    H2, W2 = H1 // 2, W1 // 2
    p1_ref[...] = jnp.zeros_like(p1_ref)
    p1_ref[:, 1:H2 + 1, 1:W2 + 1, :] = y.reshape(B, H2, W2, -1)

    # ---- layer 2 ----------------------------------------------------------
    y = _conv_pool_relu_mxu(p1_ref, w2_ref, b2_ref)           # (B*H/4, W/4, 32)
    H3, W3 = H2 // 2, W2 // 2
    p2_ref[...] = jnp.zeros_like(p2_ref)
    p2_ref[:, 1:H3 + 1, 1:W3 + 1, :] = y.reshape(B, H3, W3, -1)

    # ---- layer 3 ----------------------------------------------------------
    y = _conv_pool_relu_mxu(p2_ref, w3_ref, b3_ref)           # (B*H/8, W/8, 64)
    H4, W4 = H3 // 2, W3 // 2
    p3_ref[...] = jnp.zeros_like(p3_ref)
    p3_ref[:, 1:H4 + 1, 1:W4 + 1, :] = y.reshape(B, H4, W4, -1)

    # ---- layer 4 ----------------------------------------------------------
    y = _conv_pool_relu_mxu(p3_ref, w4_ref, b4_ref)           # (B*1, 1, 128)

    # ---- flatten (final spatial is 1x1) + L2 normalize (rsqrt on EUP) -----
    feat = y.reshape(B, y.shape[-1])                          # (B, 128)
    ss = jnp.sum(feat * feat, axis=1, keepdims=True)
    # x * rsqrt(max(ss, eps^2)) == x / max(||x||, eps)  with eps = 1e-12
    o_ref[...] = feat * lax.rsqrt(jnp.maximum(ss, 1e-24))


# ------------------------------------------------------------------
# Host-side wrappers
# ------------------------------------------------------------------
def prepare_params(params_oihw):
    """One-time conversion of torch-layout params to kernel-ready layout.

    layer 1 : weight (3,3,1,16) HWIO (used as per-tap VPU broadcasts)
    layers 2-4: weight (9*Cin, Cout) im2col matrix
    all biases : (1, Cout)
    """
    (w1, b1), *rest = params_oihw
    w1_hwio = jnp.transpose(w1, (2, 3, 1, 0)).astype(jnp.float32)
    kparams = [(w1_hwio, b1.reshape(1, -1).astype(jnp.float32))]
    for w, b in rest:
        w_hwio = jnp.transpose(w, (2, 3, 1, 0)).astype(jnp.float32)
        cin, cout = w_hwio.shape[2], w_hwio.shape[3]
        kparams.append((w_hwio.reshape(9 * cin, cout),
                        b.reshape(1, -1).astype(jnp.float32)))
    return kparams


@jax.jit
def cnn_forward(x_nchw, kparams):
    """x_nchw: (N, 1, 16, 16) f32; kparams: output of prepare_params."""
    (w1, b1), (w2, b2), (w3, b3), (w4, b4) = kparams
    N, C, H, W = x_nchw.shape
    assert C == 1 and H == 16 and W == 16, "fused kernel built for 1x16x16 input"
    # TODO(synk): inputs whose final feature map is larger than 1x1 would need
    # an additional NCHW-order flatten before the L2 normalize.

    x = jnp.transpose(x_nchw, (0, 2, 3, 1)).astype(jnp.float32)   # NHWC
    xp = jnp.pad(x, ((0, 0), (1, 1), (1, 1), (0, 0)))             # layer-1 halo

    # Batch block per grid step (grid axis is "parallel" -> megacore on v7x).
    b_blk = N if N <= 8 else 8
    n_pad = (-N) % b_blk
    if n_pad:
        xp = jnp.pad(xp, ((0, n_pad), (0, 0), (0, 0), (0, 0)))
    n_tot = N + n_pad

    c1, c2, c3, c4 = w1.shape[3], w2.shape[1], w3.shape[1], w4.shape[1]

    out = pl.pallas_call(
        _fused_cnn_kernel,
        out_shape=jax.ShapeDtypeStruct((n_tot, c4), jnp.float32),
        grid=(n_tot // b_blk,),
        in_specs=[
            pl.BlockSpec((b_blk, H + 2, W + 2, 1), lambda n: (n, 0, 0, 0)),
            pl.BlockSpec(w1.shape, lambda n: (0, 0, 0, 0)),
            pl.BlockSpec(b1.shape, lambda n: (0, 0)),
            pl.BlockSpec(w2.shape, lambda n: (0, 0)),
            pl.BlockSpec(b2.shape, lambda n: (0, 0)),
            pl.BlockSpec(w3.shape, lambda n: (0, 0)),
            pl.BlockSpec(b3.shape, lambda n: (0, 0)),
            pl.BlockSpec(w4.shape, lambda n: (0, 0)),
            pl.BlockSpec(b4.shape, lambda n: (0, 0)),
        ],
        out_specs=pl.BlockSpec((b_blk, c4), lambda n: (n, 0)),
        scratch_shapes=[
            pltpu.VMEM((b_blk, H // 2 + 2, W // 2 + 2, c1), jnp.float32),
            pltpu.VMEM((b_blk, H // 4 + 2, W // 4 + 2, c2), jnp.float32),
            pltpu.VMEM((b_blk, H // 8 + 2, W // 8 + 2, c3), jnp.float32),
        ],
        compiler_params=pltpu.CompilerParams(
            dimension_semantics=("parallel",)),
    )(xp, w1, b1, w2, b2, w3, b3, w4, b4)
    return out[:N]


# ------------------------------------------------------------------
# Plain-JAX reference (sanity check) and param init
# ------------------------------------------------------------------
def reference_forward(x, params):
    out = x
    for w, b in params:
        out = lax.conv_general_dilated(
            out, w, window_strides=(1, 1), padding=((1, 1), (1, 1)),
            dimension_numbers=("NCHW", "OIHW", "NCHW"))
        out = out + b[None, :, None, None]
        out = lax.reduce_window(out, -jnp.inf, lax.max,
                                (1, 1, 2, 2), (1, 1, 2, 2), "VALID")
        out = jnp.maximum(out, 0.0)
    out = out.reshape(out.shape[0], -1)
    nrm = jnp.sqrt(jnp.sum(out * out, axis=1, keepdims=True))
    return out / jnp.maximum(nrm, 1e-12)


def init_params(key):
    """Deterministic conv params with PyTorch-default-like uniform init."""
    chans = [(1, 16), (16, 32), (32, 64), (64, 128)]
    params = []
    for cin, cout in chans:
        key, kw, kb = jax.random.split(key, 3)
        bound = 1.0 / jnp.sqrt(cin * 3 * 3)
        w = jax.random.uniform(kw, (cout, cin, 3, 3), jnp.float32, -bound, bound)
        b = jax.random.uniform(kb, (cout,), jnp.float32, -bound, bound)
        params.append((w, b))
    return params


if __name__ == "__main__":
    key = jax.random.PRNGKey(0)
    k_in, k_p = jax.random.split(key)

    # 4 pool-by-2 stages -> 16x16 input reduces to 1x1x128 features.
    x = jax.random.normal(k_in, (2, 1, 16, 16), jnp.float32)
    params = init_params(k_p)
    kparams = prepare_params(params)          # one-time layout conversion

    out = jax.block_until_ready(cnn_forward(x, kparams))
    ref = jax.block_until_ready(reference_forward(x, params))

    assert out.shape == (2, 128), out.shape
    assert jnp.allclose(out, ref, rtol=1e-2, atol=1e-2), "mismatch vs reference"

    print("KERNEL_OK")
</pallas_src>

<mosaic_0001>
module attributes {stable_mosaic.version = 11 : i64} {
  func.func @_fused_cnn_kernel(%arg0: i32, %arg1: memref<2x18x18x1xf32, #tpu.memory_space<vmem>>, %arg2: memref<3x3x1x16xf32, #tpu.memory_space<vmem>>, %arg3: memref<1x16xf32, #tpu.memory_space<vmem>>, %arg4: memref<144x32xf32, #tpu.memory_space<vmem>>, %arg5: memref<1x32xf32, #tpu.memory_space<vmem>>, %arg6: memref<288x64xf32, #tpu.memory_space<vmem>>, %arg7: memref<1x64xf32, #tpu.memory_space<vmem>>, %arg8: memref<576x128xf32, #tpu.memory_space<vmem>>, %arg9: memref<1x128xf32, #tpu.memory_space<vmem>>, %arg10: memref<2x128xf32, #tpu.memory_space<vmem>>, %arg11: memref<2x10x10x16xf32, #tpu.memory_space<vmem>>, %arg12: memref<2x6x6x32xf32, #tpu.memory_space<vmem>>, %arg13: memref<2x4x4x64xf32, #tpu.memory_space<vmem>>) attributes {dimension_semantics = [#tpu.dimension_semantics<parallel>], iteration_bounds = array<i64: 1>, scalar_prefetch = 0 : i64, scratch_operands = 3 : i64, tpu.core_type = #tpu.core_type<tc>, window_params = [{transform_indices = @transform_0, window_bounds = array<i64: 2, 18, 18, 1>}, {pipeline_mode = #tpu.pipeline_mode<synchronous>, transform_indices = @transform_1, window_bounds = array<i64: 3, 3, 1, 16>}, {pipeline_mode = #tpu.pipeline_mode<synchronous>, transform_indices = @transform_2, window_bounds = array<i64: 1, 16>}, {pipeline_mode = #tpu.pipeline_mode<synchronous>, transform_indices = @transform_3, window_bounds = array<i64: 144, 32>}, {pipeline_mode = #tpu.pipeline_mode<synchronous>, transform_indices = @transform_4, window_bounds = array<i64: 1, 32>}, {pipeline_mode = #tpu.pipeline_mode<synchronous>, transform_indices = @transform_5, window_bounds = array<i64: 288, 64>}, {pipeline_mode = #tpu.pipeline_mode<synchronous>, transform_indices = @transform_6, window_bounds = array<i64: 1, 64>}, {pipeline_mode = #tpu.pipeline_mode<synchronous>, transform_indices = @transform_7, window_bounds = array<i64: 576, 128>}, {pipeline_mode = #tpu.pipeline_mode<synchronous>, transform_indices = @transform_8, window_bounds = array<i64: 1, 128>}, {transform_indices = @transform_9, window_bounds = array<i64: 2, 128>}]} {
    %cst = arith.constant 0.000000e+00 : f32
    %0 = vector.broadcast %cst : f32 to vector<32x16x16xf32>
    %c0 = arith.constant 0 : index
    %c0_0 = arith.constant 0 : index
    %c0_1 = arith.constant 0 : index
    %c0_2 = arith.constant 0 : index
    %1 = vector.load %arg1[%c0, %c0_0, %c0_1, %c0_2] : memref<2x18x18x1xf32, #tpu.memory_space<vmem>>, vector<2x16x16x1xf32>
    %2 = vector.shape_cast %1 : vector<2x16x16x1xf32> to vector<32x16x1xf32>
    %c0_3 = arith.constant 0 : index
    %c0_4 = arith.constant 0 : index
    %c0_5 = arith.constant 0 : index
    %c0_6 = arith.constant 0 : index
    %3 = vector.load %arg2[%c0_3, %c0_4, %c0_5, %c0_6] : memref<3x3x1x16xf32, #tpu.memory_space<vmem>>, vector<1x1x1x16xf32>
    %4 = vector.shape_cast %3 : vector<1x1x1x16xf32> to vector<1x16xf32>
    %5 = vector.shape_cast %4 : vector<1x16xf32> to vector<1x1x16xf32>
    %6 = vector.broadcast %2 : vector<32x16x1xf32> to vector<32x16x16xf32>
    %7 = vector.broadcast %5 : vector<1x1x16xf32> to vector<32x16x16xf32>
    %8 = arith.mulf %6, %7 : vector<32x16x16xf32>
    %9 = arith.addf %0, %8 : vector<32x16x16xf32>
    %c0_7 = arith.constant 0 : index
    %c0_8 = arith.constant 0 : index
    %c1 = arith.constant 1 : index
    %c0_9 = arith.constant 0 : index
    %10 = vector.load %arg1[%c0_7, %c0_8, %c1, %c0_9] : memref<2x18x18x1xf32, #tpu.memory_space<vmem>>, vector<2x16x16x1xf32>
    %11 = vector.shape_cast %10 : vector<2x16x16x1xf32> to vector<32x16x1xf32>
    %c0_10 = arith.constant 0 : index
    %c1_11 = arith.constant 1 : index
    %c0_12 = arith.constant 0 : index
    %c0_13 = arith.constant 0 : index
    %12 = vector.load %arg2[%c0_10, %c1_11, %c0_12, %c0_13] : memref<3x3x1x16xf32, #tpu.memory_space<vmem>>, vector<1x1x1x16xf32>
    %13 = vector.shape_cast %12 : vector<1x1x1x16xf32> to vector<1x16xf32>
    %14 = vector.shape_cast %13 : vector<1x16xf32> to vector<1x1x16xf32>
    %15 = vector.broadcast %11 : vector<32x16x1xf32> to vector<32x16x16xf32>
    %16 = vector.broadcast %14 : vector<1x1x16xf32> to vector<32x16x16xf32>
    %17 = arith.mulf %15, %16 : vector<32x16x16xf32>
    %18 = arith.addf %9, %17 : vector<32x16x16xf32>
    %c0_14 = arith.constant 0 : index
    %c0_15 = arith.constant 0 : index
    %c2 = arith.constant 2 : index
    %c0_16 = arith.constant 0 : index
    %19 = vector.load %arg1[%c0_14, %c0_15, %c2, %c0_16] : memref<2x18x18x1xf32, #tpu.memory_space<vmem>>, vector<2x16x16x1xf32>
    %20 = vector.shape_cast %19 : vector<2x16x16x1xf32> to vector<32x16x1xf32>
    %c0_17 = arith.constant 0 : index
    %c2_18 = arith.constant 2 : index
    %c0_19 = arith.constant 0 : index
    %c0_20 = arith.constant 0 : index
    %21 = vector.load %arg2[%c0_17, %c2_18, %c0_19, %c0_20] : memref<3x3x1x16xf32, #tpu.memory_space<vmem>>, vector<1x1x1x16xf32>
    %22 = vector.shape_cast %21 : vector<1x1x1x16xf32> to vector<1x16xf32>
    %23 = vector.shape_cast %22 : vector<1x16xf32> to vector<1x1x16xf32>
    %24 = vector.broadcast %20 : vector<32x16x1xf32> to vector<32x16x16xf32>
    %25 = vector.broadcast %23 : vector<1x1x16xf32> to vector<32x16x16xf32>
    %26 = arith.mulf %24, %25 : vector<32x16x16xf32>
    %27 = arith.addf %18, %26 : vector<32x16x16xf32>
    %c0_21 = arith.constant 0 : index
    %c1_22 = arith.constant 1 : index
    %c0_23 = arith.constant 0 : index
    %c0_24 = arith.constant 0 : index
    %28 = vector.load %arg1[%c0_21, %c1_22, %c0_23, %c0_24] : memref<2x18x18x1xf32, #tpu.memory_space<vmem>>, vector<2x16x16x1xf32>
    %29 = vector.shape_cast %28 : vector<2x16x16x1xf32> to vector<32x16x1xf32>
    %c1_25 = arith.constant 1 : index
    %c0_26 = arith.constant 0 : index
    %c0_27 = arith.constant 0 : index
    %c0_28 = arith.constant 0 : index
    %30 = vector.load %arg2[%c1_25, %c0_26, %c0_27, %c0_28] : memref<3x3x1x16xf32, #tpu.memory_space<vmem>>, vector<1x1x1x16xf32>
    %31 = vector.shape_cast %30 : vector<1x1x1x16xf32> to vector<1x16xf32>
    %32 = vector.shape_cast %31 : vector<1x16xf32> to vector<1x1x16xf32>
    %33 = vector.broadcast %29 : vector<32x16x1xf32> to vector<32x16x16xf32>
    %34 = vector.broadcast %32 : vector<1x1x16xf32> to vector<32x16x16xf32>
    %35 = arith.mulf %33, %34 : vector<32x16x16xf32>
    %36 = arith.addf %27, %35 : vector<32x16x16xf32>
    %c0_29 = arith.constant 0 : index
    %c1_30 = arith.constant 1 : index
    %c1_31 = arith.constant 1 : index
    %c0_32 = arith.constant 0 : index
    %37 = vector.load %arg1[%c0_29, %c1_30, %c1_31, %c0_32] : memref<2x18x18x1xf32, #tpu.memory_space<vmem>>, vector<2x16x16x1xf32>
    %38 = vector.shape_cast %37 : vector<2x16x16x1xf32> to vector<32x16x1xf32>
    %c1_33 = arith.constant 1 : index
    %c1_34 = arith.constant 1 : index
    %c0_35 = arith.constant 0 : index
    %c0_36 = arith.constant 0 : index
    %39 = vector.load %arg2[%c1_33, %c1_34, %c0_35, %c0_36] : memref<3x3x1x16xf32, #tpu.memory_space<vmem>>, vector<1x1x1x16xf32>
    %40 = vector.shape_cast %39 : vector<1x1x1x16xf32> to vector<1x16xf32>
    %41 = vector.shape_cast %40 : vector<1x16xf32> to vector<1x1x16xf32>
    %42 = vector.broadcast %38 : vector<32x16x1xf32> to vector<32x16x16xf32>
    %43 = vector.broadcast %41 : vector<1x1x16xf32> to vector<32x16x16xf32>
    %44 = arith.mulf %42, %43 : vector<32x16x16xf32>
    %45 = arith.addf %36, %44 : vector<32x16x16xf32>
    %c0_37 = arith.constant 0 : index
    %c1_38 = arith.constant 1 : index
    %c2_39 = arith.constant 2 : index
    %c0_40 = arith.constant 0 : index
    %46 = vector.load %arg1[%c0_37, %c1_38, %c2_39, %c0_40] : memref<2x18x18x1xf32, #tpu.memory_space<vmem>>, vector<2x16x16x1xf32>
    %47 = vector.shape_cast %46 : vector<2x16x16x1xf32> to vector<32x16x1xf32>
    %c1_41 = arith.constant 1 : index
    %c2_42 = arith.constant 2 : index
    %c0_43 = arith.constant 0 : index
    %c0_44 = arith.constant 0 : index
    %48 = vector.load %arg2[%c1_41, %c2_42, %c0_43, %c0_44] : memref<3x3x1x16xf32, #tpu.memory_space<vmem>>, vector<1x1x1x16xf32>
    %49 = vector.shape_cast %48 : vector<1x1x1x16xf32> to vector<1x16xf32>
    %50 = vector.shape_cast %49 : vector<1x16xf32> to vector<1x1x16xf32>
    %51 = vector.broadcast %47 : vector<32x16x1xf32> to vector<32x16x16xf32>
    %52 = vector.broadcast %50 : vector<1x1x16xf32> to vector<32x16x16xf32>
    %53 = arith.mulf %51, %52 : vector<32x16x16xf32>
    %54 = arith.addf %45, %53 : vector<32x16x16xf32>
    %c0_45 = arith.constant 0 : index
    %c2_46 = arith.constant 2 : index
    %c0_47 = arith.constant 0 : index
    %c0_48 = arith.constant 0 : index
    %55 = vector.load %arg1[%c0_45, %c2_46, %c0_47, %c0_48] : memref<2x18x18x1xf32, #tpu.memory_space<vmem>>, vector<2x16x16x1xf32>
    %56 = vector.shape_cast %55 : vector<2x16x16x1xf32> to vector<32x16x1xf32>
    %c2_49 = arith.constant 2 : index
    %c0_50 = arith.constant 0 : index
    %c0_51 = arith.constant 0 : index
    %c0_52 = arith.constant 0 : index
    %57 = vector.load %arg2[%c2_49, %c0_50, %c0_51, %c0_52] : memref<3x3x1x16xf32, #tpu.memory_space<vmem>>, vector<1x1x1x16xf32>
    %58 = vector.shape_cast %57 : vector<1x1x1x16xf32> to vector<1x16xf32>
    %59 = vector.shape_cast %58 : vector<1x16xf32> to vector<1x1x16xf32>
    %60 = vector.broadcast %56 : vector<32x16x1xf32> to vector<32x16x16xf32>
    %61 = vector.broadcast %59 : vector<1x1x16xf32> to vector<32x16x16xf32>
    %62 = arith.mulf %60, %61 : vector<32x16x16xf32>
    %63 = arith.addf %54, %62 : vector<32x16x16xf32>
    %c0_53 = arith.constant 0 : index
    %c2_54 = arith.constant 2 : index
    %c1_55 = arith.constant 1 : index
    %c0_56 = arith.constant 0 : index
    %64 = vector.load %arg1[%c0_53, %c2_54, %c1_55, %c0_56] : memref<2x18x18x1xf32, #tpu.memory_space<vmem>>, vector<2x16x16x1xf32>
    %65 = vector.shape_cast %64 : vector<2x16x16x1xf32> to vector<32x16x1xf32>
    %c2_57 = arith.constant 2 : index
    %c1_58 = arith.constant 1 : index
    %c0_59 = arith.constant 0 : index
    %c0_60 = arith.constant 0 : index
    %66 = vector.load %arg2[%c2_57, %c1_58, %c0_59, %c0_60] : memref<3x3x1x16xf32, #tpu.memory_space<vmem>>, vector<1x1x1x16xf32>
    %67 = vector.shape_cast %66 : vector<1x1x1x16xf32> to vector<1x16xf32>
    %68 = vector.shape_cast %67 : vector<1x16xf32> to vector<1x1x16xf32>
    %69 = vector.broadcast %65 : vector<32x16x1xf32> to vector<32x16x16xf32>
    %70 = vector.broadcast %68 : vector<1x1x16xf32> to vector<32x16x16xf32>
    %71 = arith.mulf %69, %70 : vector<32x16x16xf32>
    %72 = arith.addf %63, %71 : vector<32x16x16xf32>
    %c0_61 = arith.constant 0 : index
    %c2_62 = arith.constant 2 : index
    %c2_63 = arith.constant 2 : index
    %c0_64 = arith.constant 0 : index
    %73 = vector.load %arg1[%c0_61, %c2_62, %c2_63, %c0_64] : memref<2x18x18x1xf32, #tpu.memory_space<vmem>>, vector<2x16x16x1xf32>
    %74 = vector.shape_cast %73 : vector<2x16x16x1xf32> to vector<32x16x1xf32>
    %c2_65 = arith.constant 2 : index
    %c2_66 = arith.constant 2 : index
    %c0_67 = arith.constant 0 : index
    %c0_68 = arith.constant 0 : index
    %75 = vector.load %arg2[%c2_65, %c2_66, %c0_67, %c0_68] : memref<3x3x1x16xf32, #tpu.memory_space<vmem>>, vector<1x1x1x16xf32>
    %76 = vector.shape_cast %75 : vector<1x1x1x16xf32> to vector<1x16xf32>
    %77 = vector.shape_cast %76 : vector<1x16xf32> to vector<1x1x16xf32>
    %78 = vector.broadcast %74 : vector<32x16x1xf32> to vector<32x16x16xf32>
    %79 = vector.broadcast %77 : vector<1x1x16xf32> to vector<32x16x16xf32>
    %80 = arith.mulf %78, %79 : vector<32x16x16xf32>
    %81 = arith.addf %72, %80 : vector<32x16x16xf32>
    %c0_69 = arith.constant 0 : index
    %c0_70 = arith.constant 0 : index
    %82 = vector.load %arg3[%c0_69, %c0_70] : memref<1x16xf32, #tpu.memory_space<vmem>>, vector<1x16xf32>
    %83 = vector.shape_cast %82 : vector<1x16xf32> to vector<1x1x16xf32>
    %84 = vector.broadcast %83 : vector<1x1x16xf32> to vector<32x16x16xf32>
    %85 = arith.addf %81, %84 : vector<32x16x16xf32>
    %86 = vector.shape_cast %85 : vector<32x16x16xf32> to vector<16x2x16x16xf32>
    %cst_71 = arith.constant dense<0xFF800000> : vector<16x16x16xf32>
    %87 = vector.multi_reduction <maximumf>, %86, %cst_71 [1] : vector<16x2x16x16xf32> to vector<16x16x16xf32>
    %88 = vector.shape_cast %87 : vector<16x16x16xf32> to vector<16x8x2x16xf32>
    %cst_72 = arith.constant dense<0xFF800000> : vector<16x8x16xf32>
    %89 = vector.multi_reduction <maximumf>, %88, %cst_72 [2] : vector<16x8x2x16xf32> to vector<16x8x16xf32>
    %cst_73 = arith.constant 0.000000e+00 : f32
    %90 = vector.broadcast %cst_73 : f32 to vector<16x8x16xf32>
    %91 = arith.maximumf %89, %90 : vector<16x8x16xf32>
    %cst_74 = arith.constant 0.000000e+00 : f32
    %92 = vector.broadcast %cst_74 : f32 to vector<2x10x10x16xf32>
    %c0_75 = arith.constant 0 : index
    %c0_76 = arith.constant 0 : index
    %c0_77 = arith.constant 0 : index
    %c0_78 = arith.constant 0 : index
    %93 = vector.load %arg11[%c0_75, %c0_76, %c0_77, %c0_78] : memref<2x10x10x16xf32, #tpu.memory_space<vmem>>, vector<2x10x10x16xf32>
    tpu.vector_store %arg11[%c0_75, %c0_76, %c0_77, %c0_78], %92 {strides = array<i32>} : memref<2x10x10x16xf32, #tpu.memory_space<vmem>>, vector<2x10x10x16xf32>,
    %94 = vector.shape_cast %91 : vector<16x8x16xf32> to vector<2x8x8x16xf32>
    %c0_79 = arith.constant 0 : index
    %c1_80 = arith.constant 1 : index
    %c1_81 = arith.constant 1 : index
    %c0_82 = arith.constant 0 : index
    %95 = vector.load %arg11[%c0_79, %c1_80, %c1_81, %c0_82] : memref<2x10x10x16xf32, #tpu.memory_space<vmem>>, vector<2x8x8x16xf32>
    tpu.vector_store %arg11[%c0_79, %c1_80, %c1_81, %c0_82], %94 {strides = array<i32>} : memref<2x10x10x16xf32, #tpu.memory_space<vmem>>, vector<2x8x8x16xf32>,
    %c0_83 = arith.constant 0 : index
    %c0_84 = arith.constant 0 : index
    %c0_85 = arith.constant 0 : index
    %c0_86 = arith.constant 0 : index
    %96 = vector.load %arg11[%c0_83, %c0_84, %c0_85, %c0_86] : memref<2x10x10x16xf32, #tpu.memory_space<vmem>>, vector<2x8x8x16xf32>
    %c0_87 = arith.constant 0 : index
    %c0_88 = arith.constant 0 : index
    %c1_89 = arith.constant 1 : index
    %c0_90 = arith.constant 0 : index
    %97 = vector.load %arg11[%c0_87, %c0_88, %c1_89, %c0_90] : memref<2x10x10x16xf32, #tpu.memory_space<vmem>>, vector<2x8x8x16xf32>
    %c0_91 = arith.constant 0 : index
    %c0_92 = arith.constant 0 : index
    %c2_93 = arith.constant 2 : index
    %c0_94 = arith.constant 0 : index
    %98 = vector.load %arg11[%c0_91, %c0_92, %c2_93, %c0_94] : memref<2x10x10x16xf32, #tpu.memory_space<vmem>>, vector<2x8x8x16xf32>
    %c0_95 = arith.constant 0 : index
    %c1_96 = arith.constant 1 : index
    %c0_97 = arith.constant 0 : index
    %c0_98 = arith.constant 0 : index
    %99 = vector.load %arg11[%c0_95, %c1_96, %c0_97, %c0_98] : memref<2x10x10x16xf32, #tpu.memory_space<vmem>>, vector<2x8x8x16xf32>
    %c0_99 = arith.constant 0 : index
    %c1_100 = arith.constant 1 : index
    %c1_101 = arith.constant 1 : index
    %c0_102 = arith.constant 0 : index
    %100 = vector.load %arg11[%c0_99, %c1_100, %c1_101, %c0_102] : memref<2x10x10x16xf32, #tpu.memory_space<vmem>>, vector<2x8x8x16xf32>
    %c0_103 = arith.constant 0 : index
    %c1_104 = arith.constant 1 : index
    %c2_105 = arith.constant 2 : index
    %c0_106 = arith.constant 0 : index
    %101 = vector.load %arg11[%c0_103, %c1_104, %c2_105, %c0_106] : memref<2x10x10x16xf32, #tpu.memory_space<vmem>>, vector<2x8x8x16xf32>
    %c0_107 = arith.constant 0 : index
    %c2_108 = arith.constant 2 : index
    %c0_109 = arith.constant 0 : index
    %c0_110 = arith.constant 0 : index
    %102 = vector.load %arg11[%c0_107, %c2_108, %c0_109, %c0_110] : memref<2x10x10x16xf32, #tpu.memory_space<vmem>>, vector<2x8x8x16xf32>
    %c0_111 = arith.constant 0 : index
    %c2_112 = arith.constant 2 : index
    %c1_113 = arith.constant 1 : index
    %c0_114 = arith.constant 0 : index
    %103 = vector.load %arg11[%c0_111, %c2_112, %c1_113, %c0_114] : memref<2x10x10x16xf32, #tpu.memory_space<vmem>>, vector<2x8x8x16xf32>
    %c0_115 = arith.constant 0 : index
    %c2_116 = arith.constant 2 : index
    %c2_117 = arith.constant 2 : index
    %c0_118 = arith.constant 0 : index
    %104 = vector.load %arg11[%c0_115, %c2_116, %c2_117, %c0_118] : memref<2x10x10x16xf32, #tpu.memory_space<vmem>>, vector<2x8x8x16xf32>
    %105 = tpu.concatenate %96, %97, %98, %99, %100, %101, %102, %103, %104 in 3 : vector<2x8x8x16xf32>, vector<2x8x8x16xf32>, vector<2x8x8x16xf32>, vector<2x8x8x16xf32>, vector<2x8x8x16xf32>, vector<2x8x8x16xf32>, vector<2x8x8x16xf32>, vector<2x8x8x16xf32>, vector<2x8x8x16xf32> -> vector<2x8x8x144xf32>
    %106 = vector.shape_cast %105 : vector<2x8x8x144xf32> to vector<128x144xf32>
    %c0_119 = arith.constant 0 : index
    %c0_120 = arith.constant 0 : index
    %107 = vector.load %arg4[%c0_119, %c0_120] : memref<144x32xf32, #tpu.memory_space<vmem>>, vector<144x32xf32>
    %cst_121 = arith.constant dense<0.000000e+00> : vector<128x32xf32>
    %108 = tpu.matmul %106, %107, %cst_121 {dimension_numbers = #tpu.dot_dimension_numbers<[1], [0], [0], [1], [0, 0, 1, 1], [], []>} : vector<128x144xf32>, vector<144x32xf32>, vector<128x32xf32> -> vector<128x32xf32>
    %c0_122 = arith.constant 0 : index
    %c0_123 = arith.constant 0 : index
    %109 = vector.load %arg5[%c0_122, %c0_123] : memref<1x32xf32, #tpu.memory_space<vmem>>, vector<1x32xf32>
    %110 = vector.broadcast %109 : vector<1x32xf32> to vector<128x32xf32>
    %111 = arith.addf %108, %110 : vector<128x32xf32>
    %112 = vector.shape_cast %111 : vector<128x32xf32> to vector<16x8x32xf32>
    %113 = vector.shape_cast %112 : vector<16x8x32xf32> to vector<8x2x8x32xf32>
    %cst_124 = arith.constant dense<0xFF800000> : vector<8x8x32xf32>
    %114 = vector.multi_reduction <maximumf>, %113, %cst_124 [1] : vector<8x2x8x32xf32> to vector<8x8x32xf32>
    %115 = vector.shape_cast %114 : vector<8x8x32xf32> to vector<8x4x2x32xf32>
    %cst_125 = arith.constant dense<0xFF800000> : vector<8x4x32xf32>
    %116 = vector.multi_reduction <maximumf>, %115, %cst_125 [2] : vector<8x4x2x32xf32> to vector<8x4x32xf32>
    %cst_126 = arith.constant 0.000000e+00 : f32
    %117 = vector.broadcast %cst_126 : f32 to vector<8x4x32xf32>
    %118 = arith.maximumf %116, %117 : vector<8x4x32xf32>
    %cst_127 = arith.constant 0.000000e+00 : f32
    %119 = vector.broadcast %cst_127 : f32 to vector<2x6x6x32xf32>
    %c0_128 = arith.constant 0 : index
    %c0_129 = arith.constant 0 : index
    %c0_130 = arith.constant 0 : index
    %c0_131 = arith.constant 0 : index
    %120 = vector.load %arg12[%c0_128, %c0_129, %c0_130, %c0_131] : memref<2x6x6x32xf32, #tpu.memory_space<vmem>>, vector<2x6x6x32xf32>
    tpu.vector_store %arg12[%c0_128, %c0_129, %c0_130, %c0_131], %119 {strides = array<i32>} : memref<2x6x6x32xf32, #tpu.memory_space<vmem>>, vector<2x6x6x32xf32>,
    %121 = vector.shape_cast %118 : vector<8x4x32xf32> to vector<2x4x4x32xf32>
    %c0_132 = arith.constant 0 : index
    %c1_133 = arith.constant 1 : index
    %c1_134 = arith.constant 1 : index
    %c0_135 = arith.constant 0 : index
    %122 = vector.load %arg12[%c0_132, %c1_133, %c1_134, %c0_135] : memref<2x6x6x32xf32, #tpu.memory_space<vmem>>, vector<2x4x4x32xf32>
    tpu.vector_store %arg12[%c0_132, %c1_133, %c1_134, %c0_135], %121 {strides = array<i32>} : memref<2x6x6x32xf32, #tpu.memory_space<vmem>>, vector<2x4x4x32xf32>,
    %c0_136 = arith.constant 0 : index
    %c0_137 = arith.constant 0 : index
    %c0_138 = arith.constant 0 : index
    %c0_139 = arith.constant 0 : index
    %123 = vector.load %arg12[%c0_136, %c0_137, %c0_138, %c0_139] : memref<2x6x6x32xf32, #tpu.memory_space<vmem>>, vector<2x4x4x32xf32>
    %c0_140 = arith.constant 0 : index
    %c0_141 = arith.constant 0 : index
    %c1_142 = arith.constant 1 : index
    %c0_143 = arith.constant 0 : index
    %124 = vector.load %arg12[%c0_140, %c0_141, %c1_142, %c0_143] : memref<2x6x6x32xf32, #tpu.memory_space<vmem>>, vector<2x4x4x32xf32>
    %c0_144 = arith.constant 0 : index
    %c0_145 = arith.constant 0 : index
    %c2_146 = arith.constant 2 : index
    %c0_147 = arith.constant 0 : index
    %125 = vector.load %arg12[%c0_144, %c0_145, %c2_146, %c0_147] : memref<2x6x6x32xf32, #tpu.memory_space<vmem>>, vector<2x4x4x32xf32>
    %c0_148 = arith.constant 0 : index
    %c1_149 = arith.constant 1 : index
    %c0_150 = arith.constant 0 : index
    %c0_151 = arith.constant 0 : index
    %126 = vector.load %arg12[%c0_148, %c1_149, %c0_150, %c0_151] : memref<2x6x6x32xf32, #tpu.memory_space<vmem>>, vector<2x4x4x32xf32>
    %c0_152 = arith.constant 0 : index
    %c1_153 = arith.constant 1 : index
    %c1_154 = arith.constant 1 : index
    %c0_155 = arith.constant 0 : index
    %127 = vector.load %arg12[%c0_152, %c1_153, %c1_154, %c0_155] : memref<2x6x6x32xf32, #tpu.memory_space<vmem>>, vector<2x4x4x32xf32>
    %c0_156 = arith.constant 0 : index
    %c1_157 = arith.constant 1 : index
    %c2_158 = arith.constant 2 : index
    %c0_159 = arith.constant 0 : index
    %128 = vector.load %arg12[%c0_156, %c1_157, %c2_158, %c0_159] : memref<2x6x6x32xf32, #tpu.memory_space<vmem>>, vector<2x4x4x32xf32>
    %c0_160 = arith.constant 0 : index
    %c2_161 = arith.constant 2 : index
    %c0_162 = arith.constant 0 : index
    %c0_163 = arith.constant 0 : index
    %129 = vector.load %arg12[%c0_160, %c2_161, %c0_162, %c0_163] : memref<2x6x6x32xf32, #tpu.memory_space<vmem>>, vector<2x4x4x32xf32>
    %c0_164 = arith.constant 0 : index
    %c2_165 = arith.constant 2 : index
    %c1_166 = arith.constant 1 : index
    %c0_167 = arith.constant 0 : index
    %130 = vector.load %arg12[%c0_164, %c2_165, %c1_166, %c0_167] : memref<2x6x6x32xf32, #tpu.memory_space<vmem>>, vector<2x4x4x32xf32>
    %c0_168 = arith.constant 0 : index
    %c2_169 = arith.constant 2 : index
    %c2_170 = arith.constant 2 : index
    %c0_171 = arith.constant 0 : index
    %131 = vector.load %arg12[%c0_168, %c2_169, %c2_170, %c0_171] : memref<2x6x6x32xf32, #tpu.memory_space<vmem>>, vector<2x4x4x32xf32>
    %132 = tpu.concatenate %123, %124, %125, %126, %127, %128, %129, %130, %131 in 3 : vector<2x4x4x32xf32>, vector<2x4x4x32xf32>, vector<2x4x4x32xf32>, vector<2x4x4x32xf32>, vector<2x4x4x32xf32>, vector<2x4x4x32xf32>, vector<2x4x4x32xf32>, vector<2x4x4x32xf32>, vector<2x4x4x32xf32> -> vector<2x4x4x288xf32>
    %133 = vector.shape_cast %132 : vector<2x4x4x288xf32> to vector<32x288xf32>
    %c0_172 = arith.constant 0 : index
    %c0_173 = arith.constant 0 : index
    %134 = vector.load %arg6[%c0_172, %c0_173] : memref<288x64xf32, #tpu.memory_space<vmem>>, vector<288x64xf32>
    %cst_174 = arith.constant dense<0.000000e+00> : vector<32x64xf32>
    %135 = tpu.matmul %133, %134, %cst_174 {dimension_numbers = #tpu.dot_dimension_numbers<[1], [0], [0], [1], [0, 0, 1, 1], [], []>} : vector<32x288xf32>, vector<288x64xf32>, vector<32x64xf32> -> vector<32x64xf32>
    %c0_175 = arith.constant 0 : index
    %c0_176 = arith.constant 0 : index
    %136 = vector.load %arg7[%c0_175, %c0_176] : memref<1x64xf32, #tpu.memory_space<vmem>>, vector<1x64xf32>
    %137 = vector.broadcast %136 : vector<1x64xf32> to vector<32x64xf32>
    %138 = arith.addf %135, %137 : vector<32x64xf32>
    %139 = vector.shape_cast %138 : vector<32x64xf32> to vector<8x4x64xf32>
    %140 = vector.shape_cast %139 : vector<8x4x64xf32> to vector<4x2x4x64xf32>
    %cst_177 = arith.constant dense<0xFF800000> : vector<4x4x64xf32>
    %141 = vector.multi_reduction <maximumf>, %140, %cst_177 [1] : vector<4x2x4x64xf32> to vector<4x4x64xf32>
    %142 = vector.shape_cast %141 : vector<4x4x64xf32> to vector<4x2x2x64xf32>
    %cst_178 = arith.constant dense<0xFF800000> : vector<4x2x64xf32>
    %143 = vector.multi_reduction <maximumf>, %142, %cst_178 [2] : vector<4x2x2x64xf32> to vector<4x2x64xf32>
    %cst_179 = arith.constant 0.000000e+00 : f32
    %144 = vector.broadcast %cst_179 : f32 to vector<4x2x64xf32>
    %145 = arith.maximumf %143, %144 : vector<4x2x64xf32>
    %cst_180 = arith.constant 0.000000e+00 : f32
    %146 = vector.broadcast %cst_180 : f32 to vector<2x4x4x64xf32>
    %c0_181 = arith.constant 0 : index
    %c0_182 = arith.constant 0 : index
    %c0_183 = arith.constant 0 : index
    %c0_184 = arith.constant 0 : index
    %147 = vector.load %arg13[%c0_181, %c0_182, %c0_183, %c0_184] : memref<2x4x4x64xf32, #tpu.memory_space<vmem>>, vector<2x4x4x64xf32>
    tpu.vector_store %arg13[%c0_181, %c0_182, %c0_183, %c0_184], %146 {strides = array<i32>} : memref<2x4x4x64xf32, #tpu.memory_space<vmem>>, vector<2x4x4x64xf32>,
    %148 = vector.shape_cast %145 : vector<4x2x64xf32> to vector<2x2x2x64xf32>
    %c0_185 = arith.constant 0 : index
    %c1_186 = arith.constant 1 : index
    %c1_187 = arith.constant 1 : index
    %c0_188 = arith.constant 0 : index
    %149 = vector.load %arg13[%c0_185, %c1_186, %c1_187, %c0_188] : memref<2x4x4x64xf32, #tpu.memory_space<vmem>>, vector<2x2x2x64xf32>
    tpu.vector_store %arg13[%c0_185, %c1_186, %c1_187, %c0_188], %148 {strides = array<i32>} : memref<2x4x4x64xf32, #tpu.memory_space<vmem>>, vector<2x2x2x64xf32>,
    %c0_189 = arith.constant 0 : index
    %c0_190 = arith.constant 0 : index
    %c0_191 = arith.constant 0 : index
    %c0_192 = arith.constant 0 : index
    %150 = vector.load %arg13[%c0_189, %c0_190, %c0_191, %c0_192] : memref<2x4x4x64xf32, #tpu.memory_space<vmem>>, vector<2x2x2x64xf32>
    %c0_193 = arith.constant 0 : index
    %c0_194 = arith.constant 0 : index
    %c1_195 = arith.constant 1 : index
    %c0_196 = arith.constant 0 : index
    %151 = vector.load %arg13[%c0_193, %c0_194, %c1_195, %c0_196] : memref<2x4x4x64xf32, #tpu.memory_space<vmem>>, vector<2x2x2x64xf32>
    %c0_197 = arith.constant 0 : index
    %c0_198 = arith.constant 0 : index
    %c2_199 = arith.constant 2 : index
    %c0_200 = arith.constant 0 : index
    %152 = vector.load %arg13[%c0_197, %c0_198, %c2_199, %c0_200] : memref<2x4x4x64xf32, #tpu.memory_space<vmem>>, vector<2x2x2x64xf32>
    %c0_201 = arith.constant 0 : index
    %c1_202 = arith.constant 1 : index
    %c0_203 = arith.constant 0 : index
    %c0_204 = arith.constant 0 : index
    %153 = vector.load %arg13[%c0_201, %c1_202, %c0_203, %c0_204] : memref<2x4x4x64xf32, #tpu.memory_space<vmem>>, vector<2x2x2x64xf32>
    %c0_205 = arith.constant 0 : index
    %c1_206 = arith.constant 1 : index
    %c1_207 = arith.constant 1 : index
    %c0_208 = arith.constant 0 : index
    %154 = vector.load %arg13[%c0_205, %c1_206, %c1_207, %c0_208] : memref<2x4x4x64xf32, #tpu.memory_space<vmem>>, vector<2x2x2x64xf32>
    %c0_209 = arith.constant 0 : index
    %c1_210 = arith.constant 1 : index
    %c2_211 = arith.constant 2 : index
    %c0_212 = arith.constant 0 : index
    %155 = vector.load %arg13[%c0_209, %c1_210, %c2_211, %c0_212] : memref<2x4x4x64xf32, #tpu.memory_space<vmem>>, vector<2x2x2x64xf32>
    %c0_213 = arith.constant 0 : index
    %c2_214 = arith.constant 2 : index
    %c0_215 = arith.constant 0 : index
    %c0_216 = arith.constant 0 : index
    %156 = vector.load %arg13[%c0_213, %c2_214, %c0_215, %c0_216] : memref<2x4x4x64xf32, #tpu.memory_space<vmem>>, vector<2x2x2x64xf32>
    %c0_217 = arith.constant 0 : index
    %c2_218 = arith.constant 2 : index
    %c1_219 = arith.constant 1 : index
    %c0_220 = arith.constant 0 : index
    %157 = vector.load %arg13[%c0_217, %c2_218, %c1_219, %c0_220] : memref<2x4x4x64xf32, #tpu.memory_space<vmem>>, vector<2x2x2x64xf32>
    %c0_221 = arith.constant 0 : index
    %c2_222 = arith.constant 2 : index
    %c2_223 = arith.constant 2 : index
    %c0_224 = arith.constant 0 : index
    %158 = vector.load %arg13[%c0_221, %c2_222, %c2_223, %c0_224] : memref<2x4x4x64xf32, #tpu.memory_space<vmem>>, vector<2x2x2x64xf32>
    %159 = tpu.concatenate %150, %151, %152, %153, %154, %155, %156, %157, %158 in 3 : vector<2x2x2x64xf32>, vector<2x2x2x64xf32>, vector<2x2x2x64xf32>, vector<2x2x2x64xf32>, vector<2x2x2x64xf32>, vector<2x2x2x64xf32>, vector<2x2x2x64xf32>, vector<2x2x2x64xf32>, vector<2x2x2x64xf32> -> vector<2x2x2x576xf32>
    %160 = vector.shape_cast %159 : vector<2x2x2x576xf32> to vector<8x576xf32>
    %c0_225 = arith.constant 0 : index
    %c0_226 = arith.constant 0 : index
    %161 = vector.load %arg8[%c0_225, %c0_226] : memref<576x128xf32, #tpu.memory_space<vmem>>, vector<576x128xf32>
    %cst_227 = arith.constant dense<0.000000e+00> : vector<8x128xf32>
    %162 = tpu.matmul %160, %161, %cst_227 {dimension_numbers = #tpu.dot_dimension_numbers<[1], [0], [0], [1], [0, 0, 1, 1], [], []>} : vector<8x576xf32>, vector<576x128xf32>, vector<8x128xf32> -> vector<8x128xf32>
    %c0_228 = arith.constant 0 : index
    %c0_229 = arith.constant 0 : index
    %163 = vector.load %arg9[%c0_228, %c0_229] : memref<1x128xf32, #tpu.memory_space<vmem>>, vector<1x128xf32>
    %164 = vector.broadcast %163 : vector<1x128xf32> to vector<8x128xf32>
    %165 = arith.addf %162, %164 : vector<8x128xf32>
    %166 = vector.shape_cast %165 : vector<8x128xf32> to vector<4x2x128xf32>
    %167 = vector.shape_cast %166 : vector<4x2x128xf32> to vector<2x2x2x128xf32>
    %cst_230 = arith.constant dense<0xFF800000> : vector<2x2x128xf32>
    %168 = vector.multi_reduction <maximumf>, %167, %cst_230 [1] : vector<2x2x2x128xf32> to vector<2x2x128xf32>
    %169 = vector.shape_cast %168 : vector<2x2x128xf32> to vector<2x1x2x128xf32>
    %cst_231 = arith.constant dense<0xFF800000> : vector<2x1x128xf32>
    %170 = vector.multi_reduction <maximumf>, %169, %cst_231 [2] : vector<2x1x2x128xf32> to vector<2x1x128xf32>
    %cst_232 = arith.constant 0.000000e+00 : f32
    %171 = vector.broadcast %cst_232 : f32 to vector<2x1x128xf32>
    %172 = arith.maximumf %170, %171 : vector<2x1x128xf32>
    %173 = vector.shape_cast %172 : vector<2x1x128xf32> to vector<2x128xf32>
    %174 = arith.mulf %173, %173 : vector<2x128xf32>
    %cst_233 = arith.constant dense<0.000000e+00> : vector<2xf32>
    %175 = vector.multi_reduction <add>, %174, %cst_233 [1] : vector<2x128xf32> to vector<2xf32>
    %176 = vector.shape_cast %175 : vector<2xf32> to vector<2x1xf32>
    %cst_234 = arith.constant 1.000000e-24 : f32
    %177 = vector.broadcast %cst_234 : f32 to vector<2x1xf32>
    %178 = arith.maximumf %176, %177 : vector<2x1xf32>
    %179 = math.rsqrt %178 : vector<2x1xf32>
    %180 = vector.broadcast %179 : vector<2x1xf32> to vector<2x128xf32>
    %181 = arith.mulf %173, %180 : vector<2x128xf32>
    %c0_235 = arith.constant 0 : index
    %c0_236 = arith.constant 0 : index
    %182 = vector.load %arg10[%c0_235, %c0_236] : memref<2x128xf32, #tpu.memory_space<vmem>>, vector<2x128xf32>
    tpu.vector_store %arg10[%c0_235, %c0_236], %181 {strides = array<i32>} : memref<2x128xf32, #tpu.memory_space<vmem>>, vector<2x128xf32>,
    return
  }
  func.func @transform_0(%arg0: i32) -> (i32, i32, i32, i32) {
    %c0_i32 = arith.constant 0 : i32
    %c0_i32_0 = arith.constant 0 : i32
    %c0_i32_1 = arith.constant 0 : i32
    %c0_i32_2 = arith.constant 0 : i32
    return %arg0, %c0_i32, %c0_i32_0, %c0_i32_1 : i32, i32, i32, i32
  }
  func.func @transform_1(%arg0: i32) -> (i32, i32, i32, i32) {
    %c0_i32 = arith.constant 0 : i32
    %c0_i32_0 = arith.constant 0 : i32
    %c0_i32_1 = arith.constant 0 : i32
    %c0_i32_2 = arith.constant 0 : i32
    %c0_i32_3 = arith.constant 0 : i32
    return %c0_i32, %c0_i32_0, %c0_i32_1, %c0_i32_2 : i32, i32, i32, i32
  }
  func.func @transform_2(%arg0: i32) -> (i32, i32) {
    %c0_i32 = arith.constant 0 : i32
    %c0_i32_0 = arith.constant 0 : i32
    %c0_i32_1 = arith.constant 0 : i32
    return %c0_i32, %c0_i32_0 : i32, i32
  }
  func.func @transform_3(%arg0: i32) -> (i32, i32) {
    %c0_i32 = arith.constant 0 : i32
    %c0_i32_0 = arith.constant 0 : i32
    %c0_i32_1 = arith.constant 0 : i32
    return %c0_i32, %c0_i32_0 : i32, i32
  }
  func.func @transform_4(%arg0: i32) -> (i32, i32) {
    %c0_i32 = arith.constant 0 : i32
    %c0_i32_0 = arith.constant 0 : i32
    %c0_i32_1 = arith.constant 0 : i32
    return %c0_i32, %c0_i32_0 : i32, i32
  }
  func.func @transform_5(%arg0: i32) -> (i32, i32) {
    %c0_i32 = arith.constant 0 : i32
    %c0_i32_0 = arith.constant 0 : i32
    %c0_i32_1 = arith.constant 0 : i32
    return %c0_i32, %c0_i32_0 : i32, i32
  }
  func.func @transform_6(%arg0: i32) -> (i32, i32) {
    %c0_i32 = arith.constant 0 : i32
    %c0_i32_0 = arith.constant 0 : i32
    %c0_i32_1 = arith.constant 0 : i32
    return %c0_i32, %c0_i32_0 : i32, i32
  }
  func.func @transform_7(%arg0: i32) -> (i32, i32) {
    %c0_i32 = arith.constant 0 : i32
    %c0_i32_0 = arith.constant 0 : i32
    %c0_i32_1 = arith.constant 0 : i32
    return %c0_i32, %c0_i32_0 : i32, i32
  }
  func.func @transform_8(%arg0: i32) -> (i32, i32) {
    %c0_i32 = arith.constant 0 : i32
    %c0_i32_0 = arith.constant 0 : i32
    %c0_i32_1 = arith.constant 0 : i32
    return %c0_i32, %c0_i32_0 : i32, i32
  }
  func.func @transform_9(%arg0: i32) -> (i32, i32) {
    %c0_i32 = arith.constant 0 : i32
    %c0_i32_0 = arith.constant 0 : i32
    return %arg0, %c0_i32 : i32, i32
  }
}

</mosaic_0001>

<llo_original>
// kernel: cnn_forward.1
$region0: #{cnn_forward.1}
  #allocation0 [shape = 'u32[]', space=smem, size = 0x4, offset = 0x4, fixed_abs, tag = 'smem constant byte address 0x4 - core index']
  #allocation1 [shape = 'u32[144,128]{1,0:T(1,128)}', space=vmem, size = 0x12000, scoped, tag = 'internal scratch']
  #allocation2 [shape = 'f32[2,10,10,16]{3,2,1,0:T(8,128)}', space=vmem, size = 0x28000, scoped, tag = 'scratch operand']
  #allocation3 [shape = 'f32[2,6,6,32]{3,2,1,0:T(8,128)}', space=vmem, size = 0xc000, scoped, tag = 'scratch operand']
  #allocation4 [shape = 'f32[2,4,4,64]{3,2,1,0:T(4,128)}', space=vmem, size = 0x4000, scoped, tag = 'scratch operand']
  %s0 = inlined_call_operand.vmem [shape: f32[2,18,18,1], index: 0, kind: input, shape index: {}]
  %s1 = inlined_call_operand.vmem [shape: f32[3,3,1,16], index: 1, kind: input, shape index: {}]
  %s2 = inlined_call_operand.vmem [shape: f32[1,16], index: 2, kind: input, shape index: {}]
  %s3 = inlined_call_operand.vmem [shape: f32[144,32], index: 3, kind: input, shape index: {}]
  %s4 = inlined_call_operand.vmem [shape: f32[1,32], index: 4, kind: input, shape index: {}]
  %s5 = inlined_call_operand.vmem [shape: f32[288,64], index: 5, kind: input, shape index: {}]
  %s6 = inlined_call_operand.vmem [shape: f32[1,64], index: 6, kind: input, shape index: {}]
  %s7 = inlined_call_operand.vmem [shape: f32[576,128], index: 7, kind: input, shape index: {}]
  %s8 = inlined_call_operand.vmem [shape: f32[1,128], index: 8, kind: input, shape index: {}]
  %s9 = inlined_call_operand.hbm [shape: f32[2,128], index: 9, kind: output, shape index: {}]
  %s10 = sld [smem:[#allocation0]]
  $region46: #{cnn_forward.1} parent=0
    _
  %s12 = ssub.s32 1, %s10
  %s13 = scalar_select 0, %s12, %s10
  $region1: #{cnn_forward.1} parent=0
    #allocation5 [shape = 'u8[1024]{0}', space=vmem, size = 0x400, scoped, tag = 'output window, operand 0, single buffered']
    #allocation6 [shape = 's32[1]{0}', space=sflag, size = 0x4, scoped, tag = 'scoped memory for cnn_forward.1']
    %14 = vsyncpa [#allocation6], 0
    // Predicated region
    $region2: #{cnn_forward.1} parent=1 // pred_check
      _
    $region3: #{cnn_forward.1} parent=1 // pred_check_branch
      %16 = sbr.rel (0) target = $region5
    $region4: #{cnn_forward.1} parent=1 // pred_region
      _
    $region5: #{cnn_forward.1} parent=1 // pred_fallthru
      _
    // Predicated region
    $region6: #{cnn_forward.1} parent=1 // pred_check
      _
    $region7: #{cnn_forward.1} parent=1 // pred_check_branch
      %18 = sbr.rel (0) target = $region9
    $region8: #{cnn_forward.1} parent=1 // pred_region
      _
    $region9: #{cnn_forward.1} parent=1 // pred_fallthru
      _
    // Predicated region
    $region10: #{cnn_forward.1} parent=1 // pred_check
      _
    $region11: #{cnn_forward.1} parent=1 // pred_check_branch
      %20 = sbr.rel (0) target = $region13
    $region12: #{cnn_forward.1} parent=1 // pred_region
      _
    $region13: #{cnn_forward.1} parent=1 // pred_fallthru
      _
    // Predicated region
    $region14: #{cnn_forward.1} parent=1 // pred_check
      _
    $region15: #{cnn_forward.1} parent=1 // pred_check_branch
      %22 = sbr.rel (0) target = $region17
    $region16: #{cnn_forward.1} parent=1 // pred_region
      _
    $region17: #{cnn_forward.1} parent=1 // pred_fallthru
      _
    // Predicated region
    $region18: #{cnn_forward.1} parent=1 // pred_check
      _
    $region19: #{cnn_forward.1} parent=1 // pred_check_branch
      %24 = sbr.rel (0) target = $region21
    $region20: #{cnn_forward.1} parent=1 // pred_region
      _
    $region21: #{cnn_forward.1} parent=1 // pred_fallthru
      _
    // Predicated region
    $region22: #{cnn_forward.1} parent=1 // pred_check
      _
    $region23: #{cnn_forward.1} parent=1 // pred_check_branch
      %26 = sbr.rel (0) target = $region25
    $region24: #{cnn_forward.1} parent=1 // pred_region
      _
    $region25: #{cnn_forward.1} parent=1 // pred_fallthru
      _
    // Predicated region
    $region26: #{cnn_forward.1} parent=1 // pred_check
      _
    $region27: #{cnn_forward.1} parent=1 // pred_check_branch
      %28 = sbr.rel (0) target = $region29
    $region28: #{cnn_forward.1} parent=1 // pred_region
      _
    $region29: #{cnn_forward.1} parent=1 // pred_fallthru
      _
    // Predicated region
    $region30: #{cnn_forward.1} parent=1 // pred_check
      _
    $region31: #{cnn_forward.1} parent=1 // pred_check_branch
      %30 = sbr.rel (0) target = $region33
    $region32: #{cnn_forward.1} parent=1 // pred_region
      _
    $region33: #{cnn_forward.1} parent=1 // pred_fallthru
      _
    // Predicated region
    $region34: #{cnn_forward.1} parent=1 // pred_check
      _
    $region35: #{cnn_forward.1} parent=1 // pred_check_branch
      %32 = sbr.rel (0) target = $region37
    $region36: #{cnn_forward.1} parent=1 // pred_region
      _
    $region37: #{cnn_forward.1} parent=1 // pred_fallthru
      _
    %v33 = vld [vmem:[%s0] sm:$0xff]
    %v34 = vld [vmem:[%s0 + $0x8] sm:$0xff]
    %v35 = vld [vmem:[%s0 + $0x18] sm:$0xff]
    %v36 = vld [vmem:[%s0 + $0x20] sm:$0xff]
    %v37 = vld [vmem:[%s0 + $0x30] sm:$0xff]
    %v38 = vld [vmem:[%s0 + $0x38] sm:$0xff]
    %v39 = vld [vmem:[%s0 + $0x48] sm:$0xff]
    %v40 = vld [vmem:[%s0 + $0x50] sm:$0xff]
    %v41 = vld [vmem:[%s0 + $0x60] sm:$0xff]
    %v42 = vld [vmem:[%s0 + $0x68] sm:$0xff]
    %v43 = vld [vmem:[%s0 + $0x78] sm:$0xff]
    %v44 = vld [vmem:[%s0 + $0x80] sm:$0xff]
    %v45 = vld [vmem:[%s0 + $0x90] sm:$0xff]
    %v46 = vld [vmem:[%s0 + $0x98] sm:$0xff]
    %v47 = vld [vmem:[%s0 + $0xa8] sm:$0xff]
    %v48 = vld [vmem:[%s0 + $0xb0] sm:$0xff]
    %v49 = vld [vmem:[%s0 + $0xc0] sm:$0xff]
    %v50 = vld [vmem:[%s0 + $0xc8] sm:$0xff]
    %v51 = vld [vmem:[%s0 + $0xd8] sm:$0xff]
    %v52 = vld [vmem:[%s0 + $0xe0] sm:$0xff]
    %v53 = vld [vmem:[%s0 + $0xf0] sm:$0xff]
    %v54 = vld [vmem:[%s0 + $0xf8] sm:$0xff]
    %v55 = vld [vmem:[%s0 + $0x108] sm:$0xff]
    %v56 = vld [vmem:[%s0 + $0x110] sm:$0xff]
    %v57 = vld [vmem:[%s0 + $0x120] sm:$0xff]
    %v58 = vld [vmem:[%s0 + $0x128] sm:$0xff]
    %v59 = vld [vmem:[%s0 + $0x138] sm:$0xff]
    %v60 = vld [vmem:[%s0 + $0x140] sm:$0xff]
    %v61 = vld [vmem:[%s0 + $0x150] sm:$0xff]
    %v62 = vld [vmem:[%s0 + $0x158] sm:$0xff]
    %v63 = vld [vmem:[%s0 + $0x168] sm:$0xff]
    %v64 = vld [vmem:[%s0 + $0x170] sm:$0xff]
    %v65 = vld [vmem:[%s0 + $0x1b0] sm:$0xff]
    %v66 = vld [vmem:[%s0 + $0x1b8] sm:$0xff]
    %v67 = vld [vmem:[%s0 + $0x1c8] sm:$0xff]
    %v68 = vld [vmem:[%s0 + $0x1d0] sm:$0xff]
    %v69 = vld [vmem:[%s0 + $0x1e0] sm:$0xff]
    %v70 = vld [vmem:[%s0 + $0x1e8] sm:$0xff]
    %v71 = vld [vmem:[%s0 + $0x1f8] sm:$0xff]
    %v72 = vld [vmem:[%s0 + $0x200] sm:$0xff]
    %v73 = vld [vmem:[%s0 + $0x210] sm:$0xff]
    %v74 = vld [vmem:[%s0 + $0x218] sm:$0xff]
    %v75 = vld [vmem:[%s0 + $0x228] sm:$0xff]
    %v76 = vld [vmem:[%s0 + $0x230] sm:$0xff]
    %v77 = vld [vmem:[%s0 + $0x240] sm:$0xff]
    %v78 = vld [vmem:[%s0 + $0x248] sm:$0xff]
    %v79 = vld [vmem:[%s0 + $0x258] sm:$0xff]
    %v80 = vld [vmem:[%s0 + $0x260] sm:$0xff]
    %v81 = vld [vmem:[%s0 + $0x270] sm:$0xff]
    %v82 = vld [vmem:[%s0 + $0x278] sm:$0xff]
    %v83 = vld [vmem:[%s0 + $0x288] sm:$0xff]
    %v84 = vld [vmem:[%s0 + $0x290] sm:$0xff]
    %v85 = vld [vmem:[%s0 + $0x2a0] sm:$0xff]
    %v86 = vld [vmem:[%s0 + $0x2a8] sm:$0xff]
    %v87 = vld [vmem:[%s0 + $0x2b8] sm:$0xff]
    %v88 = vld [vmem:[%s0 + $0x2c0] sm:$0xff]
    %v89 = vld [vmem:[%s0 + $0x2d0] sm:$0xff]
    %v90 = vld [vmem:[%s0 + $0x2d8] sm:$0xff]
    %v91 = vld [vmem:[%s0 + $0x2e8] sm:$0xff]
    %v92 = vld [vmem:[%s0 + $0x2f0] sm:$0xff]
    %v93 = vld [vmem:[%s0 + $0x300] sm:$0xff]
    %v94 = vld [vmem:[%s0 + $0x308] sm:$0xff]
    %v95 = vld [vmem:[%s0 + $0x318] sm:$0xff]
    %v96 = vld [vmem:[%s0 + $0x320] sm:$0xff]
    %v97 = vld [vmem:[%s1] sm:$0x1]
    %99 = vset.pattern.permute.xlu0 0
    %100 = vperm.xlu0 %99, %v33
    %v101 = vpop.permute.xlu0 %100
    %104 = vset.pattern.permute.xlu0 0
    %105 = vperm.xlu0 %104, %v34
    %v106 = vpop.permute.xlu0 %105
    %109 = vset.pattern.permute.xlu0 0
    %110 = vperm.xlu0 %109, %v35
    %v111 = vpop.permute.xlu0 %110
    %114 = vset.pattern.permute.xlu0 0
    %115 = vperm.xlu0 %114, %v36
    %v116 = vpop.permute.xlu0 %115
    %119 = vset.pattern.permute.xlu0 0
    %120 = vperm.xlu0 %119, %v37
    %v121 = vpop.permute.xlu0 %120
    %124 = vset.pattern.permute.xlu0 0
    %125 = vperm.xlu0 %124, %v38
    %v126 = vpop.permute.xlu0 %125
    %129 = vset.pattern.permute.xlu0 0
    %130 = vperm.xlu0 %129, %v39
    %v131 = vpop.permute.xlu0 %130
    %134 = vset.pattern.permute.xlu0 0
    %135 = vperm.xlu0 %134, %v40
    %v136 = vpop.permute.xlu0 %135
    %139 = vset.pattern.permute.xlu0 0
    %140 = vperm.xlu0 %139, %v41
    %v141 = vpop.permute.xlu0 %140
    %144 = vset.pattern.permute.xlu0 0
    %145 = vperm.xlu0 %144, %v42
    %v146 = vpop.permute.xlu0 %145
    %149 = vset.pattern.permute.xlu0 0
    %150 = vperm.xlu0 %149, %v43
    %v151 = vpop.permute.xlu0 %150
    %154 = vset.pattern.permute.xlu0 0
    %155 = vperm.xlu0 %154, %v44
    %v156 = vpop.permute.xlu0 %155
    %159 = vset.pattern.permute.xlu0 0
    %160 = vperm.xlu0 %159, %v45
    %v161 = vpop.permute.xlu0 %160
    %164 = vset.pattern.permute.xlu0 0
    %165 = vperm.xlu0 %164, %v46
    %v166 = vpop.permute.xlu0 %165
    %169 = vset.pattern.permute.xlu0 0
    %170 = vperm.xlu0 %169, %v47
    %v171 = vpop.permute.xlu0 %170
    %174 = vset.pattern.permute.xlu0 0
    %175 = vperm.xlu0 %174, %v48
    %v176 = vpop.permute.xlu0 %175
    %179 = vset.pattern.permute.xlu0 0
    %180 = vperm.xlu0 %179, %v49
    %v181 = vpop.permute.xlu0 %180
    %184 = vset.pattern.permute.xlu0 0
    %185 = vperm.xlu0 %184, %v50
    %v186 = vpop.permute.xlu0 %185
    %189 = vset.pattern.permute.xlu0 0
    %190 = vperm.xlu0 %189, %v51
    %v191 = vpop.permute.xlu0 %190
    %194 = vset.pattern.permute.xlu0 0
    %195 = vperm.xlu0 %194, %v52
    %v196 = vpop.permute.xlu0 %195
    %199 = vset.pattern.permute.xlu0 0
    %200 = vperm.xlu0 %199, %v53
    %v201 = vpop.permute.xlu0 %200
    %204 = vset.pattern.permute.xlu0 0
    %205 = vperm.xlu0 %204, %v54
    %v206 = vpop.permute.xlu0 %205
    %209 = vset.pattern.permute.xlu0 0
    %210 = vperm.xlu0 %209, %v55
    %v211 = vpop.permute.xlu0 %210
    %214 = vset.pattern.permute.xlu0 0
    %215 = vperm.xlu0 %214, %v56
    %v216 = vpop.permute.xlu0 %215
    %219 = vset.pattern.permute.xlu0 0
    %220 = vperm.xlu0 %219, %v57
    %v221 = vpop.permute.xlu0 %220
    %224 = vset.pattern.permute.xlu0 0
    %225 = vperm.xlu0 %224, %v58
    %v226 = vpop.permute.xlu0 %225
    %229 = vset.pattern.permute.xlu0 0
    %230 = vperm.xlu0 %229, %v59
    %v231 = vpop.permute.xlu0 %230
    %234 = vset.pattern.permute.xlu0 0
    %235 = vperm.xlu0 %234, %v60
    %v236 = vpop.permute.xlu0 %235
    %239 = vset.pattern.permute.xlu0 0
    %240 = vperm.xlu0 %239, %v61
    %v241 = vpop.permute.xlu0 %240
    %244 = vset.pattern.permute.xlu0 0
    %245 = vperm.xlu0 %244, %v62
    %v246 = vpop.permute.xlu0 %245
    %249 = vset.pattern.permute.xlu0 0
    %250 = vperm.xlu0 %249, %v63
    %v251 = vpop.permute.xlu0 %250
    %254 = vset.pattern.permute.xlu0 0
    %255 = vperm.xlu0 %254, %v64
    %v256 = vpop.permute.xlu0 %255
    %259 = vset.pattern.permute.xlu0 0
    %260 = vperm.xlu0 %259, %v65
    %v261 = vpop.permute.xlu0 %260
    %264 = vset.pattern.permute.xlu0 0
    %265 = vperm.xlu0 %264, %v66
    %v266 = vpop.permute.xlu0 %265
    %269 = vset.pattern.permute.xlu0 0
    %270 = vperm.xlu0 %269, %v67
    %v271 = vpop.permute.xlu0 %270
    %274 = vset.pattern.permute.xlu0 0
    %275 = vperm.xlu0 %274, %v68
    %v276 = vpop.permute.xlu0 %275
    %279 = vset.pattern.permute.xlu0 0
    %280 = vperm.xlu0 %279, %v69
    %v281 = vpop.permute.xlu0 %280
    %284 = vset.pattern.permute.xlu0 0
    %285 = vperm.xlu0 %284, %v70
    %v286 = vpop.permute.xlu0 %285
    %289 = vset.pattern.permute.xlu0 0
    %290 = vperm.xlu0 %289, %v71
    %v291 = vpop.permute.xlu0 %290
    %294 = vset.pattern.permute.xlu0 0
    %295 = vperm.xlu0 %294, %v72
    %v296 = vpop.permute.xlu0 %295
    %299 = vset.pattern.permute.xlu0 0
    %300 = vperm.xlu0 %299, %v73
    %v301 = vpop.permute.xlu0 %300
    %304 = vset.pattern.permute.xlu0 0
    %305 = vperm.xlu0 %304, %v74
    %v306 = vpop.permute.xlu0 %305
    %309 = vset.pattern.permute.xlu0 0
    %310 = vperm.xlu0 %309, %v75
    %v311 = vpop.permute.xlu0 %310
    %314 = vset.pattern.permute.xlu0 0
    %315 = vperm.xlu0 %314, %v76
    %v316 = vpop.permute.xlu0 %315
    %319 = vset.pattern.permute.xlu0 0
    %320 = vperm.xlu0 %319, %v77
    %v321 = vpop.permute.xlu0 %320
    %324 = vset.pattern.permute.xlu0 0
    %325 = vperm.xlu0 %324, %v78
    %v326 = vpop.permute.xlu0 %325
    %329 = vset.pattern.permute.xlu0 0
    %330 = vperm.xlu0 %329, %v79
    %v331 = vpop.permute.xlu0 %330
    %334 = vset.pattern.permute.xlu0 0
    %335 = vperm.xlu0 %334, %v80
    %v336 = vpop.permute.xlu0 %335
    %339 = vset.pattern.permute.xlu0 0
    %340 = vperm.xlu0 %339, %v81
    %v341 = vpop.permute.xlu0 %340
    %344 = vset.pattern.permute.xlu0 0
    %345 = vperm.xlu0 %344, %v82
    %v346 = vpop.permute.xlu0 %345
    %349 = vset.pattern.permute.xlu0 0
    %350 = vperm.xlu0 %349, %v83
    %v351 = vpop.permute.xlu0 %350
    %354 = vset.pattern.permute.xlu0 0
    %355 = vperm.xlu0 %354, %v84
    %v356 = vpop.permute.xlu0 %355
    %359 = vset.pattern.permute.xlu0 0
    %360 = vperm.xlu0 %359, %v85
    %v361 = vpop.permute.xlu0 %360
    %364 = vset.pattern.permute.xlu0 0
    %365 = vperm.xlu0 %364, %v86
    %v366 = vpop.permute.xlu0 %365
    %369 = vset.pattern.permute.xlu0 0
    %370 = vperm.xlu0 %369, %v87
    %v371 = vpop.permute.xlu0 %370
    %374 = vset.pattern.permute.xlu0 0
    %375 = vperm.xlu0 %374, %v88
    %v376 = vpop.permute.xlu0 %375
    %379 = vset.pattern.permute.xlu0 0
    %380 = vperm.xlu0 %379, %v89
    %v381 = vpop.permute.xlu0 %380
    %384 = vset.pattern.permute.xlu0 0
    %385 = vperm.xlu0 %384, %v90
    %v386 = vpop.permute.xlu0 %385
    %389 = vset.pattern.permute.xlu0 0
    %390 = vperm.xlu0 %389, %v91
    %v391 = vpop.permute.xlu0 %390
    %394 = vset.pattern.permute.xlu0 0
    %395 = vperm.xlu0 %394, %v92
    %v396 = vpop.permute.xlu0 %395
    %399 = vset.pattern.permute.xlu0 0
    %400 = vperm.xlu0 %399, %v93
    %v401 = vpop.permute.xlu0 %400
    %404 = vset.pattern.permute.xlu0 0
    %405 = vperm.xlu0 %404, %v94
    %v406 = vpop.permute.xlu0 %405
    %409 = vset.pattern.permute.xlu0 0
    %410 = vperm.xlu0 %409, %v95
    %v411 = vpop.permute.xlu0 %410
    %414 = vset.pattern.permute.xlu0 0
    %415 = vperm.xlu0 %414, %v96
    %v416 = vpop.permute.xlu0 %415
    %v419 = vlaneseq
    %v420 = vshrl.u32 %v419, 7
    %v421 = vsub.s32 0, %v420
    %v422 = vrot.slane %v97, %v421
    %v424 = vmul.f32 %v101, %v422
    %v425 = vmul.f32 %v106, %v422
    %v426 = vmul.f32 %v111, %v422
    %v427 = vmul.f32 %v116, %v422
    %v428 = vmul.f32 %v121, %v422
    %v429 = vmul.f32 %v126, %v422
    %v430 = vmul.f32 %v131, %v422
    %v431 = vmul.f32 %v136, %v422
    %v432 = vmul.f32 %v141, %v422
    %v433 = vmul.f32 %v146, %v422
    %v434 = vmul.f32 %v151, %v422
    %v435 = vmul.f32 %v156, %v422
    %v436 = vmul.f32 %v161, %v422
    %v437 = vmul.f32 %v166, %v422
    %v438 = vmul.f32 %v171, %v422
    %v439 = vmul.f32 %v176, %v422
    %v440 = vmul.f32 %v181, %v422
    %v441 = vmul.f32 %v186, %v422
    %v442 = vmul.f32 %v191, %v422
    %v443 = vmul.f32 %v196, %v422
    %v444 = vmul.f32 %v201, %v422
    %v445 = vmul.f32 %v206, %v422
    %v446 = vmul.f32 %v211, %v422
    %v447 = vmul.f32 %v216, %v422
    %v448 = vmul.f32 %v221, %v422
    %v449 = vmul.f32 %v226, %v422
    %v450 = vmul.f32 %v231, %v422
    %v451 = vmul.f32 %v236, %v422
    %v452 = vmul.f32 %v241, %v422
    %v453 = vmul.f32 %v246, %v422
    %v454 = vmul.f32 %v251, %v422
    %v455 = vmul.f32 %v256, %v422
    %v456 = vmul.f32 %v261, %v422
    %v457 = vmul.f32 %v266, %v422
    %v458 = vmul.f32 %v271, %v422
    %v459 = vmul.f32 %v276, %v422
    %v460 = vmul.f32 %v281, %v422
    %v461 = vmul.f32 %v286, %v422
    %v462 = vmul.f32 %v291, %v422
    %v463 = vmul.f32 %v296, %v422
    %v464 = vmul.f32 %v301, %v422
    %v465 = vmul.f32 %v306, %v422
    %v466 = vmul.f32 %v311, %v422
    %v467 = vmul.f32 %v316, %v422
    %v468 = vmul.f32 %v321, %v422
    %v469 = vmul.f32 %v326, %v422
    %v470 = vmul.f32 %v331, %v422
    %v471 = vmul.f32 %v336, %v422
    %v472 = vmul.f32 %v341, %v422
    %v473 = vmul.f32 %v346, %v422
    %v474 = vmul.f32 %v351, %v422
    %v475 = vmul.f32 %v356, %v422
    %v476 = vmul.f32 %v361, %v422
    %v477 = vmul.f32 %v366, %v422
    %v478 = vmul.f32 %v371, %v422
    %v479 = vmul.f32 %v376, %v422
    %v480 = vmul.f32 %v381, %v422
    %v481 = vmul.f32 %v386, %v422
    %v482 = vmul.f32 %v391, %v422
    %v483 = vmul.f32 %v396, %v422
    %v484 = vmul.f32 %v401, %v422
    %v485 = vmul.f32 %v406, %v422
    %v486 = vmul.f32 %v411, %v422
    %v487 = vmul.f32 %v416, %v422
    %v488 = vadd.f32 %v424, 0.0
    %v489 = vadd.f32 %v425, 0.0
    %v490 = vadd.f32 %v426, 0.0
    %v491 = vadd.f32 %v427, 0.0
    %v492 = vadd.f32 %v428, 0.0
    %v493 = vadd.f32 %v429, 0.0
    %v494 = vadd.f32 %v430, 0.0
    %v495 = vadd.f32 %v431, 0.0
    %v496 = vadd.f32 %v432, 0.0
    %v497 = vadd.f32 %v433, 0.0
    %v498 = vadd.f32 %v434, 0.0
    %v499 = vadd.f32 %v435, 0.0
    %v500 = vadd.f32 %v436, 0.0
    %v501 = vadd.f32 %v437, 0.0
    %v502 = vadd.f32 %v438, 0.0
    %v503 = vadd.f32 %v439, 0.0
    %v504 = vadd.f32 %v440, 0.0
    %v505 = vadd.f32 %v441, 0.0
    %v506 = vadd.f32 %v442, 0.0
    %v507 = vadd.f32 %v443, 0.0
    %v508 = vadd.f32 %v444, 0.0
    %v509 = vadd.f32 %v445, 0.0
    %v510 = vadd.f32 %v446, 0.0
    %v511 = vadd.f32 %v447, 0.0
    %v512 = vadd.f32 %v448, 0.0
    %v513 = vadd.f32 %v449, 0.0
    %v514 = vadd.f32 %v450, 0.0
    %v515 = vadd.f32 %v451, 0.0
    %v516 = vadd.f32 %v452, 0.0
    %v517 = vadd.f32 %v453, 0.0
    %v518 = vadd.f32 %v454, 0.0
    %v519 = vadd.f32 %v455, 0.0
    %v520 = vadd.f32 %v456, 0.0
    %v521 = vadd.f32 %v457, 0.0
    %v522 = vadd.f32 %v458, 0.0
    %v523 = vadd.f32 %v459, 0.0
    %v524 = vadd.f32 %v460, 0.0
    %v525 = vadd.f32 %v461, 0.0
    %v526 = vadd.f32 %v462, 0.0
    %v527 = vadd.f32 %v463, 0.0
    %v528 = vadd.f32 %v464, 0.0
    %v529 = vadd.f32 %v465, 0.0
    %v530 = vadd.f32 %v466, 0.0
    %v531 = vadd.f32 %v467, 0.0
    %v532 = vadd.f32 %v468, 0.0
    %v533 = vadd.f32 %v469, 0.0
    %v534 = vadd.f32 %v470, 0.0
    %v535 = vadd.f32 %v471, 0.0
    %v536 = vadd.f32 %v472, 0.0
    %v537 = vadd.f32 %v473, 0.0
    %v538 = vadd.f32 %v474, 0.0
    %v539 = vadd.f32 %v475, 0.0
    %v540 = vadd.f32 %v476, 0.0
    %v541 = vadd.f32 %v477, 0.0
    %v542 = vadd.f32 %v478, 0.0
    %v543 = vadd.f32 %v479, 0.0
    %v544 = vadd.f32 %v480, 0.0
    %v545 = vadd.f32 %v481, 0.0
    %v546 = vadd.f32 %v482, 0.0
    %v547 = vadd.f32 %v483, 0.0
    %v548 = vadd.f32 %v484, 0.0
    %v549 = vadd.f32 %v485, 0.0
    %v550 = vadd.f32 %v486, 0.0
    %v551 = vadd.f32 %v487, 0.0
    %v552 = vld [vmem:[%s0 + $0x1] sm:$0xff]
    %v553 = vld [vmem:[%s0 + $0x9] sm:$0xff]
    %v554 = vld [vmem:[%s0 + $0x19] sm:$0xff]
    %v555 = vld [vmem:[%s0 + $0x21] sm:$0xff]
    %v556 = vld [vmem:[%s0 + $0x31] sm:$0xff]
    %v557 = vld [vmem:[%s0 + $0x39] sm:$0xff]
    %v558 = vld [vmem:[%s0 + $0x49] sm:$0xff]
    %v559 = vld [vmem:[%s0 + $0x51] sm:$0xff]
    %v560 = vld [vmem:[%s0 + $0x61] sm:$0xff]
    %v561 = vld [vmem:[%s0 + $0x69] sm:$0xff]
    %v562 = vld [vmem:[%s0 + $0x79] sm:$0xff]
    %v563 = vld [vmem:[%s0 + $0x81] sm:$0xff]
    %v564 = vld [vmem:[%s0 + $0x91] sm:$0xff]
    %v565 = vld [vmem:[%s0 + $0x99] sm:$0xff]
    %v566 = vld [vmem:[%s0 + $0xa9] sm:$0xff]
    %v567 = vld [vmem:[%s0 + $0xb1] sm:$0xff]
    %v568 = vld [vmem:[%s0 + $0xc1] sm:$0xff]
    %v569 = vld [vmem:[%s0 + $0xc9] sm:$0xff]
    %v570 = vld [vmem:[%s0 + $0xd9] sm:$0xff]
    %v571 = vld [vmem:[%s0 + $0xe1] sm:$0xff]
    %v572 = vld [vmem:[%s0 + $0xf1] sm:$0xff]
    %v573 = vld [vmem:[%s0 + $0xf9] sm:$0xff]
    %v574 = vld [vmem:[%s0 + $0x109] sm:$0xff]
    %v575 = vld [vmem:[%s0 + $0x111] sm:$0xff]
    %v576 = vld [vmem:[%s0 + $0x121] sm:$0xff]
    %v577 = vld [vmem:[%s0 + $0x129] sm:$0xff]
    %v578 = vld [vmem:[%s0 + $0x139] sm:$0xff]
    %v579 = vld [vmem:[%s0 + $0x141] sm:$0xff]
    %v580 = vld [vmem:[%s0 + $0x151] sm:$0xff]
    %v581 = vld [vmem:[%s0 + $0x159] sm:$0xff]
    %v582 = vld [vmem:[%s0 + $0x169] sm:$0xff]
    %v583 = vld [vmem:[%s0 + $0x171] sm:$0xff]
    %v584 = vld [vmem:[%s0 + $0x1b1] sm:$0xff]
    %v585 = vld [vmem:[%s0 + $0x1b9] sm:$0xff]
    %v586 = vld [vmem:[%s0 + $0x1c9] sm:$0xff]
    %v587 = vld [vmem:[%s0 + $0x1d1] sm:$0xff]
    %v588 = vld [vmem:[%s0 + $0x1e1] sm:$0xff]
    %v589 = vld [vmem:[%s0 + $0x1e9] sm:$0xff]
    %v590 = vld [vmem:[%s0 + $0x1f9] sm:$0xff]
    %v591 = vld [vmem:[%s0 + $0x201] sm:$0xff]
    %v592 = vld [vmem:[%s0 + $0x211] sm:$0xff]
    %v593 = vld [vmem:[%s0 + $0x219] sm:$0xff]
    %v594 = vld [vmem:[%s0 + $0x229] sm:$0xff]
    %v595 = vld [vmem:[%s0 + $0x231] sm:$0xff]
    %v596 = vld [vmem:[%s0 + $0x241] sm:$0xff]
    %v597 = vld [vmem:[%s0 + $0x249] sm:$0xff]
    %v598 = vld [vmem:[%s0 + $0x259] sm:$0xff]
    %v599 = vld [vmem:[%s0 + $0x261] sm:$0xff]
    %v600 = vld [vmem:[%s0 + $0x271] sm:$0xff]
    %v601 = vld [vmem:[%s0 + $0x279] sm:$0xff]
    %v602 = vld [vmem:[%s0 + $0x289] sm:$0xff]
    %v603 = vld [vmem:[%s0 + $0x291] sm:$0xff]
    %v604 = vld [vmem:[%s0 + $0x2a1] sm:$0xff]
    %v605 = vld [vmem:[%s0 + $0x2a9] sm:$0xff]
    %v606 = vld [vmem:[%s0 + $0x2b9] sm:$0xff]
    %v607 = vld [vmem:[%s0 + $0x2c1] sm:$0xff]
    %v608 = vld [vmem:[%s0 + $0x2d1] sm:$0xff]
    %v609 = vld [vmem:[%s0 + $0x2d9] sm:$0xff]
    %v610 = vld [vmem:[%s0 + $0x2e9] sm:$0xff]
    %v611 = vld [vmem:[%s0 + $0x2f1] sm:$0xff]
    %v612 = vld [vmem:[%s0 + $0x301] sm:$0xff]
    %v613 = vld [vmem:[%s0 + $0x309] sm:$0xff]
    %v614 = vld [vmem:[%s0 + $0x319] sm:$0xff]
    %v615 = vld [vmem:[%s0 + $0x321] sm:$0xff]
    %s616 = scalar_lea.vmem %s1, 1
    %v617 = vld [vmem:[%s616] sm:$0x1]
    %619 = vset.pattern.permute.xlu0 0
    %620 = vperm.xlu0 %619, %v552
    %v621 = vpop.permute.xlu0 %620
    %624 = vset.pattern.permute.xlu0 0
    %625 = vperm.xlu0 %624, %v553
    %v626 = vpop.permute.xlu0 %625
    %629 = vset.pattern.permute.xlu0 0
    %630 = vperm.xlu0 %629, %v554
    %v631 = vpop.permute.xlu0 %630
    %634 = vset.pattern.permute.xlu0 0
    %635 = vperm.xlu0 %634, %v555
    %v636 = vpop.permute.xlu0 %635
    %639 = vset.pattern.permute.xlu0 0
    %640 = vperm.xlu0 %639, %v556
    %v641 = vpop.permute.xlu0 %640
    %644 = vset.pattern.permute.xlu0 0
    %645 = vperm.xlu0 %644, %v557
    %v646 = vpop.permute.xlu0 %645
    %649 = vset.pattern.permute.xlu0 0
    %650 = vperm.xlu0 %649, %v558
    %v651 = vpop.permute.xlu0 %650
    %654 = vset.pattern.permute.xlu0 0
    %655 = vperm.xlu0 %654, %v559
    %v656 = vpop.permute.xlu0 %655
    %659 = vset.pattern.permute.xlu0 0
    %660 = vperm.xlu0 %659, %v560
    %v661 = vpop.permute.xlu0 %660
    %664 = vset.pattern.permute.xlu0 0
    %665 = vperm.xlu0 %664, %v561
    %v666 = vpop.permute.xlu0 %665
    %669 = vset.pattern.permute.xlu0 0
    %670 = vperm.xlu0 %669, %v562
    %v671 = vpop.permute.xlu0 %670
    %674 = vset.pattern.permute.xlu0 0
    %675 = vperm.xlu0 %674, %v563
    %v676 = vpop.permute.xlu0 %675
    %679 = vset.pattern.permute.xlu0 0
    %680 = vperm.xlu0 %679, %v564
    %v681 = vpop.permute.xlu0 %680
    %684 = vset.pattern.permute.xlu0 0
    %685 = vperm.xlu0 %684, %v565
    %v686 = vpop.permute.xlu0 %685
    %689 = vset.pattern.permute.xlu0 0
    %690 = vperm.xlu0 %689, %v566
    %v691 = vpop.permute.xlu0 %690
    %694 = vset.pattern.permute.xlu0 0
    %695 = vperm.xlu0 %694, %v567
    %v696 = vpop.permute.xlu0 %695
    %699 = vset.pattern.permute.xlu0 0
    %700 = vperm.xlu0 %699, %v568
    %v701 = vpop.permute.xlu0 %700
    %704 = vset.pattern.permute.xlu0 0
    %705 = vperm.xlu0 %704, %v569
    %v706 = vpop.permute.xlu0 %705
    %709 = vset.pattern.permute.xlu0 0
    %710 = vperm.xlu0 %709, %v570
    %v711 = vpop.permute.xlu0 %710
    %714 = vset.pattern.permute.xlu0 0
    %715 = vperm.xlu0 %714, %v571
    %v716 = vpop.permute.xlu0 %715
    %719 = vset.pattern.permute.xlu0 0
    %720 = vperm.xlu0 %719, %v572
    %v721 = vpop.permute.xlu0 %720
    %724 = vset.pattern.permute.xlu0 0
    %725 = vperm.xlu0 %724, %v573
    %v726 = vpop.permute.xlu0 %725
    %729 = vset.pattern.permute.xlu0 0
    %730 = vperm.xlu0 %729, %v574
    %v731 = vpop.permute.xlu0 %730
    %734 = vset.pattern.permute.xlu0 0
    %735 = vperm.xlu0 %734, %v575
    %v736 = vpop.permute.xlu0 %735
    %739 = vset.pattern.permute.xlu0 0
    %740 = vperm.xlu0 %739, %v576
    %v741 = vpop.permute.xlu0 %740
    %744 = vset.pattern.permute.xlu0 0
    %745 = vperm.xlu0 %744, %v577
    %v746 = vpop.permute.xlu0 %745
    %749 = vset.pattern.permute.xlu0 0
    %750 = vperm.xlu0 %749, %v578
    %v751 = vpop.permute.xlu0 %750
    %754 = vset.pattern.permute.xlu0 0
    %755 = vperm.xlu0 %754, %v579
    %v756 = vpop.permute.xlu0 %755
    %759 = vset.pattern.permute.xlu0 0
    %760 = vperm.xlu0 %759, %v580
    %v761 = vpop.permute.xlu0 %760
    %764 = vset.pattern.permute.xlu0 0
    %765 = vperm.xlu0 %764, %v581
    %v766 = vpop.permute.xlu0 %765
    %769 = vset.pattern.permute.xlu0 0
    %770 = vperm.xlu0 %769, %v582
    %v771 = vpop.permute.xlu0 %770
    %774 = vset.pattern.permute.xlu0 0
    %775 = vperm.xlu0 %774, %v583
    %v776 = vpop.permute.xlu0 %775
    %779 = vset.pattern.permute.xlu0 0
    %780 = vperm.xlu0 %779, %v584
    %v781 = vpop.permute.xlu0 %780
    %784 = vset.pattern.permute.xlu0 0
    %785 = vperm.xlu0 %784, %v585
    %v786 = vpop.permute.xlu0 %785
    %789 = vset.pattern.permute.xlu0 0
    %790 = vperm.xlu0 %789, %v586
    %v791 = vpop.permute.xlu0 %790
    %794 = vset.pattern.permute.xlu0 0
    %795 = vperm.xlu0 %794, %v587
    %v796 = vpop.permute.xlu0 %795
    %799 = vset.pattern.permute.xlu0 0
    %800 = vperm.xlu0 %799, %v588
    %v801 = vpop.permute.xlu0 %800
    %804 = vset.pattern.permute.xlu0 0
    %805 = vperm.xlu0 %804, %v589
    %v806 = vpop.permute.xlu0 %805
    %809 = vset.pattern.permute.xlu0 0
    %810 = vperm.xlu0 %809, %v590
    %v811 = vpop.permute.xlu0 %810
    %814 = vset.pattern.permute.xlu0 0
    %815 = vperm.xlu0 %814, %v591
    %v816 = vpop.permute.xlu0 %815
    %819 = vset.pattern.permute.xlu0 0
    %820 = vperm.xlu0 %819, %v592
    %v821 = vpop.permute.xlu0 %820
    %824 = vset.pattern.permute.xlu0 0
    %825 = vperm.xlu0 %824, %v593
    %v826 = vpop.permute.xlu0 %825
    %829 = vset.pattern.permute.xlu0 0
    %830 = vperm.xlu0 %829, %v594
    %v831 = vpop.permute.xlu0 %830
    %834 = vset.pattern.permute.xlu0 0
    %835 = vperm.xlu0 %834, %v595
    %v836 = vpop.permute.xlu0 %835
    %839 = vset.pattern.permute.xlu0 0
    %840 = vperm.xlu0 %839, %v596
    %v841 = vpop.permute.xlu0 %840
    %844 = vset.pattern.permute.xlu0 0
    %845 = vperm.xlu0 %844, %v597
    %v846 = vpop.permute.xlu0 %845
    %849 = vset.pattern.permute.xlu0 0
    %850 = vperm.xlu0 %849, %v598
    %v851 = vpop.permute.xlu0 %850
    %854 = vset.pattern.permute.xlu0 0
    %855 = vperm.xlu0 %854, %v599
    %v856 = vpop.permute.xlu0 %855
    %859 = vset.pattern.permute.xlu0 0
    %860 = vperm.xlu0 %859, %v600
    %v861 = vpop.permute.xlu0 %860
    %864 = vset.pattern.permute.xlu0 0
    %865 = vperm.xlu0 %864, %v601
    %v866 = vpop.permute.xlu0 %865
    %869 = vset.pattern.permute.xlu0 0
    %870 = vperm.xlu0 %869, %v602
    %v871 = vpop.permute.xlu0 %870
    %874 = vset.pattern.permute.xlu0 0
    %875 = vperm.xlu0 %874, %v603
    %v876 = vpop.permute.xlu0 %875
    %879 = vset.pattern.permute.xlu0 0
    %880 = vperm.xlu0 %879, %v604
    %v881 = vpop.permute.xlu0 %880
    %884 = vset.pattern.permute.xlu0 0
    %885 = vperm.xlu0 %884, %v605
    %v886 = vpop.permute.xlu0 %885
    %889 = vset.pattern.permute.xlu0 0
    %890 = vperm.xlu0 %889, %v606
    %v891 = vpop.permute.xlu0 %890
    %894 = vset.pattern.permute.xlu0 0
    %895 = vperm.xlu0 %894, %v607
    %v896 = vpop.permute.xlu0 %895
    %899 = vset.pattern.permute.xlu0 0
    %900 = vperm.xlu0 %899, %v608
    %v901 = vpop.permute.xlu0 %900
    %904 = vset.pattern.permute.xlu0 0
    %905 = vperm.xlu0 %904, %v609
    %v906 = vpop.permute.xlu0 %905
    %909 = vset.pattern.permute.xlu0 0
    %910 = vperm.xlu0 %909, %v610
    %v911 = vpop.permute.xlu0 %910
    %914 = vset.pattern.permute.xlu0 0
    %915 = vperm.xlu0 %914, %v611
    %v916 = vpop.permute.xlu0 %915
    %919 = vset.pattern.permute.xlu0 0
    %920 = vperm.xlu0 %919, %v612
    %v921 = vpop.permute.xlu0 %920
    %924 = vset.pattern.permute.xlu0 0
    %925 = vperm.xlu0 %924, %v613
    %v926 = vpop.permute.xlu0 %925
    %929 = vset.pattern.permute.xlu0 0
    %930 = vperm.xlu0 %929, %v614
    %v931 = vpop.permute.xlu0 %930
    %934 = vset.pattern.permute.xlu0 0
    %935 = vperm.xlu0 %934, %v615
    %v936 = vpop.permute.xlu0 %935
    %v939 = vlaneseq
    %v940 = vshrl.u32 %v939, 7
    %v941 = vsub.s32 0, %v940
    %v942 = vrot.slane %v617, %v941
    %v944 = vmul.f32 %v621, %v942
    %v945 = vmul.f32 %v626, %v942
    %v946 = vmul.f32 %v631, %v942
    %v947 = vmul.f32 %v636, %v942
    %v948 = vmul.f32 %v641, %v942
    %v949 = vmul.f32 %v646, %v942
    %v950 = vmul.f32 %v651, %v942
    %v951 = vmul.f32 %v656, %v942
    %v952 = vmul.f32 %v661, %v942
    %v953 = vmul.f32 %v666, %v942
    %v954 = vmul.f32 %v671, %v942
    %v955 = vmul.f32 %v676, %v942
    %v956 = vmul.f32 %v681, %v942
    %v957 = vmul.f32 %v686, %v942
    %v958 = vmul.f32 %v691, %v942
    %v959 = vmul.f32 %v696, %v942
    %v960 = vmul.f32 %v701, %v942
    %v961 = vmul.f32 %v706, %v942
    %v962 = vmul.f32 %v711, %v942
    %v963 = vmul.f32 %v716, %v942
    %v964 = vmul.f32 %v721, %v942
    %v965 = vmul.f32 %v726, %v942
    %v966 = vmul.f32 %v731, %v942
    %v967 = vmul.f32 %v736, %v942
    %v968 = vmul.f32 %v741, %v942
    %v969 = vmul.f32 %v746, %v942
    %v970 = vmul.f32 %v751, %v942
    %v971 = vmul.f32 %v756, %v942
    %v972 = vmul.f32 %v761, %v942
    %v973 = vmul.f32 %v766, %v942
    %v974 = vmul.f32 %v771, %v942
    %v975 = vmul.f32 %v776, %v942
    %v976 = vmul.f32 %v781, %v942
    %v977 = vmul.f32 %v786, %v942
    %v978 = vmul.f32 %v791, %v942
    %v979 = vmul.f32 %v796, %v942
    %v980 = vmul.f32 %v801, %v942
    %v981 = vmul.f32 %v806, %v942
    %v982 = vmul.f32 %v811, %v942
    %v983 = vmul.f32 %v816, %v942
    %v984 = vmul.f32 %v821, %v942
    %v985 = vmul.f32 %v826, %v942
    %v986 = vmul.f32 %v831, %v942
    %v987 = vmul.f32 %v836, %v942
    %v988 = vmul.f32 %v841, %v942
    %v989 = vmul.f32 %v846, %v942
    %v990 = vmul.f32 %v851, %v942
    %v991 = vmul.f32 %v856, %v942
    %v992 = vmul.f32 %v861, %v942
    %v993 = vmul.f32 %v866, %v942
    %v994 = vmul.f32 %v871, %v942
    %v995 = vmul.f32 %v876, %v942
    %v996 = vmul.f32 %v881, %v942
    %v997 = vmul.f32 %v886, %v942
    %v998 = vmul.f32 %v891, %v942
    %v999 = vmul.f32 %v896, %v942
    %v1000 = vmul.f32 %v901, %v942
    %v1001 = vmul.f32 %v906, %v942
    %v1002 = vmul.f32 %v911, %v942
    %v1003 = vmul.f32 %v916, %v942
    %v1004 = vmul.f32 %v921, %v942
    %v1005 = vmul.f32 %v926, %v942
    %v1006 = vmul.f32 %v931, %v942
    %v1007 = vmul.f32 %v936, %v942
    %v1008 = vadd.f32 %v488, %v944
    %v1009 = vadd.f32 %v489, %v945
    %v1010 = vadd.f32 %v490, %v946
    %v1011 = vadd.f32 %v491, %v947
    %v1012 = vadd.f32 %v492, %v948
    %v1013 = vadd.f32 %v493, %v949
    %v1014 = vadd.f32 %v494, %v950
    %v1015 = vadd.f32 %v495, %v951
    %v1016 = vadd.f32 %v496, %v952
    %v1017 = vadd.f32 %v497, %v953
    %v1018 = vadd.f32 %v498, %v954
    %v1019 = vadd.f32 %v499, %v955
    %v1020 = vadd.f32 %v500, %v956
    %v1021 = vadd.f32 %v501, %v957
    %v1022 = vadd.f32 %v502, %v958
    %v1023 = vadd.f32 %v503, %v959
    %v1024 = vadd.f32 %v504, %v960
    %v1025 = vadd.f32 %v505, %v961
    %v1026 = vadd.f32 %v506, %v962
    %v1027 = vadd.f32 %v507, %v963
    %v1028 = vadd.f32 %v508, %v964
    %v1029 = vadd.f32 %v509, %v965
    %v1030 = vadd.f32 %v510, %v966
    %v1031 = vadd.f32 %v511, %v967
    %v1032 = vadd.f32 %v512, %v968
    %v1033 = vadd.f32 %v513, %v969
    %v1034 = vadd.f32 %v514, %v970
    %v1035 = vadd.f32 %v515, %v971
    %v1036 = vadd.f32 %v516, %v972
    %v1037 = vadd.f32 %v517, %v973
    %v1038 = vadd.f32 %v518, %v974
    %v1039 = vadd.f32 %v519, %v975
    %v1040 = vadd.f32 %v520, %v976
    %v1041 = vadd.f32 %v521, %v977
    %v1042 = vadd.f32 %v522, %v978
    %v1043 = vadd.f32 %v523, %v979
    %v1044 = vadd.f32 %v524, %v980
    %v1045 = vadd.f32 %v525, %v981
    %v1046 = vadd.f32 %v526, %v982
    %v1047 = vadd.f32 %v527, %v983
    %v1048 = vadd.f32 %v528, %v984
    %v1049 = vadd.f32 %v529, %v985
    %v1050 = vadd.f32 %v530, %v986
    %v1051 = vadd.f32 %v531, %v987
    %v1052 = vadd.f32 %v532, %v988
    %v1053 = vadd.f32 %v533, %v989
    %v1054 = vadd.f32 %v534, %v990
    %v1055 = vadd.f32 %v535, %v991
    %v1056 = vadd.f32 %v536, %v992
    %v1057 = vadd.f32 %v537, %v993
    %v1058 = vadd.f32 %v538, %v994
    %v1059 = vadd.f32 %v539, %v995
    %v1060 = vadd.f32 %v540, %v996
    %v1061 = vadd.f32 %v541, %v997
    %v1062 = vadd.f32 %v542, %v998
    %v1063 = vadd.f32 %v543, %v999
    %v1064 = vadd.f32 %v544, %v1000
    %v1065 = vadd.f32 %v545, %v1001
    %v1066 = vadd.f32 %v546, %v1002
    %v1067 = vadd.f32 %v547, %v1003
    %v1068 = vadd.f32 %v548, %v1004
    %v1069 = vadd.f32 %v549, %v1005
    %v1070 = vadd.f32 %v550, %v1006
    %v1071 = vadd.f32 %v551, %v1007
    %v1072 = vld [vmem:[%s0 + $0x2] sm:$0xff]
    %v1073 = vld [vmem:[%s0 + $0xa] sm:$0xff]
    %v1074 = vld [vmem:[%s0 + $0x1a] sm:$0xff]
    %v1075 = vld [vmem:[%s0 + $0x22] sm:$0xff]
    %v1076 = vld [vmem:[%s0 + $0x32] sm:$0xff]
    %v1077 = vld [vmem:[%s0 + $0x3a] sm:$0xff]
    %v1078 = vld [vmem:[%s0 + $0x4a] sm:$0xff]
    %v1079 = vld [vmem:[%s0 + $0x52] sm:$0xff]
    %v1080 = vld [vmem:[%s0 + $0x62] sm:$0xff]
    %v1081 = vld [vmem:[%s0 + $0x6a] sm:$0xff]
    %v1082 = vld [vmem:[%s0 + $0x7a] sm:$0xff]
    %v1083 = vld [vmem:[%s0 + $0x82] sm:$0xff]
    %v1084 = vld [vmem:[%s0 + $0x92] sm:$0xff]
    %v1085 = vld [vmem:[%s0 + $0x9a] sm:$0xff]
    %v1086 = vld [vmem:[%s0 + $0xaa] sm:$0xff]
    %v1087 = vld [vmem:[%s0 + $0xb2] sm:$0xff]
    %v1088 = vld [vmem:[%s0 + $0xc2] sm:$0xff]
    %v1089 = vld [vmem:[%s0 + $0xca] sm:$0xff]
    %v1090 = vld [vmem:[%s0 + $0xda] sm:$0xff]
    %v1091 = vld [vmem:[%s0 + $0xe2] sm:$0xff]
    %v1092 = vld [vmem:[%s0 + $0xf2] sm:$0xff]
    %v1093 = vld [vmem:[%s0 + $0xfa] sm:$0xff]
    %v1094 = vld [vmem:[%s0 + $0x10a] sm:$0xff]
    %v1095 = vld [vmem:[%s0 + $0x112] sm:$0xff]
    %v1096 = vld [vmem:[%s0 + $0x122] sm:$0xff]
    %v1097 = vld [vmem:[%s0 + $0x12a] sm:$0xff]
    %v1098 = vld [vmem:[%s0 + $0x13a] sm:$0xff]
    %v1099 = vld [vmem:[%s0 + $0x142] sm:$0xff]
    %v1100 = vld [vmem:[%s0 + $0x152] sm:$0xff]
    %v1101 = vld [vmem:[%s0 + $0x15a] sm:$0xff]
    %v1102 = vld [vmem:[%s0 + $0x16a] sm:$0xff]
    %v1103 = vld [vmem:[%s0 + $0x172] sm:$0xff]
    %v1104 = vld [vmem:[%s0 + $0x1b2] sm:$0xff]
    %v1105 = vld [vmem:[%s0 + $0x1ba] sm:$0xff]
    %v1106 = vld [vmem:[%s0 + $0x1ca] sm:$0xff]
    %v1107 = vld [vmem:[%s0 + $0x1d2] sm:$0xff]
    %v1108 = vld [vmem:[%s0 + $0x1e2] sm:$0xff]
    %v1109 = vld [vmem:[%s0 + $0x1ea] sm:$0xff]
    %v1110 = vld [vmem:[%s0 + $0x1fa] sm:$0xff]
    %v1111 = vld [vmem:[%s0 + $0x202] sm:$0xff]
    %v1112 = vld [vmem:[%s0 + $0x212] sm:$0xff]
    %v1113 = vld [vmem:[%s0 + $0x21a] sm:$0xff]
    %v1114 = vld [vmem:[%s0 + $0x22a] sm:$0xff]
    %v1115 = vld [vmem:[%s0 + $0x232] sm:$0xff]
    %v1116 = vld [vmem:[%s0 + $0x242] sm:$0xff]
    %v1117 = vld [vmem:[%s0 + $0x24a] sm:$0xff]
    %v1118 = vld [vmem:[%s0 + $0x25a] sm:$0xff]
    %v1119 = vld [vmem:[%s0 + $0x262] sm:$0xff]
    %v1120 = vld [vmem:[%s0 + $0x272] sm:$0xff]
    %v1121 = vld [vmem:[%s0 + $0x27a] sm:$0xff]
    %v1122 = vld [vmem:[%s0 + $0x28a] sm:$0xff]
    %v1123 = vld [vmem:[%s0 + $0x292] sm:$0xff]
    %v1124 = vld [vmem:[%s0 + $0x2a2] sm:$0xff]
    %v1125 = vld [vmem:[%s0 + $0x2aa] sm:$0xff]
    %v1126 = vld [vmem:[%s0 + $0x2ba] sm:$0xff]
    %v1127 = vld [vmem:[%s0 + $0x2c2] sm:$0xff]
    %v1128 = vld [vmem:[%s0 + $0x2d2] sm:$0xff]
    %v1129 = vld [vmem:[%s0 + $0x2da] sm:$0xff]
    %v1130 = vld [vmem:[%s0 + $0x2ea] sm:$0xff]
    %v1131 = vld [vmem:[%s0 + $0x2f2] sm:$0xff]
    %v1132 = vld [vmem:[%s0 + $0x302] sm:$0xff]
    %v1133 = vld [vmem:[%s0 + $0x30a] sm:$0xff]
    %v1134 = vld [vmem:[%s0 + $0x31a] sm:$0xff]
    %v1135 = vld [vmem:[%s0 + $0x322] sm:$0xff]
    %s1136 = scalar_lea.vmem %s1, 2
    %v1137 = vld [vmem:[%s1136] sm:$0x1]
    %1139 = vset.pattern.permute.xlu0 0
    %1140 = vperm.xlu0 %1139, %v1072
    %v1141 = vpop.permute.xlu0 %1140
    %1144 = vset.pattern.permute.xlu0 0
    %1145 = vperm.xlu0 %1144, %v1073
    %v1146 = vpop.permute.xlu0 %1145
    %1149 = vset.pattern.permute.xlu0 0
    %1150 = vperm.xlu0 %1149, %v1074
    %v1151 = vpop.permute.xlu0 %1150
    %1154 = vset.pattern.permute.xlu0 0
    %1155 = vperm.xlu0 %1154, %v1075
    %v1156 = vpop.permute.xlu0 %1155
    %1159 = vset.pattern.permute.xlu0 0
    %1160 = vperm.xlu0 %1159, %v1076
    %v1161 = vpop.permute.xlu0 %1160
    %1164 = vset.pattern.permute.xlu0 0
    %1165 = vperm.xlu0 %1164, %v1077
    %v1166 = vpop.permute.xlu0 %1165
    %1169 = vset.pattern.permute.xlu0 0
    %1170 = vperm.xlu0 %1169, %v1078
    %v1171 = vpop.permute.xlu0 %1170
    %1174 = vset.pattern.permute.xlu0 0
    %1175 = vperm.xlu0 %1174, %v1079
    %v1176 = vpop.permute.xlu0 %1175
    %1179 = vset.pattern.permute.xlu0 0
    %1180 = vperm.xlu0 %1179, %v1080
    %v1181 = vpop.permute.xlu0 %1180
    %1184 = vset.pattern.permute.xlu0 0
    %1185 = vperm.xlu0 %1184, %v1081
    %v1186 = vpop.permute.xlu0 %1185
    %1189 = vset.pattern.permute.xlu0 0
    %1190 = vperm.xlu0 %1189, %v1082
    %v1191 = vpop.permute.xlu0 %1190
    %1194 = vset.pattern.permute.xlu0 0
    %1195 = vperm.xlu0 %1194, %v1083
    %v1196 = vpop.permute.xlu0 %1195
    %1199 = vset.pattern.permute.xlu0 0
    %1200 = vperm.xlu0 %1199, %v1084
    %v1201 = vpop.permute.xlu0 %1200
    %1204 = vset.pattern.permute.xlu0 0
    %1205 = vperm.xlu0 %1204, %v1085
    %v1206 = vpop.permute.xlu0 %1205
    %1209 = vset.pattern.permute.xlu0 0
    %1210 = vperm.xlu0 %1209, %v1086
    %v1211 = vpop.permute.xlu0 %1210
    %1214 = vset.pattern.permute.xlu0 0
    %1215 = vperm.xlu0 %1214, %v1087
    %v1216 = vpop.permute.xlu0 %1215
    %1219 = vset.pattern.permute.xlu0 0
    %1220 = vperm.xlu0 %1219, %v1088
    %v1221 = vpop.permute.xlu0 %1220
    %1224 = vset.pattern.permute.xlu0 0
    %1225 = vperm.xlu0 %1224, %v1089
    %v1226 = vpop.permute.xlu0 %1225
    %1229 = vset.pattern.permute.xlu0 0
    %1230 = vperm.xlu0 %1229, %v1090
    %v1231 = vpop.permute.xlu0 %1230
    %1234 = vset.pattern.permute.xlu0 0
    %1235 = vperm.xlu0 %1234, %v1091
    %v1236 = vpop.permute.xlu0 %1235
    %1239 = vset.pattern.permute.xlu0 0
    %1240 = vperm.xlu0 %1239, %v1092
    %v1241 = vpop.permute.xlu0 %1240
    %1244 = vset.pattern.permute.xlu0 0
    %1245 = vperm.xlu0 %1244, %v1093
    %v1246 = vpop.permute.xlu0 %1245
    %1249 = vset.pattern.permute.xlu0 0
    %1250 = vperm.xlu0 %1249, %v1094
    %v1251 = vpop.permute.xlu0 %1250
    %1254 = vset.pattern.permute.xlu0 0
    %1255 = vperm.xlu0 %1254, %v1095
    %v1256 = vpop.permute.xlu0 %1255
    %1259 = vset.pattern.permute.xlu0 0
    %1260 = vperm.xlu0 %1259, %v1096
    %v1261 = vpop.permute.xlu0 %1260
    %1264 = vset.pattern.permute.xlu0 0
    %1265 = vperm.xlu0 %1264, %v1097
    %v1266 = vpop.permute.xlu0 %1265
    %1269 = vset.pattern.permute.xlu0 0
    %1270 = vperm.xlu0 %1269, %v1098
    %v1271 = vpop.permute.xlu0 %1270
    %1274 = vset.pattern.permute.xlu0 0
    %1275 = vperm.xlu0 %1274, %v1099
    %v1276 = vpop.permute.xlu0 %1275
    %1279 = vset.pattern.permute.xlu0 0
    %1280 = vperm.xlu0 %1279, %v1100
    %v1281 = vpop.permute.xlu0 %1280
    %1284 = vset.pattern.permute.xlu0 0
    %1285 = vperm.xlu0 %1284, %v1101
    %v1286 = vpop.permute.xlu0 %1285
    %1289 = vset.pattern.permute.xlu0 0
    %1290 = vperm.xlu0 %1289, %v1102
    %v1291 = vpop.permute.xlu0 %1290
    %1294 = vset.pattern.permute.xlu0 0
    %1295 = vperm.xlu0 %1294, %v1103
    %v1296 = vpop.permute.xlu0 %1295
    %1299 = vset.pattern.permute.xlu0 0
    %1300 = vperm.xlu0 %1299, %v1104
    %v1301 = vpop.permute.xlu0 %1300
    %1304 = vset.pattern.permute.xlu0 0
    %1305 = vperm.xlu0 %1304, %v1105
    %v1306 = vpop.permute.xlu0 %1305
    %1309 = vset.pattern.permute.xlu0 0
    %1310 = vperm.xlu0 %1309, %v1106
    %v1311 = vpop.permute.xlu0 %1310
    %1314 = vset.pattern.permute.xlu0 0
    %1315 = vperm.xlu0 %1314, %v1107
    %v1316 = vpop.permute.xlu0 %1315
    %1319 = vset.pattern.permute.xlu0 0
    %1320 = vperm.xlu0 %1319, %v1108
    %v1321 = vpop.permute.xlu0 %1320
    %1324 = vset.pattern.permute.xlu0 0
    %1325 = vperm.xlu0 %1324, %v1109
    %v1326 = vpop.permute.xlu0 %1325
    %1329 = vset.pattern.permute.xlu0 0
    %1330 = vperm.xlu0 %1329, %v1110
    %v1331 = vpop.permute.xlu0 %1330
    %1334 = vset.pattern.permute.xlu0 0
    %1335 = vperm.xlu0 %1334, %v1111
    %v1336 = vpop.permute.xlu0 %1335
    %1339 = vset.pattern.permute.xlu0 0
    %1340 = vperm.xlu0 %1339, %v1112
    %v1341 = vpop.permute.xlu0 %1340
    %1344 = vset.pattern.permute.xlu0 0
    %1345 = vperm.xlu0 %1344, %v1113
    %v1346 = vpop.permute.xlu0 %1345
    %1349 = vset.pattern.permute.xlu0 0
    %1350 = vperm.xlu0 %1349, %v1114
    %v1351 = vpop.permute.xlu0 %1350
    %1354 = vset.pattern.permute.xlu0 0
    %1355 = vperm.xlu0 %1354, %v1115
    %v1356 = vpop.permute.xlu0 %1355
    %1359 = vset.pattern.permute.xlu0 0
    %1360 = vperm.xlu0 %1359, %v1116
    %v1361 = vpop.permute.xlu0 %1360
    %1364 = vset.pattern.permute.xlu0 0
    %1365 = vperm.xlu0 %1364, %v1117
    %v1366 = vpop.permute.xlu0 %1365
    %1369 = vset.pattern.permute.xlu0 0
    %1370 = vperm.xlu0 %1369, %v1118
    %v1371 = vpop.permute.xlu0 %1370
    %1374 = vset.pattern.permute.xlu0 0
    %1375 = vperm.xlu0 %1374, %v1119
    %v1376 = vpop.permute.xlu0 %1375
    %1379 = vset.pattern.permute.xlu0 0
    %1380 = vperm.xlu0 %1379, %v1120
    %v1381 = vpop.permute.xlu0 %1380
    %1384 = vset.pattern.permute.xlu0 0
    %1385 = vperm.xlu0 %1384, %v1121
    %v1386 = vpop.permute.xlu0 %1385
    %1389 = vset.pattern.permute.xlu0 0
    %1390 = vperm.xlu0 %1389, %v1122
    %v1391 = vpop.permute.xlu0 %1390
    %1394 = vset.pattern.permute.xlu0 0
    %1395 = vperm.xlu0 %1394, %v1123
    %v1396 = vpop.permute.xlu0 %1395
    %1399 = vset.pattern.permute.xlu0 0
    %1400 = vperm.xlu0 %1399, %v1124
    %v1401 = vpop.permute.xlu0 %1400
    %1404 = vset.pattern.permute.xlu0 0
    %1405 = vperm.xlu0 %1404, %v1125
    %v1406 = vpop.permute.xlu0 %1405
    %1409 = vset.pattern.permute.xlu0 0
    %1410 = vperm.xlu0 %1409, %v1126
    %v1411 = vpop.permute.xlu0 %1410
    %1414 = vset.pattern.permute.xlu0 0
    %1415 = vperm.xlu0 %1414, %v1127
    %v1416 = vpop.permute.xlu0 %1415
    %1419 = vset.pattern.permute.xlu0 0
    %1420 = vperm.xlu0 %1419, %v1128
    %v1421 = vpop.permute.xlu0 %1420
    %1424 = vset.pattern.permute.xlu0 0
    %1425 = vperm.xlu0 %1424, %v1129
    %v1426 = vpop.permute.xlu0 %1425
    %1429 = vset.pattern.permute.xlu0 0
    %1430 = vperm.xlu0 %1429, %v1130
    %v1431 = vpop.permute.xlu0 %1430
    %1434 = vset.pattern.permute.xlu0 0
    %1435 = vperm.xlu0 %1434, %v1131
    %v1436 = vpop.permute.xlu0 %1435
    %1439 = vset.pattern.permute.xlu0 0
    %1440 = vperm.xlu0 %1439, %v1132
    %v1441 = vpop.permute.xlu0 %1440
    %1444 = vset.pattern.permute.xlu0 0
    %1445 = vperm.xlu0 %1444, %v1133
    %v1446 = vpop.permute.xlu0 %1445
    %1449 = vset.pattern.permute.xlu0 0
    %1450 = vperm.xlu0 %1449, %v1134
    %v1451 = vpop.permute.xlu0 %1450
    %1454 = vset.pattern.permute.xlu0 0
    %1455 = vperm.xlu0 %1454, %v1135
    %v1456 = vpop.permute.xlu0 %1455
    %v1459 = vlaneseq
    %v1460 = vshrl.u32 %v1459, 7
    %v1461 = vsub.s32 0, %v1460
    %v1462 = vrot.slane %v1137, %v1461
    %v1464 = vmul.f32 %v1141, %v1462
    %v1465 = vmul.f32 %v1146, %v1462
    %v1466 = vmul.f32 %v1151, %v1462
    %v1467 = vmul.f32 %v1156, %v1462
    %v1468 = vmul.f32 %v1161, %v1462
    %v1469 = vmul.f32 %v1166, %v1462
    %v1470 = vmul.f32 %v1171, %v1462
    %v1471 = vmul.f32 %v1176, %v1462
    %v1472 = vmul.f32 %v1181, %v1462
    %v1473 = vmul.f32 %v1186, %v1462
    %v1474 = vmul.f32 %v1191, %v1462
    %v1475 = vmul.f32 %v1196, %v1462
    %v1476 = vmul.f32 %v1201, %v1462
    %v1477 = vmul.f32 %v1206, %v1462
    %v1478 = vmul.f32 %v1211, %v1462
    %v1479 = vmul.f32 %v1216, %v1462
    %v1480 = vmul.f32 %v1221, %v1462
    %v1481 = vmul.f32 %v1226, %v1462
    %v1482 = vmul.f32 %v1231, %v1462
    %v1483 = vmul.f32 %v1236, %v1462
    %v1484 = vmul.f32 %v1241, %v1462
    %v1485 = vmul.f32 %v1246, %v1462
    %v1486 = vmul.f32 %v1251, %v1462
    %v1487 = vmul.f32 %v1256, %v1462
    %v1488 = vmul.f32 %v1261, %v1462
    %v1489 = vmul.f32 %v1266, %v1462
    %v1490 = vmul.f32 %v1271, %v1462
    %v1491 = vmul.f32 %v1276, %v1462
    %v1492 = vmul.f32 %v1281, %v1462
    %v1493 = vmul.f32 %v1286, %v1462
    %v1494 = vmul.f32 %v1291, %v1462
    %v1495 = vmul.f32 %v1296, %v1462
    %v1496 = vmul.f32 %v1301, %v1462
    %v1497 = vmul.f32 %v1306, %v1462
    %v1498 = vmul.f32 %v1311, %v1462
    %v1499 = vmul.f32 %v1316, %v1462
    %v1500 = vmul.f32 %v1321, %v1462
    %v1501 = vmul.f32 %v1326, %v1462
    %v1502 = vmul.f32 %v1331, %v1462
    %v1503 = vmul.f32 %v1336, %v1462
    %v1504 = vmul.f32 %v1341, %v1462
    %v1505 = vmul.f32 %v1346, %v1462
    %v1506 = vmul.f32 %v1351, %v1462
    %v1507 = vmul.f32 %v1356, %v1462
    %v1508 = vmul.f32 %v1361, %v1462
    %v1509 = vmul.f32 %v1366, %v1462
    %v1510 = vmul.f32 %v1371, %v1462
    %v1511 = vmul.f32 %v1376, %v1462
    %v1512 = vmul.f32 %v1381, %v1462
    %v1513 = vmul.f32 %v1386, %v1462
    %v1514 = vmul.f32 %v1391, %v1462
    %v1515 = vmul.f32 %v1396, %v1462
    %v1516 = vmul.f32 %v1401, %v1462
    %v1517 = vmul.f32 %v1406, %v1462
    %v1518 = vmul.f32 %v1411, %v1462
    %v1519 = vmul.f32 %v1416, %v1462
    %v1520 = vmul.f32 %v1421, %v1462
    %v1521 = vmul.f32 %v1426, %v1462
    %v1522 = vmul.f32 %v1431, %v1462
    %v1523 = vmul.f32 %v1436, %v1462
    %v1524 = vmul.f32 %v1441, %v1462
    %v1525 = vmul.f32 %v1446, %v1462
    %v1526 = vmul.f32 %v1451, %v1462
    %v1527 = vmul.f32 %v1456, %v1462
    %v1528 = vadd.f32 %v1008, %v1464
    %v1529 = vadd.f32 %v1009, %v1465
    %v1530 = vadd.f32 %v1010, %v1466
    %v1531 = vadd.f32 %v1011, %v1467
    %v1532 = vadd.f32 %v1012, %v1468
    %v1533 = vadd.f32 %v1013, %v1469
    %v1534 = vadd.f32 %v1014, %v1470
    %v1535 = vadd.f32 %v1015, %v1471
    %v1536 = vadd.f32 %v1016, %v1472
    %v1537 = vadd.f32 %v1017, %v1473
    %v1538 = vadd.f32 %v1018, %v1474
    %v1539 = vadd.f32 %v1019, %v1475
    %v1540 = vadd.f32 %v1020, %v1476
    %v1541 = vadd.f32 %v1021, %v1477
    %v1542 = vadd.f32 %v1022, %v1478
    %v1543 = vadd.f32 %v1023, %v1479
    %v1544 = vadd.f32 %v1024, %v1480
    %v1545 = vadd.f32 %v1025, %v1481
    %v1546 = vadd.f32 %v1026, %v1482
    %v1547 = vadd.f32 %v1027, %v1483
    %v1548 = vadd.f32 %v1028, %v1484
    %v1549 = vadd.f32 %v1029, %v1485
    %v1550 = vadd.f32 %v1030, %v1486
    %v1551 = vadd.f32 %v1031, %v1487
    %v1552 = vadd.f32 %v1032, %v1488
    %v1553 = vadd.f32 %v1033, %v1489
    %v1554 = vadd.f32 %v1034, %v1490
    %v1555 = vadd.f32 %v1035, %v1491
    %v1556 = vadd.f32 %v1036, %v1492
    %v1557 = vadd.f32 %v1037, %v1493
    %v1558 = vadd.f32 %v1038, %v1494
    %v1559 = vadd.f32 %v1039, %v1495
    %v1560 = vadd.f32 %v1040, %v1496
    %v1561 = vadd.f32 %v1041, %v1497
    %v1562 = vadd.f32 %v1042, %v1498
    %v1563 = vadd.f32 %v1043, %v1499
    %v1564 = vadd.f32 %v1044, %v1500
    %v1565 = vadd.f32 %v1045, %v1501
    %v1566 = vadd.f32 %v1046, %v1502
    %v1567 = vadd.f32 %v1047, %v1503
    %v1568 = vadd.f32 %v1048, %v1504
    %v1569 = vadd.f32 %v1049, %v1505
    %v1570 = vadd.f32 %v1050, %v1506
    %v1571 = vadd.f32 %v1051, %v1507
    %v1572 = vadd.f32 %v1052, %v1508
    %v1573 = vadd.f32 %v1053, %v1509
    %v1574 = vadd.f32 %v1054, %v1510
    %v1575 = vadd.f32 %v1055, %v1511
    %v1576 = vadd.f32 %v1056, %v1512
    %v1577 = vadd.f32 %v1057, %v1513
    %v1578 = vadd.f32 %v1058, %v1514
    %v1579 = vadd.f32 %v1059, %v1515
    %v1580 = vadd.f32 %v1060, %v1516
    %v1581 = vadd.f32 %v1061, %v1517
    %v1582 = vadd.f32 %v1062, %v1518
    %v1583 = vadd.f32 %v1063, %v1519
    %v1584 = vadd.f32 %v1064, %v1520
    %v1585 = vadd.f32 %v1065, %v1521
    %v1586 = vadd.f32 %v1066, %v1522
    %v1587 = vadd.f32 %v1067, %v1523
    %v1588 = vadd.f32 %v1068, %v1524
    %v1589 = vadd.f32 %v1069, %v1525
    %v1590 = vadd.f32 %v1070, %v1526
    %v1591 = vadd.f32 %v1071, %v1527
    %s1592 = scalar_lea.vmem %s0, 24
    %v1593 = vld [vmem:[%s1592] sm:$0xff]
    %v1594 = vld [vmem:[%s1592 + $0x8] sm:$0xff]
    %v1595 = vld [vmem:[%s1592 + $0x18] sm:$0xff]
    %v1596 = vld [vmem:[%s1592 + $0x20] sm:$0xff]
    %v1597 = vld [vmem:[%s1592 + $0x30] sm:$0xff]
    %v1598 = vld [vmem:[%s1592 + $0x38] sm:$0xff]
    %v1599 = vld [vmem:[%s1592 + $0x48] sm:$0xff]
    %v1600 = vld [vmem:[%s1592 + $0x50] sm:$0xff]
    %v1601 = vld [vmem:[%s1592 + $0x60] sm:$0xff]
    %v1602 = vld [vmem:[%s1592 + $0x68] sm:$0xff]
    %v1603 = vld [vmem:[%s1592 + $0x78] sm:$0xff]
    %v1604 = vld [vmem:[%s1592 + $0x80] sm:$0xff]
    %v1605 = vld [vmem:[%s1592 + $0x90] sm:$0xff]
    %v1606 = vld [vmem:[%s1592 + $0x98] sm:$0xff]
    %v1607 = vld [vmem:[%s1592 + $0xa8] sm:$0xff]
    %v1608 = vld [vmem:[%s1592 + $0xb0] sm:$0xff]
    %v1609 = vld [vmem:[%s1592 + $0xc0] sm:$0xff]
    %v1610 = vld [vmem:[%s1592 + $0xc8] sm:$0xff]
    %v1611 = vld [vmem:[%s1592 + $0xd8] sm:$0xff]
    %v1612 = vld [vmem:[%s1592 + $0xe0] sm:$0xff]
    %v1613 = vld [vmem:[%s1592 + $0xf0] sm:$0xff]
    %v1614 = vld [vmem:[%s1592 + $0xf8] sm:$0xff]
    %v1615 = vld [vmem:[%s1592 + $0x108] sm:$0xff]
    %v1616 = vld [vmem:[%s1592 + $0x110] sm:$0xff]
    %v1617 = vld [vmem:[%s1592 + $0x120] sm:$0xff]
    %v1618 = vld [vmem:[%s1592 + $0x128] sm:$0xff]
    %v1619 = vld [vmem:[%s1592 + $0x138] sm:$0xff]
    %v1620 = vld [vmem:[%s1592 + $0x140] sm:$0xff]
    %v1621 = vld [vmem:[%s1592 + $0x150] sm:$0xff]
    %v1622 = vld [vmem:[%s1592 + $0x158] sm:$0xff]
    %v1623 = vld [vmem:[%s1592 + $0x168] sm:$0xff]
    %v1624 = vld [vmem:[%s1592 + $0x170] sm:$0xff]
    %v1625 = vld [vmem:[%s1592 + $0x1b0] sm:$0xff]
    %v1626 = vld [vmem:[%s1592 + $0x1b8] sm:$0xff]
    %v1627 = vld [vmem:[%s1592 + $0x1c8] sm:$0xff]
    %v1628 = vld [vmem:[%s1592 + $0x1d0] sm:$0xff]
    %v1629 = vld [vmem:[%s1592 + $0x1e0] sm:$0xff]
    %v1630 = vld [vmem:[%s1592 + $0x1e8] sm:$0xff]
    %v1631 = vld [vmem:[%s1592 + $0x1f8] sm:$0xff]
    %v1632 = vld [vmem:[%s1592 + $0x200] sm:$0xff]
    %v1633 = vld [vmem:[%s1592 + $0x210] sm:$0xff]
    %v1634 = vld [vmem:[%s1592 + $0x218] sm:$0xff]
    %v1635 = vld [vmem:[%s1592 + $0x228] sm:$0xff]
    %v1636 = vld [vmem:[%s1592 + $0x230] sm:$0xff]
    %v1637 = vld [vmem:[%s1592 + $0x240] sm:$0xff]
    %v1638 = vld [vmem:[%s1592 + $0x248] sm:$0xff]
    %v1639 = vld [vmem:[%s1592 + $0x258] sm:$0xff]
    %v1640 = vld [vmem:[%s1592 + $0x260] sm:$0xff]
    %v1641 = vld [vmem:[%s1592 + $0x270] sm:$0xff]
    %v1642 = vld [vmem:[%s1592 + $0x278] sm:$0xff]
    %v1643 = vld [vmem:[%s1592 + $0x288] sm:$0xff]
    %v1644 = vld [vmem:[%s1592 + $0x290] sm:$0xff]
    %v1645 = vld [vmem:[%s1592 + $0x2a0] sm:$0xff]
    %v1646 = vld [vmem:[%s1592 + $0x2a8] sm:$0xff]
    %v1647 = vld [vmem:[%s1592 + $0x2b8] sm:$0xff]
    %v1648 = vld [vmem:[%s1592 + $0x2c0] sm:$0xff]
    %v1649 = vld [vmem:[%s1592 + $0x2d0] sm:$0xff]
    %v1650 = vld [vmem:[%s1592 + $0x2d8] sm:$0xff]
    %v1651 = vld [vmem:[%s1592 + $0x2e8] sm:$0xff]
    %v1652 = vld [vmem:[%s1592 + $0x2f0] sm:$0xff]
    %v1653 = vld [vmem:[%s1592 + $0x300] sm:$0xff]
    %v1654 = vld [vmem:[%s1592 + $0x308] sm:$0xff]
    %v1655 = vld [vmem:[%s1592 + $0x318] sm:$0xff]
    %v1656 = vld [vmem:[%s1592 + $0x320] sm:$0xff]
    %s1657 = scalar_lea.vmem %s1, 3
    %v1658 = vld [vmem:[%s1657] sm:$0x1]
    %1660 = vset.pattern.permute.xlu0 0
    %1661 = vperm.xlu0 %1660, %v1593
    %v1662 = vpop.permute.xlu0 %1661
    %1665 = vset.pattern.permute.xlu0 0
    %1666 = vperm.xlu0 %1665, %v1594
    %v1667 = vpop.permute.xlu0 %1666
    %1670 = vset.pattern.permute.xlu0 0
    %1671 = vperm.xlu0 %1670, %v1595
    %v1672 = vpop.permute.xlu0 %1671
    %1675 = vset.pattern.permute.xlu0 0
    %1676 = vperm.xlu0 %1675, %v1596
    %v1677 = vpop.permute.xlu0 %1676
    %1680 = vset.pattern.permute.xlu0 0
    %1681 = vperm.xlu0 %1680, %v1597
    %v1682 = vpop.permute.xlu0 %1681
    %1685 = vset.pattern.permute.xlu0 0
    %1686 = vperm.xlu0 %1685, %v1598
    %v1687 = vpop.permute.xlu0 %1686
    %1690 = vset.pattern.permute.xlu0 0
    %1691 = vperm.xlu0 %1690, %v1599
    %v1692 = vpop.permute.xlu0 %1691
    %1695 = vset.pattern.permute.xlu0 0
    %1696 = vperm.xlu0 %1695, %v1600
    %v1697 = vpop.permute.xlu0 %1696
    %1700 = vset.pattern.permute.xlu0 0
    %1701 = vperm.xlu0 %1700, %v1601
    %v1702 = vpop.permute.xlu0 %1701
    %1705 = vset.pattern.permute.xlu0 0
    %1706 = vperm.xlu0 %1705, %v1602
    %v1707 = vpop.permute.xlu0 %1706
    %1710 = vset.pattern.permute.xlu0 0
    %1711 = vperm.xlu0 %1710, %v1603
    %v1712 = vpop.permute.xlu0 %1711
    %1715 = vset.pattern.permute.xlu0 0
    %1716 = vperm.xlu0 %1715, %v1604
    %v1717 = vpop.permute.xlu0 %1716
    %1720 = vset.pattern.permute.xlu0 0
    %1721 = vperm.xlu0 %1720, %v1605
    %v1722 = vpop.permute.xlu0 %1721
    %1725 = vset.pattern.permute.xlu0 0
    %1726 = vperm.xlu0 %1725, %v1606
    %v1727 = vpop.permute.xlu0 %1726
    %1730 = vset.pattern.permute.xlu0 0
    %1731 = vperm.xlu0 %1730, %v1607
    %v1732 = vpop.permute.xlu0 %1731
    %1735 = vset.pattern.permute.xlu0 0
    %1736 = vperm.xlu0 %1735, %v1608
    %v1737 = vpop.permute.xlu0 %1736
    %1740 = vset.pattern.permute.xlu0 0
    %1741 = vperm.xlu0 %1740, %v1609
    %v1742 = vpop.permute.xlu0 %1741
    %1745 = vset.pattern.permute.xlu0 0
    %1746 = vperm.xlu0 %1745, %v1610
    %v1747 = vpop.permute.xlu0 %1746
    %1750 = vset.pattern.permute.xlu0 0
    %1751 = vperm.xlu0 %1750, %v1611
    %v1752 = vpop.permute.xlu0 %1751
    %1755 = vset.pattern.permute.xlu0 0
    %1756 = vperm.xlu0 %1755, %v1612
    %v1757 = vpop.permute.xlu0 %1756
    %1760 = vset.pattern.permute.xlu0 0
    %1761 = vperm.xlu0 %1760, %v1613
    %v1762 = vpop.permute.xlu0 %1761
    %1765 = vset.pattern.permute.xlu0 0
    %1766 = vperm.xlu0 %1765, %v1614
    %v1767 = vpop.permute.xlu0 %1766
    %1770 = vset.pattern.permute.xlu0 0
    %1771 = vperm.xlu0 %1770, %v1615
    %v1772 = vpop.permute.xlu0 %1771
    %1775 = vset.pattern.permute.xlu0 0
    %1776 = vperm.xlu0 %1775, %v1616
    %v1777 = vpop.permute.xlu0 %1776
    %1780 = vset.pattern.permute.xlu0 0
    %1781 = vperm.xlu0 %1780, %v1617
    %v1782 = vpop.permute.xlu0 %1781
    %1785 = vset.pattern.permute.xlu0 0
    %1786 = vperm.xlu0 %1785, %v1618
    %v1787 = vpop.permute.xlu0 %1786
    %1790 = vset.pattern.permute.xlu0 0
    %1791 = vperm.xlu0 %1790, %v1619
    %v1792 = vpop.permute.xlu0 %1791
    %1795 = vset.pattern.permute.xlu0 0
    %1796 = vperm.xlu0 %1795, %v1620
    %v1797 = vpop.permute.xlu0 %1796
    %1800 = vset.pattern.permute.xlu0 0
    %1801 = vperm.xlu0 %1800, %v1621
    %v1802 = vpop.permute.xlu0 %1801
    %1805 = vset.pattern.permute.xlu0 0
    %1806 = vperm.xlu0 %1805, %v1622
    %v1807 = vpop.permute.xlu0 %1806
    %1810 = vset.pattern.permute.xlu0 0
    %1811 = vperm.xlu0 %1810, %v1623
    %v1812 = vpop.permute.xlu0 %1811
    %1815 = vset.pattern.permute.xlu0 0
    %1816 = vperm.xlu0 %1815, %v1624
    %v1817 = vpop.permute.xlu0 %1816
    %1820 = vset.pattern.permute.xlu0 0
    %1821 = vperm.xlu0 %1820, %v1625
    %v1822 = vpop.permute.xlu0 %1821
    %1825 = vset.pattern.permute.xlu0 0
    %1826 = vperm.xlu0 %1825, %v1626
    %v1827 = vpop.permute.xlu0 %1826
    %1830 = vset.pattern.permute.xlu0 0
    %1831 = vperm.xlu0 %1830, %v1627
    %v1832 = vpop.permute.xlu0 %1831
    %1835 = vset.pattern.permute.xlu0 0
    %1836 = vperm.xlu0 %1835, %v1628
    %v1837 = vpop.permute.xlu0 %1836
    %1840 = vset.pattern.permute.xlu0 0
    %1841 = vperm.xlu0 %1840, %v1629
    %v1842 = vpop.permute.xlu0 %1841
    %1845 = vset.pattern.permute.xlu0 0
    %1846 = vperm.xlu0 %1845, %v1630
    %v1847 = vpop.permute.xlu0 %1846
    %1850 = vset.pattern.permute.xlu0 0
    %1851 = vperm.xlu0 %1850, %v1631
    %v1852 = vpop.permute.xlu0 %1851
    %1855 = vset.pattern.permute.xlu0 0
    %1856 = vperm.xlu0 %1855, %v1632
    %v1857 = vpop.permute.xlu0 %1856
    %1860 = vset.pattern.permute.xlu0 0
    %1861 = vperm.xlu0 %1860, %v1633
    %v1862 = vpop.permute.xlu0 %1861
    %1865 = vset.pattern.permute.xlu0 0
    %1866 = vperm.xlu0 %1865, %v1634
    %v1867 = vpop.permute.xlu0 %1866
    %1870 = vset.pattern.permute.xlu0 0
    %1871 = vperm.xlu0 %1870, %v1635
    %v1872 = vpop.permute.xlu0 %1871
    %1875 = vset.pattern.permute.xlu0 0
    %1876 = vperm.xlu0 %1875, %v1636
    %v1877 = vpop.permute.xlu0 %1876
    %1880 = vset.pattern.permute.xlu0 0
    %1881 = vperm.xlu0 %1880, %v1637
    %v1882 = vpop.permute.xlu0 %1881
    %1885 = vset.pattern.permute.xlu0 0
    %1886 = vperm.xlu0 %1885, %v1638
    %v1887 = vpop.permute.xlu0 %1886
    %1890 = vset.pattern.permute.xlu0 0
    %1891 = vperm.xlu0 %1890, %v1639
    %v1892 = vpop.permute.xlu0 %1891
    %1895 = vset.pattern.permute.xlu0 0
    %1896 = vperm.xlu0 %1895, %v1640
    %v1897 = vpop.permute.xlu0 %1896
    %1900 = vset.pattern.permute.xlu0 0
    %1901 = vperm.xlu0 %1900, %v1641
    %v1902 = vpop.permute.xlu0 %1901
    %1905 = vset.pattern.permute.xlu0 0
    %1906 = vperm.xlu0 %1905, %v1642
    %v1907 = vpop.permute.xlu0 %1906
    %1910 = vset.pattern.permute.xlu0 0
    %1911 = vperm.xlu0 %1910, %v1643
    %v1912 = vpop.permute.xlu0 %1911
    %1915 = vset.pattern.permute.xlu0 0
    %1916 = vperm.xlu0 %1915, %v1644
    %v1917 = vpop.permute.xlu0 %1916
    %1920 = vset.pattern.permute.xlu0 0
    %1921 = vperm.xlu0 %1920, %v1645
    %v1922 = vpop.permute.xlu0 %1921
    %1925 = vset.pattern.permute.xlu0 0
    %1926 = vperm.xlu0 %1925, %v1646
    %v1927 = vpop.permute.xlu0 %1926
    %1930 = vset.pattern.permute.xlu0 0
    %1931 = vperm.xlu0 %1930, %v1647
    %v1932 = vpop.permute.xlu0 %1931
    %1935 = vset.pattern.permute.xlu0 0
    %1936 = vperm.xlu0 %1935, %v1648
    %v1937 = vpop.permute.xlu0 %1936
    %1940 = vset.pattern.permute.xlu0 0
    %1941 = vperm.xlu0 %1940, %v1649
    %v1942 = vpop.permute.xlu0 %1941
    %1945 = vset.pattern.permute.xlu0 0
    %1946 = vperm.xlu0 %1945, %v1650
    %v1947 = vpop.permute.xlu0 %1946
    %1950 = vset.pattern.permute.xlu0 0
    %1951 = vperm.xlu0 %1950, %v1651
    %v1952 = vpop.permute.xlu0 %1951
    %1955 = vset.pattern.permute.xlu0 0
    %1956 = vperm.xlu0 %1955, %v1652
    %v1957 = vpop.permute.xlu0 %1956
    %1960 = vset.pattern.permute.xlu0 0
    %1961 = vperm.xlu0 %1960, %v1653
    %v1962 = vpop.permute.xlu0 %1961
    %1965 = vset.pattern.permute.xlu0 0
    %1966 = vperm.xlu0 %1965, %v1654
    %v1967 = vpop.permute.xlu0 %1966
    %1970 = vset.pattern.permute.xlu0 0
    %1971 = vperm.xlu0 %1970, %v1655
    %v1972 = vpop.permute.xlu0 %1971
    %1975 = vset.pattern.permute.xlu0 0
    %1976 = vperm.xlu0 %1975, %v1656
    %v1977 = vpop.permute.xlu0 %1976
    %v1980 = vlaneseq
    %v1981 = vshrl.u32 %v1980, 7
    %v1982 = vsub.s32 0, %v1981
    %v1983 = vrot.slane %v1658, %v1982
    %v1985 = vmul.f32 %v1662, %v1983
    %v1986 = vmul.f32 %v1667, %v1983
    %v1987 = vmul.f32 %v1672, %v1983
    %v1988 = vmul.f32 %v1677, %v1983
    %v1989 = vmul.f32 %v1682, %v1983
    %v1990 = vmul.f32 %v1687, %v1983
    %v1991 = vmul.f32 %v1692, %v1983
    %v1992 = vmul.f32 %v1697, %v1983
    %v1993 = vmul.f32 %v1702, %v1983
    %v1994 = vmul.f32 %v1707, %v1983
    %v1995 = vmul.f32 %v1712, %v1983
    %v1996 = vmul.f32 %v1717, %v1983
    %v1997 = vmul.f32 %v1722, %v1983
    %v1998 = vmul.f32 %v1727, %v1983
    %v1999 = vmul.f32 %v1732, %v1983
    %v2000 = vmul.f32 %v1737, %v1983
    %v2001 = vmul.f32 %v1742, %v1983
    %v2002 = vmul.f32 %v1747, %v1983
    %v2003 = vmul.f32 %v1752, %v1983
    %v2004 = vmul.f32 %v1757, %v1983
    %v2005 = vmul.f32 %v1762, %v1983
    %v2006 = vmul.f32 %v1767, %v1983
    %v2007 = vmul.f32 %v1772, %v1983
    %v2008 = vmul.f32 %v1777, %v1983
    %v2009 = vmul.f32 %v1782, %v1983
    %v2010 = vmul.f32 %v1787, %v1983
    %v2011 = vmul.f32 %v1792, %v1983
    %v2012 = vmul.f32 %v1797, %v1983
    %v2013 = vmul.f32 %v1802, %v1983
    %v2014 = vmul.f32 %v1807, %v1983
    %v2015 = vmul.f32 %v1812, %v1983
    %v2016 = vmul.f32 %v1817, %v1983
    %v2017 = vmul.f32 %v1822, %v1983
    %v2018 = vmul.f32 %v1827, %v1983
    %v2019 = vmul.f32 %v1832, %v1983
    %v2020 = vmul.f32 %v1837, %v1983
    %v2021 = vmul.f32 %v1842, %v1983
    %v2022 = vmul.f32 %v1847, %v1983
    %v2023 = vmul.f32 %v1852, %v1983
    %v2024 = vmul.f32 %v1857, %v1983
    %v2025 = vmul.f32 %v1862, %v1983
    %v2026 = vmul.f32 %v1867, %v1983
    %v2027 = vmul.f32 %v1872, %v1983
    %v2028 = vmul.f32 %v1877, %v1983
    %v2029 = vmul.f32 %v1882, %v1983
    %v2030 = vmul.f32 %v1887, %v1983
    %v2031 = vmul.f32 %v1892, %v1983
    %v2032 = vmul.f32 %v1897, %v1983
    %v2033 = vmul.f32 %v1902, %v1983
    %v2034 = vmul.f32 %v1907, %v1983
    %v2035 = vmul.f32 %v1912, %v1983
    %v2036 = vmul.f32 %v1917, %v1983
    %v2037 = vmul.f32 %v1922, %v1983
    %v2038 = vmul.f32 %v1927, %v1983
    %v2039 = vmul.f32 %v1932, %v1983
    %v2040 = vmul.f32 %v1937, %v1983
    %v2041 = vmul.f32 %v1942, %v1983
    %v2042 = vmul.f32 %v1947, %v1983
    %v2043 = vmul.f32 %v1952, %v1983
    %v2044 = vmul.f32 %v1957, %v1983
    %v2045 = vmul.f32 %v1962, %v1983
    %v2046 = vmul.f32 %v1967, %v1983
    %v2047 = vmul.f32 %v1972, %v1983
    %v2048 = vmul.f32 %v1977, %v1983
    %v2049 = vadd.f32 %v1528, %v1985
    %v2050 = vadd.f32 %v1529, %v1986
    %v2051 = vadd.f32 %v1530, %v1987
    %v2052 = vadd.f32 %v1531, %v1988
    %v2053 = vadd.f32 %v1532, %v1989
    %v2054 = vadd.f32 %v1533, %v1990
    %v2055 = vadd.f32 %v1534, %v1991
    %v2056 = vadd.f32 %v1535, %v1992
    %v2057 = vadd.f32 %v1536, %v1993
    %v2058 = vadd.f32 %v1537, %v1994
    %v2059 = vadd.f32 %v1538, %v1995
    %v2060 = vadd.f32 %v1539, %v1996
    %v2061 = vadd.f32 %v1540, %v1997
    %v2062 = vadd.f32 %v1541, %v1998
    %v2063 = vadd.f32 %v1542, %v1999
    %v2064 = vadd.f32 %v1543, %v2000
    %v2065 = vadd.f32 %v1544, %v2001
    %v2066 = vadd.f32 %v1545, %v2002
    %v2067 = vadd.f32 %v1546, %v2003
    %v2068 = vadd.f32 %v1547, %v2004
    %v2069 = vadd.f32 %v1548, %v2005
    %v2070 = vadd.f32 %v1549, %v2006
    %v2071 = vadd.f32 %v1550, %v2007
    %v2072 = vadd.f32 %v1551, %v2008
    %v2073 = vadd.f32 %v1552, %v2009
    %v2074 = vadd.f32 %v1553, %v2010
    %v2075 = vadd.f32 %v1554, %v2011
    %v2076 = vadd.f32 %v1555, %v2012
    %v2077 = vadd.f32 %v1556, %v2013
    %v2078 = vadd.f32 %v1557, %v2014
    %v2079 = vadd.f32 %v1558, %v2015
    %v2080 = vadd.f32 %v1559, %v2016
    %v2081 = vadd.f32 %v1560, %v2017
    %v2082 = vadd.f32 %v1561, %v2018
    %v2083 = vadd.f32 %v1562, %v2019
    %v2084 = vadd.f32 %v1563, %v2020
    %v2085 = vadd.f32 %v1564, %v2021
    %v2086 = vadd.f32 %v1565, %v2022
    %v2087 = vadd.f32 %v1566, %v2023
    %v2088 = vadd.f32 %v1567, %v2024
    %v2089 = vadd.f32 %v1568, %v2025
    %v2090 = vadd.f32 %v1569, %v2026
    %v2091 = vadd.f32 %v1570, %v2027
    %v2092 = vadd.f32 %v1571, %v2028
    %v2093 = vadd.f32 %v1572, %v2029
    %v2094 = vadd.f32 %v1573, %v2030
    %v2095 = vadd.f32 %v1574, %v2031
    %v2096 = vadd.f32 %v1575, %v2032
    %v2097 = vadd.f32 %v1576, %v2033
    %v2098 = vadd.f32 %v1577, %v2034
    %v2099 = vadd.f32 %v1578, %v2035
    %v2100 = vadd.f32 %v1579, %v2036
    %v2101 = vadd.f32 %v1580, %v2037
    %v2102 = vadd.f32 %v1581, %v2038
    %v2103 = vadd.f32 %v1582, %v2039
    %v2104 = vadd.f32 %v1583, %v2040
    %v2105 = vadd.f32 %v1584, %v2041
    %v2106 = vadd.f32 %v1585, %v2042
    %v2107 = vadd.f32 %v1586, %v2043
    %v2108 = vadd.f32 %v1587, %v2044
    %v2109 = vadd.f32 %v1588, %v2045
    %v2110 = vadd.f32 %v1589, %v2046
    %v2111 = vadd.f32 %v1590, %v2047
    %v2112 = vadd.f32 %v1591, %v2048
    %v2113 = vld [vmem:[%s1592 + $0x1] sm:$0xff]
    %v2114 = vld [vmem:[%s1592 + $0x9] sm:$0xff]
    %v2115 = vld [vmem:[%s1592 + $0x19] sm:$0xff]
    %v2116 = vld [vmem:[%s1592 + $0x21] sm:$0xff]
    %v2117 = vld [vmem:[%s1592 + $0x31] sm:$0xff]
    %v2118 = vld [vmem:[%s1592 + $0x39] sm:$0xff]
    %v2119 = vld [vmem:[%s1592 + $0x49] sm:$0xff]
    %v2120 = vld [vmem:[%s1592 + $0x51] sm:$0xff]
    %v2121 = vld [vmem:[%s1592 + $0x61] sm:$0xff]
    %v2122 = vld [vmem:[%s1592 + $0x69] sm:$0xff]
    %v2123 = vld [vmem:[%s1592 + $0x79] sm:$0xff]
    %v2124 = vld [vmem:[%s1592 + $0x81] sm:$0xff]
    %v2125 = vld [vmem:[%s1592 + $0x91] sm:$0xff]
    %v2126 = vld [vmem:[%s1592 + $0x99] sm:$0xff]
    %v2127 = vld [vmem:[%s1592 + $0xa9] sm:$0xff]
    %v2128 = vld [vmem:[%s1592 + $0xb1] sm:$0xff]
    %v2129 = vld [vmem:[%s1592 + $0xc1] sm:$0xff]
    %v2130 = vld [vmem:[%s1592 + $0xc9] sm:$0xff]
    %v2131 = vld [vmem:[%s1592 + $0xd9] sm:$0xff]
    %v2132 = vld [vmem:[%s1592 + $0xe1] sm:$0xff]
    %v2133 = vld [vmem:[%s1592 + $0xf1] sm:$0xff]
    %v2134 = vld [vmem:[%s1592 + $0xf9] sm:$0xff]
    %v2135 = vld [vmem:[%s1592 + $0x109] sm:$0xff]
    %v2136 = vld [vmem:[%s1592 + $0x111] sm:$0xff]
    %v2137 = vld [vmem:[%s1592 + $0x121] sm:$0xff]
    %v2138 = vld [vmem:[%s1592 + $0x129] sm:$0xff]
    %v2139 = vld [vmem:[%s1592 + $0x139] sm:$0xff]
    %v2140 = vld [vmem:[%s1592 + $0x141] sm:$0xff]
    %v2141 = vld [vmem:[%s1592 + $0x151] sm:$0xff]
    %v2142 = vld [vmem:[%s1592 + $0x159] sm:$0xff]
    %v2143 = vld [vmem:[%s1592 + $0x169] sm:$0xff]
    %v2144 = vld [vmem:[%s1592 + $0x171] sm:$0xff]
    %v2145 = vld [vmem:[%s1592 + $0x1b1] sm:$0xff]
    %v2146 = vld [vmem:[%s1592 + $0x1b9] sm:$0xff]
    %v2147 = vld [vmem:[%s1592 + $0x1c9] sm:$0xff]
    %v2148 = vld [vmem:[%s1592 + $0x1d1] sm:$0xff]
    %v2149 = vld [vmem:[%s1592 + $0x1e1] sm:$0xff]
    %v2150 = vld [vmem:[%s1592 + $0x1e9] sm:$0xff]
    %v2151 = vld [vmem:[%s1592 + $0x1f9] sm:$0xff]
    %v2152 = vld [vmem:[%s1592 + $0x201] sm:$0xff]
    %v2153 = vld [vmem:[%s1592 + $0x211] sm:$0xff]
    %v2154 = vld [vmem:[%s1592 + $0x219] sm:$0xff]
    %v2155 = vld [vmem:[%s1592 + $0x229] sm:$0xff]
    %v2156 = vld [vmem:[%s1592 + $0x231] sm:$0xff]
    %v2157 = vld [vmem:[%s1592 + $0x241] sm:$0xff]
    %v2158 = vld [vmem:[%s1592 + $0x249] sm:$0xff]
    %v2159 = vld [vmem:[%s1592 + $0x259] sm:$0xff]
    %v2160 = vld [vmem:[%s1592 + $0x261] sm:$0xff]
    %v2161 = vld [vmem:[%s1592 + $0x271] sm:$0xff]
    %v2162 = vld [vmem:[%s1592 + $0x279] sm:$0xff]
    %v2163 = vld [vmem:[%s1592 + $0x289] sm:$0xff]
    %v2164 = vld [vmem:[%s1592 + $0x291] sm:$0xff]
    %v2165 = vld [vmem:[%s1592 + $0x2a1] sm:$0xff]
    %v2166 = vld [vmem:[%s1592 + $0x2a9] sm:$0xff]
    %v2167 = vld [vmem:[%s1592 + $0x2b9] sm:$0xff]
    %v2168 = vld [vmem:[%s1592 + $0x2c1] sm:$0xff]
    %v2169 = vld [vmem:[%s1592 + $0x2d1] sm:$0xff]
    %v2170 = vld [vmem:[%s1592 + $0x2d9] sm:$0xff]
    %v2171 = vld [vmem:[%s1592 + $0x2e9] sm:$0xff]
    %v2172 = vld [vmem:[%s1592 + $0x2f1] sm:$0xff]
    %v2173 = vld [vmem:[%s1592 + $0x301] sm:$0xff]
    %v2174 = vld [vmem:[%s1592 + $0x309] sm:$0xff]
    %v2175 = vld [vmem:[%s1592 + $0x319] sm:$0xff]
    %v2176 = vld [vmem:[%s1592 + $0x321] sm:$0xff]
    %s2177 = scalar_lea.vmem %s1, 4
    %v2178 = vld [vmem:[%s2177] sm:$0x1]
    %2180 = vset.pattern.permute.xlu0 0
    %2181 = vperm.xlu0 %2180, %v2113
    %v2182 = vpop.permute.xlu0 %2181
    %2185 = vset.pattern.permute.xlu0 0
    %2186 = vperm.xlu0 %2185, %v2114
    %v2187 = vpop.permute.xlu0 %2186
    %2190 = vset.pattern.permute.xlu0 0
    %2191 = vperm.xlu0 %2190, %v2115
    %v2192 = vpop.permute.xlu0 %2191
    %2195 = vset.pattern.permute.xlu0 0
    %2196 = vperm.xlu0 %2195, %v2116
    %v2197 = vpop.permute.xlu0 %2196
    %2200 = vset.pattern.permute.xlu0 0
    %2201 = vperm.xlu0 %2200, %v2117
    %v2202 = vpop.permute.xlu0 %2201
    %2205 = vset.pattern.permute.xlu0 0
    %2206 = vperm.xlu0 %2205, %v2118
    %v2207 = vpop.permute.xlu0 %2206
    %2210 = vset.pattern.permute.xlu0 0
    %2211 = vperm.xlu0 %2210, %v2119
    %v2212 = vpop.permute.xlu0 %2211
    %2215 = vset.pattern.permute.xlu0 0
    %2216 = vperm.xlu0 %2215, %v2120
    %v2217 = vpop.permute.xlu0 %2216
    %2220 = vset.pattern.permute.xlu0 0
    %2221 = vperm.xlu0 %2220, %v2121
    %v2222 = vpop.permute.xlu0 %2221
    %2225 = vset.pattern.permute.xlu0 0
    %2226 = vperm.xlu0 %2225, %v2122
    %v2227 = vpop.permute.xlu0 %2226
    %2230 = vset.pattern.permute.xlu0 0
    %2231 = vperm.xlu0 %2230, %v2123
    %v2232 = vpop.permute.xlu0 %2231
    %2235 = vset.pattern.permute.xlu0 0
    %2236 = vperm.xlu0 %2235, %v2124
    %v2237 = vpop.permute.xlu0 %2236
    %2240 = vset.pattern.permute.xlu0 0
    %2241 = vperm.xlu0 %2240, %v2125
    %v2242 = vpop.permute.xlu0 %2241
    %2245 = vset.pattern.permute.xlu0 0
    %2246 = vperm.xlu0 %2245, %v2126
    %v2247 = vpop.permute.xlu0 %2246
    %2250 = vset.pattern.permute.xlu0 0
    %2251 = vperm.xlu0 %2250, %v2127
    %v2252 = vpop.permute.xlu0 %2251
    %2255 = vset.pattern.permute.xlu0 0
    %2256 = vperm.xlu0 %2255, %v2128
    %v2257 = vpop.permute.xlu0 %2256
    %2260 = vset.pattern.permute.xlu0 0
    %2261 = vperm.xlu0 %2260, %v2129
    %v2262 = vpop.permute.xlu0 %2261
    %2265 = vset.pattern.permute.xlu0 0
    %2266 = vperm.xlu0 %2265, %v2130
    %v2267 = vpop.permute.xlu0 %2266
    %2270 = vset.pattern.permute.xlu0 0
    %2271 = vperm.xlu0 %2270, %v2131
    %v2272 = vpop.permute.xlu0 %2271
    %2275 = vset.pattern.permute.xlu0 0
    %2276 = vperm.xlu0 %2275, %v2132
    %v2277 = vpop.permute.xlu0 %2276
    %2280 = vset.pattern.permute.xlu0 0
    %2281 = vperm.xlu0 %2280, %v2133
    %v2282 = vpop.permute.xlu0 %2281
    %2285 = vset.pattern.permute.xlu0 0
    %2286 = vperm.xlu0 %2285, %v2134
    %v2287 = vpop.permute.xlu0 %2286
    %2290 = vset.pattern.permute.xlu0 0
    %2291 = vperm.xlu0 %2290, %v2135
    %v2292 = vpop.permute.xlu0 %2291
    %2295 = vset.pattern.permute.xlu0 0
    %2296 = vperm.xlu0 %2295, %v2136
    %v2297 = vpop.permute.xlu0 %2296
    %2300 = vset.pattern.permute.xlu0 0
    %2301 = vperm.xlu0 %2300, %v2137
    %v2302 = vpop.permute.xlu0 %2301
    %2305 = vset.pattern.permute.xlu0 0
    %2306 = vperm.xlu0 %2305, %v2138
    %v2307 = vpop.permute.xlu0 %2306
    %2310 = vset.pattern.permute.xlu0 0
    %2311 = vperm.xlu0 %2310, %v2139
    %v2312 = vpop.permute.xlu0 %2311
    %2315 = vset.pattern.permute.xlu0 0
    %2316 = vperm.xlu0 %2315, %v2140
    %v2317 = vpop.permute.xlu0 %2316
    %2320 = vset.pattern.permute.xlu0 0
    %2321 = vperm.xlu0 %2320, %v2141
    %v2322 = vpop.permute.xlu0 %2321
    %2325 = vset.pattern.permute.xlu0 0
    %2326 = vperm.xlu0 %2325, %v2142
    %v2327 = vpop.permute.xlu0 %2326
    %2330 = vset.pattern.permute.xlu0 0
    %2331 = vperm.xlu0 %2330, %v2143
    %v2332 = vpop.permute.xlu0 %2331
    %2335 = vset.pattern.permute.xlu0 0
    %2336 = vperm.xlu0 %2335, %v2144
    %v2337 = vpop.permute.xlu0 %2336
    %2340 = vset.pattern.permute.xlu0 0
    %2341 = vperm.xlu0 %2340, %v2145
    %v2342 = vpop.permute.xlu0 %2341
    %2345 = vset.pattern.permute.xlu0 0
    %2346 = vperm.xlu0 %2345, %v2146
    %v2347 = vpop.permute.xlu0 %2346
    %2350 = vset.pattern.permute.xlu0 0
    %2351 = vperm.xlu0 %2350, %v2147
    %v2352 = vpop.permute.xlu0 %2351
    %2355 = vset.pattern.permute.xlu0 0
    %2356 = vperm.xlu0 %2355, %v2148
    %v2357 = vpop.permute.xlu0 %2356
    %2360 = vset.pattern.permute.xlu0 0
    %2361 = vperm.xlu0 %2360, %v2149
    %v2362 = vpop.permute.xlu0 %2361
    %2365 = vset.pattern.permute.xlu0 0
    %2366 = vperm.xlu0 %2365, %v2150
    %v2367 = vpop.permute.xlu0 %2366
    %2370 = vset.pattern.permute.xlu0 0
    %2371 = vperm.xlu0 %2370, %v2151
    %v2372 = vpop.permute.xlu0 %2371
    %2375 = vset.pattern.permute.xlu0 0
    %2376 = vperm.xlu0 %2375, %v2152
    %v2377 = vpop.permute.xlu0 %2376
    %2380 = vset.pattern.permute.xlu0 0
    %2381 = vperm.xlu0 %2380, %v2153
    %v2382 = vpop.permute.xlu0 %2381
    %2385 = vset.pattern.permute.xlu0 0
    %2386 = vperm.xlu0 %2385, %v2154
    %v2387 = vpop.permute.xlu0 %2386
    %2390 = vset.pattern.permute.xlu0 0
    %2391 = vperm.xlu0 %2390, %v2155
    %v2392 = vpop.permute.xlu0 %2391
    %2395 = vset.pattern.permute.xlu0 0
    %2396 = vperm.xlu0 %2395, %v2156
    %v2397 = vpop.permute.xlu0 %2396
    %2400 = vset.pattern.permute.xlu0 0
    %2401 = vperm.xlu0 %2400, %v2157
    %v2402 = vpop.permute.xlu0 %2401
    %2405 = vset.pattern.permute.xlu0 0
    %2406 = vperm.xlu0 %2405, %v2158
    %v2407 = vpop.permute.xlu0 %2406
    %2410 = vset.pattern.permute.xlu0 0
    %2411 = vperm.xlu0 %2410, %v2159
    %v2412 = vpop.permute.xlu0 %2411
    %2415 = vset.pattern.permute.xlu0 0
    %2416 = vperm.xlu0 %2415, %v2160
    %v2417 = vpop.permute.xlu0 %2416
    %2420 = vset.pattern.permute.xlu0 0
    %2421 = vperm.xlu0 %2420, %v2161
    %v2422 = vpop.permute.xlu0 %2421
    %2425 = vset.pattern.permute.xlu0 0
    %2426 = vperm.xlu0 %2425, %v2162
    %v2427 = vpop.permute.xlu0 %2426
    %2430 = vset.pattern.permute.xlu0 0
    %2431 = vperm.xlu0 %2430, %v2163
    %v2432 = vpop.permute.xlu0 %2431
    %2435 = vset.pattern.permute.xlu0 0
    %2436 = vperm.xlu0 %2435, %v2164
    %v2437 = vpop.permute.xlu0 %2436
    %2440 = vset.pattern.permute.xlu0 0
    %2441 = vperm.xlu0 %2440, %v2165
    %v2442 = vpop.permute.xlu0 %2441
    %2445 = vset.pattern.permute.xlu0 0
    %2446 = vperm.xlu0 %2445, %v2166
    %v2447 = vpop.permute.xlu0 %2446
    %2450 = vset.pattern.permute.xlu0 0
    %2451 = vperm.xlu0 %2450, %v2167
    %v2452 = vpop.permute.xlu0 %2451
    %2455 = vset.pattern.permute.xlu0 0
    %2456 = vperm.xlu0 %2455, %v2168
    %v2457 = vpop.permute.xlu0 %2456
    %2460 = vset.pattern.permute.xlu0 0
    %2461 = vperm.xlu0 %2460, %v2169
    %v2462 = vpop.permute.xlu0 %2461
    %2465 = vset.pattern.permute.xlu0 0
    %2466 = vperm.xlu0 %2465, %v2170
    %v2467 = vpop.permute.xlu0 %2466
    %2470 = vset.pattern.permute.xlu0 0
    %2471 = vperm.xlu0 %2470, %v2171
    %v2472 = vpop.permute.xlu0 %2471
    %2475 = vset.pattern.permute.xlu0 0
    %2476 = vperm.xlu0 %2475, %v2172
    %v2477 = vpop.permute.xlu0 %2476
    %2480 = vset.pattern.permute.xlu0 0
    %2481 = vperm.xlu0 %2480, %v2173
    %v2482 = vpop.permute.xlu0 %2481
    %2485 = vset.pattern.permute.xlu0 0
    %2486 = vperm.xlu0 %2485, %v2174
    %v2487 = vpop.permute.xlu0 %2486
    %2490 = vset.pattern.permute.xlu0 0
    %2491 = vperm.xlu0 %2490, %v2175
    %v2492 = vpop.permute.xlu0 %2491
    %2495 = vset.pattern.permute.xlu0 0
    %2496 = vperm.xlu0 %2495, %v2176
    %v2497 = vpop.permute.xlu0 %2496
    %v2500 = vlaneseq
    %v2501 = vshrl.u32 %v2500, 7
    %v2502 = vsub.s32 0, %v2501
    %v2503 = vrot.slane %v2178, %v2502
    %v2505 = vmul.f32 %v2182, %v2503
    %v2506 = vmul.f32 %v2187, %v2503
    %v2507 = vmul.f32 %v2192, %v2503
    %v2508 = vmul.f32 %v2197, %v2503
    %v2509 = vmul.f32 %v2202, %v2503
    %v2510 = vmul.f32 %v2207, %v2503
    %v2511 = vmul.f32 %v2212, %v2503
    %v2512 = vmul.f32 %v2217, %v2503
    %v2513 = vmul.f32 %v2222, %v2503
    %v2514 = vmul.f32 %v2227, %v2503
    %v2515 = vmul.f32 %v2232, %v2503
    %v2516 = vmul.f32 %v2237, %v2503
    %v2517 = vmul.f32 %v2242, %v2503
    %v2518 = vmul.f32 %v2247, %v2503
    %v2519 = vmul.f32 %v2252, %v2503
    %v2520 = vmul.f32 %v2257, %v2503
    %v2521 = vmul.f32 %v2262, %v2503
    %v2522 = vmul.f32 %v2267, %v2503
    %v2523 = vmul.f32 %v2272, %v2503
    %v2524 = vmul.f32 %v2277, %v2503
    %v2525 = vmul.f32 %v2282, %v2503
    %v2526 = vmul.f32 %v2287, %v2503
    %v2527 = vmul.f32 %v2292, %v2503
    %v2528 = vmul.f32 %v2297, %v2503
    %v2529 = vmul.f32 %v2302, %v2503
    %v2530 = vmul.f32 %v2307, %v2503
    %v2531 = vmul.f32 %v2312, %v2503
    %v2532 = vmul.f32 %v2317, %v2503
    %v2533 = vmul.f32 %v2322, %v2503
    %v2534 = vmul.f32 %v2327, %v2503
    %v2535 = vmul.f32 %v2332, %v2503
    %v2536 = vmul.f32 %v2337, %v2503
    %v2537 = vmul.f32 %v2342, %v2503
    %v2538 = vmul.f32 %v2347, %v2503
    %v2539 = vmul.f32 %v2352, %v2503
    %v2540 = vmul.f32 %v2357, %v2503
    %v2541 = vmul.f32 %v2362, %v2503
    %v2542 = vmul.f32 %v2367, %v2503
    %v2543 = vmul.f32 %v2372, %v2503
    %v2544 = vmul.f32 %v2377, %v2503
    %v2545 = vmul.f32 %v2382, %v2503
    %v2546 = vmul.f32 %v2387, %v2503
    %v2547 = vmul.f32 %v2392, %v2503
    %v2548 = vmul.f32 %v2397, %v2503
    %v2549 = vmul.f32 %v2402, %v2503
    %v2550 = vmul.f32 %v2407, %v2503
    %v2551 = vmul.f32 %v2412, %v2503
    %v2552 = vmul.f32 %v2417, %v2503
    %v2553 = vmul.f32 %v2422, %v2503
    %v2554 = vmul.f32 %v2427, %v2503
    %v2555 = vmul.f32 %v2432, %v2503
    %v2556 = vmul.f32 %v2437, %v2503
    %v2557 = vmul.f32 %v2442, %v2503
    %v2558 = vmul.f32 %v2447, %v2503
    %v2559 = vmul.f32 %v2452, %v2503
    %v2560 = vmul.f32 %v2457, %v2503
    %v2561 = vmul.f32 %v2462, %v2503
    %v2562 = vmul.f32 %v2467, %v2503
    %v2563 = vmul.f32 %v2472, %v2503
    %v2564 = vmul.f32 %v2477, %v2503
    %v2565 = vmul.f32 %v2482, %v2503
    %v2566 = vmul.f32 %v2487, %v2503
    %v2567 = vmul.f32 %v2492, %v2503
    %v2568 = vmul.f32 %v2497, %v2503
    %v2569 = vadd.f32 %v2049, %v2505
    %v2570 = vadd.f32 %v2050, %v2506
    %v2571 = vadd.f32 %v2051, %v2507
    %v2572 = vadd.f32 %v2052, %v2508
    %v2573 = vadd.f32 %v2053, %v2509
    %v2574 = vadd.f32 %v2054, %v2510
    %v2575 = vadd.f32 %v2055, %v2511
    %v2576 = vadd.f32 %v2056, %v2512
    %v2577 = vadd.f32 %v2057, %v2513
    %v2578 = vadd.f32 %v2058, %v2514
    %v2579 = vadd.f32 %v2059, %v2515
    %v2580 = vadd.f32 %v2060, %v2516
    %v2581 = vadd.f32 %v2061, %v2517
    %v2582 = vadd.f32 %v2062, %v2518
    %v2583 = vadd.f32 %v2063, %v2519
    %v2584 = vadd.f32 %v2064, %v2520
    %v2585 = vadd.f32 %v2065, %v2521
    %v2586 = vadd.f32 %v2066, %v2522
    %v2587 = vadd.f32 %v2067, %v2523
    %v2588 = vadd.f32 %v2068, %v2524
    %v2589 = vadd.f32 %v2069, %v2525
    %v2590 = vadd.f32 %v2070, %v2526
    %v2591 = vadd.f32 %v2071, %v2527
    %v2592 = vadd.f32 %v2072, %v2528
    %v2593 = vadd.f32 %v2073, %v2529
    %v2594 = vadd.f32 %v2074, %v2530
    %v2595 = vadd.f32 %v2075, %v2531
    %v2596 = vadd.f32 %v2076, %v2532
    %v2597 = vadd.f32 %v2077, %v2533
    %v2598 = vadd.f32 %v2078, %v2534
    %v2599 = vadd.f32 %v2079, %v2535
    %v2600 = vadd.f32 %v2080, %v2536
    %v2601 = vadd.f32 %v2081, %v2537
    %v2602 = vadd.f32 %v2082, %v2538
    %v2603 = vadd.f32 %v2083, %v2539
    %v2604 = vadd.f32 %v2084, %v2540
    %v2605 = vadd.f32 %v2085, %v2541
    %v2606 = vadd.f32 %v2086, %v2542
    %v2607 = vadd.f32 %v2087, %v2543
    %v2608 = vadd.f32 %v2088, %v2544
    %v2609 = vadd.f32 %v2089, %v2545
    %v2610 = vadd.f32 %v2090, %v2546
    %v2611 = vadd.f32 %v2091, %v2547
    %v2612 = vadd.f32 %v2092, %v2548
    %v2613 = vadd.f32 %v2093, %v2549
    %v2614 = vadd.f32 %v2094, %v2550
    %v2615 = vadd.f32 %v2095, %v2551
    %v2616 = vadd.f32 %v2096, %v2552
    %v2617 = vadd.f32 %v2097, %v2553
    %v2618 = vadd.f32 %v2098, %v2554
    %v2619 = vadd.f32 %v2099, %v2555
    %v2620 = vadd.f32 %v2100, %v2556
    %v2621 = vadd.f32 %v2101, %v2557
    %v2622 = vadd.f32 %v2102, %v2558
    %v2623 = vadd.f32 %v2103, %v2559
    %v2624 = vadd.f32 %v2104, %v2560
    %v2625 = vadd.f32 %v2105, %v2561
    %v2626 = vadd.f32 %v2106, %v2562
    %v2627 = vadd.f32 %v2107, %v2563
    %v2628 = vadd.f32 %v2108, %v2564
    %v2629 = vadd.f32 %v2109, %v2565
    %v2630 = vadd.f32 %v2110, %v2566
    %v2631 = vadd.f32 %v2111, %v2567
    %v2632 = vadd.f32 %v2112, %v2568
    %v2633 = vld [vmem:[%s1592 + $0x2] sm:$0xff]
    %v2634 = vld [vmem:[%s1592 + $0xa] sm:$0xff]
    %v2635 = vld [vmem:[%s1592 + $0x1a] sm:$0xff]
    %v2636 = vld [vmem:[%s1592 + $0x22] sm:$0xff]
    %v2637 = vld [vmem:[%s1592 + $0x32] sm:$0xff]
    %v2638 = vld [vmem:[%s1592 + $0x3a] sm:$0xff]
    %v2639 = vld [vmem:[%s1592 + $0x4a] sm:$0xff]
    %v2640 = vld [vmem:[%s1592 + $0x52] sm:$0xff]
    %v2641 = vld [vmem:[%s1592 + $0x62] sm:$0xff]
    %v2642 = vld [vmem:[%s1592 + $0x6a] sm:$0xff]
    %v2643 = vld [vmem:[%s1592 + $0x7a] sm:$0xff]
    %v2644 = vld [vmem:[%s1592 + $0x82] sm:$0xff]
    %v2645 = vld [vmem:[%s1592 + $0x92] sm:$0xff]
    %v2646 = vld [vmem:[%s1592 + $0x9a] sm:$0xff]
    %v2647 = vld [vmem:[%s1592 + $0xaa] sm:$0xff]
    %v2648 = vld [vmem:[%s1592 + $0xb2] sm:$0xff]
    %v2649 = vld [vmem:[%s1592 + $0xc2] sm:$0xff]
    %v2650 = vld [vmem:[%s1592 + $0xca] sm:$0xff]
    %v2651 = vld [vmem:[%s1592 + $0xda] sm:$0xff]
    %v2652 = vld [vmem:[%s1592 + $0xe2] sm:$0xff]
    %v2653 = vld [vmem:[%s1592 + $0xf2] sm:$0xff]
    %v2654 = vld [vmem:[%s1592 + $0xfa] sm:$0xff]
    %v2655 = vld [vmem:[%s1592 + $0x10a] sm:$0xff]
    %v2656 = vld [vmem:[%s1592 + $0x112] sm:$0xff]
    %v2657 = vld [vmem:[%s1592 + $0x122] sm:$0xff]
    %v2658 = vld [vmem:[%s1592 + $0x12a] sm:$0xff]
    %v2659 = vld [vmem:[%s1592 + $0x13a] sm:$0xff]
    %v2660 = vld [vmem:[%s1592 + $0x142] sm:$0xff]
    %v2661 = vld [vmem:[%s1592 + $0x152] sm:$0xff]
    %v2662 = vld [vmem:[%s1592 + $0x15a] sm:$0xff]
    %v2663 = vld [vmem:[%s1592 + $0x16a] sm:$0xff]
    %v2664 = vld [vmem:[%s1592 + $0x172] sm:$0xff]
    %v2665 = vld [vmem:[%s1592 + $0x1b2] sm:$0xff]
    %v2666 = vld [vmem:[%s1592 + $0x1ba] sm:$0xff]
    %v2667 = vld [vmem:[%s1592 + $0x1ca] sm:$0xff]
    %v2668 = vld [vmem:[%s1592 + $0x1d2] sm:$0xff]
    %v2669 = vld [vmem:[%s1592 + $0x1e2] sm:$0xff]
    %v2670 = vld [vmem:[%s1592 + $0x1ea] sm:$0xff]
    %v2671 = vld [vmem:[%s1592 + $0x1fa] sm:$0xff]
    %v2672 = vld [vmem:[%s1592 + $0x202] sm:$0xff]
    %v2673 = vld [vmem:[%s1592 + $0x212] sm:$0xff]
    %v2674 = vld [vmem:[%s1592 + $0x21a] sm:$0xff]
    %v2675 = vld [vmem:[%s1592 + $0x22a] sm:$0xff]
    %v2676 = vld [vmem:[%s1592 + $0x232] sm:$0xff]
    %v2677 = vld [vmem:[%s1592 + $0x242] sm:$0xff]
    %v2678 = vld [vmem:[%s1592 + $0x24a] sm:$0xff]
    %v2679 = vld [vmem:[%s1592 + $0x25a] sm:$0xff]
    %v2680 = vld [vmem:[%s1592 + $0x262] sm:$0xff]
    %v2681 = vld [vmem:[%s1592 + $0x272] sm:$0xff]
    %v2682 = vld [vmem:[%s1592 + $0x27a] sm:$0xff]
    %v2683 = vld [vmem:[%s1592 + $0x28a] sm:$0xff]
    %v2684 = vld [vmem:[%s1592 + $0x292] sm:$0xff]
    %v2685 = vld [vmem:[%s1592 + $0x2a2] sm:$0xff]
    %v2686 = vld [vmem:[%s1592 + $0x2aa] sm:$0xff]
    %v2687 = vld [vmem:[%s1592 + $0x2ba] sm:$0xff]
    %v2688 = vld [vmem:[%s1592 + $0x2c2] sm:$0xff]
    %v2689 = vld [vmem:[%s1592 + $0x2d2] sm:$0xff]
    %v2690 = vld [vmem:[%s1592 + $0x2da] sm:$0xff]
    %v2691 = vld [vmem:[%s1592 + $0x2ea] sm:$0xff]
    %v2692 = vld [vmem:[%s1592 + $0x2f2] sm:$0xff]
    %v2693 = vld [vmem:[%s1592 + $0x302] sm:$0xff]
    %v2694 = vld [vmem:[%s1592 + $0x30a] sm:$0xff]
    %v2695 = vld [vmem:[%s1592 + $0x31a] sm:$0xff]
    %v2696 = vld [vmem:[%s1592 + $0x322] sm:$0xff]
    %s2697 = scalar_lea.vmem %s1, 5
    %v2698 = vld [vmem:[%s2697] sm:$0x1]
    %2700 = vset.pattern.permute.xlu0 0
    %2701 = vperm.xlu0 %2700, %v2633
    %v2702 = vpop.permute.xlu0 %2701
    %2705 = vset.pattern.permute.xlu0 0
    %2706 = vperm.xlu0 %2705, %v2634
    %v2707 = vpop.permute.xlu0 %2706
    %2710 = vset.pattern.permute.xlu0 0
    %2711 = vperm.xlu0 %2710, %v2635
    %v2712 = vpop.permute.xlu0 %2711
    %2715 = vset.pattern.permute.xlu0 0
    %2716 = vperm.xlu0 %2715, %v2636
    %v2717 = vpop.permute.xlu0 %2716
    %2720 = vset.pattern.permute.xlu0 0
    %2721 = vperm.xlu0 %2720, %v2637
    %v2722 = vpop.permute.xlu0 %2721
    %2725 = vset.pattern.permute.xlu0 0
    %2726 = vperm.xlu0 %2725, %v2638
    %v2727 = vpop.permute.xlu0 %2726
    %2730 = vset.pattern.permute.xlu0 0
    %2731 = vperm.xlu0 %2730, %v2639
    %v2732 = vpop.permute.xlu0 %2731
    %2735 = vset.pattern.permute.xlu0 0
    %2736 = vperm.xlu0 %2735, %v2640
    %v2737 = vpop.permute.xlu0 %2736
    %2740 = vset.pattern.permute.xlu0 0
    %2741 = vperm.xlu0 %2740, %v2641
    %v2742 = vpop.permute.xlu0 %2741
    %2745 = vset.pattern.permute.xlu0 0
    %2746 = vperm.xlu0 %2745, %v2642
    %v2747 = vpop.permute.xlu0 %2746
    %2750 = vset.pattern.permute.xlu0 0
    %2751 = vperm.xlu0 %2750, %v2643
    %v2752 = vpop.permute.xlu0 %2751
    %2755 = vset.pattern.permute.xlu0 0
    %2756 = vperm.xlu0 %2755, %v2644
    %v2757 = vpop.permute.xlu0 %2756
    %2760 = vset.pattern.permute.xlu0 0
    %2761 = vperm.xlu0 %2760, %v2645
    %v2762 = vpop.permute.xlu0 %2761
    %2765 = vset.pattern.permute.xlu0 0
    %2766 = vperm.xlu0 %2765, %v2646
    %v2767 = vpop.permute.xlu0 %2766
    %2770 = vset.pattern.permute.xlu0 0
    %2771 = vperm.xlu0 %2770, %v2647
    %v2772 = vpop.permute.xlu0 %2771
    %2775 = vset.pattern.permute.xlu0 0
    %2776 = vperm.xlu0 %2775, %v2648
    %v2777 = vpop.permute.xlu0 %2776
    %2780 = vset.pattern.permute.xlu0 0
    %2781 = vperm.xlu0 %2780, %v2649
    %v2782 = vpop.permute.xlu0 %2781
    %2785 = vset.pattern.permute.xlu0 0
    %2786 = vperm.xlu0 %2785, %v2650
    %v2787 = vpop.permute.xlu0 %2786
    %2790 = vset.pattern.permute.xlu0 0
    %2791 = vperm.xlu0 %2790, %v2651
    %v2792 = vpop.permute.xlu0 %2791
    %2795 = vset.pattern.permute.xlu0 0
    %2796 = vperm.xlu0 %2795, %v2652
    %v2797 = vpop.permute.xlu0 %2796
    %2800 = vset.pattern.permute.xlu0 0
    %2801 = vperm.xlu0 %2800, %v2653
    %v2802 = vpop.permute.xlu0 %2801
    %2805 = vset.pattern.permute.xlu0 0
    %2806 = vperm.xlu0 %2805, %v2654
    %v2807 = vpop.permute.xlu0 %2806
    %2810 = vset.pattern.permute.xlu0 0
    %2811 = vperm.xlu0 %2810, %v2655
    %v2812 = vpop.permute.xlu0 %2811
    %2815 = vset.pattern.permute.xlu0 0
    %2816 = vperm.xlu0 %2815, %v2656
    %v2817 = vpop.permute.xlu0 %2816
    %2820 = vset.pattern.permute.xlu0 0
    %2821 = vperm.xlu0 %2820, %v2657
    %v2822 = vpop.permute.xlu0 %2821
    %2825 = vset.pattern.permute.xlu0 0
    %2826 = vperm.xlu0 %2825, %v2658
    %v2827 = vpop.permute.xlu0 %2826
    %2830 = vset.pattern.permute.xlu0 0
    %2831 = vperm.xlu0 %2830, %v2659
    %v2832 = vpop.permute.xlu0 %2831
    %2835 = vset.pattern.permute.xlu0 0
    %2836 = vperm.xlu0 %2835, %v2660
    %v2837 = vpop.permute.xlu0 %2836
    %2840 = vset.pattern.permute.xlu0 0
    %2841 = vperm.xlu0 %2840, %v2661
    %v2842 = vpop.permute.xlu0 %2841
    %2845 = vset.pattern.permute.xlu0 0
    %2846 = vperm.xlu0 %2845, %v2662
    %v2847 = vpop.permute.xlu0 %2846
    %2850 = vset.pattern.permute.xlu0 0
    %2851 = vperm.xlu0 %2850, %v2663
    %v2852 = vpop.permute.xlu0 %2851
    %2855 = vset.pattern.permute.xlu0 0
    %2856 = vperm.xlu0 %2855, %v2664
    %v2857 = vpop.permute.xlu0 %2856
    %2860 = vset.pattern.permute.xlu0 0
    %2861 = vperm.xlu0 %2860, %v2665
    %v2862 = vpop.permute.xlu0 %2861
    %2865 = vset.pattern.permute.xlu0 0
    %2866 = vperm.xlu0 %2865, %v2666
    %v2867 = vpop.permute.xlu0 %2866
    %2870 = vset.pattern.permute.xlu0 0
    %2871 = vperm.xlu0 %2870, %v2667
    %v2872 = vpop.permute.xlu0 %2871
    %2875 = vset.pattern.permute.xlu0 0
    %2876 = vperm.xlu0 %2875, %v2668
    %v2877 = vpop.permute.xlu0 %2876
    %2880 = vset.pattern.permute.xlu0 0
    %2881 = vperm.xlu0 %2880, %v2669
    %v2882 = vpop.permute.xlu0 %2881
    %2885 = vset.pattern.permute.xlu0 0
    %2886 = vperm.xlu0 %2885, %v2670
    %v2887 = vpop.permute.xlu0 %2886
    %2890 = vset.pattern.permute.xlu0 0
    %2891 = vperm.xlu0 %2890, %v2671
    %v2892 = vpop.permute.xlu0 %2891
    %2895 = vset.pattern.permute.xlu0 0
    %2896 = vperm.xlu0 %2895, %v2672
    %v2897 = vpop.permute.xlu0 %2896
    %2900 = vset.pattern.permute.xlu0 0
    %2901 = vperm.xlu0 %2900, %v2673
    %v2902 = vpop.permute.xlu0 %2901
    %2905 = vset.pattern.permute.xlu0 0
    %2906 = vperm.xlu0 %2905, %v2674
    %v2907 = vpop.permute.xlu0 %2906
    %2910 = vset.pattern.permute.xlu0 0
    %2911 = vperm.xlu0 %2910, %v2675
    %v2912 = vpop.permute.xlu0 %2911
    %2915 = vset.pattern.permute.xlu0 0
    %2916 = vperm.xlu0 %2915, %v2676
    %v2917 = vpop.permute.xlu0 %2916
    %2920 = vset.pattern.permute.xlu0 0
    %2921 = vperm.xlu0 %2920, %v2677
    %v2922 = vpop.permute.xlu0 %2921
    %2925 = vset.pattern.permute.xlu0 0
    %2926 = vperm.xlu0 %2925, %v2678
    %v2927 = vpop.permute.xlu0 %2926
    %2930 = vset.pattern.permute.xlu0 0
    %2931 = vperm.xlu0 %2930, %v2679
    %v2932 = vpop.permute.xlu0 %2931
    %2935 = vset.pattern.permute.xlu0 0
    %2936 = vperm.xlu0 %2935, %v2680
    %v2937 = vpop.permute.xlu0 %2936
    %2940 = vset.pattern.permute.xlu0 0
    %2941 = vperm.xlu0 %2940, %v2681
    %v2942 = vpop.permute.xlu0 %2941
    %2945 = vset.pattern.permute.xlu0 0
    %2946 = vperm.xlu0 %2945, %v2682
    %v2947 = vpop.permute.xlu0 %2946
    %2950 = vset.pattern.permute.xlu0 0
    %2951 = vperm.xlu0 %2950, %v2683
    %v2952 = vpop.permute.xlu0 %2951
    %2955 = vset.pattern.permute.xlu0 0
    %2956 = vperm.xlu0 %2955, %v2684
    %v2957 = vpop.permute.xlu0 %2956
    %2960 = vset.pattern.permute.xlu0 0
    %2961 = vperm.xlu0 %2960, %v2685
    %v2962 = vpop.permute.xlu0 %2961
    %2965 = vset.pattern.permute.xlu0 0
    %2966 = vperm.xlu0 %2965, %v2686
    %v2967 = vpop.permute.xlu0 %2966
    %2970 = vset.pattern.permute.xlu0 0
    %2971 = vperm.xlu0 %2970, %v2687
    %v2972 = vpop.permute.xlu0 %2971
    %2975 = vset.pattern.permute.xlu0 0
    %2976 = vperm.xlu0 %2975, %v2688
    %v2977 = vpop.permute.xlu0 %2976
    %2980 = vset.pattern.permute.xlu0 0
    %2981 = vperm.xlu0 %2980, %v2689
    %v2982 = vpop.permute.xlu0 %2981
    %2985 = vset.pattern.permute.xlu0 0
    %2986 = vperm.xlu0 %2985, %v2690
    %v2987 = vpop.permute.xlu0 %2986
    %2990 = vset.pattern.permute.xlu0 0
    %2991 = vperm.xlu0 %2990, %v2691
    %v2992 = vpop.permute.xlu0 %2991
    %2995 = vset.pattern.permute.xlu0 0
    %2996 = vperm.xlu0 %2995, %v2692
    %v2997 = vpop.permute.xlu0 %2996
    %3000 = vset.pattern.permute.xlu0 0
    %3001 = vperm.xlu0 %3000, %v2693
    %v3002 = vpop.permute.xlu0 %3001
    %3005 = vset.pattern.permute.xlu0 0
    %3006 = vperm.xlu0 %3005, %v2694
    %v3007 = vpop.permute.xlu0 %3006
    %3010 = vset.pattern.permute.xlu0 0
    %3011 = vperm.xlu0 %3010, %v2695
    %v3012 = vpop.permute.xlu0 %3011
    %3015 = vset.pattern.permute.xlu0 0
    %3016 = vperm.xlu0 %3015, %v2696
    %v3017 = vpop.permute.xlu0 %3016
    %v3020 = vlaneseq
    %v3021 = vshrl.u32 %v3020, 7
    %v3022 = vsub.s32 0, %v3021
    %v3023 = vrot.slane %v2698, %v3022
    %v3025 = vmul.f32 %v2702, %v3023
    %v3026 = vmul.f32 %v2707, %v3023
    %v3027 = vmul.f32 %v2712, %v3023
    %v3028 = vmul.f32 %v2717, %v3023
    %v3029 = vmul.f32 %v2722, %v3023
    %v3030 = vmul.f32 %v2727, %v3023
    %v3031 = vmul.f32 %v2732, %v3023
    %v3032 = vmul.f32 %v2737, %v3023
    %v3033 = vmul.f32 %v2742, %v3023
    %v3034 = vmul.f32 %v2747, %v3023
    %v3035 = vmul.f32 %v2752, %v3023
    %v3036 = vmul.f32 %v2757, %v3023
    %v3037 = vmul.f32 %v2762, %v3023
    %v3038 = vmul.f32 %v2767, %v3023
    %v3039 = vmul.f32 %v2772, %v3023
    %v3040 = vmul.f32 %v2777, %v3023
    %v3041 = vmul.f32 %v2782, %v3023
    %v3042 = vmul.f32 %v2787, %v3023
    %v3043 = vmul.f32 %v2792, %v3023
    %v3044 = vmul.f32 %v2797, %v3023
    %v3045 = vmul.f32 %v2802, %v3023
    %v3046 = vmul.f32 %v2807, %v3023
    %v3047 = vmul.f32 %v2812, %v3023
    %v3048 = vmul.f32 %v2817, %v3023
    %v3049 = vmul.f32 %v2822, %v3023
    %v3050 = vmul.f32 %v2827, %v3023
    %v3051 = vmul.f32 %v2832, %v3023
    %v3052 = vmul.f32 %v2837, %v3023
    %v3053 = vmul.f32 %v2842, %v3023
    %v3054 = vmul.f32 %v2847, %v3023
    %v3055 = vmul.f32 %v2852, %v3023
    %v3056 = vmul.f32 %v2857, %v3023
    %v3057 = vmul.f32 %v2862, %v3023
    %v3058 = vmul.f32 %v2867, %v3023
    %v3059 = vmul.f32 %v2872, %v3023
    %v3060 = vmul.f32 %v2877, %v3023
    %v3061 = vmul.f32 %v2882, %v3023
    %v3062 = vmul.f32 %v2887, %v3023
    %v3063 = vmul.f32 %v2892, %v3023
    %v3064 = vmul.f32 %v2897, %v3023
    %v3065 = vmul.f32 %v2902, %v3023
    %v3066 = vmul.f32 %v2907, %v3023
    %v3067 = vmul.f32 %v2912, %v3023
    %v3068 = vmul.f32 %v2917, %v3023
    %v3069 = vmul.f32 %v2922, %v3023
    %v3070 = vmul.f32 %v2927, %v3023
    %v3071 = vmul.f32 %v2932, %v3023
    %v3072 = vmul.f32 %v2937, %v3023
    %v3073 = vmul.f32 %v2942, %v3023
    %v3074 = vmul.f32 %v2947, %v3023
    %v3075 = vmul.f32 %v2952, %v3023
    %v3076 = vmul.f32 %v2957, %v3023
    %v3077 = vmul.f32 %v2962, %v3023
    %v3078 = vmul.f32 %v2967, %v3023
    %v3079 = vmul.f32 %v2972, %v3023
    %v3080 = vmul.f32 %v2977, %v3023
    %v3081 = vmul.f32 %v2982, %v3023
    %v3082 = vmul.f32 %v2987, %v3023
    %v3083 = vmul.f32 %v2992, %v3023
    %v3084 = vmul.f32 %v2997, %v3023
    %v3085 = vmul.f32 %v3002, %v3023
    %v3086 = vmul.f32 %v3007, %v3023
    %v3087 = vmul.f32 %v3012, %v3023
    %v3088 = vmul.f32 %v3017, %v3023
    %v3089 = vadd.f32 %v2569, %v3025
    %v3090 = vadd.f32 %v2570, %v3026
    %v3091 = vadd.f32 %v2571, %v3027
    %v3092 = vadd.f32 %v2572, %v3028
    %v3093 = vadd.f32 %v2573, %v3029
    %v3094 = vadd.f32 %v2574, %v3030
    %v3095 = vadd.f32 %v2575, %v3031
    %v3096 = vadd.f32 %v2576, %v3032
    %v3097 = vadd.f32 %v2577, %v3033
    %v3098 = vadd.f32 %v2578, %v3034
    %v3099 = vadd.f32 %v2579, %v3035
    %v3100 = vadd.f32 %v2580, %v3036
    %v3101 = vadd.f32 %v2581, %v3037
    %v3102 = vadd.f32 %v2582, %v3038
    %v3103 = vadd.f32 %v2583, %v3039
    %v3104 = vadd.f32 %v2584, %v3040
    %v3105 = vadd.f32 %v2585, %v3041
    %v3106 = vadd.f32 %v2586, %v3042
    %v3107 = vadd.f32 %v2587, %v3043
    %v3108 = vadd.f32 %v2588, %v3044
    %v3109 = vadd.f32 %v2589, %v3045
    %v3110 = vadd.f32 %v2590, %v3046
    %v3111 = vadd.f32 %v2591, %v3047
    %v3112 = vadd.f32 %v2592, %v3048
    %v3113 = vadd.f32 %v2593, %v3049
    %v3114 = vadd.f32 %v2594, %v3050
    %v3115 = vadd.f32 %v2595, %v3051
    %v3116 = vadd.f32 %v2596, %v3052
    %v3117 = vadd.f32 %v2597, %v3053
    %v3118 = vadd.f32 %v2598, %v3054
    %v3119 = vadd.f32 %v2599, %v3055
    %v3120 = vadd.f32 %v2600, %v3056
    %v3121 = vadd.f32 %v2601, %v3057
    %v3122 = vadd.f32 %v2602, %v3058
    %v3123 = vadd.f32 %v2603, %v3059
    %v3124 = vadd.f32 %v2604, %v3060
    %v3125 = vadd.f32 %v2605, %v3061
    %v3126 = vadd.f32 %v2606, %v3062
    %v3127 = vadd.f32 %v2607, %v3063
    %v3128 = vadd.f32 %v2608, %v3064
    %v3129 = vadd.f32 %v2609, %v3065
    %v3130 = vadd.f32 %v2610, %v3066
    %v3131 = vadd.f32 %v2611, %v3067
    %v3132 = vadd.f32 %v2612, %v3068
    %v3133 = vadd.f32 %v2613, %v3069
    %v3134 = vadd.f32 %v2614, %v3070
    %v3135 = vadd.f32 %v2615, %v3071
    %v3136 = vadd.f32 %v2616, %v3072
    %v3137 = vadd.f32 %v2617, %v3073
    %v3138 = vadd.f32 %v2618, %v3074
    %v3139 = vadd.f32 %v2619, %v3075
    %v3140 = vadd.f32 %v2620, %v3076
    %v3141 = vadd.f32 %v2621, %v3077
    %v3142 = vadd.f32 %v2622, %v3078
    %v3143 = vadd.f32 %v2623, %v3079
    %v3144 = vadd.f32 %v2624, %v3080
    %v3145 = vadd.f32 %v2625, %v3081
    %v3146 = vadd.f32 %v2626, %v3082
    %v3147 = vadd.f32 %v2627, %v3083
    %v3148 = vadd.f32 %v2628, %v3084
    %v3149 = vadd.f32 %v2629, %v3085
    %v3150 = vadd.f32 %v2630, %v3086
    %v3151 = vadd.f32 %v2631, %v3087
    %v3152 = vadd.f32 %v2632, %v3088
    %s3153 = scalar_lea.vmem %s0, 48
    %v3154 = vld [vmem:[%s3153] sm:$0xff]
    %v3155 = vld [vmem:[%s3153 + $0x8] sm:$0xff]
    %v3156 = vld [vmem:[%s3153 + $0x18] sm:$0xff]
    %v3157 = vld [vmem:[%s3153 + $0x20] sm:$0xff]
    %v3158 = vld [vmem:[%s3153 + $0x30] sm:$0xff]
    %v3159 = vld [vmem:[%s3153 + $0x38] sm:$0xff]
    %v3160 = vld [vmem:[%s3153 + $0x48] sm:$0xff]
    %v3161 = vld [vmem:[%s3153 + $0x50] sm:$0xff]
    %v3162 = vld [vmem:[%s3153 + $0x60] sm:$0xff]
    %v3163 = vld [vmem:[%s3153 + $0x68] sm:$0xff]
    %v3164 = vld [vmem:[%s3153 + $0x78] sm:$0xff]
    %v3165 = vld [vmem:[%s3153 + $0x80] sm:$0xff]
    %v3166 = vld [vmem:[%s3153 + $0x90] sm:$0xff]
    %v3167 = vld [vmem:[%s3153 + $0x98] sm:$0xff]
    %v3168 = vld [vmem:[%s3153 + $0xa8] sm:$0xff]
    %v3169 = vld [vmem:[%s3153 + $0xb0] sm:$0xff]
    %v3170 = vld [vmem:[%s3153 + $0xc0] sm:$0xff]
    %v3171 = vld [vmem:[%s3153 + $0xc8] sm:$0xff]
    %v3172 = vld [vmem:[%s3153 + $0xd8] sm:$0xff]
    %v3173 = vld [vmem:[%s3153 + $0xe0] sm:$0xff]
    %v3174 = vld [vmem:[%s3153 + $0xf0] sm:$0xff]
    %v3175 = vld [vmem:[%s3153 + $0xf8] sm:$0xff]
    %v3176 = vld [vmem:[%s3153 + $0x108] sm:$0xff]
    %v3177 = vld [vmem:[%s3153 + $0x110] sm:$0xff]
    %v3178 = vld [vmem:[%s3153 + $0x120] sm:$0xff]
    %v3179 = vld [vmem:[%s3153 + $0x128] sm:$0xff]
    %v3180 = vld [vmem:[%s3153 + $0x138] sm:$0xff]
    %v3181 = vld [vmem:[%s3153 + $0x140] sm:$0xff]
    %v3182 = vld [vmem:[%s3153 + $0x150] sm:$0xff]
    %v3183 = vld [vmem:[%s3153 + $0x158] sm:$0xff]
    %v3184 = vld [vmem:[%s3153 + $0x168] sm:$0xff]
    %v3185 = vld [vmem:[%s3153 + $0x170] sm:$0xff]
    %v3186 = vld [vmem:[%s3153 + $0x1b0] sm:$0xff]
    %v3187 = vld [vmem:[%s3153 + $0x1b8] sm:$0xff]
    %v3188 = vld [vmem:[%s3153 + $0x1c8] sm:$0xff]
    %v3189 = vld [vmem:[%s3153 + $0x1d0] sm:$0xff]
    %v3190 = vld [vmem:[%s3153 + $0x1e0] sm:$0xff]
    %v3191 = vld [vmem:[%s3153 + $0x1e8] sm:$0xff]
    %v3192 = vld [vmem:[%s3153 + $0x1f8] sm:$0xff]
    %v3193 = vld [vmem:[%s3153 + $0x200] sm:$0xff]
    %v3194 = vld [vmem:[%s3153 + $0x210] sm:$0xff]
    %v3195 = vld [vmem:[%s3153 + $0x218] sm:$0xff]
    %v3196 = vld [vmem:[%s3153 + $0x228] sm:$0xff]
    %v3197 = vld [vmem:[%s3153 + $0x230] sm:$0xff]
    %v3198 = vld [vmem:[%s3153 + $0x240] sm:$0xff]
    %v3199 = vld [vmem:[%s3153 + $0x248] sm:$0xff]
    %v3200 = vld [vmem:[%s3153 + $0x258] sm:$0xff]
    %v3201 = vld [vmem:[%s3153 + $0x260] sm:$0xff]
    %v3202 = vld [vmem:[%s3153 + $0x270] sm:$0xff]
    %v3203 = vld [vmem:[%s3153 + $0x278] sm:$0xff]
    %v3204 = vld [vmem:[%s3153 + $0x288] sm:$0xff]
    %v3205 = vld [vmem:[%s3153 + $0x290] sm:$0xff]
    %v3206 = vld [vmem:[%s3153 + $0x2a0] sm:$0xff]
    %v3207 = vld [vmem:[%s3153 + $0x2a8] sm:$0xff]
    %v3208 = vld [vmem:[%s3153 + $0x2b8] sm:$0xff]
    %v3209 = vld [vmem:[%s3153 + $0x2c0] sm:$0xff]
    %v3210 = vld [vmem:[%s3153 + $0x2d0] sm:$0xff]
    %v3211 = vld [vmem:[%s3153 + $0x2d8] sm:$0xff]
    %v3212 = vld [vmem:[%s3153 + $0x2e8] sm:$0xff]
    %v3213 = vld [vmem:[%s3153 + $0x2f0] sm:$0xff]
    %v3214 = vld [vmem:[%s3153 + $0x300] sm:$0xff]
    %v3215 = vld [vmem:[%s3153 + $0x308] sm:$0xff]
    %v3216 = vld [vmem:[%s3153 + $0x318] sm:$0xff]
    %v3217 = vld [vmem:[%s3153 + $0x320] sm:$0xff]
    %s3218 = scalar_lea.vmem %s1, 6
    %v3219 = vld [vmem:[%s3218] sm:$0x1]
    %3221 = vset.pattern.permute.xlu0 0
    %3222 = vperm.xlu0 %3221, %v3154
    %v3223 = vpop.permute.xlu0 %3222
    %3226 = vset.pattern.permute.xlu0 0
    %3227 = vperm.xlu0 %3226, %v3155
    %v3228 = vpop.permute.xlu0 %3227
    %3231 = vset.pattern.permute.xlu0 0
    %3232 = vperm.xlu0 %3231, %v3156
    %v3233 = vpop.permute.xlu0 %3232
    %3236 = vset.pattern.permute.xlu0 0
    %3237 = vperm.xlu0 %3236, %v3157
    %v3238 = vpop.permute.xlu0 %3237
    %3241 = vset.pattern.permute.xlu0 0
    %3242 = vperm.xlu0 %3241, %v3158
    %v3243 = vpop.permute.xlu0 %3242
    %3246 = vset.pattern.permute.xlu0 0
    %3247 = vperm.xlu0 %3246, %v3159
    %v3248 = vpop.permute.xlu0 %3247
    %3251 = vset.pattern.permute.xlu0 0
    %3252 = vperm.xlu0 %3251, %v3160
    %v3253 = vpop.permute.xlu0 %3252
    %3256 = vset.pattern.permute.xlu0 0
    %3257 = vperm.xlu0 %3256, %v3161
    %v3258 = vpop.permute.xlu0 %3257
    %3261 = vset.pattern.permute.xlu0 0
    %3262 = vperm.xlu0 %3261, %v3162
    %v3263 = vpop.permute.xlu0 %3262
    %3266 = vset.pattern.permute.xlu0 0
    %3267 = vperm.xlu0 %3266, %v3163
    %v3268 = vpop.permute.xlu0 %3267
    %3271 = vset.pattern.permute.xlu0 0
    %3272 = vperm.xlu0 %3271, %v3164
    %v3273 = vpop.permute.xlu0 %3272
    %3276 = vset.pattern.permute.xlu0 0
    %3277 = vperm.xlu0 %3276, %v3165
    %v3278 = vpop.permute.xlu0 %3277
    %3281 = vset.pattern.permute.xlu0 0
    %3282 = vperm.xlu0 %3281, %v3166
    %v3283 = vpop.permute.xlu0 %3282
    %3286 = vset.pattern.permute.xlu0 0
    %3287 = vperm.xlu0 %3286, %v3167
    %v3288 = vpop.permute.xlu0 %3287
    %3291 = vset.pattern.permute.xlu0 0
    %3292 = vperm.xlu0 %3291, %v3168
    %v3293 = vpop.permute.xlu0 %3292
    %3296 = vset.pattern.permute.xlu0 0
    %3297 = vperm.xlu0 %3296, %v3169
    %v3298 = vpop.permute.xlu0 %3297
    %3301 = vset.pattern.permute.xlu0 0
    %3302 = vperm.xlu0 %3301, %v3170
    %v3303 = vpop.permute.xlu0 %3302
    %3306 = vset.pattern.permute.xlu0 0
    %3307 = vperm.xlu0 %3306, %v3171
    %v3308 = vpop.permute.xlu0 %3307
    %3311 = vset.pattern.permute.xlu0 0
    %3312 = vperm.xlu0 %3311, %v3172
    %v3313 = vpop.permute.xlu0 %3312
    %3316 = vset.pattern.permute.xlu0 0
    %3317 = vperm.xlu0 %3316, %v3173
    %v3318 = vpop.permute.xlu0 %3317
    %3321 = vset.pattern.permute.xlu0 0
    %3322 = vperm.xlu0 %3321, %v3174
    %v3323 = vpop.permute.xlu0 %3322
    %3326 = vset.pattern.permute.xlu0 0
    %3327 = vperm.xlu0 %3326, %v3175
    %v3328 = vpop.permute.xlu0 %3327
    %3331 = vset.pattern.permute.xlu0 0
    %3332 = vperm.xlu0 %3331, %v3176
    %v3333 = vpop.permute.xlu0 %3332
    %3336 = vset.pattern.permute.xlu0 0
    %3337 = vperm.xlu0 %3336, %v3177
    %v3338 = vpop.permute.xlu0 %3337
    %3341 = vset.pattern.permute.xlu0 0
    %3342 = vperm.xlu0 %3341, %v3178
    %v3343 = vpop.permute.xlu0 %3342
    %3346 = vset.pattern.permute.xlu0 0
    %3347 = vperm.xlu0 %3346, %v3179
    %v3348 = vpop.permute.xlu0 %3347
    %3351 = vset.pattern.permute.xlu0 0
    %3352 = vperm.xlu0 %3351, %v3180
    %v3353 = vpop.permute.xlu0 %3352
    %3356 = vset.pattern.permute.xlu0 0
    %3357 = vperm.xlu0 %3356, %v3181
    %v3358 = vpop.permute.xlu0 %3357
    %3361 = vset.pattern.permute.xlu0 0
    %3362 = vperm.xlu0 %3361, %v3182
    %v3363 = vpop.permute.xlu0 %3362
    %3366 = vset.pattern.permute.xlu0 0
    %3367 = vperm.xlu0 %3366, %v3183
    %v3368 = vpop.permute.xlu0 %3367
    %3371 = vset.pattern.permute.xlu0 0
    %3372 = vperm.xlu0 %3371, %v3184
    %v3373 = vpop.permute.xlu0 %3372
    %3376 = vset.pattern.permute.xlu0 0
    %3377 = vperm.xlu0 %3376, %v3185
    %v3378 = vpop.permute.xlu0 %3377
    %3381 = vset.pattern.permute.xlu0 0
    %3382 = vperm.xlu0 %3381, %v3186
    %v3383 = vpop.permute.xlu0 %3382
    %3386 = vset.pattern.permute.xlu0 0
    %3387 = vperm.xlu0 %3386, %v3187
    %v3388 = vpop.permute.xlu0 %3387
    %3391 = vset.pattern.permute.xlu0 0
    %3392 = vperm.xlu0 %3391, %v3188
    %v3393 = vpop.permute.xlu0 %3392
    %3396 = vset.pattern.permute.xlu0 0
    %3397 = vperm.xlu0 %3396, %v3189
    %v3398 = vpop.permute.xlu0 %3397
    %3401 = vset.pattern.permute.xlu0 0
    %3402 = vperm.xlu0 %3401, %v3190
    %v3403 = vpop.permute.xlu0 %3402
    %3406 = vset.pattern.permute.xlu0 0
    %3407 = vperm.xlu0 %3406, %v3191
    %v3408 = vpop.permute.xlu0 %3407
    %3411 = vset.pattern.permute.xlu0 0
    %3412 = vperm.xlu0 %3411, %v3192
    %v3413 = vpop.permute.xlu0 %3412
    %3416 = vset.pattern.permute.xlu0 0
    %3417 = vperm.xlu0 %3416, %v3193
    %v3418 = vpop.permute.xlu0 %3417
    %3421 = vset.pattern.permute.xlu0 0
    %3422 = vperm.xlu0 %3421, %v3194
    %v3423 = vpop.permute.xlu0 %3422
    %3426 = vset.pattern.permute.xlu0 0
    %3427 = vperm.xlu0 %3426, %v3195
    %v3428 = vpop.permute.xlu0 %3427
    %3431 = vset.pattern.permute.xlu0 0
    %3432 = vperm.xlu0 %3431, %v3196
    %v3433 = vpop.permute.xlu0 %3432
    %3436 = vset.pattern.permute.xlu0 0
    %3437 = vperm.xlu0 %3436, %v3197
    %v3438 = vpop.permute.xlu0 %3437
    %3441 = vset.pattern.permute.xlu0 0
    %3442 = vperm.xlu0 %3441, %v3198
    %v3443 = vpop.permute.xlu0 %3442
    %3446 = vset.pattern.permute.xlu0 0
    %3447 = vperm.xlu0 %3446, %v3199
    %v3448 = vpop.permute.xlu0 %3447
    %3451 = vset.pattern.permute.xlu0 0
    %3452 = vperm.xlu0 %3451, %v3200
    %v3453 = vpop.permute.xlu0 %3452
    %3456 = vset.pattern.permute.xlu0 0
    %3457 = vperm.xlu0 %3456, %v3201
    %v3458 = vpop.permute.xlu0 %3457
    %3461 = vset.pattern.permute.xlu0 0
    %3462 = vperm.xlu0 %3461, %v3202
    %v3463 = vpop.permute.xlu0 %3462
    %3466 = vset.pattern.permute.xlu0 0
    %3467 = vperm.xlu0 %3466, %v3203
    %v3468 = vpop.permute.xlu0 %3467
    %3471 = vset.pattern.permute.xlu0 0
    %3472 = vperm.xlu0 %3471, %v3204
    %v3473 = vpop.permute.xlu0 %3472
    %3476 = vset.pattern.permute.xlu0 0
    %3477 = vperm.xlu0 %3476, %v3205
    %v3478 = vpop.permute.xlu0 %3477
    %3481 = vset.pattern.permute.xlu0 0
    %3482 = vperm.xlu0 %3481, %v3206
    %v3483 = vpop.permute.xlu0 %3482
    %3486 = vset.pattern.permute.xlu0 0
    %3487 = vperm.xlu0 %3486, %v3207
    %v3488 = vpop.permute.xlu0 %3487
    %3491 = vset.pattern.permute.xlu0 0
    %3492 = vperm.xlu0 %3491, %v3208
    %v3493 = vpop.permute.xlu0 %3492
    %3496 = vset.pattern.permute.xlu0 0
    %3497 = vperm.xlu0 %3496, %v3209
    %v3498 = vpop.permute.xlu0 %3497
    %3501 = vset.pattern.permute.xlu0 0
    %3502 = vperm.xlu0 %3501, %v3210
    %v3503 = vpop.permute.xlu0 %3502
    %3506 = vset.pattern.permute.xlu0 0
    %3507 = vperm.xlu0 %3506, %v3211
    %v3508 = vpop.permute.xlu0 %3507
    %3511 = vset.pattern.permute.xlu0 0
    %3512 = vperm.xlu0 %3511, %v3212
    %v3513 = vpop.permute.xlu0 %3512
    %3516 = vset.pattern.permute.xlu0 0
    %3517 = vperm.xlu0 %3516, %v3213
    %v3518 = vpop.permute.xlu0 %3517
    %3521 = vset.pattern.permute.xlu0 0
    %3522 = vperm.xlu0 %3521, %v3214
    %v3523 = vpop.permute.xlu0 %3522
    %3526 = vset.pattern.permute.xlu0 0
    %3527 = vperm.xlu0 %3526, %v3215
    %v3528 = vpop.permute.xlu0 %3527
    %3531 = vset.pattern.permute.xlu0 0
    %3532 = vperm.xlu0 %3531, %v3216
    %v3533 = vpop.permute.xlu0 %3532
    %3536 = vset.pattern.permute.xlu0 0
    %3537 = vperm.xlu0 %3536, %v3217
    %v3538 = vpop.permute.xlu0 %3537
    %v3541 = vlaneseq
    %v3542 = vshrl.u32 %v3541, 7
    %v3543 = vsub.s32 0, %v3542
    %v3544 = vrot.slane %v3219, %v3543
    %v3546 = vmul.f32 %v3223, %v3544
    %v3547 = vmul.f32 %v3228, %v3544
    %v3548 = vmul.f32 %v3233, %v3544
    %v3549 = vmul.f32 %v3238, %v3544
    %v3550 = vmul.f32 %v3243, %v3544
    %v3551 = vmul.f32 %v3248, %v3544
    %v3552 = vmul.f32 %v3253, %v3544
    %v3553 = vmul.f32 %v3258, %v3544
    %v3554 = vmul.f32 %v3263, %v3544
    %v3555 = vmul.f32 %v3268, %v3544
    %v3556 = vmul.f32 %v3273, %v3544
    %v3557 = vmul.f32 %v3278, %v3544
    %v3558 = vmul.f32 %v3283, %v3544
    %v3559 = vmul.f32 %v3288, %v3544
    %v3560 = vmul.f32 %v3293, %v3544
    %v3561 = vmul.f32 %v3298, %v3544
    %v3562 = vmul.f32 %v3303, %v3544
    %v3563 = vmul.f32 %v3308, %v3544
    %v3564 = vmul.f32 %v3313, %v3544
    %v3565 = vmul.f32 %v3318, %v3544
    %v3566 = vmul.f32 %v3323, %v3544
    %v3567 = vmul.f32 %v3328, %v3544
    %v3568 = vmul.f32 %v3333, %v3544
    %v3569 = vmul.f32 %v3338, %v3544
    %v3570 = vmul.f32 %v3343, %v3544
    %v3571 = vmul.f32 %v3348, %v3544
    %v3572 = vmul.f32 %v3353, %v3544
    %v3573 = vmul.f32 %v3358, %v3544
    %v3574 = vmul.f32 %v3363, %v3544
    %v3575 = vmul.f32 %v3368, %v3544
    %v3576 = vmul.f32 %v3373, %v3544
    %v3577 = vmul.f32 %v3378, %v3544
    %v3578 = vmul.f32 %v3383, %v3544
    %v3579 = vmul.f32 %v3388, %v3544
    %v3580 = vmul.f32 %v3393, %v3544
    %v3581 = vmul.f32 %v3398, %v3544
    %v3582 = vmul.f32 %v3403, %v3544
    %v3583 = vmul.f32 %v3408, %v3544
    %v3584 = vmul.f32 %v3413, %v3544
    %v3585 = vmul.f32 %v3418, %v3544
    %v3586 = vmul.f32 %v3423, %v3544
    %v3587 = vmul.f32 %v3428, %v3544
    %v3588 = vmul.f32 %v3433, %v3544
    %v3589 = vmul.f32 %v3438, %v3544
    %v3590 = vmul.f32 %v3443, %v3544
    %v3591 = vmul.f32 %v3448, %v3544
    %v3592 = vmul.f32 %v3453, %v3544
    %v3593 = vmul.f32 %v3458, %v3544
    %v3594 = vmul.f32 %v3463, %v3544
    %v3595 = vmul.f32 %v3468, %v3544
    %v3596 = vmul.f32 %v3473, %v3544
    %v3597 = vmul.f32 %v3478, %v3544
    %v3598 = vmul.f32 %v3483, %v3544
    %v3599 = vmul.f32 %v3488, %v3544
    %v3600 = vmul.f32 %v3493, %v3544
    %v3601 = vmul.f32 %v3498, %v3544
    %v3602 = vmul.f32 %v3503, %v3544
    %v3603 = vmul.f32 %v3508, %v3544
    %v3604 = vmul.f32 %v3513, %v3544
    %v3605 = vmul.f32 %v3518, %v3544
    %v3606 = vmul.f32 %v3523, %v3544
    %v3607 = vmul.f32 %v3528, %v3544
    %v3608 = vmul.f32 %v3533, %v3544
    %v3609 = vmul.f32 %v3538, %v3544
    %v3610 = vadd.f32 %v3089, %v3546
    %v3611 = vadd.f32 %v3090, %v3547
    %v3612 = vadd.f32 %v3091, %v3548
    %v3613 = vadd.f32 %v3092, %v3549
    %v3614 = vadd.f32 %v3093, %v3550
    %v3615 = vadd.f32 %v3094, %v3551
    %v3616 = vadd.f32 %v3095, %v3552
    %v3617 = vadd.f32 %v3096, %v3553
    %v3618 = vadd.f32 %v3097, %v3554
    %v3619 = vadd.f32 %v3098, %v3555
    %v3620 = vadd.f32 %v3099, %v3556
    %v3621 = vadd.f32 %v3100, %v3557
    %v3622 = vadd.f32 %v3101, %v3558
    %v3623 = vadd.f32 %v3102, %v3559
    %v3624 = vadd.f32 %v3103, %v3560
    %v3625 = vadd.f32 %v3104, %v3561
    %v3626 = vadd.f32 %v3105, %v3562
    %v3627 = vadd.f32 %v3106, %v3563
    %v3628 = vadd.f32 %v3107, %v3564
    %v3629 = vadd.f32 %v3108, %v3565
    %v3630 = vadd.f32 %v3109, %v3566
    %v3631 = vadd.f32 %v3110, %v3567
    %v3632 = vadd.f32 %v3111, %v3568
    %v3633 = vadd.f32 %v3112, %v3569
    %v3634 = vadd.f32 %v3113, %v3570
    %v3635 = vadd.f32 %v3114, %v3571
    %v3636 = vadd.f32 %v3115, %v3572
    %v3637 = vadd.f32 %v3116, %v3573
    %v3638 = vadd.f32 %v3117, %v3574
    %v3639 = vadd.f32 %v3118, %v3575
    %v3640 = vadd.f32 %v3119, %v3576
    %v3641 = vadd.f32 %v3120, %v3577
    %v3642 = vadd.f32 %v3121, %v3578
    %v3643 = vadd.f32 %v3122, %v3579
    %v3644 = vadd.f32 %v3123, %v3580
    %v3645 = vadd.f32 %v3124, %v3581
    %v3646 = vadd.f32 %v3125, %v3582
    %v3647 = vadd.f32 %v3126, %v3583
    %v3648 = vadd.f32 %v3127, %v3584
    %v3649 = vadd.f32 %v3128, %v3585
    %v3650 = vadd.f32 %v3129, %v3586
    %v3651 = vadd.f32 %v3130, %v3587
    %v3652 = vadd.f32 %v3131, %v3588
    %v3653 = vadd.f32 %v3132, %v3589
    %v3654 = vadd.f32 %v3133, %v3590
    %v3655 = vadd.f32 %v3134, %v3591
    %v3656 = vadd.f32 %v3135, %v3592
    %v3657 = vadd.f32 %v3136, %v3593
    %v3658 = vadd.f32 %v3137, %v3594
    %v3659 = vadd.f32 %v3138, %v3595
    %v3660 = vadd.f32 %v3139, %v3596
    %v3661 = vadd.f32 %v3140, %v3597
    %v3662 = vadd.f32 %v3141, %v3598
    %v3663 = vadd.f32 %v3142, %v3599
    %v3664 = vadd.f32 %v3143, %v3600
    %v3665 = vadd.f32 %v3144, %v3601
    %v3666 = vadd.f32 %v3145, %v3602
    %v3667 = vadd.f32 %v3146, %v3603
    %v3668 = vadd.f32 %v3147, %v3604
    %v3669 = vadd.f32 %v3148, %v3605
    %v3670 = vadd.f32 %v3149, %v3606
    %v3671 = vadd.f32 %v3150, %v3607
    %v3672 = vadd.f32 %v3151, %v3608
    %v3673 = vadd.f32 %v3152, %v3609
    %v3674 = vld [vmem:[%s3153 + $0x1] sm:$0xff]
    %v3675 = vld [vmem:[%s3153 + $0x9] sm:$0xff]
    %v3676 = vld [vmem:[%s3153 + $0x19] sm:$0xff]
    %v3677 = vld [vmem:[%s3153 + $0x21] sm:$0xff]
    %v3678 = vld [vmem:[%s3153 + $0x31] sm:$0xff]
    %v3679 = vld [vmem:[%s3153 + $0x39] sm:$0xff]
    %v3680 = vld [vmem:[%s3153 + $0x49] sm:$0xff]
    %v3681 = vld [vmem:[%s3153 + $0x51] sm:$0xff]
    %v3682 = vld [vmem:[%s3153 + $0x61] sm:$0xff]
    %v3683 = vld [vmem:[%s3153 + $0x69] sm:$0xff]
    %v3684 = vld [vmem:[%s3153 + $0x79] sm:$0xff]
    %v3685 = vld [vmem:[%s3153 + $0x81] sm:$0xff]
    %v3686 = vld [vmem:[%s3153 + $0x91] sm:$0xff]
    %v3687 = vld [vmem:[%s3153 + $0x99] sm:$0xff]
    %v3688 = vld [vmem:[%s3153 + $0xa9] sm:$0xff]
    %v3689 = vld [vmem:[%s3153 + $0xb1] sm:$0xff]
    %v3690 = vld [vmem:[%s3153 + $0xc1] sm:$0xff]
    %v3691 = vld [vmem:[%s3153 + $0xc9] sm:$0xff]
    %v3692 = vld [vmem:[%s3153 + $0xd9] sm:$0xff]
    %v3693 = vld [vmem:[%s3153 + $0xe1] sm:$0xff]
    %v3694 = vld [vmem:[%s3153 + $0xf1] sm:$0xff]
    %v3695 = vld [vmem:[%s3153 + $0xf9] sm:$0xff]
    %v3696 = vld [vmem:[%s3153 + $0x109] sm:$0xff]
    %v3697 = vld [vmem:[%s3153 + $0x111] sm:$0xff]
    %v3698 = vld [vmem:[%s3153 + $0x121] sm:$0xff]
    %v3699 = vld [vmem:[%s3153 + $0x129] sm:$0xff]
    %v3700 = vld [vmem:[%s3153 + $0x139] sm:$0xff]
    %v3701 = vld [vmem:[%s3153 + $0x141] sm:$0xff]
    %v3702 = vld [vmem:[%s3153 + $0x151] sm:$0xff]
    %v3703 = vld [vmem:[%s3153 + $0x159] sm:$0xff]
    %v3704 = vld [vmem:[%s3153 + $0x169] sm:$0xff]
    %v3705 = vld [vmem:[%s3153 + $0x171] sm:$0xff]
    %v3706 = vld [vmem:[%s3153 + $0x1b1] sm:$0xff]
    %v3707 = vld [vmem:[%s3153 + $0x1b9] sm:$0xff]
    %v3708 = vld [vmem:[%s3153 + $0x1c9] sm:$0xff]
    %v3709 = vld [vmem:[%s3153 + $0x1d1] sm:$0xff]
    %v3710 = vld [vmem:[%s3153 + $0x1e1] sm:$0xff]
    %v3711 = vld [vmem:[%s3153 + $0x1e9] sm:$0xff]
    %v3712 = vld [vmem:[%s3153 + $0x1f9] sm:$0xff]
    %v3713 = vld [vmem:[%s3153 + $0x201] sm:$0xff]
    %v3714 = vld [vmem:[%s3153 + $0x211] sm:$0xff]
    %v3715 = vld [vmem:[%s3153 + $0x219] sm:$0xff]
    %v3716 = vld [vmem:[%s3153 + $0x229] sm:$0xff]
    %v3717 = vld [vmem:[%s3153 + $0x231] sm:$0xff]
    %v3718 = vld [vmem:[%s3153 + $0x241] sm:$0xff]
    %v3719 = vld [vmem:[%s3153 + $0x249] sm:$0xff]
    %v3720 = vld [vmem:[%s3153 + $0x259] sm:$0xff]
    %v3721 = vld [vmem:[%s3153 + $0x261] sm:$0xff]
    %v3722 = vld [vmem:[%s3153 + $0x271] sm:$0xff]
    %v3723 = vld [vmem:[%s3153 + $0x279] sm:$0xff]
    %v3724 = vld [vmem:[%s3153 + $0x289] sm:$0xff]
    %v3725 = vld [vmem:[%s3153 + $0x291] sm:$0xff]
    %v3726 = vld [vmem:[%s3153 + $0x2a1] sm:$0xff]
    %v3727 = vld [vmem:[%s3153 + $0x2a9] sm:$0xff]
    %v3728 = vld [vmem:[%s3153 + $0x2b9] sm:$0xff]
    %v3729 = vld [vmem:[%s3153 + $0x2c1] sm:$0xff]
    %v3730 = vld [vmem:[%s3153 + $0x2d1] sm:$0xff]
    %v3731 = vld [vmem:[%s3153 + $0x2d9] sm:$0xff]
    %v3732 = vld [vmem:[%s3153 + $0x2e9] sm:$0xff]
    %v3733 = vld [vmem:[%s3153 + $0x2f1] sm:$0xff]
    %v3734 = vld [vmem:[%s3153 + $0x301] sm:$0xff]
    %v3735 = vld [vmem:[%s3153 + $0x309] sm:$0xff]
    %v3736 = vld [vmem:[%s3153 + $0x319] sm:$0xff]
    %v3737 = vld [vmem:[%s3153 + $0x321] sm:$0xff]
    %s3738 = scalar_lea.vmem %s1, 7
    %v3739 = vld [vmem:[%s3738] sm:$0x1]
    %3741 = vset.pattern.permute.xlu0 0
    %3742 = vperm.xlu0 %3741, %v3674
    %v3743 = vpop.permute.xlu0 %3742
    %3746 = vset.pattern.permute.xlu0 0
    %3747 = vperm.xlu0 %3746, %v3675
    %v3748 = vpop.permute.xlu0 %3747
    %3751 = vset.pattern.permute.xlu0 0
    %3752 = vperm.xlu0 %3751, %v3676
    %v3753 = vpop.permute.xlu0 %3752
    %3756 = vset.pattern.permute.xlu0 0
    %3757 = vperm.xlu0 %3756, %v3677
    %v3758 = vpop.permute.xlu0 %3757
    %3761 = vset.pattern.permute.xlu0 0
    %3762 = vperm.xlu0 %3761, %v3678
    %v3763 = vpop.permute.xlu0 %3762
    %3766 = vset.pattern.permute.xlu0 0
    %3767 = vperm.xlu0 %3766, %v3679
    %v3768 = vpop.permute.xlu0 %3767
    %3771 = vset.pattern.permute.xlu0 0
    %3772 = vperm.xlu0 %3771, %v3680
    %v3773 = vpop.permute.xlu0 %3772
    %3776 = vset.pattern.permute.xlu0 0
    %3777 = vperm.xlu0 %3776, %v3681
    %v3778 = vpop.permute.xlu0 %3777
    %3781 = vset.pattern.permute.xlu0 0
    %3782 = vperm.xlu0 %3781, %v3682
    %v3783 = vpop.permute.xlu0 %3782
    %3786 = vset.pattern.permute.xlu0 0
    %3787 = vperm.xlu0 %3786, %v3683
    %v3788 = vpop.permute.xlu0 %3787
    %3791 = vset.pattern.permute.xlu0 0
    %3792 = vperm.xlu0 %3791, %v3684
    %v3793 = vpop.permute.xlu0 %3792
    %3796 = vset.pattern.permute.xlu0 0
    %3797 = vperm.xlu0 %3796, %v3685
    %v3798 = vpop.permute.xlu0 %3797
    %3801 = vset.pattern.permute.xlu0 0
    %3802 = vperm.xlu0 %3801, %v3686
    %v3803 = vpop.permute.xlu0 %3802
    %3806 = vset.pattern.permute.xlu0 0
    %3807 = vperm.xlu0 %3806, %v3687
    %v3808 = vpop.permute.xlu0 %3807
    %3811 = vset.pattern.permute.xlu0 0
    %3812 = vperm.xlu0 %3811, %v3688
    %v3813 = vpop.permute.xlu0 %3812
    %3816 = vset.pattern.permute.xlu0 0
    %3817 = vperm.xlu0 %3816, %v3689
    %v3818 = vpop.permute.xlu0 %3817
    %3821 = vset.pattern.permute.xlu0 0
    %3822 = vperm.xlu0 %3821, %v3690
    %v3823 = vpop.permute.xlu0 %3822
    %3826 = vset.pattern.permute.xlu0 0
    %3827 = vperm.xlu0 %3826, %v3691
    %v3828 = vpop.permute.xlu0 %3827
    %3831 = vset.pattern.permute.xlu0 0
    %3832 = vperm.xlu0 %3831, %v3692
    %v3833 = vpop.permute.xlu0 %3832
    %3836 = vset.pattern.permute.xlu0 0
    %3837 = vperm.xlu0 %3836, %v3693
    %v3838 = vpop.permute.xlu0 %3837
    %3841 = vset.pattern.permute.xlu0 0
    %3842 = vperm.xlu0 %3841, %v3694
    %v3843 = vpop.permute.xlu0 %3842
    %3846 = vset.pattern.permute.xlu0 0
    %3847 = vperm.xlu0 %3846, %v3695
    %v3848 = vpop.permute.xlu0 %3847
    %3851 = vset.pattern.permute.xlu0 0
    %3852 = vperm.xlu0 %3851, %v3696
    %v3853 = vpop.permute.xlu0 %3852
    %3856 = vset.pattern.permute.xlu0 0
    %3857 = vperm.xlu0 %3856, %v3697
    %v3858 = vpop.permute.xlu0 %3857
    %3861 = vset.pattern.permute.xlu0 0
    %3862 = vperm.xlu0 %3861, %v3698
    %v3863 = vpop.permute.xlu0 %3862
    %3866 = vset.pattern.permute.xlu0 0
    %3867 = vperm.xlu0 %3866, %v3699
    %v3868 = vpop.permute.xlu0 %3867
    %3871 = vset.pattern.permute.xlu0 0
    %3872 = vperm.xlu0 %3871, %v3700
    %v3873 = vpop.permute.xlu0 %3872
    %3876 = vset.pattern.permute.xlu0 0
    %3877 = vperm.xlu0 %3876, %v3701
    %v3878 = vpop.permute.xlu0 %3877
    %3881 = vset.pattern.permute.xlu0 0
    %3882 = vperm.xlu0 %3881, %v3702
    %v3883 = vpop.permute.xlu0 %3882
    %3886 = vset.pattern.permute.xlu0 0
    %3887 = vperm.xlu0 %3886, %v3703
    %v3888 = vpop.permute.xlu0 %3887
    %3891 = vset.pattern.permute.xlu0 0
    %3892 = vperm.xlu0 %3891, %v3704
    %v3893 = vpop.permute.xlu0 %3892
    %3896 = vset.pattern.permute.xlu0 0
    %3897 = vperm.xlu0 %3896, %v3705
    %v3898 = vpop.permute.xlu0 %3897
    %3901 = vset.pattern.permute.xlu0 0
    %3902 = vperm.xlu0 %3901, %v3706
    %v3903 = vpop.permute.xlu0 %3902
    %3906 = vset.pattern.permute.xlu0 0
    %3907 = vperm.xlu0 %3906, %v3707
    %v3908 = vpop.permute.xlu0 %3907
    %3911 = vset.pattern.permute.xlu0 0
    %3912 = vperm.xlu0 %3911, %v3708
    %v3913 = vpop.permute.xlu0 %3912
    %3916 = vset.pattern.permute.xlu0 0
    %3917 = vperm.xlu0 %3916, %v3709
    %v3918 = vpop.permute.xlu0 %3917
    %3921 = vset.pattern.permute.xlu0 0
    %3922 = vperm.xlu0 %3921, %v3710
    %v3923 = vpop.permute.xlu0 %3922
    %3926 = vset.pattern.permute.xlu0 0
    %3927 = vperm.xlu0 %3926, %v3711
    %v3928 = vpop.permute.xlu0 %3927
    %3931 = vset.pattern.permute.xlu0 0
    %3932 = vperm.xlu0 %3931, %v3712
    %v3933 = vpop.permute.xlu0 %3932
    %3936 = vset.pattern.permute.xlu0 0
    %3937 = vperm.xlu0 %3936, %v3713
    %v3938 = vpop.permute.xlu0 %3937
    %3941 = vset.pattern.permute.xlu0 0
    %3942 = vperm.xlu0 %3941, %v3714
    %v3943 = vpop.permute.xlu0 %3942
    %3946 = vset.pattern.permute.xlu0 0
    %3947 = vperm.xlu0 %3946, %v3715
    %v3948 = vpop.permute.xlu0 %3947
    %3951 = vset.pattern.permute.xlu0 0
    %3952 = vperm.xlu0 %3951, %v3716
    %v3953 = vpop.permute.xlu0 %3952
    %3956 = vset.pattern.permute.xlu0 0
    %3957 = vperm.xlu0 %3956, %v3717
    %v3958 = vpop.permute.xlu0 %3957
    %3961 = vset.pattern.permute.xlu0 0
    %3962 = vperm.xlu0 %3961, %v3718
    %v3963 = vpop.permute.xlu0 %3962
    %3966 = vset.pattern.permute.xlu0 0
    %3967 = vperm.xlu0 %3966, %v3719
    %v3968 = vpop.permute.xlu0 %3967
    %3971 = vset.pattern.permute.xlu0 0
    %3972 = vperm.xlu0 %3971, %v3720
    %v3973 = vpop.permute.xlu0 %3972
    %3976 = vset.pattern.permute.xlu0 0
    %3977 = vperm.xlu0 %3976, %v3721
    %v3978 = vpop.permute.xlu0 %3977
    %3981 = vset.pattern.permute.xlu0 0
    %3982 = vperm.xlu0 %3981, %v3722
    %v3983 = vpop.permute.xlu0 %3982
    %3986 = vset.pattern.permute.xlu0 0
    %3987 = vperm.xlu0 %3986, %v3723
    %v3988 = vpop.permute.xlu0 %3987
    %3991 = vset.pattern.permute.xlu0 0
    %3992 = vperm.xlu0 %3991, %v3724
    %v3993 = vpop.permute.xlu0 %3992
    %3996 = vset.pattern.permute.xlu0 0
    %3997 = vperm.xlu0 %3996, %v3725
    %v3998 = vpop.permute.xlu0 %3997
    %4001 = vset.pattern.permute.xlu0 0
    %4002 = vperm.xlu0 %4001, %v3726
    %v4003 = vpop.permute.xlu0 %4002
    %4006 = vset.pattern.permute.xlu0 0
    %4007 = vperm.xlu0 %4006, %v3727
    %v4008 = vpop.permute.xlu0 %4007
    %4011 = vset.pattern.permute.xlu0 0
    %4012 = vperm.xlu0 %4011, %v3728
    %v4013 = vpop.permute.xlu0 %4012
    %4016 = vset.pattern.permute.xlu0 0
    %4017 = vperm.xlu0 %4016, %v3729
    %v4018 = vpop.permute.xlu0 %4017
    %4021 = vset.pattern.permute.xlu0 0
    %4022 = vperm.xlu0 %4021, %v3730
    %v4023 = vpop.permute.xlu0 %4022
    %4026 = vset.pattern.permute.xlu0 0
    %4027 = vperm.xlu0 %4026, %v3731
    %v4028 = vpop.permute.xlu0 %4027
    %4031 = vset.pattern.permute.xlu0 0
    %4032 = vperm.xlu0 %4031, %v3732
    %v4033 = vpop.permute.xlu0 %4032
    %4036 = vset.pattern.permute.xlu0 0
    %4037 = vperm.xlu0 %4036, %v3733
    %v4038 = vpop.permute.xlu0 %4037
    %4041 = vset.pattern.permute.xlu0 0
    %4042 = vperm.xlu0 %4041, %v3734
    %v4043 = vpop.permute.xlu0 %4042
    %4046 = vset.pattern.permute.xlu0 0
    %4047 = vperm.xlu0 %4046, %v3735
    %v4048 = vpop.permute.xlu0 %4047
    %4051 = vset.pattern.permute.xlu0 0
    %4052 = vperm.xlu0 %4051, %v3736
    %v4053 = vpop.permute.xlu0 %4052
    %4056 = vset.pattern.permute.xlu0 0
    %4057 = vperm.xlu0 %4056, %v3737
    %v4058 = vpop.permute.xlu0 %4057
    %v4061 = vlaneseq
    %v4062 = vshrl.u32 %v4061, 7
    %v4063 = vsub.s32 0, %v4062
    %v4064 = vrot.slane %v3739, %v4063
    %v4066 = vmul.f32 %v3743, %v4064
    %v4067 = vmul.f32 %v3748, %v4064
    %v4068 = vmul.f32 %v3753, %v4064
    %v4069 = vmul.f32 %v3758, %v4064
    %v4070 = vmul.f32 %v3763, %v4064
    %v4071 = vmul.f32 %v3768, %v4064
    %v4072 = vmul.f32 %v3773, %v4064
    %v4073 = vmul.f32 %v3778, %v4064
    %v4074 = vmul.f32 %v3783, %v4064
    %v4075 = vmul.f32 %v3788, %v4064
    %v4076 = vmul.f32 %v3793, %v4064
    %v4077 = vmul.f32 %v3798, %v4064
    %v4078 = vmul.f32 %v3803, %v4064
    %v4079 = vmul.f32 %v3808, %v4064
    %v4080 = vmul.f32 %v3813, %v4064
    %v4081 = vmul.f32 %v3818, %v4064
    %v4082 = vmul.f32 %v3823, %v4064
    %v4083 = vmul.f32 %v3828, %v4064
    %v4084 = vmul.f32 %v3833, %v4064
    %v4085 = vmul.f32 %v3838, %v4064
    %v4086 = vmul.f32 %v3843, %v4064
    %v4087 = vmul.f32 %v3848, %v4064
    %v4088 = vmul.f32 %v3853, %v4064
    %v4089 = vmul.f32 %v3858, %v4064
    %v4090 = vmul.f32 %v3863, %v4064
    %v4091 = vmul.f32 %v3868, %v4064
    %v4092 = vmul.f32 %v3873, %v4064
    %v4093 = vmul.f32 %v3878, %v4064
    %v4094 = vmul.f32 %v3883, %v4064
    %v4095 = vmul.f32 %v3888, %v4064
    %v4096 = vmul.f32 %v3893, %v4064
    %v4097 = vmul.f32 %v3898, %v4064
    %v4098 = vmul.f32 %v3903, %v4064
    %v4099 = vmul.f32 %v3908, %v4064
    %v4100 = vmul.f32 %v3913, %v4064
    %v4101 = vmul.f32 %v3918, %v4064
    %v4102 = vmul.f32 %v3923, %v4064
    %v4103 = vmul.f32 %v3928, %v4064
    %v4104 = vmul.f32 %v3933, %v4064
    %v4105 = vmul.f32 %v3938, %v4064
    %v4106 = vmul.f32 %v3943, %v4064
    %v4107 = vmul.f32 %v3948, %v4064
    %v4108 = vmul.f32 %v3953, %v4064
    %v4109 = vmul.f32 %v3958, %v4064
    %v4110 = vmul.f32 %v3963, %v4064
    %v4111 = vmul.f32 %v3968, %v4064
    %v4112 = vmul.f32 %v3973, %v4064
    %v4113 = vmul.f32 %v3978, %v4064
    %v4114 = vmul.f32 %v3983, %v4064
    %v4115 = vmul.f32 %v3988, %v4064
    %v4116 = vmul.f32 %v3993, %v4064
    %v4117 = vmul.f32 %v3998, %v4064
    %v4118 = vmul.f32 %v4003, %v4064
    %v4119 = vmul.f32 %v4008, %v4064
    %v4120 = vmul.f32 %v4013, %v4064
    %v4121 = vmul.f32 %v4018, %v4064
    %v4122 = vmul.f32 %v4023, %v4064
    %v4123 = vmul.f32 %v4028, %v4064
    %v4124 = vmul.f32 %v4033, %v4064
    %v4125 = vmul.f32 %v4038, %v4064
    %v4126 = vmul.f32 %v4043, %v4064
    %v4127 = vmul.f32 %v4048, %v4064
    %v4128 = vmul.f32 %v4053, %v4064
    %v4129 = vmul.f32 %v4058, %v4064
    %v4130 = vadd.f32 %v3610, %v4066
    %v4131 = vadd.f32 %v3611, %v4067
    %v4132 = vadd.f32 %v3612, %v4068
    %v4133 = vadd.f32 %v3613, %v4069
    %v4134 = vadd.f32 %v3614, %v4070
    %v4135 = vadd.f32 %v3615, %v4071
    %v4136 = vadd.f32 %v3616, %v4072
    %v4137 = vadd.f32 %v3617, %v4073
    %v4138 = vadd.f32 %v3618, %v4074
    %v4139 = vadd.f32 %v3619, %v4075
    %v4140 = vadd.f32 %v3620, %v4076
    %v4141 = vadd.f32 %v3621, %v4077
    %v4142 = vadd.f32 %v3622, %v4078
    %v4143 = vadd.f32 %v3623, %v4079
    %v4144 = vadd.f32 %v3624, %v4080
    %v4145 = vadd.f32 %v3625, %v4081
    %v4146 = vadd.f32 %v3626, %v4082
    %v4147 = vadd.f32 %v3627, %v4083
    %v4148 = vadd.f32 %v3628, %v4084
    %v4149 = vadd.f32 %v3629, %v4085
    %v4150 = vadd.f32 %v3630, %v4086
    %v4151 = vadd.f32 %v3631, %v4087
    %v4152 = vadd.f32 %v3632, %v4088
    %v4153 = vadd.f32 %v3633, %v4089
    %v4154 = vadd.f32 %v3634, %v4090
    %v4155 = vadd.f32 %v3635, %v4091
    %v4156 = vadd.f32 %v3636, %v4092
    %v4157 = vadd.f32 %v3637, %v4093
    %v4158 = vadd.f32 %v3638, %v4094
    %v4159 = vadd.f32 %v3639, %v4095
    %v4160 = vadd.f32 %v3640, %v4096
    %v4161 = vadd.f32 %v3641, %v4097
    %v4162 = vadd.f32 %v3642, %v4098
    %v4163 = vadd.f32 %v3643, %v4099
    %v4164 = vadd.f32 %v3644, %v4100
    %v4165 = vadd.f32 %v3645, %v4101
    %v4166 = vadd.f32 %v3646, %v4102
    %v4167 = vadd.f32 %v3647, %v4103
    %v4168 = vadd.f32 %v3648, %v4104
    %v4169 = vadd.f32 %v3649, %v4105
    %v4170 = vadd.f32 %v3650, %v4106
    %v4171 = vadd.f32 %v3651, %v4107
    %v4172 = vadd.f32 %v3652, %v4108
    %v4173 = vadd.f32 %v3653, %v4109
    %v4174 = vadd.f32 %v3654, %v4110
    %v4175 = vadd.f32 %v3655, %v4111
    %v4176 = vadd.f32 %v3656, %v4112
    %v4177 = vadd.f32 %v3657, %v4113
    %v4178 = vadd.f32 %v3658, %v4114
    %v4179 = vadd.f32 %v3659, %v4115
    %v4180 = vadd.f32 %v3660, %v4116
    %v4181 = vadd.f32 %v3661, %v4117
    %v4182 = vadd.f32 %v3662, %v4118
    %v4183 = vadd.f32 %v3663, %v4119
    %v4184 = vadd.f32 %v3664, %v4120
    %v4185 = vadd.f32 %v3665, %v4121
    %v4186 = vadd.f32 %v3666, %v4122
    %v4187 = vadd.f32 %v3667, %v4123
    %v4188 = vadd.f32 %v3668, %v4124
    %v4189 = vadd.f32 %v3669, %v4125
    %v4190 = vadd.f32 %v3670, %v4126
    %v4191 = vadd.f32 %v3671, %v4127
    %v4192 = vadd.f32 %v3672, %v4128
    %v4193 = vadd.f32 %v3673, %v4129
    %v4194 = vld [vmem:[%s3153 + $0x2] sm:$0xff]
    %v4195 = vld [vmem:[%s3153 + $0xa] sm:$0xff]
    %v4196 = vld [vmem:[%s3153 + $0x1a] sm:$0xff]
    %v4197 = vld [vmem:[%s3153 + $0x22] sm:$0xff]
    %v4198 = vld [vmem:[%s3153 + $0x32] sm:$0xff]
    %v4199 = vld [vmem:[%s3153 + $0x3a] sm:$0xff]
    %v4200 = vld [vmem:[%s3153 + $0x4a] sm:$0xff]
    %v4201 = vld [vmem:[%s3153 + $0x52] sm:$0xff]
    %v4202 = vld [vmem:[%s3153 + $0x62] sm:$0xff]
    %v4203 = vld [vmem:[%s3153 + $0x6a] sm:$0xff]
    %v4204 = vld [vmem:[%s3153 + $0x7a] sm:$0xff]
    %v4205 = vld [vmem:[%s3153 + $0x82] sm:$0xff]
    %v4206 = vld [vmem:[%s3153 + $0x92] sm:$0xff]
    %v4207 = vld [vmem:[%s3153 + $0x9a] sm:$0xff]
    %v4208 = vld [vmem:[%s3153 + $0xaa] sm:$0xff]
    %v4209 = vld [vmem:[%s3153 + $0xb2] sm:$0xff]
    %v4210 = vld [vmem:[%s3153 + $0xc2] sm:$0xff]
    %v4211 = vld [vmem:[%s3153 + $0xca] sm:$0xff]
    %v4212 = vld [vmem:[%s3153 + $0xda] sm:$0xff]
    %v4213 = vld [vmem:[%s3153 + $0xe2] sm:$0xff]
    %v4214 = vld [vmem:[%s3153 + $0xf2] sm:$0xff]
    %v4215 = vld [vmem:[%s3153 + $0xfa] sm:$0xff]
    %v4216 = vld [vmem:[%s3153 + $0x10a] sm:$0xff]
    %v4217 = vld [vmem:[%s3153 + $0x112] sm:$0xff]
    %v4218 = vld [vmem:[%s3153 + $0x122] sm:$0xff]
    %v4219 = vld [vmem:[%s3153 + $0x12a] sm:$0xff]
    %v4220 = vld [vmem:[%s3153 + $0x13a] sm:$0xff]
    %v4221 = vld [vmem:[%s3153 + $0x142] sm:$0xff]
    %v4222 = vld [vmem:[%s3153 + $0x152] sm:$0xff]
    %v4223 = vld [vmem:[%s3153 + $0x15a] sm:$0xff]
    %v4224 = vld [vmem:[%s3153 + $0x16a] sm:$0xff]
    %v4225 = vld [vmem:[%s3153 + $0x172] sm:$0xff]
    %v4226 = vld [vmem:[%s3153 + $0x1b2] sm:$0xff]
    %v4227 = vld [vmem:[%s3153 + $0x1ba] sm:$0xff]
    %v4228 = vld [vmem:[%s3153 + $0x1ca] sm:$0xff]
    %v4229 = vld [vmem:[%s3153 + $0x1d2] sm:$0xff]
    %v4230 = vld [vmem:[%s3153 + $0x1e2] sm:$0xff]
    %v4231 = vld [vmem:[%s3153 + $0x1ea] sm:$0xff]
    %v4232 = vld [vmem:[%s3153 + $0x1fa] sm:$0xff]
    %v4233 = vld [vmem:[%s3153 + $0x202] sm:$0xff]
    %v4234 = vld [vmem:[%s3153 + $0x212] sm:$0xff]
    %v4235 = vld [vmem:[%s3153 + $0x21a] sm:$0xff]
    %v4236 = vld [vmem:[%s3153 + $0x22a] sm:$0xff]
    %v4237 = vld [vmem:[%s3153 + $0x232] sm:$0xff]
    %v4238 = vld [vmem:[%s3153 + $0x242] sm:$0xff]
    %v4239 = vld [vmem:[%s3153 + $0x24a] sm:$0xff]
    %v4240 = vld [vmem:[%s3153 + $0x25a] sm:$0xff]
    %v4241 = vld [vmem:[%s3153 + $0x262] sm:$0xff]
    %v4242 = vld [vmem:[%s3153 + $0x272] sm:$0xff]
    %v4243 = vld [vmem:[%s3153 + $0x27a] sm:$0xff]
    %v4244 = vld [vmem:[%s3153 + $0x28a] sm:$0xff]
    %v4245 = vld [vmem:[%s3153 + $0x292] sm:$0xff]
    %v4246 = vld [vmem:[%s3153 + $0x2a2] sm:$0xff]
    %v4247 = vld [vmem:[%s3153 + $0x2aa] sm:$0xff]
    %v4248 = vld [vmem:[%s3153 + $0x2ba] sm:$0xff]
    %v4249 = vld [vmem:[%s3153 + $0x2c2] sm:$0xff]
    %v4250 = vld [vmem:[%s3153 + $0x2d2] sm:$0xff]
    %v4251 = vld [vmem:[%s3153 + $0x2da] sm:$0xff]
    %v4252 = vld [vmem:[%s3153 + $0x2ea] sm:$0xff]
    %v4253 = vld [vmem:[%s3153 + $0x2f2] sm:$0xff]
    %v4254 = vld [vmem:[%s3153 + $0x302] sm:$0xff]
    %v4255 = vld [vmem:[%s3153 + $0x30a] sm:$0xff]
    %v4256 = vld [vmem:[%s3153 + $0x31a] sm:$0xff]
    %v4257 = vld [vmem:[%s3153 + $0x322] sm:$0xff]
    %s4258 = scalar_lea.vmem %s1, 8
    %v4259 = vld [vmem:[%s4258] sm:$0x1]
    %4261 = vset.pattern.permute.xlu0 0
    %4262 = vperm.xlu0 %4261, %v4194
    %v4263 = vpop.permute.xlu0 %4262
    %4266 = vset.pattern.permute.xlu0 0
    %4267 = vperm.xlu0 %4266, %v4195
    %v4268 = vpop.permute.xlu0 %4267
    %4271 = vset.pattern.permute.xlu0 0
    %4272 = vperm.xlu0 %4271, %v4196
    %v4273 = vpop.permute.xlu0 %4272
    %4276 = vset.pattern.permute.xlu0 0
    %4277 = vperm.xlu0 %4276, %v4197
    %v4278 = vpop.permute.xlu0 %4277
    %4281 = vset.pattern.permute.xlu0 0
    %4282 = vperm.xlu0 %4281, %v4198
    %v4283 = vpop.permute.xlu0 %4282
    %4286 = vset.pattern.permute.xlu0 0
    %4287 = vperm.xlu0 %4286, %v4199
    %v4288 = vpop.permute.xlu0 %4287
    %4291 = vset.pattern.permute.xlu0 0
    %4292 = vperm.xlu0 %4291, %v4200
    %v4293 = vpop.permute.xlu0 %4292
    %4296 = vset.pattern.permute.xlu0 0
    %4297 = vperm.xlu0 %4296, %v4201
    %v4298 = vpop.permute.xlu0 %4297
    %4301 = vset.pattern.permute.xlu0 0
    %4302 = vperm.xlu0 %4301, %v4202
    %v4303 = vpop.permute.xlu0 %4302
    %4306 = vset.pattern.permute.xlu0 0
    %4307 = vperm.xlu0 %4306, %v4203
    %v4308 = vpop.permute.xlu0 %4307
    %4311 = vset.pattern.permute.xlu0 0
    %4312 = vperm.xlu0 %4311, %v4204
    %v4313 = vpop.permute.xlu0 %4312
    %4316 = vset.pattern.permute.xlu0 0
    %4317 = vperm.xlu0 %4316, %v4205
    %v4318 = vpop.permute.xlu0 %4317
    %4321 = vset.pattern.permute.xlu0 0
    %4322 = vperm.xlu0 %4321, %v4206
    %v4323 = vpop.permute.xlu0 %4322
    %4326 = vset.pattern.permute.xlu0 0
    %4327 = vperm.xlu0 %4326, %v4207
    %v4328 = vpop.permute.xlu0 %4327
    %4331 = vset.pattern.permute.xlu0 0
    %4332 = vperm.xlu0 %4331, %v4208
    %v4333 = vpop.permute.xlu0 %4332
    %4336 = vset.pattern.permute.xlu0 0
    %4337 = vperm.xlu0 %4336, %v4209
    %v4338 = vpop.permute.xlu0 %4337
    %4341 = vset.pattern.permute.xlu0 0
    %4342 = vperm.xlu0 %4341, %v4210
    %v4343 = vpop.permute.xlu0 %4342
    %4346 = vset.pattern.permute.xlu0 0
    %4347 = vperm.xlu0 %4346, %v4211
    %v4348 = vpop.permute.xlu0 %4347
    %4351 = vset.pattern.permute.xlu0 0
    %4352 = vperm.xlu0 %4351, %v4212
    %v4353 = vpop.permute.xlu0 %4352
    %4356 = vset.pattern.permute.xlu0 0
    %4357 = vperm.xlu0 %4356, %v4213
    %v4358 = vpop.permute.xlu0 %4357
    %4361 = vset.pattern.permute.xlu0 0
    %4362 = vperm.xlu0 %4361, %v4214
    %v4363 = vpop.permute.xlu0 %4362
    %4366 = vset.pattern.permute.xlu0 0
    %4367 = vperm.xlu0 %4366, %v4215
    %v4368 = vpop.permute.xlu0 %4367
    %4371 = vset.pattern.permute.xlu0 0
    %4372 = vperm.xlu0 %4371, %v4216
    %v4373 = vpop.permute.xlu0 %4372
    %4376 = vset.pattern.permute.xlu0 0
    %4377 = vperm.xlu0 %4376, %v4217
    %v4378 = vpop.permute.xlu0 %4377
    %4381 = vset.pattern.permute.xlu0 0
    %4382 = vperm.xlu0 %4381, %v4218
    %v4383 = vpop.permute.xlu0 %4382
    %4386 = vset.pattern.permute.xlu0 0
    %4387 = vperm.xlu0 %4386, %v4219
    %v4388 = vpop.permute.xlu0 %4387
    %4391 = vset.pattern.permute.xlu0 0
    %4392 = vperm.xlu0 %4391, %v4220
    %v4393 = vpop.permute.xlu0 %4392
    %4396 = vset.pattern.permute.xlu0 0
    %4397 = vperm.xlu0 %4396, %v4221
    %v4398 = vpop.permute.xlu0 %4397
    %4401 = vset.pattern.permute.xlu0 0
    %4402 = vperm.xlu0 %4401, %v4222
    %v4403 = vpop.permute.xlu0 %4402
    %4406 = vset.pattern.permute.xlu0 0
    %4407 = vperm.xlu0 %4406, %v4223
    %v4408 = vpop.permute.xlu0 %4407
    %4411 = vset.pattern.permute.xlu0 0
    %4412 = vperm.xlu0 %4411, %v4224
    %v4413 = vpop.permute.xlu0 %4412
    %4416 = vset.pattern.permute.xlu0 0
    %4417 = vperm.xlu0 %4416, %v4225
    %v4418 = vpop.permute.xlu0 %4417
    %4421 = vset.pattern.permute.xlu0 0
    %4422 = vperm.xlu0 %4421, %v4226
    %v4423 = vpop.permute.xlu0 %4422
    %4426 = vset.pattern.permute.xlu0 0
    %4427 = vperm.xlu0 %4426, %v4227
    %v4428 = vpop.permute.xlu0 %4427
    %4431 = vset.pattern.permute.xlu0 0
    %4432 = vperm.xlu0 %4431, %v4228
    %v4433 = vpop.permute.xlu0 %4432
    %4436 = vset.pattern.permute.xlu0 0
    %4437 = vperm.xlu0 %4436, %v4229
    %v4438 = vpop.permute.xlu0 %4437
    %4441 = vset.pattern.permute.xlu0 0
    %4442 = vperm.xlu0 %4441, %v4230
    %v4443 = vpop.permute.xlu0 %4442
    %4446 = vset.pattern.permute.xlu0 0
    %4447 = vperm.xlu0 %4446, %v4231
    %v4448 = vpop.permute.xlu0 %4447
    %4451 = vset.pattern.permute.xlu0 0
    %4452 = vperm.xlu0 %4451, %v4232
    %v4453 = vpop.permute.xlu0 %4452
    %4456 = vset.pattern.permute.xlu0 0
    %4457 = vperm.xlu0 %4456, %v4233
    %v4458 = vpop.permute.xlu0 %4457
    %4461 = vset.pattern.permute.xlu0 0
    %4462 = vperm.xlu0 %4461, %v4234
    %v4463 = vpop.permute.xlu0 %4462
    %4466 = vset.pattern.permute.xlu0 0
    %4467 = vperm.xlu0 %4466, %v4235
    %v4468 = vpop.permute.xlu0 %4467
    %4471 = vset.pattern.permute.xlu0 0
    %4472 = vperm.xlu0 %4471, %v4236
    %v4473 = vpop.permute.xlu0 %4472
    %4476 = vset.pattern.permute.xlu0 0
    %4477 = vperm.xlu0 %4476, %v4237
    %v4478 = vpop.permute.xlu0 %4477
    %4481 = vset.pattern.permute.xlu0 0
    %4482 = vperm.xlu0 %4481, %v4238
    %v4483 = vpop.permute.xlu0 %4482
    %4486 = vset.pattern.permute.xlu0 0
    %4487 = vperm.xlu0 %4486, %v4239
    %v4488 = vpop.permute.xlu0 %4487
    %4491 = vset.pattern.permute.xlu0 0
    %4492 = vperm.xlu0 %4491, %v4240
    %v4493 = vpop.permute.xlu0 %4492
    %4496 = vset.pattern.permute.xlu0 0
    %4497 = vperm.xlu0 %4496, %v4241
    %v4498 = vpop.permute.xlu0 %4497
    %4501 = vset.pattern.permute.xlu0 0
    %4502 = vperm.xlu0 %4501, %v4242
    %v4503 = vpop.permute.xlu0 %4502
    %4506 = vset.pattern.permute.xlu0 0
    %4507 = vperm.xlu0 %4506, %v4243
    %v4508 = vpop.permute.xlu0 %4507
    %4511 = vset.pattern.permute.xlu0 0
    %4512 = vperm.xlu0 %4511, %v4244
    %v4513 = vpop.permute.xlu0 %4512
    %4516 = vset.pattern.permute.xlu0 0
    %4517 = vperm.xlu0 %4516, %v4245
    %v4518 = vpop.permute.xlu0 %4517
    %4521 = vset.pattern.permute.xlu0 0
    %4522 = vperm.xlu0 %4521, %v4246
    %v4523 = vpop.permute.xlu0 %4522
    %4526 = vset.pattern.permute.xlu0 0
    %4527 = vperm.xlu0 %4526, %v4247
    %v4528 = vpop.permute.xlu0 %4527
    %4531 = vset.pattern.permute.xlu0 0
    %4532 = vperm.xlu0 %4531, %v4248
    %v4533 = vpop.permute.xlu0 %4532
    %4536 = vset.pattern.permute.xlu0 0
    %4537 = vperm.xlu0 %4536, %v4249
    %v4538 = vpop.permute.xlu0 %4537
    %4541 = vset.pattern.permute.xlu0 0
    %4542 = vperm.xlu0 %4541, %v4250
    %v4543 = vpop.permute.xlu0 %4542
    %4546 = vset.pattern.permute.xlu0 0
    %4547 = vperm.xlu0 %4546, %v4251
    %v4548 = vpop.permute.xlu0 %4547
    %4551 = vset.pattern.permute.xlu0 0
    %4552 = vperm.xlu0 %4551, %v4252
    %v4553 = vpop.permute.xlu0 %4552
    %4556 = vset.pattern.permute.xlu0 0
    %4557 = vperm.xlu0 %4556, %v4253
    %v4558 = vpop.permute.xlu0 %4557
    %4561 = vset.pattern.permute.xlu0 0
    %4562 = vperm.xlu0 %4561, %v4254
    %v4563 = vpop.permute.xlu0 %4562
    %4566 = vset.pattern.permute.xlu0 0
    %4567 = vperm.xlu0 %4566, %v4255
    %v4568 = vpop.permute.xlu0 %4567
    %4571 = vset.pattern.permute.xlu0 0
    %4572 = vperm.xlu0 %4571, %v4256
    %v4573 = vpop.permute.xlu0 %4572
    %4576 = vset.pattern.permute.xlu0 0
    %4577 = vperm.xlu0 %4576, %v4257
    %v4578 = vpop.permute.xlu0 %4577
    %v4581 = vlaneseq
    %v4582 = vshrl.u32 %v4581, 7
    %v4583 = vsub.s32 0, %v4582
    %v4584 = vrot.slane %v4259, %v4583
    %v4586 = vmul.f32 %v4263, %v4584
    %v4587 = vmul.f32 %v4268, %v4584
    %v4588 = vmul.f32 %v4273, %v4584
    %v4589 = vmul.f32 %v4278, %v4584
    %v4590 = vmul.f32 %v4283, %v4584
    %v4591 = vmul.f32 %v4288, %v4584
    %v4592 = vmul.f32 %v4293, %v4584
    %v4593 = vmul.f32 %v4298, %v4584
    %v4594 = vmul.f32 %v4303, %v4584
    %v4595 = vmul.f32 %v4308, %v4584
    %v4596 = vmul.f32 %v4313, %v4584
    %v4597 = vmul.f32 %v4318, %v4584
    %v4598 = vmul.f32 %v4323, %v4584
    %v4599 = vmul.f32 %v4328, %v4584
    %v4600 = vmul.f32 %v4333, %v4584
    %v4601 = vmul.f32 %v4338, %v4584
    %v4602 = vmul.f32 %v4343, %v4584
    %v4603 = vmul.f32 %v4348, %v4584
    %v4604 = vmul.f32 %v4353, %v4584
    %v4605 = vmul.f32 %v4358, %v4584
    %v4606 = vmul.f32 %v4363, %v4584
    %v4607 = vmul.f32 %v4368, %v4584
    %v4608 = vmul.f32 %v4373, %v4584
    %v4609 = vmul.f32 %v4378, %v4584
    %v4610 = vmul.f32 %v4383, %v4584
    %v4611 = vmul.f32 %v4388, %v4584
    %v4612 = vmul.f32 %v4393, %v4584
    %v4613 = vmul.f32 %v4398, %v4584
    %v4614 = vmul.f32 %v4403, %v4584
    %v4615 = vmul.f32 %v4408, %v4584
    %v4616 = vmul.f32 %v4413, %v4584
    %v4617 = vmul.f32 %v4418, %v4584
    %v4618 = vmul.f32 %v4423, %v4584
    %v4619 = vmul.f32 %v4428, %v4584
    %v4620 = vmul.f32 %v4433, %v4584
    %v4621 = vmul.f32 %v4438, %v4584
    %v4622 = vmul.f32 %v4443, %v4584
    %v4623 = vmul.f32 %v4448, %v4584
    %v4624 = vmul.f32 %v4453, %v4584
    %v4625 = vmul.f32 %v4458, %v4584
    %v4626 = vmul.f32 %v4463, %v4584
    %v4627 = vmul.f32 %v4468, %v4584
    %v4628 = vmul.f32 %v4473, %v4584
    %v4629 = vmul.f32 %v4478, %v4584
    %v4630 = vmul.f32 %v4483, %v4584
    %v4631 = vmul.f32 %v4488, %v4584
    %v4632 = vmul.f32 %v4493, %v4584
    %v4633 = vmul.f32 %v4498, %v4584
    %v4634 = vmul.f32 %v4503, %v4584
    %v4635 = vmul.f32 %v4508, %v4584
    %v4636 = vmul.f32 %v4513, %v4584
    %v4637 = vmul.f32 %v4518, %v4584
    %v4638 = vmul.f32 %v4523, %v4584
    %v4639 = vmul.f32 %v4528, %v4584
    %v4640 = vmul.f32 %v4533, %v4584
    %v4641 = vmul.f32 %v4538, %v4584
    %v4642 = vmul.f32 %v4543, %v4584
    %v4643 = vmul.f32 %v4548, %v4584
    %v4644 = vmul.f32 %v4553, %v4584
    %v4645 = vmul.f32 %v4558, %v4584
    %v4646 = vmul.f32 %v4563, %v4584
    %v4647 = vmul.f32 %v4568, %v4584
    %v4648 = vmul.f32 %v4573, %v4584
    %v4649 = vmul.f32 %v4578, %v4584
    %v4650 = vadd.f32 %v4130, %v4586
    %v4651 = vadd.f32 %v4131, %v4587
    %v4652 = vadd.f32 %v4132, %v4588
    %v4653 = vadd.f32 %v4133, %v4589
    %v4654 = vadd.f32 %v4134, %v4590
    %v4655 = vadd.f32 %v4135, %v4591
    %v4656 = vadd.f32 %v4136, %v4592
    %v4657 = vadd.f32 %v4137, %v4593
    %v4658 = vadd.f32 %v4138, %v4594
    %v4659 = vadd.f32 %v4139, %v4595
    %v4660 = vadd.f32 %v4140, %v4596
    %v4661 = vadd.f32 %v4141, %v4597
    %v4662 = vadd.f32 %v4142, %v4598
    %v4663 = vadd.f32 %v4143, %v4599
    %v4664 = vadd.f32 %v4144, %v4600
    %v4665 = vadd.f32 %v4145, %v4601
    %v4666 = vadd.f32 %v4146, %v4602
    %v4667 = vadd.f32 %v4147, %v4603
    %v4668 = vadd.f32 %v4148, %v4604
    %v4669 = vadd.f32 %v4149, %v4605
    %v4670 = vadd.f32 %v4150, %v4606
    %v4671 = vadd.f32 %v4151, %v4607
    %v4672 = vadd.f32 %v4152, %v4608
    %v4673 = vadd.f32 %v4153, %v4609
    %v4674 = vadd.f32 %v4154, %v4610
    %v4675 = vadd.f32 %v4155, %v4611
    %v4676 = vadd.f32 %v4156, %v4612
    %v4677 = vadd.f32 %v4157, %v4613
    %v4678 = vadd.f32 %v4158, %v4614
    %v4679 = vadd.f32 %v4159, %v4615
    %v4680 = vadd.f32 %v4160, %v4616
    %v4681 = vadd.f32 %v4161, %v4617
    %v4682 = vadd.f32 %v4162, %v4618
    %v4683 = vadd.f32 %v4163, %v4619
    %v4684 = vadd.f32 %v4164, %v4620
    %v4685 = vadd.f32 %v4165, %v4621
    %v4686 = vadd.f32 %v4166, %v4622
    %v4687 = vadd.f32 %v4167, %v4623
    %v4688 = vadd.f32 %v4168, %v4624
    %v4689 = vadd.f32 %v4169, %v4625
    %v4690 = vadd.f32 %v4170, %v4626
    %v4691 = vadd.f32 %v4171, %v4627
    %v4692 = vadd.f32 %v4172, %v4628
    %v4693 = vadd.f32 %v4173, %v4629
    %v4694 = vadd.f32 %v4174, %v4630
    %v4695 = vadd.f32 %v4175, %v4631
    %v4696 = vadd.f32 %v4176, %v4632
    %v4697 = vadd.f32 %v4177, %v4633
    %v4698 = vadd.f32 %v4178, %v4634
    %v4699 = vadd.f32 %v4179, %v4635
    %v4700 = vadd.f32 %v4180, %v4636
    %v4701 = vadd.f32 %v4181, %v4637
    %v4702 = vadd.f32 %v4182, %v4638
    %v4703 = vadd.f32 %v4183, %v4639
    %v4704 = vadd.f32 %v4184, %v4640
    %v4705 = vadd.f32 %v4185, %v4641
    %v4706 = vadd.f32 %v4186, %v4642
    %v4707 = vadd.f32 %v4187, %v4643
    %v4708 = vadd.f32 %v4188, %v4644
    %v4709 = vadd.f32 %v4189, %v4645
    %v4710 = vadd.f32 %v4190, %v4646
    %v4711 = vadd.f32 %v4191, %v4647
    %v4712 = vadd.f32 %v4192, %v4648
    %v4713 = vadd.f32 %v4193, %v4649
    %v4714 = vld [vmem:[%s2] sm:$0x1]
    %v4716 = vlaneseq
    %v4717 = vshrl.u32 %v4716, 7
    %v4718 = vsub.s32 0, %v4717
    %v4719 = vrot.slane %v4714, %v4718
    %v4721 = vadd.f32 %v4650, %v4719
    %v4722 = vadd.f32 %v4651, %v4719
    %v4723 = vadd.f32 %v4652, %v4719
    %v4724 = vadd.f32 %v4653, %v4719
    %v4725 = vadd.f32 %v4654, %v4719
    %v4726 = vadd.f32 %v4655, %v4719
    %v4727 = vadd.f32 %v4656, %v4719
    %v4728 = vadd.f32 %v4657, %v4719
    %v4729 = vadd.f32 %v4658, %v4719
    %v4730 = vadd.f32 %v4659, %v4719
    %v4731 = vadd.f32 %v4660, %v4719
    %v4732 = vadd.f32 %v4661, %v4719
    %v4733 = vadd.f32 %v4662, %v4719
    %v4734 = vadd.f32 %v4663, %v4719
    %v4735 = vadd.f32 %v4664, %v4719
    %v4736 = vadd.f32 %v4665, %v4719
    %v4737 = vadd.f32 %v4666, %v4719
    %v4738 = vadd.f32 %v4667, %v4719
    %v4739 = vadd.f32 %v4668, %v4719
    %v4740 = vadd.f32 %v4669, %v4719
    %v4741 = vadd.f32 %v4670, %v4719
    %v4742 = vadd.f32 %v4671, %v4719
    %v4743 = vadd.f32 %v4672, %v4719
    %v4744 = vadd.f32 %v4673, %v4719
    %v4745 = vadd.f32 %v4674, %v4719
    %v4746 = vadd.f32 %v4675, %v4719
    %v4747 = vadd.f32 %v4676, %v4719
    %v4748 = vadd.f32 %v4677, %v4719
    %v4749 = vadd.f32 %v4678, %v4719
    %v4750 = vadd.f32 %v4679, %v4719
    %v4751 = vadd.f32 %v4680, %v4719
    %v4752 = vadd.f32 %v4681, %v4719
    %v4753 = vadd.f32 %v4682, %v4719
    %v4754 = vadd.f32 %v4683, %v4719
    %v4755 = vadd.f32 %v4684, %v4719
    %v4756 = vadd.f32 %v4685, %v4719
    %v4757 = vadd.f32 %v4686, %v4719
    %v4758 = vadd.f32 %v4687, %v4719
    %v4759 = vadd.f32 %v4688, %v4719
    %v4760 = vadd.f32 %v4689, %v4719
    %v4761 = vadd.f32 %v4690, %v4719
    %v4762 = vadd.f32 %v4691, %v4719
    %v4763 = vadd.f32 %v4692, %v4719
    %v4764 = vadd.f32 %v4693, %v4719
    %v4765 = vadd.f32 %v4694, %v4719
    %v4766 = vadd.f32 %v4695, %v4719
    %v4767 = vadd.f32 %v4696, %v4719
    %v4768 = vadd.f32 %v4697, %v4719
    %v4769 = vadd.f32 %v4698, %v4719
    %v4770 = vadd.f32 %v4699, %v4719
    %v4771 = vadd.f32 %v4700, %v4719
    %v4772 = vadd.f32 %v4701, %v4719
    %v4773 = vadd.f32 %v4702, %v4719
    %v4774 = vadd.f32 %v4703, %v4719
    %v4775 = vadd.f32 %v4704, %v4719
    %v4776 = vadd.f32 %v4705, %v4719
    %v4777 = vadd.f32 %v4706, %v4719
    %v4778 = vadd.f32 %v4707, %v4719
    %v4779 = vadd.f32 %v4708, %v4719
    %v4780 = vadd.f32 %v4709, %v4719
    %v4781 = vadd.f32 %v4710, %v4719
    %v4782 = vadd.f32 %v4711, %v4719
    %v4783 = vadd.f32 %v4712, %v4719
    %v4784 = vadd.f32 %v4713, %v4719
    %vm4785 = vcmask 130048
    %v4786 = vsel %vm4785, %v4721, -inf
    %v4787 = vsel %vm4785, %v4723, -inf
    %v4788 = vmax.f32 %v4786, %v4787
    %v4789 = vsel %vm4785, %v4722, -inf
    %v4790 = vsel %vm4785, %v4724, -inf
    %v4791 = vmax.f32 %v4789, %v4790
    %v4792 = vsel %vm4785, %v4725, -inf
    %v4793 = vsel %vm4785, %v4727, -inf
    %v4794 = vmax.f32 %v4792, %v4793
    %v4795 = vsel %vm4785, %v4726, -inf
    %v4796 = vsel %vm4785, %v4728, -inf
    %v4797 = vmax.f32 %v4795, %v4796
    %v4798 = vsel %vm4785, %v4729, -inf
    %v4799 = vsel %vm4785, %v4731, -inf
    %v4800 = vmax.f32 %v4798, %v4799
    %v4801 = vsel %vm4785, %v4730, -inf
    %v4802 = vsel %vm4785, %v4732, -inf
    %v4803 = vmax.f32 %v4801, %v4802
    %v4804 = vsel %vm4785, %v4733, -inf
    %v4805 = vsel %vm4785, %v4735, -inf
    %v4806 = vmax.f32 %v4804, %v4805
    %v4807 = vsel %vm4785, %v4734, -inf
    %v4808 = vsel %vm4785, %v4736, -inf
    %v4809 = vmax.f32 %v4807, %v4808
    %v4810 = vsel %vm4785, %v4737, -inf
    %v4811 = vsel %vm4785, %v4739, -inf
    %v4812 = vmax.f32 %v4810, %v4811
    %v4813 = vsel %vm4785, %v4738, -inf
    %v4814 = vsel %vm4785, %v4740, -inf
    %v4815 = vmax.f32 %v4813, %v4814
    %v4816 = vsel %vm4785, %v4741, -inf
    %v4817 = vsel %vm4785, %v4743, -inf
    %v4818 = vmax.f32 %v4816, %v4817
    %v4819 = vsel %vm4785, %v4742, -inf
    %v4820 = vsel %vm4785, %v4744, -inf
    %v4821 = vmax.f32 %v4819, %v4820
    %v4822 = vsel %vm4785, %v4745, -inf
    %v4823 = vsel %vm4785, %v4747, -inf
    %v4824 = vmax.f32 %v4822, %v4823
    %v4825 = vsel %vm4785, %v4746, -inf
    %v4826 = vsel %vm4785, %v4748, -inf
    %v4827 = vmax.f32 %v4825, %v4826
    %v4828 = vsel %vm4785, %v4749, -inf
    %v4829 = vsel %vm4785, %v4751, -inf
    %v4830 = vmax.f32 %v4828, %v4829
    %v4831 = vsel %vm4785, %v4750, -inf
    %v4832 = vsel %vm4785, %v4752, -inf
    %v4833 = vmax.f32 %v4831, %v4832
    %v4834 = vsel %vm4785, %v4753, -inf
    %v4835 = vsel %vm4785, %v4755, -inf
    %v4836 = vmax.f32 %v4834, %v4835
    %v4837 = vsel %vm4785, %v4754, -inf
    %v4838 = vsel %vm4785, %v4756, -inf
    %v4839 = vmax.f32 %v4837, %v4838
    %v4840 = vsel %vm4785, %v4757, -inf
    %v4841 = vsel %vm4785, %v4759, -inf
    %v4842 = vmax.f32 %v4840, %v4841
    %v4843 = vsel %vm4785, %v4758, -inf
    %v4844 = vsel %vm4785, %v4760, -inf
    %v4845 = vmax.f32 %v4843, %v4844
    %v4846 = vsel %vm4785, %v4761, -inf
    %v4847 = vsel %vm4785, %v4763, -inf
    %v4848 = vmax.f32 %v4846, %v4847
    %v4849 = vsel %vm4785, %v4762, -inf
    %v4850 = vsel %vm4785, %v4764, -inf
    %v4851 = vmax.f32 %v4849, %v4850
    %v4852 = vsel %vm4785, %v4765, -inf
    %v4853 = vsel %vm4785, %v4767, -inf
    %v4854 = vmax.f32 %v4852, %v4853
    %v4855 = vsel %vm4785, %v4766, -inf
    %v4856 = vsel %vm4785, %v4768, -inf
    %v4857 = vmax.f32 %v4855, %v4856
    %v4858 = vsel %vm4785, %v4769, -inf
    %v4859 = vsel %vm4785, %v4771, -inf
    %v4860 = vmax.f32 %v4858, %v4859
    %v4861 = vsel %vm4785, %v4770, -inf
    %v4862 = vsel %vm4785, %v4772, -inf
    %v4863 = vmax.f32 %v4861, %v4862
    %v4864 = vsel %vm4785, %v4773, -inf
    %v4865 = vsel %vm4785, %v4775, -inf
    %v4866 = vmax.f32 %v4864, %v4865
    %v4867 = vsel %vm4785, %v4774, -inf
    %v4868 = vsel %vm4785, %v4776, -inf
    %v4869 = vmax.f32 %v4867, %v4868
    %v4870 = vsel %vm4785, %v4777, -inf
    %v4871 = vsel %vm4785, %v4779, -inf
    %v4872 = vmax.f32 %v4870, %v4871
    %v4873 = vsel %vm4785, %v4778, -inf
    %v4874 = vsel %vm4785, %v4780, -inf
    %v4875 = vmax.f32 %v4873, %v4874
    %v4876 = vsel %vm4785, %v4781, -inf
    %v4877 = vsel %vm4785, %v4783, -inf
    %v4878 = vmax.f32 %v4876, %v4877
    %v4879 = vsel %vm4785, %v4782, -inf
    %v4880 = vsel %vm4785, %v4784, -inf
    %v4881 = vmax.f32 %v4879, %v4880
    %v4914 = vcombine.high %v4788, %v4788
    %v4916 = vunpack.c.l.s4 1983009808
    %v4917 = vunpack.c.0.s8 %v4916
    %v4918 = vlaneseq
    %v4919 = vshrl.u32 %v4918, 7
    %v4920 = vsub.s32 %v4917, %v4919
    %v4921 = vrot.slane %v4788, %v4920
    %v4923 = vunpack.c.l.s4 1983009808
    %v4924 = vunpack.c.0.s8 %v4923
    %v4925 = vlaneseq
    %v4926 = vshrl.u32 %v4925, 7
    %v4927 = vsub.s32 %v4924, %v4926
    %v4928 = vrot.slane %v4914, %v4927
    %v4929 = vcombine.high %v4921, %v4921
    %v4930 = vcombine.high %v4928, %v4928
    %v4931 = vcombine.high %v4791, %v4791
    %v4933 = vunpack.c.l.s4 1983009808
    %v4934 = vunpack.c.0.s8 %v4933
    %v4935 = vlaneseq
    %v4936 = vshrl.u32 %v4935, 7
    %v4937 = vsub.s32 %v4934, %v4936
    %v4938 = vrot.slane %v4791, %v4937
    %v4940 = vunpack.c.l.s4 1983009808
    %v4941 = vunpack.c.0.s8 %v4940
    %v4942 = vlaneseq
    %v4943 = vshrl.u32 %v4942, 7
    %v4944 = vsub.s32 %v4941, %v4943
    %v4945 = vrot.slane %v4931, %v4944
    %v4946 = vcombine.high %v4938, %v4938
    %v4947 = vcombine.high %v4945, %v4945
    %v4948 = vcombine.high %v4794, %v4794
    %v4950 = vunpack.c.l.s4 1983009808
    %v4951 = vunpack.c.0.s8 %v4950
    %v4952 = vlaneseq
    %v4953 = vshrl.u32 %v4952, 7
    %v4954 = vsub.s32 %v4951, %v4953
    %v4955 = vrot.slane %v4794, %v4954
    %v4957 = vunpack.c.l.s4 1983009808
    %v4958 = vunpack.c.0.s8 %v4957
    %v4959 = vlaneseq
    %v4960 = vshrl.u32 %v4959, 7
    %v4961 = vsub.s32 %v4958, %v4960
    %v4962 = vrot.slane %v4948, %v4961
    %v4963 = vcombine.high %v4955, %v4955
    %v4964 = vcombine.high %v4962, %v4962
    %v4965 = vcombine.high %v4797, %v4797
    %v4967 = vunpack.c.l.s4 1983009808
    %v4968 = vunpack.c.0.s8 %v4967
    %v4969 = vlaneseq
    %v4970 = vshrl.u32 %v4969, 7
    %v4971 = vsub.s32 %v4968, %v4970
    %v4972 = vrot.slane %v4797, %v4971
    %v4974 = vunpack.c.l.s4 1983009808
    %v4975 = vunpack.c.0.s8 %v4974
    %v4976 = vlaneseq
    %v4977 = vshrl.u32 %v4976, 7
    %v4978 = vsub.s32 %v4975, %v4977
    %v4979 = vrot.slane %v4965, %v4978
    %v4980 = vcombine.high %v4972, %v4972
    %v4981 = vcombine.high %v4979, %v4979
    %v4982 = vcombine.high %v4800, %v4800
    %v4984 = vunpack.c.l.s4 1983009808
    %v4985 = vunpack.c.0.s8 %v4984
    %v4986 = vlaneseq
    %v4987 = vshrl.u32 %v4986, 7
    %v4988 = vsub.s32 %v4985, %v4987
    %v4989 = vrot.slane %v4800, %v4988
    %v4991 = vunpack.c.l.s4 1983009808
    %v4992 = vunpack.c.0.s8 %v4991
    %v4993 = vlaneseq
    %v4994 = vshrl.u32 %v4993, 7
    %v4995 = vsub.s32 %v4992, %v4994
    %v4996 = vrot.slane %v4982, %v4995
    %v4997 = vcombine.high %v4989, %v4989
    %v4998 = vcombine.high %v4996, %v4996
    %v4999 = vcombine.high %v4803, %v4803
    %v5001 = vunpack.c.l.s4 1983009808
    %v5002 = vunpack.c.0.s8 %v5001
    %v5003 = vlaneseq
    %v5004 = vshrl.u32 %v5003, 7
    %v5005 = vsub.s32 %v5002, %v5004
    %v5006 = vrot.slane %v4803, %v5005
    %v5008 = vunpack.c.l.s4 1983009808
    %v5009 = vunpack.c.0.s8 %v5008
    %v5010 = vlaneseq
    %v5011 = vshrl.u32 %v5010, 7
    %v5012 = vsub.s32 %v5009, %v5011
    %v5013 = vrot.slane %v4999, %v5012
    %v5014 = vcombine.high %v5006, %v5006
    %v5015 = vcombine.high %v5013, %v5013
    %v5016 = vcombine.high %v4806, %v4806
    %v5018 = vunpack.c.l.s4 1983009808
    %v5019 = vunpack.c.0.s8 %v5018
    %v5020 = vlaneseq
    %v5021 = vshrl.u32 %v5020, 7
    %v5022 = vsub.s32 %v5019, %v5021
    %v5023 = vrot.slane %v4806, %v5022
    %v5025 = vunpack.c.l.s4 1983009808
    %v5026 = vunpack.c.0.s8 %v5025
    %v5027 = vlaneseq
    %v5028 = vshrl.u32 %v5027, 7
    %v5029 = vsub.s32 %v5026, %v5028
    %v5030 = vrot.slane %v5016, %v5029
    %v5031 = vcombine.high %v5023, %v5023
    %v5032 = vcombine.high %v5030, %v5030
    %v5033 = vcombine.high %v4809, %v4809
    %v5035 = vunpack.c.l.s4 1983009808
    %v5036 = vunpack.c.0.s8 %v5035
    %v5037 = vlaneseq
    %v5038 = vshrl.u32 %v5037, 7
    %v5039 = vsub.s32 %v5036, %v5038
    %v5040 = vrot.slane %v4809, %v5039
    %v5042 = vunpack.c.l.s4 1983009808
    %v5043 = vunpack.c.0.s8 %v5042
    %v5044 = vlaneseq
    %v5045 = vshrl.u32 %v5044, 7
    %v5046 = vsub.s32 %v5043, %v5045
    %v5047 = vrot.slane %v5033, %v5046
    %v5048 = vcombine.high %v5040, %v5040
    %v5049 = vcombine.high %v5047, %v5047
    %v5050 = vcombine.high %v4812, %v4812
    %v5052 = vunpack.c.l.s4 1983009808
    %v5053 = vunpack.c.0.s8 %v5052
    %v5054 = vlaneseq
    %v5055 = vshrl.u32 %v5054, 7
    %v5056 = vsub.s32 %v5053, %v5055
    %v5057 = vrot.slane %v4812, %v5056
    %v5059 = vunpack.c.l.s4 1983009808
    %v5060 = vunpack.c.0.s8 %v5059
    %v5061 = vlaneseq
    %v5062 = vshrl.u32 %v5061, 7
    %v5063 = vsub.s32 %v5060, %v5062
    %v5064 = vrot.slane %v5050, %v5063
    %v5065 = vcombine.high %v5057, %v5057
    %v5066 = vcombine.high %v5064, %v5064
    %v5067 = vcombine.high %v4815, %v4815
    %v5069 = vunpack.c.l.s4 1983009808
    %v5070 = vunpack.c.0.s8 %v5069
    %v5071 = vlaneseq
    %v5072 = vshrl.u32 %v5071, 7
    %v5073 = vsub.s32 %v5070, %v5072
    %v5074 = vrot.slane %v4815, %v5073
    %v5076 = vunpack.c.l.s4 1983009808
    %v5077 = vunpack.c.0.s8 %v5076
    %v5078 = vlaneseq
    %v5079 = vshrl.u32 %v5078, 7
    %v5080 = vsub.s32 %v5077, %v5079
    %v5081 = vrot.slane %v5067, %v5080
    %v5082 = vcombine.high %v5074, %v5074
    %v5083 = vcombine.high %v5081, %v5081
    %v5084 = vcombine.high %v4818, %v4818
    %v5086 = vunpack.c.l.s4 1983009808
    %v5087 = vunpack.c.0.s8 %v5086
    %v5088 = vlaneseq
    %v5089 = vshrl.u32 %v5088, 7
    %v5090 = vsub.s32 %v5087, %v5089
    %v5091 = vrot.slane %v4818, %v5090
    %v5093 = vunpack.c.l.s4 1983009808
    %v5094 = vunpack.c.0.s8 %v5093
    %v5095 = vlaneseq
    %v5096 = vshrl.u32 %v5095, 7
    %v5097 = vsub.s32 %v5094, %v5096
    %v5098 = vrot.slane %v5084, %v5097
    %v5099 = vcombine.high %v5091, %v5091
    %v5100 = vcombine.high %v5098, %v5098
    %v5101 = vcombine.high %v4821, %v4821
    %v5103 = vunpack.c.l.s4 1983009808
    %v5104 = vunpack.c.0.s8 %v5103
    %v5105 = vlaneseq
    %v5106 = vshrl.u32 %v5105, 7
    %v5107 = vsub.s32 %v5104, %v5106
    %v5108 = vrot.slane %v4821, %v5107
    %v5110 = vunpack.c.l.s4 1983009808
    %v5111 = vunpack.c.0.s8 %v5110
    %v5112 = vlaneseq
    %v5113 = vshrl.u32 %v5112, 7
    %v5114 = vsub.s32 %v5111, %v5113
    %v5115 = vrot.slane %v5101, %v5114
    %v5116 = vcombine.high %v5108, %v5108
    %v5117 = vcombine.high %v5115, %v5115
    %v5118 = vcombine.high %v4824, %v4824
    %v5120 = vunpack.c.l.s4 1983009808
    %v5121 = vunpack.c.0.s8 %v5120
    %v5122 = vlaneseq
    %v5123 = vshrl.u32 %v5122, 7
    %v5124 = vsub.s32 %v5121, %v5123
    %v5125 = vrot.slane %v4824, %v5124
    %v5127 = vunpack.c.l.s4 1983009808
    %v5128 = vunpack.c.0.s8 %v5127
    %v5129 = vlaneseq
    %v5130 = vshrl.u32 %v5129, 7
    %v5131 = vsub.s32 %v5128, %v5130
    %v5132 = vrot.slane %v5118, %v5131
    %v5133 = vcombine.high %v5125, %v5125
    %v5134 = vcombine.high %v5132, %v5132
    %v5135 = vcombine.high %v4827, %v4827
    %v5137 = vunpack.c.l.s4 1983009808
    %v5138 = vunpack.c.0.s8 %v5137
    %v5139 = vlaneseq
    %v5140 = vshrl.u32 %v5139, 7
    %v5141 = vsub.s32 %v5138, %v5140
    %v5142 = vrot.slane %v4827, %v5141
    %v5144 = vunpack.c.l.s4 1983009808
    %v5145 = vunpack.c.0.s8 %v5144
    %v5146 = vlaneseq
    %v5147 = vshrl.u32 %v5146, 7
    %v5148 = vsub.s32 %v5145, %v5147
    %v5149 = vrot.slane %v5135, %v5148
    %v5150 = vcombine.high %v5142, %v5142
    %v5151 = vcombine.high %v5149, %v5149
    %v5152 = vcombine.high %v4830, %v4830
    %v5154 = vunpack.c.l.s4 1983009808
    %v5155 = vunpack.c.0.s8 %v5154
    %v5156 = vlaneseq
    %v5157 = vshrl.u32 %v5156, 7
    %v5158 = vsub.s32 %v5155, %v5157
    %v5159 = vrot.slane %v4830, %v5158
    %v5161 = vunpack.c.l.s4 1983009808
    %v5162 = vunpack.c.0.s8 %v5161
    %v5163 = vlaneseq
    %v5164 = vshrl.u32 %v5163, 7
    %v5165 = vsub.s32 %v5162, %v5164
    %v5166 = vrot.slane %v5152, %v5165
    %v5167 = vcombine.high %v5159, %v5159
    %v5168 = vcombine.high %v5166, %v5166
    %v5169 = vcombine.high %v4833, %v4833
    %v5171 = vunpack.c.l.s4 1983009808
    %v5172 = vunpack.c.0.s8 %v5171
    %v5173 = vlaneseq
    %v5174 = vshrl.u32 %v5173, 7
    %v5175 = vsub.s32 %v5172, %v5174
    %v5176 = vrot.slane %v4833, %v5175
    %v5178 = vunpack.c.l.s4 1983009808
    %v5179 = vunpack.c.0.s8 %v5178
    %v5180 = vlaneseq
    %v5181 = vshrl.u32 %v5180, 7
    %v5182 = vsub.s32 %v5179, %v5181
    %v5183 = vrot.slane %v5169, %v5182
    %v5184 = vcombine.high %v5176, %v5176
    %v5185 = vcombine.high %v5183, %v5183
    %v5186 = vcombine.high %v4836, %v4836
    %v5188 = vunpack.c.l.s4 1983009808
    %v5189 = vunpack.c.0.s8 %v5188
    %v5190 = vlaneseq
    %v5191 = vshrl.u32 %v5190, 7
    %v5192 = vsub.s32 %v5189, %v5191
    %v5193 = vrot.slane %v4836, %v5192
    %v5195 = vunpack.c.l.s4 1983009808
    %v5196 = vunpack.c.0.s8 %v5195
    %v5197 = vlaneseq
    %v5198 = vshrl.u32 %v5197, 7
    %v5199 = vsub.s32 %v5196, %v5198
    %v5200 = vrot.slane %v5186, %v5199
    %v5201 = vcombine.high %v5193, %v5193
    %v5202 = vcombine.high %v5200, %v5200
    %v5203 = vcombine.high %v4839, %v4839
    %v5205 = vunpack.c.l.s4 1983009808
    %v5206 = vunpack.c.0.s8 %v5205
    %v5207 = vlaneseq
    %v5208 = vshrl.u32 %v5207, 7
    %v5209 = vsub.s32 %v5206, %v5208
    %v5210 = vrot.slane %v4839, %v5209
    %v5212 = vunpack.c.l.s4 1983009808
    %v5213 = vunpack.c.0.s8 %v5212
    %v5214 = vlaneseq
    %v5215 = vshrl.u32 %v5214, 7
    %v5216 = vsub.s32 %v5213, %v5215
    %v5217 = vrot.slane %v5203, %v5216
    %v5218 = vcombine.high %v5210, %v5210
    %v5219 = vcombine.high %v5217, %v5217
    %v5220 = vcombine.high %v4842, %v4842
    %v5222 = vunpack.c.l.s4 1983009808
    %v5223 = vunpack.c.0.s8 %v5222
    %v5224 = vlaneseq
    %v5225 = vshrl.u32 %v5224, 7
    %v5226 = vsub.s32 %v5223, %v5225
    %v5227 = vrot.slane %v4842, %v5226
    %v5229 = vunpack.c.l.s4 1983009808
    %v5230 = vunpack.c.0.s8 %v5229
    %v5231 = vlaneseq
    %v5232 = vshrl.u32 %v5231, 7
    %v5233 = vsub.s32 %v5230, %v5232
    %v5234 = vrot.slane %v5220, %v5233
    %v5235 = vcombine.high %v5227, %v5227
    %v5236 = vcombine.high %v5234, %v5234
    %v5237 = vcombine.high %v4845, %v4845
    %v5239 = vunpack.c.l.s4 1983009808
    %v5240 = vunpack.c.0.s8 %v5239
    %v5241 = vlaneseq
    %v5242 = vshrl.u32 %v5241, 7
    %v5243 = vsub.s32 %v5240, %v5242
    %v5244 = vrot.slane %v4845, %v5243
    %v5246 = vunpack.c.l.s4 1983009808
    %v5247 = vunpack.c.0.s8 %v5246
    %v5248 = vlaneseq
    %v5249 = vshrl.u32 %v5248, 7
    %v5250 = vsub.s32 %v5247, %v5249
    %v5251 = vrot.slane %v5237, %v5250
    %v5252 = vcombine.high %v5244, %v5244
    %v5253 = vcombine.high %v5251, %v5251
    %v5254 = vcombine.high %v4848, %v4848
    %v5256 = vunpack.c.l.s4 1983009808
    %v5257 = vunpack.c.0.s8 %v5256
    %v5258 = vlaneseq
    %v5259 = vshrl.u32 %v5258, 7
    %v5260 = vsub.s32 %v5257, %v5259
    %v5261 = vrot.slane %v4848, %v5260
    %v5263 = vunpack.c.l.s4 1983009808
    %v5264 = vunpack.c.0.s8 %v5263
    %v5265 = vlaneseq
    %v5266 = vshrl.u32 %v5265, 7
    %v5267 = vsub.s32 %v5264, %v5266
    %v5268 = vrot.slane %v5254, %v5267
    %v5269 = vcombine.high %v5261, %v5261
    %v5270 = vcombine.high %v5268, %v5268
    %v5271 = vcombine.high %v4851, %v4851
    %v5273 = vunpack.c.l.s4 1983009808
    %v5274 = vunpack.c.0.s8 %v5273
    %v5275 = vlaneseq
    %v5276 = vshrl.u32 %v5275, 7
    %v5277 = vsub.s32 %v5274, %v5276
    %v5278 = vrot.slane %v4851, %v5277
    %v5280 = vunpack.c.l.s4 1983009808
    %v5281 = vunpack.c.0.s8 %v5280
    %v5282 = vlaneseq
    %v5283 = vshrl.u32 %v5282, 7
    %v5284 = vsub.s32 %v5281, %v5283
    %v5285 = vrot.slane %v5271, %v5284
    %v5286 = vcombine.high %v5278, %v5278
    %v5287 = vcombine.high %v5285, %v5285
    %v5288 = vcombine.high %v4854, %v4854
    %v5290 = vunpack.c.l.s4 1983009808
    %v5291 = vunpack.c.0.s8 %v5290
    %v5292 = vlaneseq
    %v5293 = vshrl.u32 %v5292, 7
    %v5294 = vsub.s32 %v5291, %v5293
    %v5295 = vrot.slane %v4854, %v5294
    %v5297 = vunpack.c.l.s4 1983009808
    %v5298 = vunpack.c.0.s8 %v5297
    %v5299 = vlaneseq
    %v5300 = vshrl.u32 %v5299, 7
    %v5301 = vsub.s32 %v5298, %v5300
    %v5302 = vrot.slane %v5288, %v5301
    %v5303 = vcombine.high %v5295, %v5295
    %v5304 = vcombine.high %v5302, %v5302
    %v5305 = vcombine.high %v4857, %v4857
    %v5307 = vunpack.c.l.s4 1983009808
    %v5308 = vunpack.c.0.s8 %v5307
    %v5309 = vlaneseq
    %v5310 = vshrl.u32 %v5309, 7
    %v5311 = vsub.s32 %v5308, %v5310
    %v5312 = vrot.slane %v4857, %v5311
    %v5314 = vunpack.c.l.s4 1983009808
    %v5315 = vunpack.c.0.s8 %v5314
    %v5316 = vlaneseq
    %v5317 = vshrl.u32 %v5316, 7
    %v5318 = vsub.s32 %v5315, %v5317
    %v5319 = vrot.slane %v5305, %v5318
    %v5320 = vcombine.high %v5312, %v5312
    %v5321 = vcombine.high %v5319, %v5319
    %v5322 = vcombine.high %v4860, %v4860
    %v5324 = vunpack.c.l.s4 1983009808
    %v5325 = vunpack.c.0.s8 %v5324
    %v5326 = vlaneseq
    %v5327 = vshrl.u32 %v5326, 7
    %v5328 = vsub.s32 %v5325, %v5327
    %v5329 = vrot.slane %v4860, %v5328
    %v5331 = vunpack.c.l.s4 1983009808
    %v5332 = vunpack.c.0.s8 %v5331
    %v5333 = vlaneseq
    %v5334 = vshrl.u32 %v5333, 7
    %v5335 = vsub.s32 %v5332, %v5334
    %v5336 = vrot.slane %v5322, %v5335
    %v5337 = vcombine.high %v5329, %v5329
    %v5338 = vcombine.high %v5336, %v5336
    %v5339 = vcombine.high %v4863, %v4863
    %v5341 = vunpack.c.l.s4 1983009808
    %v5342 = vunpack.c.0.s8 %v5341
    %v5343 = vlaneseq
    %v5344 = vshrl.u32 %v5343, 7
    %v5345 = vsub.s32 %v5342, %v5344
    %v5346 = vrot.slane %v4863, %v5345
    %v5348 = vunpack.c.l.s4 1983009808
    %v5349 = vunpack.c.0.s8 %v5348
    %v5350 = vlaneseq
    %v5351 = vshrl.u32 %v5350, 7
    %v5352 = vsub.s32 %v5349, %v5351
    %v5353 = vrot.slane %v5339, %v5352
    %v5354 = vcombine.high %v5346, %v5346
    %v5355 = vcombine.high %v5353, %v5353
    %v5356 = vcombine.high %v4866, %v4866
    %v5358 = vunpack.c.l.s4 1983009808
    %v5359 = vunpack.c.0.s8 %v5358
    %v5360 = vlaneseq
    %v5361 = vshrl.u32 %v5360, 7
    %v5362 = vsub.s32 %v5359, %v5361
    %v5363 = vrot.slane %v4866, %v5362
    %v5365 = vunpack.c.l.s4 1983009808
    %v5366 = vunpack.c.0.s8 %v5365
    %v5367 = vlaneseq
    %v5368 = vshrl.u32 %v5367, 7
    %v5369 = vsub.s32 %v5366, %v5368
    %v5370 = vrot.slane %v5356, %v5369
    %v5371 = vcombine.high %v5363, %v5363
    %v5372 = vcombine.high %v5370, %v5370
    %v5373 = vcombine.high %v4869, %v4869
    %v5375 = vunpack.c.l.s4 1983009808
    %v5376 = vunpack.c.0.s8 %v5375
    %v5377 = vlaneseq
    %v5378 = vshrl.u32 %v5377, 7
    %v5379 = vsub.s32 %v5376, %v5378
    %v5380 = vrot.slane %v4869, %v5379
    %v5382 = vunpack.c.l.s4 1983009808
    %v5383 = vunpack.c.0.s8 %v5382
    %v5384 = vlaneseq
    %v5385 = vshrl.u32 %v5384, 7
    %v5386 = vsub.s32 %v5383, %v5385
    %v5387 = vrot.slane %v5373, %v5386
    %v5388 = vcombine.high %v5380, %v5380
    %v5389 = vcombine.high %v5387, %v5387
    %v5390 = vcombine.high %v4872, %v4872
    %v5392 = vunpack.c.l.s4 1983009808
    %v5393 = vunpack.c.0.s8 %v5392
    %v5394 = vlaneseq
    %v5395 = vshrl.u32 %v5394, 7
    %v5396 = vsub.s32 %v5393, %v5395
    %v5397 = vrot.slane %v4872, %v5396
    %v5399 = vunpack.c.l.s4 1983009808
    %v5400 = vunpack.c.0.s8 %v5399
    %v5401 = vlaneseq
    %v5402 = vshrl.u32 %v5401, 7
    %v5403 = vsub.s32 %v5400, %v5402
    %v5404 = vrot.slane %v5390, %v5403
    %v5405 = vcombine.high %v5397, %v5397
    %v5406 = vcombine.high %v5404, %v5404
    %v5407 = vcombine.high %v4875, %v4875
    %v5409 = vunpack.c.l.s4 1983009808
    %v5410 = vunpack.c.0.s8 %v5409
    %v5411 = vlaneseq
    %v5412 = vshrl.u32 %v5411, 7
    %v5413 = vsub.s32 %v5410, %v5412
    %v5414 = vrot.slane %v4875, %v5413
    %v5416 = vunpack.c.l.s4 1983009808
    %v5417 = vunpack.c.0.s8 %v5416
    %v5418 = vlaneseq
    %v5419 = vshrl.u32 %v5418, 7
    %v5420 = vsub.s32 %v5417, %v5419
    %v5421 = vrot.slane %v5407, %v5420
    %v5422 = vcombine.high %v5414, %v5414
    %v5423 = vcombine.high %v5421, %v5421
    %v5424 = vcombine.high %v4878, %v4878
    %v5426 = vunpack.c.l.s4 1983009808
    %v5427 = vunpack.c.0.s8 %v5426
    %v5428 = vlaneseq
    %v5429 = vshrl.u32 %v5428, 7
    %v5430 = vsub.s32 %v5427, %v5429
    %v5431 = vrot.slane %v4878, %v5430
    %v5433 = vunpack.c.l.s4 1983009808
    %v5434 = vunpack.c.0.s8 %v5433
    %v5435 = vlaneseq
    %v5436 = vshrl.u32 %v5435, 7
    %v5437 = vsub.s32 %v5434, %v5436
    %v5438 = vrot.slane %v5424, %v5437
    %v5439 = vcombine.high %v5431, %v5431
    %v5440 = vcombine.high %v5438, %v5438
    %v5441 = vcombine.high %v4881, %v4881
    %v5443 = vunpack.c.l.s4 1983009808
    %v5444 = vunpack.c.0.s8 %v5443
    %v5445 = vlaneseq
    %v5446 = vshrl.u32 %v5445, 7
    %v5447 = vsub.s32 %v5444, %v5446
    %v5448 = vrot.slane %v4881, %v5447
    %v5450 = vunpack.c.l.s4 1983009808
    %v5451 = vunpack.c.0.s8 %v5450
    %v5452 = vlaneseq
    %v5453 = vshrl.u32 %v5452, 7
    %v5454 = vsub.s32 %v5451, %v5453
    %v5455 = vrot.slane %v5441, %v5454
    %v5456 = vcombine.high %v5448, %v5448
    %v5457 = vcombine.high %v5455, %v5455
    %vm5586 = vcmask 123904
    %v5587 = vsel %vm5586, %v4921, -inf
    %v5588 = vrot.slane %v5587, 4
    %v5589 = vmax.f32 %v5587, %v5588
    %v5590 = vrot.slane %v5589, 2
    %v5591 = vmax.f32 %v5589, %v5590
    %v5592 = vrot.slane %v5591, 1
    %v5593 = vmax.f32 %v5591, %v5592
    %v5594 = vsel %vm5586, %v4929, -inf
    %v5595 = vrot.slane %v5594, 4
    %v5596 = vmax.f32 %v5594, %v5595
    %v5597 = vrot.slane %v5596, 2
    %v5598 = vmax.f32 %v5596, %v5597
    %v5599 = vrot.slane %v5598, 1
    %v5600 = vmax.f32 %v5598, %v5599
    %v5601 = vsel %vm5586, %v4928, -inf
    %v5602 = vrot.slane %v5601, 4
    %v5603 = vmax.f32 %v5601, %v5602
    %v5604 = vrot.slane %v5603, 2
    %v5605 = vmax.f32 %v5603, %v5604
    %v5606 = vrot.slane %v5605, 1
    %v5607 = vmax.f32 %v5605, %v5606
    %v5608 = vsel %vm5586, %v4930, -inf
    %v5609 = vrot.slane %v5608, 4
    %v5610 = vmax.f32 %v5608, %v5609
    %v5611 = vrot.slane %v5610, 2
    %v5612 = vmax.f32 %v5610, %v5611
    %v5613 = vrot.slane %v5612, 1
    %v5614 = vmax.f32 %v5612, %v5613
    %v5615 = vsel %vm5586, %v4938, -inf
    %v5616 = vrot.slane %v5615, 4
    %v5617 = vmax.f32 %v5615, %v5616
    %v5618 = vrot.slane %v5617, 2
    %v5619 = vmax.f32 %v5617, %v5618
    %v5620 = vrot.slane %v5619, 1
    %v5621 = vmax.f32 %v5619, %v5620
    %v5622 = vsel %vm5586, %v4946, -inf
    %v5623 = vrot.slane %v5622, 4
    %v5624 = vmax.f32 %v5622, %v5623
    %v5625 = vrot.slane %v5624, 2
    %v5626 = vmax.f32 %v5624, %v5625
    %v5627 = vrot.slane %v5626, 1
    %v5628 = vmax.f32 %v5626, %v5627
    %v5629 = vsel %vm5586, %v4945, -inf
    %v5630 = vrot.slane %v5629, 4
    %v5631 = vmax.f32 %v5629, %v5630
    %v5632 = vrot.slane %v5631, 2
    %v5633 = vmax.f32 %v5631, %v5632
    %v5634 = vrot.slane %v5633, 1
    %v5635 = vmax.f32 %v5633, %v5634
    %v5636 = vsel %vm5586, %v4947, -inf
    %v5637 = vrot.slane %v5636, 4
    %v5638 = vmax.f32 %v5636, %v5637
    %v5639 = vrot.slane %v5638, 2
    %v5640 = vmax.f32 %v5638, %v5639
    %v5641 = vrot.slane %v5640, 1
    %v5642 = vmax.f32 %v5640, %v5641
    %v5643 = vsel %vm5586, %v4955, -inf
    %v5644 = vrot.slane %v5643, 4
    %v5645 = vmax.f32 %v5643, %v5644
    %v5646 = vrot.slane %v5645, 2
    %v5647 = vmax.f32 %v5645, %v5646
    %v5648 = vrot.slane %v5647, 1
    %v5649 = vmax.f32 %v5647, %v5648
    %v5650 = vsel %vm5586, %v4963, -inf
    %v5651 = vrot.slane %v5650, 4
    %v5652 = vmax.f32 %v5650, %v5651
    %v5653 = vrot.slane %v5652, 2
    %v5654 = vmax.f32 %v5652, %v5653
    %v5655 = vrot.slane %v5654, 1
    %v5656 = vmax.f32 %v5654, %v5655
    %v5657 = vsel %vm5586, %v4962, -inf
    %v5658 = vrot.slane %v5657, 4
    %v5659 = vmax.f32 %v5657, %v5658
    %v5660 = vrot.slane %v5659, 2
    %v5661 = vmax.f32 %v5659, %v5660
    %v5662 = vrot.slane %v5661, 1
    %v5663 = vmax.f32 %v5661, %v5662
    %v5664 = vsel %vm5586, %v4964, -inf
    %v5665 = vrot.slane %v5664, 4
    %v5666 = vmax.f32 %v5664, %v5665
    %v5667 = vrot.slane %v5666, 2
    %v5668 = vmax.f32 %v5666, %v5667
    %v5669 = vrot.slane %v5668, 1
    %v5670 = vmax.f32 %v5668, %v5669
    %v5671 = vsel %vm5586, %v4972, -inf
    %v5672 = vrot.slane %v5671, 4
    %v5673 = vmax.f32 %v5671, %v5672
    %v5674 = vrot.slane %v5673, 2
    %v5675 = vmax.f32 %v5673, %v5674
    %v5676 = vrot.slane %v5675, 1
    %v5677 = vmax.f32 %v5675, %v5676
    %v5678 = vsel %vm5586, %v4980, -inf
    %v5679 = vrot.slane %v5678, 4
    %v5680 = vmax.f32 %v5678, %v5679
    %v5681 = vrot.slane %v5680, 2
    %v5682 = vmax.f32 %v5680, %v5681
    %v5683 = vrot.slane %v5682, 1
    %v5684 = vmax.f32 %v5682, %v5683
    %v5685 = vsel %vm5586, %v4979, -inf
    %v5686 = vrot.slane %v5685, 4
    %v5687 = vmax.f32 %v5685, %v5686
    %v5688 = vrot.slane %v5687, 2
    %v5689 = vmax.f32 %v5687, %v5688
    %v5690 = vrot.slane %v5689, 1
    %v5691 = vmax.f32 %v5689, %v5690
    %v5692 = vsel %vm5586, %v4981, -inf
    %v5693 = vrot.slane %v5692, 4
    %v5694 = vmax.f32 %v5692, %v5693
    %v5695 = vrot.slane %v5694, 2
    %v5696 = vmax.f32 %v5694, %v5695
    %v5697 = vrot.slane %v5696, 1
    %v5698 = vmax.f32 %v5696, %v5697
    %v5699 = vsel %vm5586, %v4989, -inf
    %v5700 = vrot.slane %v5699, 4
    %v5701 = vmax.f32 %v5699, %v5700
    %v5702 = vrot.slane %v5701, 2
    %v5703 = vmax.f32 %v5701, %v5702
    %v5704 = vrot.slane %v5703, 1
    %v5705 = vmax.f32 %v5703, %v5704
    %v5706 = vsel %vm5586, %v4997, -inf
    %v5707 = vrot.slane %v5706, 4
    %v5708 = vmax.f32 %v5706, %v5707
    %v5709 = vrot.slane %v5708, 2
    %v5710 = vmax.f32 %v5708, %v5709
    %v5711 = vrot.slane %v5710, 1
    %v5712 = vmax.f32 %v5710, %v5711
    %v5713 = vsel %vm5586, %v4996, -inf
    %v5714 = vrot.slane %v5713, 4
    %v5715 = vmax.f32 %v5713, %v5714
    %v5716 = vrot.slane %v5715, 2
    %v5717 = vmax.f32 %v5715, %v5716
    %v5718 = vrot.slane %v5717, 1
    %v5719 = vmax.f32 %v5717, %v5718
    %v5720 = vsel %vm5586, %v4998, -inf
    %v5721 = vrot.slane %v5720, 4
    %v5722 = vmax.f32 %v5720, %v5721
    %v5723 = vrot.slane %v5722, 2
    %v5724 = vmax.f32 %v5722, %v5723
    %v5725 = vrot.slane %v5724, 1
    %v5726 = vmax.f32 %v5724, %v5725
    %v5727 = vsel %vm5586, %v5006, -inf
    %v5728 = vrot.slane %v5727, 4
    %v5729 = vmax.f32 %v5727, %v5728
    %v5730 = vrot.slane %v5729, 2
    %v5731 = vmax.f32 %v5729, %v5730
    %v5732 = vrot.slane %v5731, 1
    %v5733 = vmax.f32 %v5731, %v5732
    %v5734 = vsel %vm5586, %v5014, -inf
    %v5735 = vrot.slane %v5734, 4
    %v5736 = vmax.f32 %v5734, %v5735
    %v5737 = vrot.slane %v5736, 2
    %v5738 = vmax.f32 %v5736, %v5737
    %v5739 = vrot.slane %v5738, 1
    %v5740 = vmax.f32 %v5738, %v5739
    %v5741 = vsel %vm5586, %v5013, -inf
    %v5742 = vrot.slane %v5741, 4
    %v5743 = vmax.f32 %v5741, %v5742
    %v5744 = vrot.slane %v5743, 2
    %v5745 = vmax.f32 %v5743, %v5744
    %v5746 = vrot.slane %v5745, 1
    %v5747 = vmax.f32 %v5745, %v5746
    %v5748 = vsel %vm5586, %v5015, -inf
    %v5749 = vrot.slane %v5748, 4
    %v5750 = vmax.f32 %v5748, %v5749
    %v5751 = vrot.slane %v5750, 2
    %v5752 = vmax.f32 %v5750, %v5751
    %v5753 = vrot.slane %v5752, 1
    %v5754 = vmax.f32 %v5752, %v5753
    %v5755 = vsel %vm5586, %v5023, -inf
    %v5756 = vrot.slane %v5755, 4
    %v5757 = vmax.f32 %v5755, %v5756
    %v5758 = vrot.slane %v5757, 2
    %v5759 = vmax.f32 %v5757, %v5758
    %v5760 = vrot.slane %v5759, 1
    %v5761 = vmax.f32 %v5759, %v5760
    %v5762 = vsel %vm5586, %v5031, -inf
    %v5763 = vrot.slane %v5762, 4
    %v5764 = vmax.f32 %v5762, %v5763
    %v5765 = vrot.slane %v5764, 2
    %v5766 = vmax.f32 %v5764, %v5765
    %v5767 = vrot.slane %v5766, 1
    %v5768 = vmax.f32 %v5766, %v5767
    %v5769 = vsel %vm5586, %v5030, -inf
    %v5770 = vrot.slane %v5769, 4
    %v5771 = vmax.f32 %v5769, %v5770
    %v5772 = vrot.slane %v5771, 2
    %v5773 = vmax.f32 %v5771, %v5772
    %v5774 = vrot.slane %v5773, 1
    %v5775 = vmax.f32 %v5773, %v5774
    %v5776 = vsel %vm5586, %v5032, -inf
    %v5777 = vrot.slane %v5776, 4
    %v5778 = vmax.f32 %v5776, %v5777
    %v5779 = vrot.slane %v5778, 2
    %v5780 = vmax.f32 %v5778, %v5779
    %v5781 = vrot.slane %v5780, 1
    %v5782 = vmax.f32 %v5780, %v5781
    %v5783 = vsel %vm5586, %v5040, -inf
    %v5784 = vrot.slane %v5783, 4
    %v5785 = vmax.f32 %v5783, %v5784
    %v5786 = vrot.slane %v5785, 2
    %v5787 = vmax.f32 %v5785, %v5786
    %v5788 = vrot.slane %v5787, 1
    %v5789 = vmax.f32 %v5787, %v5788
    %v5790 = vsel %vm5586, %v5048, -inf
    %v5791 = vrot.slane %v5790, 4
    %v5792 = vmax.f32 %v5790, %v5791
    %v5793 = vrot.slane %v5792, 2
    %v5794 = vmax.f32 %v5792, %v5793
    %v5795 = vrot.slane %v5794, 1
    %v5796 = vmax.f32 %v5794, %v5795
    %v5797 = vsel %vm5586, %v5047, -inf
    %v5798 = vrot.slane %v5797, 4
    %v5799 = vmax.f32 %v5797, %v5798
    %v5800 = vrot.slane %v5799, 2
    %v5801 = vmax.f32 %v5799, %v5800
    %v5802 = vrot.slane %v5801, 1
    %v5803 = vmax.f32 %v5801, %v5802
    %v5804 = vsel %vm5586, %v5049, -inf
    %v5805 = vrot.slane %v5804, 4
    %v5806 = vmax.f32 %v5804, %v5805
    %v5807 = vrot.slane %v5806, 2
    %v5808 = vmax.f32 %v5806, %v5807
    %v5809 = vrot.slane %v5808, 1
    %v5810 = vmax.f32 %v5808, %v5809
    %v5811 = vsel %vm5586, %v5057, -inf
    %v5812 = vrot.slane %v5811, 4
    %v5813 = vmax.f32 %v5811, %v5812
    %v5814 = vrot.slane %v5813, 2
    %v5815 = vmax.f32 %v5813, %v5814
    %v5816 = vrot.slane %v5815, 1
    %v5817 = vmax.f32 %v5815, %v5816
    %v5818 = vsel %vm5586, %v5065, -inf
    %v5819 = vrot.slane %v5818, 4
    %v5820 = vmax.f32 %v5818, %v5819
    %v5821 = vrot.slane %v5820, 2
    %v5822 = vmax.f32 %v5820, %v5821
    %v5823 = vrot.slane %v5822, 1
    %v5824 = vmax.f32 %v5822, %v5823
    %v5825 = vsel %vm5586, %v5064, -inf
    %v5826 = vrot.slane %v5825, 4
    %v5827 = vmax.f32 %v5825, %v5826
    %v5828 = vrot.slane %v5827, 2
    %v5829 = vmax.f32 %v5827, %v5828
    %v5830 = vrot.slane %v5829, 1
    %v5831 = vmax.f32 %v5829, %v5830
    %v5832 = vsel %vm5586, %v5066, -inf
    %v5833 = vrot.slane %v5832, 4
    %v5834 = vmax.f32 %v5832, %v5833
    %v5835 = vrot.slane %v5834, 2
    %v5836 = vmax.f32 %v5834, %v5835
    %v5837 = vrot.slane %v5836, 1
    %v5838 = vmax.f32 %v5836, %v5837
    %v5839 = vsel %vm5586, %v5074, -inf
    %v5840 = vrot.slane %v5839, 4
    %v5841 = vmax.f32 %v5839, %v5840
    %v5842 = vrot.slane %v5841, 2
    %v5843 = vmax.f32 %v5841, %v5842
    %v5844 = vrot.slane %v5843, 1
    %v5845 = vmax.f32 %v5843, %v5844
    %v5846 = vsel %vm5586, %v5082, -inf
    %v5847 = vrot.slane %v5846, 4
    %v5848 = vmax.f32 %v5846, %v5847
    %v5849 = vrot.slane %v5848, 2
    %v5850 = vmax.f32 %v5848, %v5849
    %v5851 = vrot.slane %v5850, 1
    %v5852 = vmax.f32 %v5850, %v5851
    %v5853 = vsel %vm5586, %v5081, -inf
    %v5854 = vrot.slane %v5853, 4
    %v5855 = vmax.f32 %v5853, %v5854
    %v5856 = vrot.slane %v5855, 2
    %v5857 = vmax.f32 %v5855, %v5856
    %v5858 = vrot.slane %v5857, 1
    %v5859 = vmax.f32 %v5857, %v5858
    %v5860 = vsel %vm5586, %v5083, -inf
    %v5861 = vrot.slane %v5860, 4
    %v5862 = vmax.f32 %v5860, %v5861
    %v5863 = vrot.slane %v5862, 2
    %v5864 = vmax.f32 %v5862, %v5863
    %v5865 = vrot.slane %v5864, 1
    %v5866 = vmax.f32 %v5864, %v5865
    %v5867 = vsel %vm5586, %v5091, -inf
    %v5868 = vrot.slane %v5867, 4
    %v5869 = vmax.f32 %v5867, %v5868
    %v5870 = vrot.slane %v5869, 2
    %v5871 = vmax.f32 %v5869, %v5870
    %v5872 = vrot.slane %v5871, 1
    %v5873 = vmax.f32 %v5871, %v5872
    %v5874 = vsel %vm5586, %v5099, -inf
    %v5875 = vrot.slane %v5874, 4
    %v5876 = vmax.f32 %v5874, %v5875
    %v5877 = vrot.slane %v5876, 2
    %v5878 = vmax.f32 %v5876, %v5877
    %v5879 = vrot.slane %v5878, 1
    %v5880 = vmax.f32 %v5878, %v5879
    %v5881 = vsel %vm5586, %v5098, -inf
    %v5882 = vrot.slane %v5881, 4
    %v5883 = vmax.f32 %v5881, %v5882
    %v5884 = vrot.slane %v5883, 2
    %v5885 = vmax.f32 %v5883, %v5884
    %v5886 = vrot.slane %v5885, 1
    %v5887 = vmax.f32 %v5885, %v5886
    %v5888 = vsel %vm5586, %v5100, -inf
    %v5889 = vrot.slane %v5888, 4
    %v5890 = vmax.f32 %v5888, %v5889
    %v5891 = vrot.slane %v5890, 2
    %v5892 = vmax.f32 %v5890, %v5891
    %v5893 = vrot.slane %v5892, 1
    %v5894 = vmax.f32 %v5892, %v5893
    %v5895 = vsel %vm5586, %v5108, -inf
    %v5896 = vrot.slane %v5895, 4
    %v5897 = vmax.f32 %v5895, %v5896
    %v5898 = vrot.slane %v5897, 2
    %v5899 = vmax.f32 %v5897, %v5898
    %v5900 = vrot.slane %v5899, 1
    %v5901 = vmax.f32 %v5899, %v5900
    %v5902 = vsel %vm5586, %v5116, -inf
    %v5903 = vrot.slane %v5902, 4
    %v5904 = vmax.f32 %v5902, %v5903
    %v5905 = vrot.slane %v5904, 2
    %v5906 = vmax.f32 %v5904, %v5905
    %v5907 = vrot.slane %v5906, 1
    %v5908 = vmax.f32 %v5906, %v5907
    %v5909 = vsel %vm5586, %v5115, -inf
    %v5910 = vrot.slane %v5909, 4
    %v5911 = vmax.f32 %v5909, %v5910
    %v5912 = vrot.slane %v5911, 2
    %v5913 = vmax.f32 %v5911, %v5912
    %v5914 = vrot.slane %v5913, 1
    %v5915 = vmax.f32 %v5913, %v5914
    %v5916 = vsel %vm5586, %v5117, -inf
    %v5917 = vrot.slane %v5916, 4
    %v5918 = vmax.f32 %v5916, %v5917
    %v5919 = vrot.slane %v5918, 2
    %v5920 = vmax.f32 %v5918, %v5919
    %v5921 = vrot.slane %v5920, 1
    %v5922 = vmax.f32 %v5920, %v5921
    %v5923 = vsel %vm5586, %v5125, -inf
    %v5924 = vrot.slane %v5923, 4
    %v5925 = vmax.f32 %v5923, %v5924
    %v5926 = vrot.slane %v5925, 2
    %v5927 = vmax.f32 %v5925, %v5926
    %v5928 = vrot.slane %v5927, 1
    %v5929 = vmax.f32 %v5927, %v5928
    %v5930 = vsel %vm5586, %v5133, -inf
    %v5931 = vrot.slane %v5930, 4
    %v5932 = vmax.f32 %v5930, %v5931
    %v5933 = vrot.slane %v5932, 2
    %v5934 = vmax.f32 %v5932, %v5933
    %v5935 = vrot.slane %v5934, 1
    %v5936 = vmax.f32 %v5934, %v5935
    %v5937 = vsel %vm5586, %v5132, -inf
    %v5938 = vrot.slane %v5937, 4
    %v5939 = vmax.f32 %v5937, %v5938
    %v5940 = vrot.slane %v5939, 2
    %v5941 = vmax.f32 %v5939, %v5940
    %v5942 = vrot.slane %v5941, 1
    %v5943 = vmax.f32 %v5941, %v5942
    %v5944 = vsel %vm5586, %v5134, -inf
    %v5945 = vrot.slane %v5944, 4
    %v5946 = vmax.f32 %v5944, %v5945
    %v5947 = vrot.slane %v5946, 2
    %v5948 = vmax.f32 %v5946, %v5947
    %v5949 = vrot.slane %v5948, 1
    %v5950 = vmax.f32 %v5948, %v5949
    %v5951 = vsel %vm5586, %v5142, -inf
    %v5952 = vrot.slane %v5951, 4
    %v5953 = vmax.f32 %v5951, %v5952
    %v5954 = vrot.slane %v5953, 2
    %v5955 = vmax.f32 %v5953, %v5954
    %v5956 = vrot.slane %v5955, 1
    %v5957 = vmax.f32 %v5955, %v5956
    %v5958 = vsel %vm5586, %v5150, -inf
    %v5959 = vrot.slane %v5958, 4
    %v5960 = vmax.f32 %v5958, %v5959
    %v5961 = vrot.slane %v5960, 2
    %v5962 = vmax.f32 %v5960, %v5961
    %v5963 = vrot.slane %v5962, 1
    %v5964 = vmax.f32 %v5962, %v5963
    %v5965 = vsel %vm5586, %v5149, -inf
    %v5966 = vrot.slane %v5965, 4
    %v5967 = vmax.f32 %v5965, %v5966
    %v5968 = vrot.slane %v5967, 2
    %v5969 = vmax.f32 %v5967, %v5968
    %v5970 = vrot.slane %v5969, 1
    %v5971 = vmax.f32 %v5969, %v5970
    %v5972 = vsel %vm5586, %v5151, -inf
    %v5973 = vrot.slane %v5972, 4
    %v5974 = vmax.f32 %v5972, %v5973
    %v5975 = vrot.slane %v5974, 2
    %v5976 = vmax.f32 %v5974, %v5975
    %v5977 = vrot.slane %v5976, 1
    %v5978 = vmax.f32 %v5976, %v5977
    %v5979 = vsel %vm5586, %v5159, -inf
    %v5980 = vrot.slane %v5979, 4
    %v5981 = vmax.f32 %v5979, %v5980
    %v5982 = vrot.slane %v5981, 2
    %v5983 = vmax.f32 %v5981, %v5982
    %v5984 = vrot.slane %v5983, 1
    %v5985 = vmax.f32 %v5983, %v5984
    %v5986 = vsel %vm5586, %v5167, -inf
    %v5987 = vrot.slane %v5986, 4
    %v5988 = vmax.f32 %v5986, %v5987
    %v5989 = vrot.slane %v5988, 2
    %v5990 = vmax.f32 %v5988, %v5989
    %v5991 = vrot.slane %v5990, 1
    %v5992 = vmax.f32 %v5990, %v5991
    %v5993 = vsel %vm5586, %v5166, -inf
    %v5994 = vrot.slane %v5993, 4
    %v5995 = vmax.f32 %v5993, %v5994
    %v5996 = vrot.slane %v5995, 2
    %v5997 = vmax.f32 %v5995, %v5996
    %v5998 = vrot.slane %v5997, 1
    %v5999 = vmax.f32 %v5997, %v5998
    %v6000 = vsel %vm5586, %v5168, -inf
    %v6001 = vrot.slane %v6000, 4
    %v6002 = vmax.f32 %v6000, %v6001
    %v6003 = vrot.slane %v6002, 2
    %v6004 = vmax.f32 %v6002, %v6003
    %v6005 = vrot.slane %v6004, 1
    %v6006 = vmax.f32 %v6004, %v6005
    %v6007 = vsel %vm5586, %v5176, -inf
    %v6008 = vrot.slane %v6007, 4
    %v6009 = vmax.f32 %v6007, %v6008
    %v6010 = vrot.slane %v6009, 2
    %v6011 = vmax.f32 %v6009, %v6010
    %v6012 = vrot.slane %v6011, 1
    %v6013 = vmax.f32 %v6011, %v6012
    %v6014 = vsel %vm5586, %v5184, -inf
    %v6015 = vrot.slane %v6014, 4
    %v6016 = vmax.f32 %v6014, %v6015
    %v6017 = vrot.slane %v6016, 2
    %v6018 = vmax.f32 %v6016, %v6017
    %v6019 = vrot.slane %v6018, 1
    %v6020 = vmax.f32 %v6018, %v6019
    %v6021 = vsel %vm5586, %v5183, -inf
    %v6022 = vrot.slane %v6021, 4
    %v6023 = vmax.f32 %v6021, %v6022
    %v6024 = vrot.slane %v6023, 2
    %v6025 = vmax.f32 %v6023, %v6024
    %v6026 = vrot.slane %v6025, 1
    %v6027 = vmax.f32 %v6025, %v6026
    %v6028 = vsel %vm5586, %v5185, -inf
    %v6029 = vrot.slane %v6028, 4
    %v6030 = vmax.f32 %v6028, %v6029
    %v6031 = vrot.slane %v6030, 2
    %v6032 = vmax.f32 %v6030, %v6031
    %v6033 = vrot.slane %v6032, 1
    %v6034 = vmax.f32 %v6032, %v6033
    %v6035 = vsel %vm5586, %v5193, -inf
    %v6036 = vrot.slane %v6035, 4
    %v6037 = vmax.f32 %v6035, %v6036
    %v6038 = vrot.slane %v6037, 2
    %v6039 = vmax.f32 %v6037, %v6038
    %v6040 = vrot.slane %v6039, 1
    %v6041 = vmax.f32 %v6039, %v6040
    %v6042 = vsel %vm5586, %v5201, -inf
    %v6043 = vrot.slane %v6042, 4
    %v6044 = vmax.f32 %v6042, %v6043
    %v6045 = vrot.slane %v6044, 2
    %v6046 = vmax.f32 %v6044, %v6045
    %v6047 = vrot.slane %v6046, 1
    %v6048 = vmax.f32 %v6046, %v6047
    %v6049 = vsel %vm5586, %v5200, -inf
    %v6050 = vrot.slane %v6049, 4
    %v6051 = vmax.f32 %v6049, %v6050
    %v6052 = vrot.slane %v6051, 2
    %v6053 = vmax.f32 %v6051, %v6052
    %v6054 = vrot.slane %v6053, 1
    %v6055 = vmax.f32 %v6053, %v6054
    %v6056 = vsel %vm5586, %v5202, -inf
    %v6057 = vrot.slane %v6056, 4
    %v6058 = vmax.f32 %v6056, %v6057
    %v6059 = vrot.slane %v6058, 2
    %v6060 = vmax.f32 %v6058, %v6059
    %v6061 = vrot.slane %v6060, 1
    %v6062 = vmax.f32 %v6060, %v6061
    %v6063 = vsel %vm5586, %v5210, -inf
    %v6064 = vrot.slane %v6063, 4
    %v6065 = vmax.f32 %v6063, %v6064
    %v6066 = vrot.slane %v6065, 2
    %v6067 = vmax.f32 %v6065, %v6066
    %v6068 = vrot.slane %v6067, 1
    %v6069 = vmax.f32 %v6067, %v6068
    %v6070 = vsel %vm5586, %v5218, -inf
    %v6071 = vrot.slane %v6070, 4
    %v6072 = vmax.f32 %v6070, %v6071
    %v6073 = vrot.slane %v6072, 2
    %v6074 = vmax.f32 %v6072, %v6073
    %v6075 = vrot.slane %v6074, 1
    %v6076 = vmax.f32 %v6074, %v6075
    %v6077 = vsel %vm5586, %v5217, -inf
    %v6078 = vrot.slane %v6077, 4
    %v6079 = vmax.f32 %v6077, %v6078
    %v6080 = vrot.slane %v6079, 2
    %v6081 = vmax.f32 %v6079, %v6080
    %v6082 = vrot.slane %v6081, 1
    %v6083 = vmax.f32 %v6081, %v6082
    %v6084 = vsel %vm5586, %v5219, -inf
    %v6085 = vrot.slane %v6084, 4
    %v6086 = vmax.f32 %v6084, %v6085
    %v6087 = vrot.slane %v6086, 2
    %v6088 = vmax.f32 %v6086, %v6087
    %v6089 = vrot.slane %v6088, 1
    %v6090 = vmax.f32 %v6088, %v6089
    %v6091 = vsel %vm5586, %v5227, -inf
    %v6092 = vrot.slane %v6091, 4
    %v6093 = vmax.f32 %v6091, %v6092
    %v6094 = vrot.slane %v6093, 2
    %v6095 = vmax.f32 %v6093, %v6094
    %v6096 = vrot.slane %v6095, 1
    %v6097 = vmax.f32 %v6095, %v6096
    %v6098 = vsel %vm5586, %v5235, -inf
    %v6099 = vrot.slane %v6098, 4
    %v6100 = vmax.f32 %v6098, %v6099
    %v6101 = vrot.slane %v6100, 2
    %v6102 = vmax.f32 %v6100, %v6101
    %v6103 = vrot.slane %v6102, 1
    %v6104 = vmax.f32 %v6102, %v6103
    %v6105 = vsel %vm5586, %v5234, -inf
    %v6106 = vrot.slane %v6105, 4
    %v6107 = vmax.f32 %v6105, %v6106
    %v6108 = vrot.slane %v6107, 2
    %v6109 = vmax.f32 %v6107, %v6108
    %v6110 = vrot.slane %v6109, 1
    %v6111 = vmax.f32 %v6109, %v6110
    %v6112 = vsel %vm5586, %v5236, -inf
    %v6113 = vrot.slane %v6112, 4
    %v6114 = vmax.f32 %v6112, %v6113
    %v6115 = vrot.slane %v6114, 2
    %v6116 = vmax.f32 %v6114, %v6115
    %v6117 = vrot.slane %v6116, 1
    %v6118 = vmax.f32 %v6116, %v6117
    %v6119 = vsel %vm5586, %v5244, -inf
    %v6120 = vrot.slane %v6119, 4
    %v6121 = vmax.f32 %v6119, %v6120
    %v6122 = vrot.slane %v6121, 2
    %v6123 = vmax.f32 %v6121, %v6122
    %v6124 = vrot.slane %v6123, 1
    %v6125 = vmax.f32 %v6123, %v6124
    %v6126 = vsel %vm5586, %v5252, -inf
    %v6127 = vrot.slane %v6126, 4
    %v6128 = vmax.f32 %v6126, %v6127
    %v6129 = vrot.slane %v6128, 2
    %v6130 = vmax.f32 %v6128, %v6129
    %v6131 = vrot.slane %v6130, 1
    %v6132 = vmax.f32 %v6130, %v6131
    %v6133 = vsel %vm5586, %v5251, -inf
    %v6134 = vrot.slane %v6133, 4
    %v6135 = vmax.f32 %v6133, %v6134
    %v6136 = vrot.slane %v6135, 2
    %v6137 = vmax.f32 %v6135, %v6136
    %v6138 = vrot.slane %v6137, 1
    %v6139 = vmax.f32 %v6137, %v6138
    %v6140 = vsel %vm5586, %v5253, -inf
    %v6141 = vrot.slane %v6140, 4
    %v6142 = vmax.f32 %v6140, %v6141
    %v6143 = vrot.slane %v6142, 2
    %v6144 = vmax.f32 %v6142, %v6143
    %v6145 = vrot.slane %v6144, 1
    %v6146 = vmax.f32 %v6144, %v6145
    %v6147 = vsel %vm5586, %v5261, -inf
    %v6148 = vrot.slane %v6147, 4
    %v6149 = vmax.f32 %v6147, %v6148
    %v6150 = vrot.slane %v6149, 2
    %v6151 = vmax.f32 %v6149, %v6150
    %v6152 = vrot.slane %v6151, 1
    %v6153 = vmax.f32 %v6151, %v6152
    %v6154 = vsel %vm5586, %v5269, -inf
    %v6155 = vrot.slane %v6154, 4
    %v6156 = vmax.f32 %v6154, %v6155
    %v6157 = vrot.slane %v6156, 2
    %v6158 = vmax.f32 %v6156, %v6157
    %v6159 = vrot.slane %v6158, 1
    %v6160 = vmax.f32 %v6158, %v6159
    %v6161 = vsel %vm5586, %v5268, -inf
    %v6162 = vrot.slane %v6161, 4
    %v6163 = vmax.f32 %v6161, %v6162
    %v6164 = vrot.slane %v6163, 2
    %v6165 = vmax.f32 %v6163, %v6164
    %v6166 = vrot.slane %v6165, 1
    %v6167 = vmax.f32 %v6165, %v6166
    %v6168 = vsel %vm5586, %v5270, -inf
    %v6169 = vrot.slane %v6168, 4
    %v6170 = vmax.f32 %v6168, %v6169
    %v6171 = vrot.slane %v6170, 2
    %v6172 = vmax.f32 %v6170, %v6171
    %v6173 = vrot.slane %v6172, 1
    %v6174 = vmax.f32 %v6172, %v6173
    %v6175 = vsel %vm5586, %v5278, -inf
    %v6176 = vrot.slane %v6175, 4
    %v6177 = vmax.f32 %v6175, %v6176
    %v6178 = vrot.slane %v6177, 2
    %v6179 = vmax.f32 %v6177, %v6178
    %v6180 = vrot.slane %v6179, 1
    %v6181 = vmax.f32 %v6179, %v6180
    %v6182 = vsel %vm5586, %v5286, -inf
    %v6183 = vrot.slane %v6182, 4
    %v6184 = vmax.f32 %v6182, %v6183
    %v6185 = vrot.slane %v6184, 2
    %v6186 = vmax.f32 %v6184, %v6185
    %v6187 = vrot.slane %v6186, 1
    %v6188 = vmax.f32 %v6186, %v6187
    %v6189 = vsel %vm5586, %v5285, -inf
    %v6190 = vrot.slane %v6189, 4
    %v6191 = vmax.f32 %v6189, %v6190
    %v6192 = vrot.slane %v6191, 2
    %v6193 = vmax.f32 %v6191, %v6192
    %v6194 = vrot.slane %v6193, 1
    %v6195 = vmax.f32 %v6193, %v6194
    %v6196 = vsel %vm5586, %v5287, -inf
    %v6197 = vrot.slane %v6196, 4
    %v6198 = vmax.f32 %v6196, %v6197
    %v6199 = vrot.slane %v6198, 2
    %v6200 = vmax.f32 %v6198, %v6199
    %v6201 = vrot.slane %v6200, 1
    %v6202 = vmax.f32 %v6200, %v6201
    %v6203 = vsel %vm5586, %v5295, -inf
    %v6204 = vrot.slane %v6203, 4
    %v6205 = vmax.f32 %v6203, %v6204
    %v6206 = vrot.slane %v6205, 2
    %v6207 = vmax.f32 %v6205, %v6206
    %v6208 = vrot.slane %v6207, 1
    %v6209 = vmax.f32 %v6207, %v6208
    %v6210 = vsel %vm5586, %v5303, -inf
    %v6211 = vrot.slane %v6210, 4
    %v6212 = vmax.f32 %v6210, %v6211
    %v6213 = vrot.slane %v6212, 2
    %v6214 = vmax.f32 %v6212, %v6213
    %v6215 = vrot.slane %v6214, 1
    %v6216 = vmax.f32 %v6214, %v6215
    %v6217 = vsel %vm5586, %v5302, -inf
    %v6218 = vrot.slane %v6217, 4
    %v6219 = vmax.f32 %v6217, %v6218
    %v6220 = vrot.slane %v6219, 2
    %v6221 = vmax.f32 %v6219, %v6220
    %v6222 = vrot.slane %v6221, 1
    %v6223 = vmax.f32 %v6221, %v6222
    %v6224 = vsel %vm5586, %v5304, -inf
    %v6225 = vrot.slane %v6224, 4
    %v6226 = vmax.f32 %v6224, %v6225
    %v6227 = vrot.slane %v6226, 2
    %v6228 = vmax.f32 %v6226, %v6227
    %v6229 = vrot.slane %v6228, 1
    %v6230 = vmax.f32 %v6228, %v6229
    %v6231 = vsel %vm5586, %v5312, -inf
    %v6232 = vrot.slane %v6231, 4
    %v6233 = vmax.f32 %v6231, %v6232
    %v6234 = vrot.slane %v6233, 2
    %v6235 = vmax.f32 %v6233, %v6234
    %v6236 = vrot.slane %v6235, 1
    %v6237 = vmax.f32 %v6235, %v6236
    %v6238 = vsel %vm5586, %v5320, -inf
    %v6239 = vrot.slane %v6238, 4
    %v6240 = vmax.f32 %v6238, %v6239
    %v6241 = vrot.slane %v6240, 2
    %v6242 = vmax.f32 %v6240, %v6241
    %v6243 = vrot.slane %v6242, 1
    %v6244 = vmax.f32 %v6242, %v6243
    %v6245 = vsel %vm5586, %v5319, -inf
    %v6246 = vrot.slane %v6245, 4
    %v6247 = vmax.f32 %v6245, %v6246
    %v6248 = vrot.slane %v6247, 2
    %v6249 = vmax.f32 %v6247, %v6248
    %v6250 = vrot.slane %v6249, 1
    %v6251 = vmax.f32 %v6249, %v6250
    %v6252 = vsel %vm5586, %v5321, -inf
    %v6253 = vrot.slane %v6252, 4
    %v6254 = vmax.f32 %v6252, %v6253
    %v6255 = vrot.slane %v6254, 2
    %v6256 = vmax.f32 %v6254, %v6255
    %v6257 = vrot.slane %v6256, 1
    %v6258 = vmax.f32 %v6256, %v6257
    %v6259 = vsel %vm5586, %v5329, -inf
    %v6260 = vrot.slane %v6259, 4
    %v6261 = vmax.f32 %v6259, %v6260
    %v6262 = vrot.slane %v6261, 2
    %v6263 = vmax.f32 %v6261, %v6262
    %v6264 = vrot.slane %v6263, 1
    %v6265 = vmax.f32 %v6263, %v6264
    %v6266 = vsel %vm5586, %v5337, -inf
    %v6267 = vrot.slane %v6266, 4
    %v6268 = vmax.f32 %v6266, %v6267
    %v6269 = vrot.slane %v6268, 2
    %v6270 = vmax.f32 %v6268, %v6269
    %v6271 = vrot.slane %v6270, 1
    %v6272 = vmax.f32 %v6270, %v6271
    %v6273 = vsel %vm5586, %v5336, -inf
    %v6274 = vrot.slane %v6273, 4
    %v6275 = vmax.f32 %v6273, %v6274
    %v6276 = vrot.slane %v6275, 2
    %v6277 = vmax.f32 %v6275, %v6276
    %v6278 = vrot.slane %v6277, 1
    %v6279 = vmax.f32 %v6277, %v6278
    %v6280 = vsel %vm5586, %v5338, -inf
    %v6281 = vrot.slane %v6280, 4
    %v6282 = vmax.f32 %v6280, %v6281
    %v6283 = vrot.slane %v6282, 2
    %v6284 = vmax.f32 %v6282, %v6283
    %v6285 = vrot.slane %v6284, 1
    %v6286 = vmax.f32 %v6284, %v6285
    %v6287 = vsel %vm5586, %v5346, -inf
    %v6288 = vrot.slane %v6287, 4
    %v6289 = vmax.f32 %v6287, %v6288
    %v6290 = vrot.slane %v6289, 2
    %v6291 = vmax.f32 %v6289, %v6290
    %v6292 = vrot.slane %v6291, 1
    %v6293 = vmax.f32 %v6291, %v6292
    %v6294 = vsel %vm5586, %v5354, -inf
    %v6295 = vrot.slane %v6294, 4
    %v6296 = vmax.f32 %v6294, %v6295
    %v6297 = vrot.slane %v6296, 2
    %v6298 = vmax.f32 %v6296, %v6297
    %v6299 = vrot.slane %v6298, 1
    %v6300 = vmax.f32 %v6298, %v6299
    %v6301 = vsel %vm5586, %v5353, -inf
    %v6302 = vrot.slane %v6301, 4
    %v6303 = vmax.f32 %v6301, %v6302
    %v6304 = vrot.slane %v6303, 2
    %v6305 = vmax.f32 %v6303, %v6304
    %v6306 = vrot.slane %v6305, 1
    %v6307 = vmax.f32 %v6305, %v6306
    %v6308 = vsel %vm5586, %v5355, -inf
    %v6309 = vrot.slane %v6308, 4
    %v6310 = vmax.f32 %v6308, %v6309
    %v6311 = vrot.slane %v6310, 2
    %v6312 = vmax.f32 %v6310, %v6311
    %v6313 = vrot.slane %v6312, 1
    %v6314 = vmax.f32 %v6312, %v6313
    %v6315 = vsel %vm5586, %v5363, -inf
    %v6316 = vrot.slane %v6315, 4
    %v6317 = vmax.f32 %v6315, %v6316
    %v6318 = vrot.slane %v6317, 2
    %v6319 = vmax.f32 %v6317, %v6318
    %v6320 = vrot.slane %v6319, 1
    %v6321 = vmax.f32 %v6319, %v6320
    %v6322 = vsel %vm5586, %v5371, -inf
    %v6323 = vrot.slane %v6322, 4
    %v6324 = vmax.f32 %v6322, %v6323
    %v6325 = vrot.slane %v6324, 2
    %v6326 = vmax.f32 %v6324, %v6325
    %v6327 = vrot.slane %v6326, 1
    %v6328 = vmax.f32 %v6326, %v6327
    %v6329 = vsel %vm5586, %v5370, -inf
    %v6330 = vrot.slane %v6329, 4
    %v6331 = vmax.f32 %v6329, %v6330
    %v6332 = vrot.slane %v6331, 2
    %v6333 = vmax.f32 %v6331, %v6332
    %v6334 = vrot.slane %v6333, 1
    %v6335 = vmax.f32 %v6333, %v6334
    %v6336 = vsel %vm5586, %v5372, -inf
    %v6337 = vrot.slane %v6336, 4
    %v6338 = vmax.f32 %v6336, %v6337
    %v6339 = vrot.slane %v6338, 2
    %v6340 = vmax.f32 %v6338, %v6339
    %v6341 = vrot.slane %v6340, 1
    %v6342 = vmax.f32 %v6340, %v6341
    %v6343 = vsel %vm5586, %v5380, -inf
    %v6344 = vrot.slane %v6343, 4
    %v6345 = vmax.f32 %v6343, %v6344
    %v6346 = vrot.slane %v6345, 2
    %v6347 = vmax.f32 %v6345, %v6346
    %v6348 = vrot.slane %v6347, 1
    %v6349 = vmax.f32 %v6347, %v6348
    %v6350 = vsel %vm5586, %v5388, -inf
    %v6351 = vrot.slane %v6350, 4
    %v6352 = vmax.f32 %v6350, %v6351
    %v6353 = vrot.slane %v6352, 2
    %v6354 = vmax.f32 %v6352, %v6353
    %v6355 = vrot.slane %v6354, 1
    %v6356 = vmax.f32 %v6354, %v6355
    %v6357 = vsel %vm5586, %v5387, -inf
    %v6358 = vrot.slane %v6357, 4
    %v6359 = vmax.f32 %v6357, %v6358
    %v6360 = vrot.slane %v6359, 2
    %v6361 = vmax.f32 %v6359, %v6360
    %v6362 = vrot.slane %v6361, 1
    %v6363 = vmax.f32 %v6361, %v6362
    %v6364 = vsel %vm5586, %v5389, -inf
    %v6365 = vrot.slane %v6364, 4
    %v6366 = vmax.f32 %v6364, %v6365
    %v6367 = vrot.slane %v6366, 2
    %v6368 = vmax.f32 %v6366, %v6367
    %v6369 = vrot.slane %v6368, 1
    %v6370 = vmax.f32 %v6368, %v6369
    %v6371 = vsel %vm5586, %v5397, -inf
    %v6372 = vrot.slane %v6371, 4
    %v6373 = vmax.f32 %v6371, %v6372
    %v6374 = vrot.slane %v6373, 2
    %v6375 = vmax.f32 %v6373, %v6374
    %v6376 = vrot.slane %v6375, 1
    %v6377 = vmax.f32 %v6375, %v6376
    %v6378 = vsel %vm5586, %v5405, -inf
    %v6379 = vrot.slane %v6378, 4
    %v6380 = vmax.f32 %v6378, %v6379
    %v6381 = vrot.slane %v6380, 2
    %v6382 = vmax.f32 %v6380, %v6381
    %v6383 = vrot.slane %v6382, 1
    %v6384 = vmax.f32 %v6382, %v6383
    %v6385 = vsel %vm5586, %v5404, -inf
    %v6386 = vrot.slane %v6385, 4
    %v6387 = vmax.f32 %v6385, %v6386
    %v6388 = vrot.slane %v6387, 2
    %v6389 = vmax.f32 %v6387, %v6388
    %v6390 = vrot.slane %v6389, 1
    %v6391 = vmax.f32 %v6389, %v6390
    %v6392 = vsel %vm5586, %v5406, -inf
    %v6393 = vrot.slane %v6392, 4
    %v6394 = vmax.f32 %v6392, %v6393
    %v6395 = vrot.slane %v6394, 2
    %v6396 = vmax.f32 %v6394, %v6395
    %v6397 = vrot.slane %v6396, 1
    %v6398 = vmax.f32 %v6396, %v6397
    %v6399 = vsel %vm5586, %v5414, -inf
    %v6400 = vrot.slane %v6399, 4
    %v6401 = vmax.f32 %v6399, %v6400
    %v6402 = vrot.slane %v6401, 2
    %v6403 = vmax.f32 %v6401, %v6402
    %v6404 = vrot.slane %v6403, 1
    %v6405 = vmax.f32 %v6403, %v6404
    %v6406 = vsel %vm5586, %v5422, -inf
    %v6407 = vrot.slane %v6406, 4
    %v6408 = vmax.f32 %v6406, %v6407
    %v6409 = vrot.slane %v6408, 2
    %v6410 = vmax.f32 %v6408, %v6409
    %v6411 = vrot.slane %v6410, 1
    %v6412 = vmax.f32 %v6410, %v6411
    %v6413 = vsel %vm5586, %v5421, -inf
    %v6414 = vrot.slane %v6413, 4
    %v6415 = vmax.f32 %v6413, %v6414
    %v6416 = vrot.slane %v6415, 2
    %v6417 = vmax.f32 %v6415, %v6416
    %v6418 = vrot.slane %v6417, 1
    %v6419 = vmax.f32 %v6417, %v6418
    %v6420 = vsel %vm5586, %v5423, -inf
    %v6421 = vrot.slane %v6420, 4
    %v6422 = vmax.f32 %v6420, %v6421
    %v6423 = vrot.slane %v6422, 2
    %v6424 = vmax.f32 %v6422, %v6423
    %v6425 = vrot.slane %v6424, 1
    %v6426 = vmax.f32 %v6424, %v6425
    %v6427 = vsel %vm5586, %v5431, -inf
    %v6428 = vrot.slane %v6427, 4
    %v6429 = vmax.f32 %v6427, %v6428
    %v6430 = vrot.slane %v6429, 2
    %v6431 = vmax.f32 %v6429, %v6430
    %v6432 = vrot.slane %v6431, 1
    %v6433 = vmax.f32 %v6431, %v6432
    %v6434 = vsel %vm5586, %v5439, -inf
    %v6435 = vrot.slane %v6434, 4
    %v6436 = vmax.f32 %v6434, %v6435
    %v6437 = vrot.slane %v6436, 2
    %v6438 = vmax.f32 %v6436, %v6437
    %v6439 = vrot.slane %v6438, 1
    %v6440 = vmax.f32 %v6438, %v6439
    %v6441 = vsel %vm5586, %v5438, -inf
    %v6442 = vrot.slane %v6441, 4
    %v6443 = vmax.f32 %v6441, %v6442
    %v6444 = vrot.slane %v6443, 2
    %v6445 = vmax.f32 %v6443, %v6444
    %v6446 = vrot.slane %v6445, 1
    %v6447 = vmax.f32 %v6445, %v6446
    %v6448 = vsel %vm5586, %v5440, -inf
    %v6449 = vrot.slane %v6448, 4
    %v6450 = vmax.f32 %v6448, %v6449
    %v6451 = vrot.slane %v6450, 2
    %v6452 = vmax.f32 %v6450, %v6451
    %v6453 = vrot.slane %v6452, 1
    %v6454 = vmax.f32 %v6452, %v6453
    %v6455 = vsel %vm5586, %v5448, -inf
    %v6456 = vrot.slane %v6455, 4
    %v6457 = vmax.f32 %v6455, %v6456
    %v6458 = vrot.slane %v6457, 2
    %v6459 = vmax.f32 %v6457, %v6458
    %v6460 = vrot.slane %v6459, 1
    %v6461 = vmax.f32 %v6459, %v6460
    %v6462 = vsel %vm5586, %v5456, -inf
    %v6463 = vrot.slane %v6462, 4
    %v6464 = vmax.f32 %v6462, %v6463
    %v6465 = vrot.slane %v6464, 2
    %v6466 = vmax.f32 %v6464, %v6465
    %v6467 = vrot.slane %v6466, 1
    %v6468 = vmax.f32 %v6466, %v6467
    %v6469 = vsel %vm5586, %v5455, -inf
    %v6470 = vrot.slane %v6469, 4
    %v6471 = vmax.f32 %v6469, %v6470
    %v6472 = vrot.slane %v6471, 2
    %v6473 = vmax.f32 %v6471, %v6472
    %v6474 = vrot.slane %v6473, 1
    %v6475 = vmax.f32 %v6473, %v6474
    %v6476 = vsel %vm5586, %v5457, -inf
    %v6477 = vrot.slane %v6476, 4
    %v6478 = vmax.f32 %v6476, %v6477
    %v6479 = vrot.slane %v6478, 2
    %v6480 = vmax.f32 %v6478, %v6479
    %v6481 = vrot.slane %v6480, 1
    %v6482 = vmax.f32 %v6480, %v6481
    %v6483 = vmax.f32 %v5593, 0.0
    %v6484 = vmax.f32 %v5600, 0.0
    %v6485 = vmax.f32 %v5607, 0.0
    %v6486 = vmax.f32 %v5614, 0.0
    %v6487 = vmax.f32 %v5621, 0.0
    %v6488 = vmax.f32 %v5628, 0.0
    %v6489 = vmax.f32 %v5635, 0.0
    %v6490 = vmax.f32 %v5642, 0.0
    %v6491 = vmax.f32 %v5649, 0.0
    %v6492 = vmax.f32 %v5656, 0.0
    %v6493 = vmax.f32 %v5663, 0.0
    %v6494 = vmax.f32 %v5670, 0.0
    %v6495 = vmax.f32 %v5677, 0.0
    %v6496 = vmax.f32 %v5684, 0.0
    %v6497 = vmax.f32 %v5691, 0.0
    %v6498 = vmax.f32 %v5698, 0.0
    %v6499 = vmax.f32 %v5705, 0.0
    %v6500 = vmax.f32 %v5712, 0.0
    %v6501 = vmax.f32 %v5719, 0.0
    %v6502 = vmax.f32 %v5726, 0.0
    %v6503 = vmax.f32 %v5733, 0.0
    %v6504 = vmax.f32 %v5740, 0.0
    %v6505 = vmax.f32 %v5747, 0.0
    %v6506 = vmax.f32 %v5754, 0.0
    %v6507 = vmax.f32 %v5761, 0.0
    %v6508 = vmax.f32 %v5768, 0.0
    %v6509 = vmax.f32 %v5775, 0.0
    %v6510 = vmax.f32 %v5782, 0.0
    %v6511 = vmax.f32 %v5789, 0.0
    %v6512 = vmax.f32 %v5796, 0.0
    %v6513 = vmax.f32 %v5803, 0.0
    %v6514 = vmax.f32 %v5810, 0.0
    %v6515 = vmax.f32 %v5817, 0.0
    %v6516 = vmax.f32 %v5824, 0.0
    %v6517 = vmax.f32 %v5831, 0.0
    %v6518 = vmax.f32 %v5838, 0.0
    %v6519 = vmax.f32 %v5845, 0.0
    %v6520 = vmax.f32 %v5852, 0.0
    %v6521 = vmax.f32 %v5859, 0.0
    %v6522 = vmax.f32 %v5866, 0.0
    %v6523 = vmax.f32 %v5873, 0.0
    %v6524 = vmax.f32 %v5880, 0.0
    %v6525 = vmax.f32 %v5887, 0.0
    %v6526 = vmax.f32 %v5894, 0.0
    %v6527 = vmax.f32 %v5901, 0.0
    %v6528 = vmax.f32 %v5908, 0.0
    %v6529 = vmax.f32 %v5915, 0.0
    %v6530 = vmax.f32 %v5922, 0.0
    %v6531 = vmax.f32 %v5929, 0.0
    %v6532 = vmax.f32 %v5936, 0.0
    %v6533 = vmax.f32 %v5943, 0.0
    %v6534 = vmax.f32 %v5950, 0.0
    %v6535 = vmax.f32 %v5957, 0.0
    %v6536 = vmax.f32 %v5964, 0.0
    %v6537 = vmax.f32 %v5971, 0.0
    %v6538 = vmax.f32 %v5978, 0.0
    %v6539 = vmax.f32 %v5985, 0.0
    %v6540 = vmax.f32 %v5992, 0.0
    %v6541 = vmax.f32 %v5999, 0.0
    %v6542 = vmax.f32 %v6006, 0.0
    %v6543 = vmax.f32 %v6013, 0.0
    %v6544 = vmax.f32 %v6020, 0.0
    %v6545 = vmax.f32 %v6027, 0.0
    %v6546 = vmax.f32 %v6034, 0.0
    %v6547 = vmax.f32 %v6041, 0.0
    %v6548 = vmax.f32 %v6048, 0.0
    %v6549 = vmax.f32 %v6055, 0.0
    %v6550 = vmax.f32 %v6062, 0.0
    %v6551 = vmax.f32 %v6069, 0.0
    %v6552 = vmax.f32 %v6076, 0.0
    %v6553 = vmax.f32 %v6083, 0.0
    %v6554 = vmax.f32 %v6090, 0.0
    %v6555 = vmax.f32 %v6097, 0.0
    %v6556 = vmax.f32 %v6104, 0.0
    %v6557 = vmax.f32 %v6111, 0.0
    %v6558 = vmax.f32 %v6118, 0.0
    %v6559 = vmax.f32 %v6125, 0.0
    %v6560 = vmax.f32 %v6132, 0.0
    %v6561 = vmax.f32 %v6139, 0.0
    %v6562 = vmax.f32 %v6146, 0.0
    %v6563 = vmax.f32 %v6153, 0.0
    %v6564 = vmax.f32 %v6160, 0.0
    %v6565 = vmax.f32 %v6167, 0.0
    %v6566 = vmax.f32 %v6174, 0.0
    %v6567 = vmax.f32 %v6181, 0.0
    %v6568 = vmax.f32 %v6188, 0.0
    %v6569 = vmax.f32 %v6195, 0.0
    %v6570 = vmax.f32 %v6202, 0.0
    %v6571 = vmax.f32 %v6209, 0.0
    %v6572 = vmax.f32 %v6216, 0.0
    %v6573 = vmax.f32 %v6223, 0.0
    %v6574 = vmax.f32 %v6230, 0.0
    %v6575 = vmax.f32 %v6237, 0.0
    %v6576 = vmax.f32 %v6244, 0.0
    %v6577 = vmax.f32 %v6251, 0.0
    %v6578 = vmax.f32 %v6258, 0.0
    %v6579 = vmax.f32 %v6265, 0.0
    %v6580 = vmax.f32 %v6272, 0.0
    %v6581 = vmax.f32 %v6279, 0.0
    %v6582 = vmax.f32 %v6286, 0.0
    %v6583 = vmax.f32 %v6293, 0.0
    %v6584 = vmax.f32 %v6300, 0.0
    %v6585 = vmax.f32 %v6307, 0.0
    %v6586 = vmax.f32 %v6314, 0.0
    %v6587 = vmax.f32 %v6321, 0.0
    %v6588 = vmax.f32 %v6328, 0.0
    %v6589 = vmax.f32 %v6335, 0.0
    %v6590 = vmax.f32 %v6342, 0.0
    %v6591 = vmax.f32 %v6349, 0.0
    %v6592 = vmax.f32 %v6356, 0.0
    %v6593 = vmax.f32 %v6363, 0.0
    %v6594 = vmax.f32 %v6370, 0.0
    %v6595 = vmax.f32 %v6377, 0.0
    %v6596 = vmax.f32 %v6384, 0.0
    %v6597 = vmax.f32 %v6391, 0.0
    %v6598 = vmax.f32 %v6398, 0.0
    %v6599 = vmax.f32 %v6405, 0.0
    %v6600 = vmax.f32 %v6412, 0.0
    %v6601 = vmax.f32 %v6419, 0.0
    %v6602 = vmax.f32 %v6426, 0.0
    %v6603 = vmax.f32 %v6433, 0.0
    %v6604 = vmax.f32 %v6440, 0.0
    %v6605 = vmax.f32 %v6447, 0.0
    %v6606 = vmax.f32 %v6454, 0.0
    %v6607 = vmax.f32 %v6461, 0.0
    %v6608 = vmax.f32 %v6468, 0.0
    %v6609 = vmax.f32 %v6475, 0.0
    %v6610 = vmax.f32 %v6482, 0.0
    %6611 = vst.msk [vmem:[#allocation2] sm:$0xff] %vm4785, 0.0
    %6612 = vst.msk [vmem:[#allocation2 + $0x8] sm:$0x3] %vm5586, 0.0
    %6613 = vst.msk [vmem:[#allocation2 + $0x10] sm:$0xff] %vm4785, 0.0
    %6614 = vst.msk [vmem:[#allocation2 + $0x18] sm:$0x3] %vm5586, 0.0
    %6615 = vst.msk [vmem:[#allocation2 + $0x20] sm:$0xff] %vm4785, 0.0
    %6616 = vst.msk [vmem:[#allocation2 + $0x28] sm:$0x3] %vm5586, 0.0
    %6617 = vst.msk [vmem:[#allocation2 + $0x30] sm:$0xff] %vm4785, 0.0
    %6618 = vst.msk [vmem:[#allocation2 + $0x38] sm:$0x3] %vm5586, 0.0
    %6619 = vst.msk [vmem:[#allocation2 + $0x40] sm:$0xff] %vm4785, 0.0
    %6620 = vst.msk [vmem:[#allocation2 + $0x48] sm:$0x3] %vm5586, 0.0
    %6621 = vst.msk [vmem:[#allocation2 + $0x50] sm:$0xff] %vm4785, 0.0
    %6622 = vst.msk [vmem:[#allocation2 + $0x58] sm:$0x3] %vm5586, 0.0
    %6623 = vst.msk [vmem:[#allocation2 + $0x60] sm:$0xff] %vm4785, 0.0
    %6624 = vst.msk [vmem:[#allocation2 + $0x68] sm:$0x3] %vm5586, 0.0
    %6625 = vst.msk [vmem:[#allocation2 + $0x70] sm:$0xff] %vm4785, 0.0
    %6626 = vst.msk [vmem:[#allocation2 + $0x78] sm:$0x3] %vm5586, 0.0
    %6627 = vst.msk [vmem:[#allocation2 + $0x80] sm:$0xff] %vm4785, 0.0
    %6628 = vst.msk [vmem:[#allocation2 + $0x88] sm:$0x3] %vm5586, 0.0
    %6629 = vst.msk [vmem:[#allocation2 + $0x90] sm:$0xff] %vm4785, 0.0
    %6630 = vst.msk [vmem:[#allocation2 + $0x98] sm:$0x3] %vm5586, 0.0
    %6631 = vst.msk [vmem:[#allocation2 + $0xa0] sm:$0xff] %vm4785, 0.0
    %6632 = vst.msk [vmem:[#allocation2 + $0xa8] sm:$0x3] %vm5586, 0.0
    %6633 = vst.msk [vmem:[#allocation2 + $0xb0] sm:$0xff] %vm4785, 0.0
    %6634 = vst.msk [vmem:[#allocation2 + $0xb8] sm:$0x3] %vm5586, 0.0
    %6635 = vst.msk [vmem:[#allocation2 + $0xc0] sm:$0xff] %vm4785, 0.0
    %6636 = vst.msk [vmem:[#allocation2 + $0xc8] sm:$0x3] %vm5586, 0.0
    %6637 = vst.msk [vmem:[#allocation2 + $0xd0] sm:$0xff] %vm4785, 0.0
    %6638 = vst.msk [vmem:[#allocation2 + $0xd8] sm:$0x3] %vm5586, 0.0
    %6639 = vst.msk [vmem:[#allocation2 + $0xe0] sm:$0xff] %vm4785, 0.0
    %6640 = vst.msk [vmem:[#allocation2 + $0xe8] sm:$0x3] %vm5586, 0.0
    %6641 = vst.msk [vmem:[#allocation2 + $0xf0] sm:$0xff] %vm4785, 0.0
    %6642 = vst.msk [vmem:[#allocation2 + $0xf8] sm:$0x3] %vm5586, 0.0
    %6643 = vst.msk [vmem:[#allocation2 + $0x100] sm:$0xff] %vm4785, 0.0
    %6644 = vst.msk [vmem:[#allocation2 + $0x108] sm:$0x3] %vm5586, 0.0
    %6645 = vst.msk [vmem:[#allocation2 + $0x110] sm:$0xff] %vm4785, 0.0
    %6646 = vst.msk [vmem:[#allocation2 + $0x118] sm:$0x3] %vm5586, 0.0
    %6647 = vst.msk [vmem:[#allocation2 + $0x120] sm:$0xff] %vm4785, 0.0
    %6648 = vst.msk [vmem:[#allocation2 + $0x128] sm:$0x3] %vm5586, 0.0
    %6649 = vst.msk [vmem:[#allocation2 + $0x130] sm:$0xff] %vm4785, 0.0
    %6650 = vst.msk [vmem:[#allocation2 + $0x138] sm:$0x3] %vm5586, 0.0
    %vm6779 = vcmask 1041409
    %v6780 = vsel %vm6779, %v6484, %v6483
    %vm6781 = vcmask 1042434
    %v6782 = vsel %vm6781, %v6485, %v6780
    %vm6783 = vcmask 1043459
    %v6784 = vsel %vm6783, %v6486, %v6782
    %vm6785 = vcmask 1044484
    %v6786 = vsel %vm6785, %v6487, %v6784
    %vm6787 = vcmask 1045509
    %v6788 = vsel %vm6787, %v6488, %v6786
    %vm6789 = vcmask 1046534
    %v6790 = vsel %vm6789, %v6489, %v6788
    %vm6791 = vcmask 1047559
    %v6792 = vsel %vm6791, %v6490, %v6790
    %v6793 = vsel %vm6779, %v6492, %v6491
    %v6794 = vsel %vm6781, %v6493, %v6793
    %v6795 = vsel %vm6783, %v6494, %v6794
    %v6796 = vsel %vm6785, %v6495, %v6795
    %v6797 = vsel %vm6787, %v6496, %v6796
    %v6798 = vsel %vm6789, %v6497, %v6797
    %v6799 = vsel %vm6791, %v6498, %v6798
    %v6800 = vsel %vm6779, %v6500, %v6499
    %v6801 = vsel %vm6781, %v6501, %v6800
    %v6802 = vsel %vm6783, %v6502, %v6801
    %v6803 = vsel %vm6785, %v6503, %v6802
    %v6804 = vsel %vm6787, %v6504, %v6803
    %v6805 = vsel %vm6789, %v6505, %v6804
    %v6806 = vsel %vm6791, %v6506, %v6805
    %v6807 = vsel %vm6779, %v6508, %v6507
    %v6808 = vsel %vm6781, %v6509, %v6807
    %v6809 = vsel %vm6783, %v6510, %v6808
    %v6810 = vsel %vm6785, %v6511, %v6809
    %v6811 = vsel %vm6787, %v6512, %v6810
    %v6812 = vsel %vm6789, %v6513, %v6811
    %v6813 = vsel %vm6791, %v6514, %v6812
    %v6814 = vsel %vm6779, %v6516, %v6515
    %v6815 = vsel %vm6781, %v6517, %v6814
    %v6816 = vsel %vm6783, %v6518, %v6815
    %v6817 = vsel %vm6785, %v6519, %v6816
    %v6818 = vsel %vm6787, %v6520, %v6817
    %v6819 = vsel %vm6789, %v6521, %v6818
    %v6820 = vsel %vm6791, %v6522, %v6819
    %v6821 = vsel %vm6779, %v6524, %v6523
    %v6822 = vsel %vm6781, %v6525, %v6821
    %v6823 = vsel %vm6783, %v6526, %v6822
    %v6824 = vsel %vm6785, %v6527, %v6823
    %v6825 = vsel %vm6787, %v6528, %v6824
    %v6826 = vsel %vm6789, %v6529, %v6825
    %v6827 = vsel %vm6791, %v6530, %v6826
    %v6828 = vsel %vm6779, %v6532, %v6531
    %v6829 = vsel %vm6781, %v6533, %v6828
    %v6830 = vsel %vm6783, %v6534, %v6829
    %v6831 = vsel %vm6785, %v6535, %v6830
    %v6832 = vsel %vm6787, %v6536, %v6831
    %v6833 = vsel %vm6789, %v6537, %v6832
    %v6834 = vsel %vm6791, %v6538, %v6833
    %v6835 = vsel %vm6779, %v6540, %v6539
    %v6836 = vsel %vm6781, %v6541, %v6835
    %v6837 = vsel %vm6783, %v6542, %v6836
    %v6838 = vsel %vm6785, %v6543, %v6837
    %v6839 = vsel %vm6787, %v6544, %v6838
    %v6840 = vsel %vm6789, %v6545, %v6839
    %v6841 = vsel %vm6791, %v6546, %v6840
    %v6842 = vsel %vm6779, %v6548, %v6547
    %v6843 = vsel %vm6781, %v6549, %v6842
    %v6844 = vsel %vm6783, %v6550, %v6843
    %v6845 = vsel %vm6785, %v6551, %v6844
    %v6846 = vsel %vm6787, %v6552, %v6845
    %v6847 = vsel %vm6789, %v6553, %v6846
    %v6848 = vsel %vm6791, %v6554, %v6847
    %v6849 = vsel %vm6779, %v6556, %v6555
    %v6850 = vsel %vm6781, %v6557, %v6849
    %v6851 = vsel %vm6783, %v6558, %v6850
    %v6852 = vsel %vm6785, %v6559, %v6851
    %v6853 = vsel %vm6787, %v6560, %v6852
    %v6854 = vsel %vm6789, %v6561, %v6853
    %v6855 = vsel %vm6791, %v6562, %v6854
    %v6856 = vsel %vm6779, %v6564, %v6563
    %v6857 = vsel %vm6781, %v6565, %v6856
    %v6858 = vsel %vm6783, %v6566, %v6857
    %v6859 = vsel %vm6785, %v6567, %v6858
    %v6860 = vsel %vm6787, %v6568, %v6859
    %v6861 = vsel %vm6789, %v6569, %v6860
    %v6862 = vsel %vm6791, %v6570, %v6861
    %v6863 = vsel %vm6779, %v6572, %v6571
    %v6864 = vsel %vm6781, %v6573, %v6863
    %v6865 = vsel %vm6783, %v6574, %v6864
    %v6866 = vsel %vm6785, %v6575, %v6865
    %v6867 = vsel %vm6787, %v6576, %v6866
    %v6868 = vsel %vm6789, %v6577, %v6867
    %v6869 = vsel %vm6791, %v6578, %v6868
    %v6870 = vsel %vm6779, %v6580, %v6579
    %v6871 = vsel %vm6781, %v6581, %v6870
    %v6872 = vsel %vm6783, %v6582, %v6871
    %v6873 = vsel %vm6785, %v6583, %v6872
    %v6874 = vsel %vm6787, %v6584, %v6873
    %v6875 = vsel %vm6789, %v6585, %v6874
    %v6876 = vsel %vm6791, %v6586, %v6875
    %v6877 = vsel %vm6779, %v6588, %v6587
    %v6878 = vsel %vm6781, %v6589, %v6877
    %v6879 = vsel %vm6783, %v6590, %v6878
    %v6880 = vsel %vm6785, %v6591, %v6879
    %v6881 = vsel %vm6787, %v6592, %v6880
    %v6882 = vsel %vm6789, %v6593, %v6881
    %v6883 = vsel %vm6791, %v6594, %v6882
    %v6884 = vsel %vm6779, %v6596, %v6595
    %v6885 = vsel %vm6781, %v6597, %v6884
    %v6886 = vsel %vm6783, %v6598, %v6885
    %v6887 = vsel %vm6785, %v6599, %v6886
    %v6888 = vsel %vm6787, %v6600, %v6887
    %v6889 = vsel %vm6789, %v6601, %v6888
    %v6890 = vsel %vm6791, %v6602, %v6889
    %v6891 = vsel %vm6779, %v6604, %v6603
    %v6892 = vsel %vm6781, %v6605, %v6891
    %v6893 = vsel %vm6783, %v6606, %v6892
    %v6894 = vsel %vm6785, %v6607, %v6893
    %v6895 = vsel %vm6787, %v6608, %v6894
    %v6896 = vsel %vm6789, %v6609, %v6895
    %v6897 = vsel %vm6791, %v6610, %v6896
    %s6914 = scalar_lea.vmem [#allocation2], 16
    %6915 = vst.msk [vmem:[%s6914 + $0x1] sm:$0xff] %vm4785, %v6792
    %6916 = vst.msk [vmem:[%s6914 + $0x11] sm:$0xff] %vm4785, %v6799
    %6917 = vst.msk [vmem:[%s6914 + $0x21] sm:$0xff] %vm4785, %v6806
    %6918 = vst.msk [vmem:[%s6914 + $0x31] sm:$0xff] %vm4785, %v6813
    %6919 = vst.msk [vmem:[%s6914 + $0x41] sm:$0xff] %vm4785, %v6820
    %6920 = vst.msk [vmem:[%s6914 + $0x51] sm:$0xff] %vm4785, %v6827
    %6921 = vst.msk [vmem:[%s6914 + $0x61] sm:$0xff] %vm4785, %v6834
    %6922 = vst.msk [vmem:[%s6914 + $0x71] sm:$0xff] %vm4785, %v6841
    %6923 = vst.msk [vmem:[%s6914 + $0xa1] sm:$0xff] %vm4785, %v6848
    %6924 = vst.msk [vmem:[%s6914 + $0xb1] sm:$0xff] %vm4785, %v6855
    %6925 = vst.msk [vmem:[%s6914 + $0xc1] sm:$0xff] %vm4785, %v6862
    %6926 = vst.msk [vmem:[%s6914 + $0xd1] sm:$0xff] %vm4785, %v6869
    %6927 = vst.msk [vmem:[%s6914 + $0xe1] sm:$0xff] %vm4785, %v6876
    %6928 = vst.msk [vmem:[%s6914 + $0xf1] sm:$0xff] %vm4785, %v6883
    %6929 = vst.msk [vmem:[%s6914 + $0x101] sm:$0xff] %vm4785, %v6890
    %6930 = vst.msk [vmem:[%s6914 + $0x111] sm:$0xff] %vm4785, %v6897
    %v6931 = vld [vmem:[#allocation2] sm:$0xff]
    %v6932 = vld [vmem:[#allocation2 + $0x10] sm:$0xff]
    %v6933 = vld [vmem:[#allocation2 + $0x20] sm:$0xff]
    %v6934 = vld [vmem:[#allocation2 + $0x30] sm:$0xff]
    %v6935 = vld [vmem:[#allocation2 + $0x40] sm:$0xff]
    %v6936 = vld [vmem:[#allocation2 + $0x50] sm:$0xff]
    %v6937 = vld [vmem:[#allocation2 + $0x60] sm:$0xff]
    %v6938 = vld [vmem:[#allocation2 + $0x70] sm:$0xff]
    %v6939 = vld [vmem:[#allocation2 + $0xa0] sm:$0xff]
    %v6940 = vld [vmem:[#allocation2 + $0xb0] sm:$0xff]
    %v6941 = vld [vmem:[#allocation2 + $0xc0] sm:$0xff]
    %v6942 = vld [vmem:[#allocation2 + $0xd0] sm:$0xff]
    %v6943 = vld [vmem:[#allocation2 + $0xe0] sm:$0xff]
    %v6944 = vld [vmem:[#allocation2 + $0xf0] sm:$0xff]
    %v6945 = vld [vmem:[#allocation2 + $0x100] sm:$0xff]
    %v6946 = vld [vmem:[#allocation2 + $0x110] sm:$0xff]
    %v6947 = vld [vmem:[#allocation2 + $0x1] sm:$0xff]
    %v6948 = vld [vmem:[#allocation2 + $0x11] sm:$0xff]
    %v6949 = vld [vmem:[#allocation2 + $0x21] sm:$0xff]
    %v6950 = vld [vmem:[#allocation2 + $0x31] sm:$0xff]
    %v6951 = vld [vmem:[#allocation2 + $0x41] sm:$0xff]
    %v6952 = vld [vmem:[#allocation2 + $0x51] sm:$0xff]
    %v6953 = vld [vmem:[#allocation2 + $0x61] sm:$0xff]
    %v6954 = vld [vmem:[#allocation2 + $0x71] sm:$0xff]
    %v6955 = vld [vmem:[#allocation2 + $0xa1] sm:$0xff]
    %v6956 = vld [vmem:[#allocation2 + $0xb1] sm:$0xff]
    %v6957 = vld [vmem:[#allocation2 + $0xc1] sm:$0xff]
    %v6958 = vld [vmem:[#allocation2 + $0xd1] sm:$0xff]
    %v6959 = vld [vmem:[#allocation2 + $0xe1] sm:$0xff]
    %v6960 = vld [vmem:[#allocation2 + $0xf1] sm:$0xff]
    %v6961 = vld [vmem:[#allocation2 + $0x101] sm:$0xff]
    %v6962 = vld [vmem:[#allocation2 + $0x111] sm:$0xff]
    %v6963 = vld [vmem:[#allocation2 + $0x2] sm:$0xff]
    %v6964 = vld [vmem:[#allocation2 + $0x12] sm:$0xff]
    %v6965 = vld [vmem:[#allocation2 + $0x22] sm:$0xff]
    %v6966 = vld [vmem:[#allocation2 + $0x32] sm:$0xff]
    %v6967 = vld [vmem:[#allocation2 + $0x42] sm:$0xff]
    %v6968 = vld [vmem:[#allocation2 + $0x52] sm:$0xff]
    %v6969 = vld [vmem:[#allocation2 + $0x62] sm:$0xff]
    %v6970 = vld [vmem:[#allocation2 + $0x72] sm:$0xff]
    %v6971 = vld [vmem:[#allocation2 + $0xa2] sm:$0xff]
    %v6972 = vld [vmem:[#allocation2 + $0xb2] sm:$0xff]
    %v6973 = vld [vmem:[#allocation2 + $0xc2] sm:$0xff]
    %v6974 = vld [vmem:[#allocation2 + $0xd2] sm:$0xff]
    %v6975 = vld [vmem:[#allocation2 + $0xe2] sm:$0xff]
    %v6976 = vld [vmem:[#allocation2 + $0xf2] sm:$0xff]
    %v6977 = vld [vmem:[#allocation2 + $0x102] sm:$0xff]
    %v6978 = vld [vmem:[#allocation2 + $0x112] sm:$0xff]
    %v6979 = vld [vmem:[%s6914] sm:$0xff]
    %v6980 = vld [vmem:[%s6914 + $0x10] sm:$0xff]
    %v6981 = vld [vmem:[%s6914 + $0x20] sm:$0xff]
    %v6982 = vld [vmem:[%s6914 + $0x30] sm:$0xff]
    %v6983 = vld [vmem:[%s6914 + $0x40] sm:$0xff]
    %v6984 = vld [vmem:[%s6914 + $0x50] sm:$0xff]
    %v6985 = vld [vmem:[%s6914 + $0x60] sm:$0xff]
    %v6986 = vld [vmem:[%s6914 + $0x70] sm:$0xff]
    %v6987 = vld [vmem:[%s6914 + $0xa0] sm:$0xff]
    %v6988 = vld [vmem:[%s6914 + $0xb0] sm:$0xff]
    %v6989 = vld [vmem:[%s6914 + $0xc0] sm:$0xff]
    %v6990 = vld [vmem:[%s6914 + $0xd0] sm:$0xff]
    %v6991 = vld [vmem:[%s6914 + $0xe0] sm:$0xff]
    %v6992 = vld [vmem:[%s6914 + $0xf0] sm:$0xff]
    %v6993 = vld [vmem:[%s6914 + $0x100] sm:$0xff]
    %v6994 = vld [vmem:[%s6914 + $0x110] sm:$0xff]
    %v6995 = vld [vmem:[%s6914 + $0x1] sm:$0xff]
    %v6996 = vld [vmem:[%s6914 + $0x11] sm:$0xff]
    %v6997 = vld [vmem:[%s6914 + $0x21] sm:$0xff]
    %v6998 = vld [vmem:[%s6914 + $0x31] sm:$0xff]
    %v6999 = vld [vmem:[%s6914 + $0x41] sm:$0xff]
    %v7000 = vld [vmem:[%s6914 + $0x51] sm:$0xff]
    %v7001 = vld [vmem:[%s6914 + $0x61] sm:$0xff]
    %v7002 = vld [vmem:[%s6914 + $0x71] sm:$0xff]
    %v7003 = vld [vmem:[%s6914 + $0xa1] sm:$0xff]
    %v7004 = vld [vmem:[%s6914 + $0xb1] sm:$0xff]
    %v7005 = vld [vmem:[%s6914 + $0xc1] sm:$0xff]
    %v7006 = vld [vmem:[%s6914 + $0xd1] sm:$0xff]
    %v7007 = vld [vmem:[%s6914 + $0xe1] sm:$0xff]
    %v7008 = vld [vmem:[%s6914 + $0xf1] sm:$0xff]
    %v7009 = vld [vmem:[%s6914 + $0x101] sm:$0xff]
    %v7010 = vld [vmem:[%s6914 + $0x111] sm:$0xff]
    %v7011 = vld [vmem:[%s6914 + $0x2] sm:$0xff]
    %v7012 = vld [vmem:[%s6914 + $0x12] sm:$0xff]
    %v7013 = vld [vmem:[%s6914 + $0x22] sm:$0xff]
    %v7014 = vld [vmem:[%s6914 + $0x32] sm:$0xff]
    %v7015 = vld [vmem:[%s6914 + $0x42] sm:$0xff]
    %v7016 = vld [vmem:[%s6914 + $0x52] sm:$0xff]
    %v7017 = vld [vmem:[%s6914 + $0x62] sm:$0xff]
    %v7018 = vld [vmem:[%s6914 + $0x72] sm:$0xff]
    %v7019 = vld [vmem:[%s6914 + $0xa2] sm:$0xff]
    %v7020 = vld [vmem:[%s6914 + $0xb2] sm:$0xff]
    %v7021 = vld [vmem:[%s6914 + $0xc2] sm:$0xff]
    %v7022 = vld [vmem:[%s6914 + $0xd2] sm:$0xff]
    %v7023 = vld [vmem:[%s6914 + $0xe2] sm:$0xff]
    %v7024 = vld [vmem:[%s6914 + $0xf2] sm:$0xff]
    %v7025 = vld [vmem:[%s6914 + $0x102] sm:$0xff]
    %v7026 = vld [vmem:[%s6914 + $0x112] sm:$0xff]
    %s7027 = scalar_lea.vmem [#allocation2], 32
    %v7028 = vld [vmem:[%s7027] sm:$0xff]
    %v7029 = vld [vmem:[%s7027 + $0x10] sm:$0xff]
    %v7030 = vld [vmem:[%s7027 + $0x20] sm:$0xff]
    %v7031 = vld [vmem:[%s7027 + $0x30] sm:$0xff]
    %v7032 = vld [vmem:[%s7027 + $0x40] sm:$0xff]
    %v7033 = vld [vmem:[%s7027 + $0x50] sm:$0xff]
    %v7034 = vld [vmem:[%s7027 + $0x60] sm:$0xff]
    %v7035 = vld [vmem:[%s7027 + $0x70] sm:$0xff]
    %v7036 = vld [vmem:[%s7027 + $0xa0] sm:$0xff]
    %v7037 = vld [vmem:[%s7027 + $0xb0] sm:$0xff]
    %v7038 = vld [vmem:[%s7027 + $0xc0] sm:$0xff]
    %v7039 = vld [vmem:[%s7027 + $0xd0] sm:$0xff]
    %v7040 = vld [vmem:[%s7027 + $0xe0] sm:$0xff]
    %v7041 = vld [vmem:[%s7027 + $0xf0] sm:$0xff]
    %v7042 = vld [vmem:[%s7027 + $0x100] sm:$0xff]
    %v7043 = vld [vmem:[%s7027 + $0x110] sm:$0xff]
    %v7044 = vld [vmem:[%s7027 + $0x1] sm:$0xff]
    %v7045 = vld [vmem:[%s7027 + $0x11] sm:$0xff]
    %v7046 = vld [vmem:[%s7027 + $0x21] sm:$0xff]
    %v7047 = vld [vmem:[%s7027 + $0x31] sm:$0xff]
    %v7048 = vld [vmem:[%s7027 + $0x41] sm:$0xff]
    %v7049 = vld [vmem:[%s7027 + $0x51] sm:$0xff]
    %v7050 = vld [vmem:[%s7027 + $0x61] sm:$0xff]
    %v7051 = vld [vmem:[%s7027 + $0x71] sm:$0xff]
    %v7052 = vld [vmem:[%s7027 + $0xa1] sm:$0xff]
    %v7053 = vld [vmem:[%s7027 + $0xb1] sm:$0xff]
    %v7054 = vld [vmem:[%s7027 + $0xc1] sm:$0xff]
    %v7055 = vld [vmem:[%s7027 + $0xd1] sm:$0xff]
    %v7056 = vld [vmem:[%s7027 + $0xe1] sm:$0xff]
    %v7057 = vld [vmem:[%s7027 + $0xf1] sm:$0xff]
    %v7058 = vld [vmem:[%s7027 + $0x101] sm:$0xff]
    %v7059 = vld [vmem:[%s7027 + $0x111] sm:$0xff]
    %v7060 = vld [vmem:[%s7027 + $0x2] sm:$0xff]
    %v7061 = vld [vmem:[%s7027 + $0x12] sm:$0xff]
    %v7062 = vld [vmem:[%s7027 + $0x22] sm:$0xff]
    %v7063 = vld [vmem:[%s7027 + $0x32] sm:$0xff]
    %v7064 = vld [vmem:[%s7027 + $0x42] sm:$0xff]
    %v7065 = vld [vmem:[%s7027 + $0x52] sm:$0xff]
    %v7066 = vld [vmem:[%s7027 + $0x62] sm:$0xff]
    %v7067 = vld [vmem:[%s7027 + $0x72] sm:$0xff]
    %v7068 = vld [vmem:[%s7027 + $0xa2] sm:$0xff]
    %v7069 = vld [vmem:[%s7027 + $0xb2] sm:$0xff]
    %v7070 = vld [vmem:[%s7027 + $0xc2] sm:$0xff]
    %v7071 = vld [vmem:[%s7027 + $0xd2] sm:$0xff]
    %v7072 = vld [vmem:[%s7027 + $0xe2] sm:$0xff]
    %v7073 = vld [vmem:[%s7027 + $0xf2] sm:$0xff]
    %v7074 = vld [vmem:[%s7027 + $0x102] sm:$0xff]
    %v7075 = vld [vmem:[%s7027 + $0x112] sm:$0xff]
    %7092 = vrot.lane.b32.xlu0 %v6947, 16
    %v7093 = vpop.permute.xlu0 %7092
    %7094 = vrot.lane.b32.xlu0 %v6948, 16
    %v7095 = vpop.permute.xlu0 %7094
    %7096 = vrot.lane.b32.xlu0 %v6949, 16
    %v7097 = vpop.permute.xlu0 %7096
    %7098 = vrot.lane.b32.xlu0 %v6950, 16
    %v7099 = vpop.permute.xlu0 %7098
    %7100 = vrot.lane.b32.xlu0 %v6951, 16
    %v7101 = vpop.permute.xlu0 %7100
    %7102 = vrot.lane.b32.xlu0 %v6952, 16
    %v7103 = vpop.permute.xlu0 %7102
    %7104 = vrot.lane.b32.xlu0 %v6953, 16
    %v7105 = vpop.permute.xlu0 %7104
    %7106 = vrot.lane.b32.xlu0 %v6954, 16
    %v7107 = vpop.permute.xlu0 %7106
    %7108 = vrot.lane.b32.xlu0 %v6955, 16
    %v7109 = vpop.permute.xlu0 %7108
    %7110 = vrot.lane.b32.xlu0 %v6956, 16
    %v7111 = vpop.permute.xlu0 %7110
    %7112 = vrot.lane.b32.xlu0 %v6957, 16
    %v7113 = vpop.permute.xlu0 %7112
    %7114 = vrot.lane.b32.xlu0 %v6958, 16
    %v7115 = vpop.permute.xlu0 %7114
    %7116 = vrot.lane.b32.xlu0 %v6959, 16
    %v7117 = vpop.permute.xlu0 %7116
    %7118 = vrot.lane.b32.xlu0 %v6960, 16
    %v7119 = vpop.permute.xlu0 %7118
    %7120 = vrot.lane.b32.xlu0 %v6961, 16
    %v7121 = vpop.permute.xlu0 %7120
    %7122 = vrot.lane.b32.xlu0 %v6962, 16
    %v7123 = vpop.permute.xlu0 %7122
    %7156 = vrot.lane.b32.xlu0 %v6963, 32
    %v7157 = vpop.permute.xlu0 %7156
    %7158 = vrot.lane.b32.xlu0 %v6964, 32
    %v7159 = vpop.permute.xlu0 %7158
    %7160 = vrot.lane.b32.xlu0 %v6965, 32
    %v7161 = vpop.permute.xlu0 %7160
    %7162 = vrot.lane.b32.xlu0 %v6966, 32
    %v7163 = vpop.permute.xlu0 %7162
    %7164 = vrot.lane.b32.xlu0 %v6967, 32
    %v7165 = vpop.permute.xlu0 %7164
    %7166 = vrot.lane.b32.xlu0 %v6968, 32
    %v7167 = vpop.permute.xlu0 %7166
    %7168 = vrot.lane.b32.xlu0 %v6969, 32
    %v7169 = vpop.permute.xlu0 %7168
    %7170 = vrot.lane.b32.xlu0 %v6970, 32
    %v7171 = vpop.permute.xlu0 %7170
    %7172 = vrot.lane.b32.xlu0 %v6971, 32
    %v7173 = vpop.permute.xlu0 %7172
    %7174 = vrot.lane.b32.xlu0 %v6972, 32
    %v7175 = vpop.permute.xlu0 %7174
    %7176 = vrot.lane.b32.xlu0 %v6973, 32
    %v7177 = vpop.permute.xlu0 %7176
    %7178 = vrot.lane.b32.xlu0 %v6974, 32
    %v7179 = vpop.permute.xlu0 %7178
    %7180 = vrot.lane.b32.xlu0 %v6975, 32
    %v7181 = vpop.permute.xlu0 %7180
    %7182 = vrot.lane.b32.xlu0 %v6976, 32
    %v7183 = vpop.permute.xlu0 %7182
    %7184 = vrot.lane.b32.xlu0 %v6977, 32
    %v7185 = vpop.permute.xlu0 %7184
    %7186 = vrot.lane.b32.xlu0 %v6978, 32
    %v7187 = vpop.permute.xlu0 %7186
    %7220 = vrot.lane.b32.xlu0 %v6979, 48
    %v7221 = vpop.permute.xlu0 %7220
    %7222 = vrot.lane.b32.xlu0 %v6980, 48
    %v7223 = vpop.permute.xlu0 %7222
    %7224 = vrot.lane.b32.xlu0 %v6981, 48
    %v7225 = vpop.permute.xlu0 %7224
    %7226 = vrot.lane.b32.xlu0 %v6982, 48
    %v7227 = vpop.permute.xlu0 %7226
    %7228 = vrot.lane.b32.xlu0 %v6983, 48
    %v7229 = vpop.permute.xlu0 %7228
    %7230 = vrot.lane.b32.xlu0 %v6984, 48
    %v7231 = vpop.permute.xlu0 %7230
    %7232 = vrot.lane.b32.xlu0 %v6985, 48
    %v7233 = vpop.permute.xlu0 %7232
    %7234 = vrot.lane.b32.xlu0 %v6986, 48
    %v7235 = vpop.permute.xlu0 %7234
    %7236 = vrot.lane.b32.xlu0 %v6987, 48
    %v7237 = vpop.permute.xlu0 %7236
    %7238 = vrot.lane.b32.xlu0 %v6988, 48
    %v7239 = vpop.permute.xlu0 %7238
    %7240 = vrot.lane.b32.xlu0 %v6989, 48
    %v7241 = vpop.permute.xlu0 %7240
    %7242 = vrot.lane.b32.xlu0 %v6990, 48
    %v7243 = vpop.permute.xlu0 %7242
    %7244 = vrot.lane.b32.xlu0 %v6991, 48
    %v7245 = vpop.permute.xlu0 %7244
    %7246 = vrot.lane.b32.xlu0 %v6992, 48
    %v7247 = vpop.permute.xlu0 %7246
    %7248 = vrot.lane.b32.xlu0 %v6993, 48
    %v7249 = vpop.permute.xlu0 %7248
    %7250 = vrot.lane.b32.xlu0 %v6994, 48
    %v7251 = vpop.permute.xlu0 %7250
    %7284 = vrot.lane.b32.xlu0 %v6995, 64
    %v7285 = vpop.permute.xlu0 %7284
    %7286 = vrot.lane.b32.xlu0 %v6996, 64
    %v7287 = vpop.permute.xlu0 %7286
    %7288 = vrot.lane.b32.xlu0 %v6997, 64
    %v7289 = vpop.permute.xlu0 %7288
    %7290 = vrot.lane.b32.xlu0 %v6998, 64
    %v7291 = vpop.permute.xlu0 %7290
    %7292 = vrot.lane.b32.xlu0 %v6999, 64
    %v7293 = vpop.permute.xlu0 %7292
    %7294 = vrot.lane.b32.xlu0 %v7000, 64
    %v7295 = vpop.permute.xlu0 %7294
    %7296 = vrot.lane.b32.xlu0 %v7001, 64
    %v7297 = vpop.permute.xlu0 %7296
    %7298 = vrot.lane.b32.xlu0 %v7002, 64
    %v7299 = vpop.permute.xlu0 %7298
    %7300 = vrot.lane.b32.xlu0 %v7003, 64
    %v7301 = vpop.permute.xlu0 %7300
    %7302 = vrot.lane.b32.xlu0 %v7004, 64
    %v7303 = vpop.permute.xlu0 %7302
    %7304 = vrot.lane.b32.xlu0 %v7005, 64
    %v7305 = vpop.permute.xlu0 %7304
    %7306 = vrot.lane.b32.xlu0 %v7006, 64
    %v7307 = vpop.permute.xlu0 %7306
    %7308 = vrot.lane.b32.xlu0 %v7007, 64
    %v7309 = vpop.permute.xlu0 %7308
    %7310 = vrot.lane.b32.xlu0 %v7008, 64
    %v7311 = vpop.permute.xlu0 %7310
    %7312 = vrot.lane.b32.xlu0 %v7009, 64
    %v7313 = vpop.permute.xlu0 %7312
    %7314 = vrot.lane.b32.xlu0 %v7010, 64
    %v7315 = vpop.permute.xlu0 %7314
    %7348 = vrot.lane.b32.xlu0 %v7011, 80
    %v7349 = vpop.permute.xlu0 %7348
    %7350 = vrot.lane.b32.xlu0 %v7012, 80
    %v7351 = vpop.permute.xlu0 %7350
    %7352 = vrot.lane.b32.xlu0 %v7013, 80
    %v7353 = vpop.permute.xlu0 %7352
    %7354 = vrot.lane.b32.xlu0 %v7014, 80
    %v7355 = vpop.permute.xlu0 %7354
    %7356 = vrot.lane.b32.xlu0 %v7015, 80
    %v7357 = vpop.permute.xlu0 %7356
    %7358 = vrot.lane.b32.xlu0 %v7016, 80
    %v7359 = vpop.permute.xlu0 %7358
    %7360 = vrot.lane.b32.xlu0 %v7017, 80
    %v7361 = vpop.permute.xlu0 %7360
    %7362 = vrot.lane.b32.xlu0 %v7018, 80
    %v7363 = vpop.permute.xlu0 %7362
    %7364 = vrot.lane.b32.xlu0 %v7019, 80
    %v7365 = vpop.permute.xlu0 %7364
    %7366 = vrot.lane.b32.xlu0 %v7020, 80
    %v7367 = vpop.permute.xlu0 %7366
    %7368 = vrot.lane.b32.xlu0 %v7021, 80
    %v7369 = vpop.permute.xlu0 %7368
    %7370 = vrot.lane.b32.xlu0 %v7022, 80
    %v7371 = vpop.permute.xlu0 %7370
    %7372 = vrot.lane.b32.xlu0 %v7023, 80
    %v7373 = vpop.permute.xlu0 %7372
    %7374 = vrot.lane.b32.xlu0 %v7024, 80
    %v7375 = vpop.permute.xlu0 %7374
    %7376 = vrot.lane.b32.xlu0 %v7025, 80
    %v7377 = vpop.permute.xlu0 %7376
    %7378 = vrot.lane.b32.xlu0 %v7026, 80
    %v7379 = vpop.permute.xlu0 %7378
    %7412 = vrot.lane.b32.xlu0 %v7028, 96
    %v7413 = vpop.permute.xlu0 %7412
    %7414 = vrot.lane.b32.xlu0 %v7029, 96
    %v7415 = vpop.permute.xlu0 %7414
    %7416 = vrot.lane.b32.xlu0 %v7030, 96
    %v7417 = vpop.permute.xlu0 %7416
    %7418 = vrot.lane.b32.xlu0 %v7031, 96
    %v7419 = vpop.permute.xlu0 %7418
    %7420 = vrot.lane.b32.xlu0 %v7032, 96
    %v7421 = vpop.permute.xlu0 %7420
    %7422 = vrot.lane.b32.xlu0 %v7033, 96
    %v7423 = vpop.permute.xlu0 %7422
    %7424 = vrot.lane.b32.xlu0 %v7034, 96
    %v7425 = vpop.permute.xlu0 %7424
    %7426 = vrot.lane.b32.xlu0 %v7035, 96
    %v7427 = vpop.permute.xlu0 %7426
    %7428 = vrot.lane.b32.xlu0 %v7036, 96
    %v7429 = vpop.permute.xlu0 %7428
    %7430 = vrot.lane.b32.xlu0 %v7037, 96
    %v7431 = vpop.permute.xlu0 %7430
    %7432 = vrot.lane.b32.xlu0 %v7038, 96
    %v7433 = vpop.permute.xlu0 %7432
    %7434 = vrot.lane.b32.xlu0 %v7039, 96
    %v7435 = vpop.permute.xlu0 %7434
    %7436 = vrot.lane.b32.xlu0 %v7040, 96
    %v7437 = vpop.permute.xlu0 %7436
    %7438 = vrot.lane.b32.xlu0 %v7041, 96
    %v7439 = vpop.permute.xlu0 %7438
    %7440 = vrot.lane.b32.xlu0 %v7042, 96
    %v7441 = vpop.permute.xlu0 %7440
    %7442 = vrot.lane.b32.xlu0 %v7043, 96
    %v7443 = vpop.permute.xlu0 %7442
    %7476 = vrot.lane.b32.xlu0 %v7044, 112
    %v7477 = vpop.permute.xlu0 %7476
    %7478 = vrot.lane.b32.xlu0 %v7045, 112
    %v7479 = vpop.permute.xlu0 %7478
    %7480 = vrot.lane.b32.xlu0 %v7046, 112
    %v7481 = vpop.permute.xlu0 %7480
    %7482 = vrot.lane.b32.xlu0 %v7047, 112
    %v7483 = vpop.permute.xlu0 %7482
    %7484 = vrot.lane.b32.xlu0 %v7048, 112
    %v7485 = vpop.permute.xlu0 %7484
    %7486 = vrot.lane.b32.xlu0 %v7049, 112
    %v7487 = vpop.permute.xlu0 %7486
    %7488 = vrot.lane.b32.xlu0 %v7050, 112
    %v7489 = vpop.permute.xlu0 %7488
    %7490 = vrot.lane.b32.xlu0 %v7051, 112
    %v7491 = vpop.permute.xlu0 %7490
    %7492 = vrot.lane.b32.xlu0 %v7052, 112
    %v7493 = vpop.permute.xlu0 %7492
    %7494 = vrot.lane.b32.xlu0 %v7053, 112
    %v7495 = vpop.permute.xlu0 %7494
    %7496 = vrot.lane.b32.xlu0 %v7054, 112
    %v7497 = vpop.permute.xlu0 %7496
    %7498 = vrot.lane.b32.xlu0 %v7055, 112
    %v7499 = vpop.permute.xlu0 %7498
    %7500 = vrot.lane.b32.xlu0 %v7056, 112
    %v7501 = vpop.permute.xlu0 %7500
    %7502 = vrot.lane.b32.xlu0 %v7057, 112
    %v7503 = vpop.permute.xlu0 %7502
    %7504 = vrot.lane.b32.xlu0 %v7058, 112
    %v7505 = vpop.permute.xlu0 %7504
    %7506 = vrot.lane.b32.xlu0 %v7059, 112
    %v7507 = vpop.permute.xlu0 %7506
    %v7524 = vsel %vm4785, %v6931, %v7093
    %v7525 = vsel %vm4785, %v6932, %v7095
    %v7526 = vsel %vm4785, %v6933, %v7097
    %v7527 = vsel %vm4785, %v6934, %v7099
    %v7528 = vsel %vm4785, %v6935, %v7101
    %v7529 = vsel %vm4785, %v6936, %v7103
    %v7530 = vsel %vm4785, %v6937, %v7105
    %v7531 = vsel %vm4785, %v6938, %v7107
    %v7532 = vsel %vm4785, %v6939, %v7109
    %v7533 = vsel %vm4785, %v6940, %v7111
    %v7534 = vsel %vm4785, %v6941, %v7113
    %v7535 = vsel %vm4785, %v6942, %v7115
    %v7536 = vsel %vm4785, %v6943, %v7117
    %v7537 = vsel %vm4785, %v6944, %v7119
    %v7538 = vsel %vm4785, %v6945, %v7121
    %v7539 = vsel %vm4785, %v6946, %v7123
    %vm7540 = vcmask 261120
    %v7541 = vsel %vm7540, %v7524, %v7157
    %v7542 = vsel %vm7540, %v7525, %v7159
    %v7543 = vsel %vm7540, %v7526, %v7161
    %v7544 = vsel %vm7540, %v7527, %v7163
    %v7545 = vsel %vm7540, %v7528, %v7165
    %v7546 = vsel %vm7540, %v7529, %v7167
    %v7547 = vsel %vm7540, %v7530, %v7169
    %v7548 = vsel %vm7540, %v7531, %v7171
    %v7549 = vsel %vm7540, %v7532, %v7173
    %v7550 = vsel %vm7540, %v7533, %v7175
    %v7551 = vsel %vm7540, %v7534, %v7177
    %v7552 = vsel %vm7540, %v7535, %v7179
    %v7553 = vsel %vm7540, %v7536, %v7181
    %v7554 = vsel %vm7540, %v7537, %v7183
    %v7555 = vsel %vm7540, %v7538, %v7185
    %v7556 = vsel %vm7540, %v7539, %v7187
    %vm7557 = vcmask 392192
    %v7558 = vsel %vm7557, %v7541, %v7221
    %v7559 = vsel %vm7557, %v7542, %v7223
    %v7560 = vsel %vm7557, %v7543, %v7225
    %v7561 = vsel %vm7557, %v7544, %v7227
    %v7562 = vsel %vm7557, %v7545, %v7229
    %v7563 = vsel %vm7557, %v7546, %v7231
    %v7564 = vsel %vm7557, %v7547, %v7233
    %v7565 = vsel %vm7557, %v7548, %v7235
    %v7566 = vsel %vm7557, %v7549, %v7237
    %v7567 = vsel %vm7557, %v7550, %v7239
    %v7568 = vsel %vm7557, %v7551, %v7241
    %v7569 = vsel %vm7557, %v7552, %v7243
    %v7570 = vsel %vm7557, %v7553, %v7245
    %v7571 = vsel %vm7557, %v7554, %v7247
    %v7572 = vsel %vm7557, %v7555, %v7249
    %v7573 = vsel %vm7557, %v7556, %v7251
    %vm7574 = vcmask 523264
    %v7575 = vsel %vm7574, %v7558, %v7285
    %v7576 = vsel %vm7574, %v7559, %v7287
    %v7577 = vsel %vm7574, %v7560, %v7289
    %v7578 = vsel %vm7574, %v7561, %v7291
    %v7579 = vsel %vm7574, %v7562, %v7293
    %v7580 = vsel %vm7574, %v7563, %v7295
    %v7581 = vsel %vm7574, %v7564, %v7297
    %v7582 = vsel %vm7574, %v7565, %v7299
    %v7583 = vsel %vm7574, %v7566, %v7301
    %v7584 = vsel %vm7574, %v7567, %v7303
    %v7585 = vsel %vm7574, %v7568, %v7305
    %v7586 = vsel %vm7574, %v7569, %v7307
    %v7587 = vsel %vm7574, %v7570, %v7309
    %v7588 = vsel %vm7574, %v7571, %v7311
    %v7589 = vsel %vm7574, %v7572, %v7313
    %v7590 = vsel %vm7574, %v7573, %v7315
    %vm7591 = vcmask 654336
    %v7592 = vsel %vm7591, %v7575, %v7349
    %v7593 = vsel %vm7591, %v7576, %v7351
    %v7594 = vsel %vm7591, %v7577, %v7353
    %v7595 = vsel %vm7591, %v7578, %v7355
    %v7596 = vsel %vm7591, %v7579, %v7357
    %v7597 = vsel %vm7591, %v7580, %v7359
    %v7598 = vsel %vm7591, %v7581, %v7361
    %v7599 = vsel %vm7591, %v7582, %v7363
    %v7600 = vsel %vm7591, %v7583, %v7365
    %v7601 = vsel %vm7591, %v7584, %v7367
    %v7602 = vsel %vm7591, %v7585, %v7369
    %v7603 = vsel %vm7591, %v7586, %v7371
    %v7604 = vsel %vm7591, %v7587, %v7373
    %v7605 = vsel %vm7591, %v7588, %v7375
    %v7606 = vsel %vm7591, %v7589, %v7377
    %v7607 = vsel %vm7591, %v7590, %v7379
    %vm7608 = vcmask 785408
    %v7609 = vsel %vm7608, %v7592, %v7413
    %v7610 = vsel %vm7608, %v7593, %v7415
    %v7611 = vsel %vm7608, %v7594, %v7417
    %v7612 = vsel %vm7608, %v7595, %v7419
    %v7613 = vsel %vm7608, %v7596, %v7421
    %v7614 = vsel %vm7608, %v7597, %v7423
    %v7615 = vsel %vm7608, %v7598, %v7425
    %v7616 = vsel %vm7608, %v7599, %v7427
    %v7617 = vsel %vm7608, %v7600, %v7429
    %v7618 = vsel %vm7608, %v7601, %v7431
    %v7619 = vsel %vm7608, %v7602, %v7433
    %v7620 = vsel %vm7608, %v7603, %v7435
    %v7621 = vsel %vm7608, %v7604, %v7437
    %v7622 = vsel %vm7608, %v7605, %v7439
    %v7623 = vsel %vm7608, %v7606, %v7441
    %v7624 = vsel %vm7608, %v7607, %v7443
    %vm7625 = vcmask 916480
    %v7626 = vsel %vm7625, %v7609, %v7477
    %v7627 = vsel %vm7625, %v7610, %v7479
    %v7628 = vsel %vm7625, %v7611, %v7481
    %v7629 = vsel %vm7625, %v7612, %v7483
    %v7630 = vsel %vm7625, %v7613, %v7485
    %v7631 = vsel %vm7625, %v7614, %v7487
    %v7632 = vsel %vm7625, %v7615, %v7489
    %v7633 = vsel %vm7625, %v7616, %v7491
    %v7634 = vsel %vm7625, %v7617, %v7493
    %v7635 = vsel %vm7625, %v7618, %v7495
    %v7636 = vsel %vm7625, %v7619, %v7497
    %v7637 = vsel %vm7625, %v7620, %v7499
    %v7638 = vsel %vm7625, %v7621, %v7501
    %v7639 = vsel %vm7625, %v7622, %v7503
    %v7640 = vsel %vm7625, %v7623, %v7505
    %v7641 = vsel %vm7625, %v7624, %v7507
    %v7642 = vld [vmem:[%s3] sm:$0xff]
    %v7643 = vld [vmem:[%s3 + $0x8] sm:$0xff]
    %v7644 = vld [vmem:[%s3 + $0x10] sm:$0xff]
    %v7645 = vld [vmem:[%s3 + $0x18] sm:$0xff]
    %v7646 = vld [vmem:[%s3 + $0x20] sm:$0xff]
    %v7647 = vld [vmem:[%s3 + $0x28] sm:$0xff]
    %v7648 = vld [vmem:[%s3 + $0x30] sm:$0xff]
    %v7649 = vld [vmem:[%s3 + $0x38] sm:$0xff]
    %v7650 = vld [vmem:[%s3 + $0x40] sm:$0xff]
    %v7651 = vld [vmem:[%s3 + $0x48] sm:$0xff]
    %v7652 = vld [vmem:[%s3 + $0x50] sm:$0xff]
    %v7653 = vld [vmem:[%s3 + $0x58] sm:$0xff]
    %v7654 = vld [vmem:[%s3 + $0x60] sm:$0xff]
    %v7655 = vld [vmem:[%s3 + $0x68] sm:$0xff]
    %v7656 = vld [vmem:[%s3 + $0x70] sm:$0xff]
    %v7657 = vld [vmem:[%s3 + $0x78] sm:$0xff]
    %v7658 = vld [vmem:[%s3 + $0x80] sm:$0xff]
    %v7659 = vld [vmem:[%s3 + $0x88] sm:$0xff]
    %v7660 = vld [vmem:[%s4] sm:$0x1]
    %v7662 = vlaneseq
    %v7663 = vshrl.u32 %v7662, 7
    %v7664 = vsub.s32 0, %v7663
    %v7665 = vrot.slane %v7660, %v7664
    %v7668 = vsel %vm4785, %v7060, 0
    %v7671 = vsel %vm4785, %v7061, 0
    %v7674 = vsel %vm4785, %v7062, 0
    %v7677 = vsel %vm4785, %v7063, 0
    %v7680 = vsel %vm4785, %v7064, 0
    %v7683 = vsel %vm4785, %v7065, 0
    %v7686 = vsel %vm4785, %v7066, 0
    %v7689 = vsel %vm4785, %v7067, 0
    %v7692 = vsel %vm4785, %v7068, 0
    %v7695 = vsel %vm4785, %v7069, 0
    %v7698 = vsel %vm4785, %v7070, 0
    %v7701 = vsel %vm4785, %v7071, 0
    %v7704 = vsel %vm4785, %v7072, 0
    %v7707 = vsel %vm4785, %v7073, 0
    %v7710 = vsel %vm4785, %v7074, 0
    %v7713 = vsel %vm4785, %v7075, 0
    %7715 = vmatprep.subr.mxu0 0.0
    %7716 = vmatpush1.msra.mxu0 %v7657
    %7717 = vmatprep.subr.mxu0 0.0
    %7718 = vmatpush1.msra.mxu0 %v7656
    %7719 = vmatprep.subr.mxu0 0.0
    %7720 = vmatpush1.msra.mxu0 %v7655
    %7721 = vmatprep.subr.mxu0 0.0
    %7722 = vmatpush1.msra.mxu0 %v7654
    %7723 = vmatprep.subr.mxu0 0.0
    %7724 = vmatpush1.msra.mxu0 %v7653
    %7725 = vmatprep.subr.mxu0 0.0
    %7726 = vmatpush1.msra.mxu0 %v7652
    %7727 = vmatprep.subr.mxu0 0.0
    %7728 = vmatpush1.msra.mxu0 %v7651
    %7729 = vmatprep.subr.mxu0 0.0
    %7730 = vmatpush1.msra.mxu0 %v7650
    %7731 = vmatprep.subr.mxu0 0.0
    %7732 = vmatpush1.msra.mxu0 %v7649
    %7733 = vmatprep.subr.mxu0 0.0
    %7734 = vmatpush1.msra.mxu0 %v7648
    %7735 = vmatprep.subr.mxu0 0.0
    %7736 = vmatpush1.msra.mxu0 %v7647
    %7737 = vmatprep.subr.mxu0 0.0
    %7738 = vmatpush1.msra.mxu0 %v7646
    %7739 = vmatprep.subr.mxu0 0.0
    %7740 = vmatpush1.msra.mxu0 %v7645
    %7741 = vmatprep.subr.mxu0 0.0
    %7742 = vmatpush1.msra.mxu0 %v7644
    %7743 = vmatprep.subr.mxu0 0.0
    %7744 = vmatpush1.msra.mxu0 %v7643
    %7745 = vmatprep.subr.mxu0 0.0
    %7746 = vmatpush1.msra.mxu0 %v7642
    %7747 = vmatprep.subr.mxu0 0.0
    %7748 = vmatpush2.msra.mxu0 0.0
    %7749 = vmatprep.subr.mxu0 0.0
    %7750 = vmatpush2.msra.mxu0 0.0
    %7751 = vmatprep.subr.mxu0 0.0
    %7752 = vmatpush2.msra.mxu0 0.0
    %7753 = vmatprep.subr.mxu0 0.0
    %7754 = vmatpush2.msra.mxu0 0.0
    %7755 = vmatprep.subr.mxu0 0.0
    %7756 = vmatpush2.msra.mxu0 0.0
    %7757 = vmatprep.subr.mxu0 0.0
    %7758 = vmatpush2.msra.mxu0 0.0
    %7759 = vmatprep.subr.mxu0 0.0
    %7760 = vmatpush2.msra.mxu0 0.0
    %7761 = vmatprep.subr.mxu0 0.0
    %7762 = vmatpush2.msra.mxu0 0.0
    %7763 = vmatprep.subr.mxu0 0.0
    %7764 = vmatpush2.msra.mxu0 0.0
    %7765 = vmatprep.subr.mxu0 0.0
    %7766 = vmatpush2.msra.mxu0 0.0
    %7767 = vmatprep.subr.mxu0 0.0
    %7768 = vmatpush2.msra.mxu0 0.0
    %7769 = vmatprep.subr.mxu0 0.0
    %7770 = vmatpush2.msra.mxu0 0.0
    %7771 = vmatprep.subr.mxu0 0.0
    %7772 = vmatpush2.msra.mxu0 0.0
    %7773 = vmatprep.subr.mxu0 0.0
    %7774 = vmatpush2.msra.mxu0 0.0
    %7775 = vmatprep.subr.mxu0 0.0
    %7776 = vmatpush2.msra.mxu0 %v7659
    %7777 = vmatprep.subr.mxu0 0.0
    %7778 = vmatpush2.msra.mxu0 %v7658
    %7779 = vmatprep.mubr.f32.mxu0 %v7668
    %7780 = vmatmul.mubr.f32.gmra.mxu0 %v7626
    %v7781 = vpop.f32.mrf.mxu0
    %v7782 = vadd.f32 %v7665, %v7781
    %v7783 = vpop.f32.mrf.mxu0
    %7784 = vmatprep.mubr.f32.mxu0 %v7671
    %7785 = vmatmul.mubr.f32.gmra.mxu0 %v7627
    %v7786 = vpop.f32.mrf.mxu0
    %v7787 = vadd.f32 %v7665, %v7786
    %v7788 = vpop.f32.mrf.mxu0
    %7789 = vmatprep.mubr.f32.mxu0 %v7674
    %7790 = vmatmul.mubr.f32.gmra.mxu0 %v7628
    %v7791 = vpop.f32.mrf.mxu0
    %v7792 = vadd.f32 %v7665, %v7791
    %v7793 = vpop.f32.mrf.mxu0
    %7794 = vmatprep.mubr.f32.mxu0 %v7677
    %7795 = vmatmul.mubr.f32.gmra.mxu0 %v7629
    %v7796 = vpop.f32.mrf.mxu0
    %v7797 = vadd.f32 %v7665, %v7796
    %v7798 = vpop.f32.mrf.mxu0
    %7799 = vmatprep.mubr.f32.mxu0 %v7680
    %7800 = vmatmul.mubr.f32.gmra.mxu0 %v7630
    %v7801 = vpop.f32.mrf.mxu0
    %v7802 = vadd.f32 %v7665, %v7801
    %v7803 = vpop.f32.mrf.mxu0
    %7804 = vmatprep.mubr.f32.mxu0 %v7683
    %7805 = vmatmul.mubr.f32.gmra.mxu0 %v7631
    %v7806 = vpop.f32.mrf.mxu0
    %v7807 = vadd.f32 %v7665, %v7806
    %v7808 = vpop.f32.mrf.mxu0
    %7809 = vmatprep.mubr.f32.mxu0 %v7686
    %7810 = vmatmul.mubr.f32.gmra.mxu0 %v7632
    %v7811 = vpop.f32.mrf.mxu0
    %v7812 = vadd.f32 %v7665, %v7811
    %v7813 = vpop.f32.mrf.mxu0
    %7814 = vmatprep.mubr.f32.mxu0 %v7689
    %7815 = vmatmul.mubr.f32.gmra.mxu0 %v7633
    %v7816 = vpop.f32.mrf.mxu0
    %v7817 = vadd.f32 %v7665, %v7816
    %v7818 = vpop.f32.mrf.mxu0
    %7819 = vmatprep.mubr.f32.mxu0 %v7692
    %7820 = vmatmul.mubr.f32.gmra.mxu0 %v7634
    %v7821 = vpop.f32.mrf.mxu0
    %v7822 = vadd.f32 %v7665, %v7821
    %v7823 = vpop.f32.mrf.mxu0
    %7824 = vmatprep.mubr.f32.mxu0 %v7695
    %7825 = vmatmul.mubr.f32.gmra.mxu0 %v7635
    %v7826 = vpop.f32.mrf.mxu0
    %v7827 = vadd.f32 %v7665, %v7826
    %v7828 = vpop.f32.mrf.mxu0
    %7829 = vmatprep.mubr.f32.mxu0 %v7698
    %7830 = vmatmul.mubr.f32.gmra.mxu0 %v7636
    %v7831 = vpop.f32.mrf.mxu0
    %v7832 = vadd.f32 %v7665, %v7831
    %v7833 = vpop.f32.mrf.mxu0
    %7834 = vmatprep.mubr.f32.mxu0 %v7701
    %7835 = vmatmul.mubr.f32.gmra.mxu0 %v7637
    %v7836 = vpop.f32.mrf.mxu0
    %v7837 = vadd.f32 %v7665, %v7836
    %v7838 = vpop.f32.mrf.mxu0
    %7839 = vmatprep.mubr.f32.mxu0 %v7704
    %7840 = vmatmul.mubr.f32.gmra.mxu0 %v7638
    %v7841 = vpop.f32.mrf.mxu0
    %v7842 = vadd.f32 %v7665, %v7841
    %v7843 = vpop.f32.mrf.mxu0
    %7844 = vmatprep.mubr.f32.mxu0 %v7707
    %7845 = vmatmul.mubr.f32.gmra.mxu0 %v7639
    %v7846 = vpop.f32.mrf.mxu0
    %v7847 = vadd.f32 %v7665, %v7846
    %v7848 = vpop.f32.mrf.mxu0
    %7849 = vmatprep.mubr.f32.mxu0 %v7710
    %7850 = vmatmul.mubr.f32.gmra.mxu0 %v7640
    %v7851 = vpop.f32.mrf.mxu0
    %v7852 = vadd.f32 %v7665, %v7851
    %v7853 = vpop.f32.mrf.mxu0
    %7854 = vmatprep.mubr.f32.mxu0 %v7713
    %7855 = vmatmul.mubr.f32.gmra.mxu0 %v7641
    %v7856 = vpop.f32.mrf.mxu0
    %v7857 = vadd.f32 %v7665, %v7856
    %v7858 = vpop.f32.mrf.mxu0
    %7859 = vdwg.mxu0
    %v7860 = vsel %vm7540, %v7782, -inf
    %v7861 = vsel %vm7540, %v7787, -inf
    %v7862 = vmax.f32 %v7860, %v7861
    %v7863 = vsel %vm7540, %v7792, -inf
    %v7864 = vsel %vm7540, %v7797, -inf
    %v7865 = vmax.f32 %v7863, %v7864
    %v7866 = vsel %vm7540, %v7802, -inf
    %v7867 = vsel %vm7540, %v7807, -inf
    %v7868 = vmax.f32 %v7866, %v7867
    %v7869 = vsel %vm7540, %v7812, -inf
    %v7870 = vsel %vm7540, %v7817, -inf
    %v7871 = vmax.f32 %v7869, %v7870
    %v7872 = vsel %vm7540, %v7822, -inf
    %v7873 = vsel %vm7540, %v7827, -inf
    %v7874 = vmax.f32 %v7872, %v7873
    %v7875 = vsel %vm7540, %v7832, -inf
    %v7876 = vsel %vm7540, %v7837, -inf
    %v7877 = vmax.f32 %v7875, %v7876
    %v7878 = vsel %vm7540, %v7842, -inf
    %v7879 = vsel %vm7540, %v7847, -inf
    %v7880 = vmax.f32 %v7878, %v7879
    %v7881 = vsel %vm7540, %v7852, -inf
    %v7882 = vsel %vm7540, %v7857, -inf
    %v7883 = vmax.f32 %v7881, %v7882
    %v7892 = vcombine.high %v7862, %v7862
    %v7894 = vunpack.c.l.s4 1983009808
    %v7895 = vunpack.c.0.s8 %v7894
    %v7896 = vlaneseq
    %v7897 = vshrl.u32 %v7896, 7
    %v7898 = vsub.s32 %v7895, %v7897
    %v7899 = vrot.slane %v7862, %v7898
    %v7901 = vunpack.c.l.s4 1983009808
    %v7902 = vunpack.c.0.s8 %v7901
    %v7903 = vlaneseq
    %v7904 = vshrl.u32 %v7903, 7
    %v7905 = vsub.s32 %v7902, %v7904
    %v7906 = vrot.slane %v7892, %v7905
    %v7907 = vcombine.high %v7899, %v7899
    %v7908 = vcombine.high %v7906, %v7906
    %v7909 = vcombine.high %v7865, %v7865
    %v7911 = vunpack.c.l.s4 1983009808
    %v7912 = vunpack.c.0.s8 %v7911
    %v7913 = vlaneseq
    %v7914 = vshrl.u32 %v7913, 7
    %v7915 = vsub.s32 %v7912, %v7914
    %v7916 = vrot.slane %v7865, %v7915
    %v7918 = vunpack.c.l.s4 1983009808
    %v7919 = vunpack.c.0.s8 %v7918
    %v7920 = vlaneseq
    %v7921 = vshrl.u32 %v7920, 7
    %v7922 = vsub.s32 %v7919, %v7921
    %v7923 = vrot.slane %v7909, %v7922
    %v7924 = vcombine.high %v7916, %v7916
    %v7925 = vcombine.high %v7923, %v7923
    %v7926 = vcombine.high %v7868, %v7868
    %v7928 = vunpack.c.l.s4 1983009808
    %v7929 = vunpack.c.0.s8 %v7928
    %v7930 = vlaneseq
    %v7931 = vshrl.u32 %v7930, 7
    %v7932 = vsub.s32 %v7929, %v7931
    %v7933 = vrot.slane %v7868, %v7932
    %v7935 = vunpack.c.l.s4 1983009808
    %v7936 = vunpack.c.0.s8 %v7935
    %v7937 = vlaneseq
    %v7938 = vshrl.u32 %v7937, 7
    %v7939 = vsub.s32 %v7936, %v7938
    %v7940 = vrot.slane %v7926, %v7939
    %v7941 = vcombine.high %v7933, %v7933
    %v7942 = vcombine.high %v7940, %v7940
    %v7943 = vcombine.high %v7871, %v7871
    %v7945 = vunpack.c.l.s4 1983009808
    %v7946 = vunpack.c.0.s8 %v7945
    %v7947 = vlaneseq
    %v7948 = vshrl.u32 %v7947, 7
    %v7949 = vsub.s32 %v7946, %v7948
    %v7950 = vrot.slane %v7871, %v7949
    %v7952 = vunpack.c.l.s4 1983009808
    %v7953 = vunpack.c.0.s8 %v7952
    %v7954 = vlaneseq
    %v7955 = vshrl.u32 %v7954, 7
    %v7956 = vsub.s32 %v7953, %v7955
    %v7957 = vrot.slane %v7943, %v7956
    %v7958 = vcombine.high %v7950, %v7950
    %v7959 = vcombine.high %v7957, %v7957
    %v7960 = vcombine.high %v7874, %v7874
    %v7962 = vunpack.c.l.s4 1983009808
    %v7963 = vunpack.c.0.s8 %v7962
    %v7964 = vlaneseq
    %v7965 = vshrl.u32 %v7964, 7
    %v7966 = vsub.s32 %v7963, %v7965
    %v7967 = vrot.slane %v7874, %v7966
    %v7969 = vunpack.c.l.s4 1983009808
    %v7970 = vunpack.c.0.s8 %v7969
    %v7971 = vlaneseq
    %v7972 = vshrl.u32 %v7971, 7
    %v7973 = vsub.s32 %v7970, %v7972
    %v7974 = vrot.slane %v7960, %v7973
    %v7975 = vcombine.high %v7967, %v7967
    %v7976 = vcombine.high %v7974, %v7974
    %v7977 = vcombine.high %v7877, %v7877
    %v7979 = vunpack.c.l.s4 1983009808
    %v7980 = vunpack.c.0.s8 %v7979
    %v7981 = vlaneseq
    %v7982 = vshrl.u32 %v7981, 7
    %v7983 = vsub.s32 %v7980, %v7982
    %v7984 = vrot.slane %v7877, %v7983
    %v7986 = vunpack.c.l.s4 1983009808
    %v7987 = vunpack.c.0.s8 %v7986
    %v7988 = vlaneseq
    %v7989 = vshrl.u32 %v7988, 7
    %v7990 = vsub.s32 %v7987, %v7989
    %v7991 = vrot.slane %v7977, %v7990
    %v7992 = vcombine.high %v7984, %v7984
    %v7993 = vcombine.high %v7991, %v7991
    %v7994 = vcombine.high %v7880, %v7880
    %v7996 = vunpack.c.l.s4 1983009808
    %v7997 = vunpack.c.0.s8 %v7996
    %v7998 = vlaneseq
    %v7999 = vshrl.u32 %v7998, 7
    %v8000 = vsub.s32 %v7997, %v7999
    %v8001 = vrot.slane %v7880, %v8000
    %v8003 = vunpack.c.l.s4 1983009808
    %v8004 = vunpack.c.0.s8 %v8003
    %v8005 = vlaneseq
    %v8006 = vshrl.u32 %v8005, 7
    %v8007 = vsub.s32 %v8004, %v8006
    %v8008 = vrot.slane %v7994, %v8007
    %v8009 = vcombine.high %v8001, %v8001
    %v8010 = vcombine.high %v8008, %v8008
    %v8011 = vcombine.high %v7883, %v7883
    %v8013 = vunpack.c.l.s4 1983009808
    %v8014 = vunpack.c.0.s8 %v8013
    %v8015 = vlaneseq
    %v8016 = vshrl.u32 %v8015, 7
    %v8017 = vsub.s32 %v8014, %v8016
    %v8018 = vrot.slane %v7883, %v8017
    %v8020 = vunpack.c.l.s4 1983009808
    %v8021 = vunpack.c.0.s8 %v8020
    %v8022 = vlaneseq
    %v8023 = vshrl.u32 %v8022, 7
    %v8024 = vsub.s32 %v8021, %v8023
    %v8025 = vrot.slane %v8011, %v8024
    %v8026 = vcombine.high %v8018, %v8018
    %v8027 = vcombine.high %v8025, %v8025
    %vm8060 = vcmask 254976
    %v8061 = vsel %vm8060, %v7899, -inf
    %v8062 = vrot.slane %v8061, 4
    %v8063 = vmax.f32 %v8061, %v8062
    %v8064 = vrot.slane %v8063, 2
    %v8065 = vmax.f32 %v8063, %v8064
    %v8066 = vrot.slane %v8065, 1
    %v8067 = vmax.f32 %v8065, %v8066
    %v8068 = vsel %vm8060, %v7907, -inf
    %v8069 = vrot.slane %v8068, 4
    %v8070 = vmax.f32 %v8068, %v8069
    %v8071 = vrot.slane %v8070, 2
    %v8072 = vmax.f32 %v8070, %v8071
    %v8073 = vrot.slane %v8072, 1
    %v8074 = vmax.f32 %v8072, %v8073
    %v8075 = vsel %vm8060, %v7906, -inf
    %v8076 = vrot.slane %v8075, 4
    %v8077 = vmax.f32 %v8075, %v8076
    %v8078 = vrot.slane %v8077, 2
    %v8079 = vmax.f32 %v8077, %v8078
    %v8080 = vrot.slane %v8079, 1
    %v8081 = vmax.f32 %v8079, %v8080
    %v8082 = vsel %vm8060, %v7908, -inf
    %v8083 = vrot.slane %v8082, 4
    %v8084 = vmax.f32 %v8082, %v8083
    %v8085 = vrot.slane %v8084, 2
    %v8086 = vmax.f32 %v8084, %v8085
    %v8087 = vrot.slane %v8086, 1
    %v8088 = vmax.f32 %v8086, %v8087
    %v8089 = vsel %vm8060, %v7916, -inf
    %v8090 = vrot.slane %v8089, 4
    %v8091 = vmax.f32 %v8089, %v8090
    %v8092 = vrot.slane %v8091, 2
    %v8093 = vmax.f32 %v8091, %v8092
    %v8094 = vrot.slane %v8093, 1
    %v8095 = vmax.f32 %v8093, %v8094
    %v8096 = vsel %vm8060, %v7924, -inf
    %v8097 = vrot.slane %v8096, 4
    %v8098 = vmax.f32 %v8096, %v8097
    %v8099 = vrot.slane %v8098, 2
    %v8100 = vmax.f32 %v8098, %v8099
    %v8101 = vrot.slane %v8100, 1
    %v8102 = vmax.f32 %v8100, %v8101
    %v8103 = vsel %vm8060, %v7923, -inf
    %v8104 = vrot.slane %v8103, 4
    %v8105 = vmax.f32 %v8103, %v8104
    %v8106 = vrot.slane %v8105, 2
    %v8107 = vmax.f32 %v8105, %v8106
    %v8108 = vrot.slane %v8107, 1
    %v8109 = vmax.f32 %v8107, %v8108
    %v8110 = vsel %vm8060, %v7925, -inf
    %v8111 = vrot.slane %v8110, 4
    %v8112 = vmax.f32 %v8110, %v8111
    %v8113 = vrot.slane %v8112, 2
    %v8114 = vmax.f32 %v8112, %v8113
    %v8115 = vrot.slane %v8114, 1
    %v8116 = vmax.f32 %v8114, %v8115
    %v8117 = vsel %vm8060, %v7933, -inf
    %v8118 = vrot.slane %v8117, 4
    %v8119 = vmax.f32 %v8117, %v8118
    %v8120 = vrot.slane %v8119, 2
    %v8121 = vmax.f32 %v8119, %v8120
    %v8122 = vrot.slane %v8121, 1
    %v8123 = vmax.f32 %v8121, %v8122
    %v8124 = vsel %vm8060, %v7941, -inf
    %v8125 = vrot.slane %v8124, 4
    %v8126 = vmax.f32 %v8124, %v8125
    %v8127 = vrot.slane %v8126, 2
    %v8128 = vmax.f32 %v8126, %v8127
    %v8129 = vrot.slane %v8128, 1
    %v8130 = vmax.f32 %v8128, %v8129
    %v8131 = vsel %vm8060, %v7940, -inf
    %v8132 = vrot.slane %v8131, 4
    %v8133 = vmax.f32 %v8131, %v8132
    %v8134 = vrot.slane %v8133, 2
    %v8135 = vmax.f32 %v8133, %v8134
    %v8136 = vrot.slane %v8135, 1
    %v8137 = vmax.f32 %v8135, %v8136
    %v8138 = vsel %vm8060, %v7942, -inf
    %v8139 = vrot.slane %v8138, 4
    %v8140 = vmax.f32 %v8138, %v8139
    %v8141 = vrot.slane %v8140, 2
    %v8142 = vmax.f32 %v8140, %v8141
    %v8143 = vrot.slane %v8142, 1
    %v8144 = vmax.f32 %v8142, %v8143
    %v8145 = vsel %vm8060, %v7950, -inf
    %v8146 = vrot.slane %v8145, 4
    %v8147 = vmax.f32 %v8145, %v8146
    %v8148 = vrot.slane %v8147, 2
    %v8149 = vmax.f32 %v8147, %v8148
    %v8150 = vrot.slane %v8149, 1
    %v8151 = vmax.f32 %v8149, %v8150
    %v8152 = vsel %vm8060, %v7958, -inf
    %v8153 = vrot.slane %v8152, 4
    %v8154 = vmax.f32 %v8152, %v8153
    %v8155 = vrot.slane %v8154, 2
    %v8156 = vmax.f32 %v8154, %v8155
    %v8157 = vrot.slane %v8156, 1
    %v8158 = vmax.f32 %v8156, %v8157
    %v8159 = vsel %vm8060, %v7957, -inf
    %v8160 = vrot.slane %v8159, 4
    %v8161 = vmax.f32 %v8159, %v8160
    %v8162 = vrot.slane %v8161, 2
    %v8163 = vmax.f32 %v8161, %v8162
    %v8164 = vrot.slane %v8163, 1
    %v8165 = vmax.f32 %v8163, %v8164
    %v8166 = vsel %vm8060, %v7959, -inf
    %v8167 = vrot.slane %v8166, 4
    %v8168 = vmax.f32 %v8166, %v8167
    %v8169 = vrot.slane %v8168, 2
    %v8170 = vmax.f32 %v8168, %v8169
    %v8171 = vrot.slane %v8170, 1
    %v8172 = vmax.f32 %v8170, %v8171
    %v8173 = vsel %vm8060, %v7967, -inf
    %v8174 = vrot.slane %v8173, 4
    %v8175 = vmax.f32 %v8173, %v8174
    %v8176 = vrot.slane %v8175, 2
    %v8177 = vmax.f32 %v8175, %v8176
    %v8178 = vrot.slane %v8177, 1
    %v8179 = vmax.f32 %v8177, %v8178
    %v8180 = vsel %vm8060, %v7975, -inf
    %v8181 = vrot.slane %v8180, 4
    %v8182 = vmax.f32 %v8180, %v8181
    %v8183 = vrot.slane %v8182, 2
    %v8184 = vmax.f32 %v8182, %v8183
    %v8185 = vrot.slane %v8184, 1
    %v8186 = vmax.f32 %v8184, %v8185
    %v8187 = vsel %vm8060, %v7974, -inf
    %v8188 = vrot.slane %v8187, 4
    %v8189 = vmax.f32 %v8187, %v8188
    %v8190 = vrot.slane %v8189, 2
    %v8191 = vmax.f32 %v8189, %v8190
    %v8192 = vrot.slane %v8191, 1
    %v8193 = vmax.f32 %v8191, %v8192
    %v8194 = vsel %vm8060, %v7976, -inf
    %v8195 = vrot.slane %v8194, 4
    %v8196 = vmax.f32 %v8194, %v8195
    %v8197 = vrot.slane %v8196, 2
    %v8198 = vmax.f32 %v8196, %v8197
    %v8199 = vrot.slane %v8198, 1
    %v8200 = vmax.f32 %v8198, %v8199
    %v8201 = vsel %vm8060, %v7984, -inf
    %v8202 = vrot.slane %v8201, 4
    %v8203 = vmax.f32 %v8201, %v8202
    %v8204 = vrot.slane %v8203, 2
    %v8205 = vmax.f32 %v8203, %v8204
    %v8206 = vrot.slane %v8205, 1
    %v8207 = vmax.f32 %v8205, %v8206
    %v8208 = vsel %vm8060, %v7992, -inf
    %v8209 = vrot.slane %v8208, 4
    %v8210 = vmax.f32 %v8208, %v8209
    %v8211 = vrot.slane %v8210, 2
    %v8212 = vmax.f32 %v8210, %v8211
    %v8213 = vrot.slane %v8212, 1
    %v8214 = vmax.f32 %v8212, %v8213
    %v8215 = vsel %vm8060, %v7991, -inf
    %v8216 = vrot.slane %v8215, 4
    %v8217 = vmax.f32 %v8215, %v8216
    %v8218 = vrot.slane %v8217, 2
    %v8219 = vmax.f32 %v8217, %v8218
    %v8220 = vrot.slane %v8219, 1
    %v8221 = vmax.f32 %v8219, %v8220
    %v8222 = vsel %vm8060, %v7993, -inf
    %v8223 = vrot.slane %v8222, 4
    %v8224 = vmax.f32 %v8222, %v8223
    %v8225 = vrot.slane %v8224, 2
    %v8226 = vmax.f32 %v8224, %v8225
    %v8227 = vrot.slane %v8226, 1
    %v8228 = vmax.f32 %v8226, %v8227
    %v8229 = vsel %vm8060, %v8001, -inf
    %v8230 = vrot.slane %v8229, 4
    %v8231 = vmax.f32 %v8229, %v8230
    %v8232 = vrot.slane %v8231, 2
    %v8233 = vmax.f32 %v8231, %v8232
    %v8234 = vrot.slane %v8233, 1
    %v8235 = vmax.f32 %v8233, %v8234
    %v8236 = vsel %vm8060, %v8009, -inf
    %v8237 = vrot.slane %v8236, 4
    %v8238 = vmax.f32 %v8236, %v8237
    %v8239 = vrot.slane %v8238, 2
    %v8240 = vmax.f32 %v8238, %v8239
    %v8241 = vrot.slane %v8240, 1
    %v8242 = vmax.f32 %v8240, %v8241
    %v8243 = vsel %vm8060, %v8008, -inf
    %v8244 = vrot.slane %v8243, 4
    %v8245 = vmax.f32 %v8243, %v8244
    %v8246 = vrot.slane %v8245, 2
    %v8247 = vmax.f32 %v8245, %v8246
    %v8248 = vrot.slane %v8247, 1
    %v8249 = vmax.f32 %v8247, %v8248
    %v8250 = vsel %vm8060, %v8010, -inf
    %v8251 = vrot.slane %v8250, 4
    %v8252 = vmax.f32 %v8250, %v8251
    %v8253 = vrot.slane %v8252, 2
    %v8254 = vmax.f32 %v8252, %v8253
    %v8255 = vrot.slane %v8254, 1
    %v8256 = vmax.f32 %v8254, %v8255
    %v8257 = vsel %vm8060, %v8018, -inf
    %v8258 = vrot.slane %v8257, 4
    %v8259 = vmax.f32 %v8257, %v8258
    %v8260 = vrot.slane %v8259, 2
    %v8261 = vmax.f32 %v8259, %v8260
    %v8262 = vrot.slane %v8261, 1
    %v8263 = vmax.f32 %v8261, %v8262
    %v8264 = vsel %vm8060, %v8026, -inf
    %v8265 = vrot.slane %v8264, 4
    %v8266 = vmax.f32 %v8264, %v8265
    %v8267 = vrot.slane %v8266, 2
    %v8268 = vmax.f32 %v8266, %v8267
    %v8269 = vrot.slane %v8268, 1
    %v8270 = vmax.f32 %v8268, %v8269
    %v8271 = vsel %vm8060, %v8025, -inf
    %v8272 = vrot.slane %v8271, 4
    %v8273 = vmax.f32 %v8271, %v8272
    %v8274 = vrot.slane %v8273, 2
    %v8275 = vmax.f32 %v8273, %v8274
    %v8276 = vrot.slane %v8275, 1
    %v8277 = vmax.f32 %v8275, %v8276
    %v8278 = vsel %vm8060, %v8027, -inf
    %v8279 = vrot.slane %v8278, 4
    %v8280 = vmax.f32 %v8278, %v8279
    %v8281 = vrot.slane %v8280, 2
    %v8282 = vmax.f32 %v8280, %v8281
    %v8283 = vrot.slane %v8282, 1
    %v8284 = vmax.f32 %v8282, %v8283
    %v8285 = vmax.f32 %v8067, 0.0
    %v8286 = vmax.f32 %v8074, 0.0
    %v8287 = vmax.f32 %v8081, 0.0
    %v8288 = vmax.f32 %v8088, 0.0
    %v8289 = vmax.f32 %v8095, 0.0
    %v8290 = vmax.f32 %v8102, 0.0
    %v8291 = vmax.f32 %v8109, 0.0
    %v8292 = vmax.f32 %v8116, 0.0
    %v8293 = vmax.f32 %v8123, 0.0
    %v8294 = vmax.f32 %v8130, 0.0
    %v8295 = vmax.f32 %v8137, 0.0
    %v8296 = vmax.f32 %v8144, 0.0
    %v8297 = vmax.f32 %v8151, 0.0
    %v8298 = vmax.f32 %v8158, 0.0
    %v8299 = vmax.f32 %v8165, 0.0
    %v8300 = vmax.f32 %v8172, 0.0
    %v8301 = vmax.f32 %v8179, 0.0
    %v8302 = vmax.f32 %v8186, 0.0
    %v8303 = vmax.f32 %v8193, 0.0
    %v8304 = vmax.f32 %v8200, 0.0
    %v8305 = vmax.f32 %v8207, 0.0
    %v8306 = vmax.f32 %v8214, 0.0
    %v8307 = vmax.f32 %v8221, 0.0
    %v8308 = vmax.f32 %v8228, 0.0
    %v8309 = vmax.f32 %v8235, 0.0
    %v8310 = vmax.f32 %v8242, 0.0
    %v8311 = vmax.f32 %v8249, 0.0
    %v8312 = vmax.f32 %v8256, 0.0
    %v8313 = vmax.f32 %v8263, 0.0
    %v8314 = vmax.f32 %v8270, 0.0
    %v8315 = vmax.f32 %v8277, 0.0
    %v8316 = vmax.f32 %v8284, 0.0
    %vm8317 = vcmask 259072
    %8318 = vst.msk [vmem:[#allocation3] sm:$0x3f] %vm8317, 0.0
    %8319 = vst.msk [vmem:[#allocation3 + $0x8] sm:$0x3f] %vm8317, 0.0
    %8320 = vst.msk [vmem:[#allocation3 + $0x10] sm:$0x3f] %vm8317, 0.0
    %8321 = vst.msk [vmem:[#allocation3 + $0x18] sm:$0x3f] %vm8317, 0.0
    %8322 = vst.msk [vmem:[#allocation3 + $0x20] sm:$0x3f] %vm8317, 0.0
    %8323 = vst.msk [vmem:[#allocation3 + $0x28] sm:$0x3f] %vm8317, 0.0
    %8324 = vst.msk [vmem:[#allocation3 + $0x30] sm:$0x3f] %vm8317, 0.0
    %8325 = vst.msk [vmem:[#allocation3 + $0x38] sm:$0x3f] %vm8317, 0.0
    %8326 = vst.msk [vmem:[#allocation3 + $0x40] sm:$0x3f] %vm8317, 0.0
    %8327 = vst.msk [vmem:[#allocation3 + $0x48] sm:$0x3f] %vm8317, 0.0
    %8328 = vst.msk [vmem:[#allocation3 + $0x50] sm:$0x3f] %vm8317, 0.0
    %8329 = vst.msk [vmem:[#allocation3 + $0x58] sm:$0x3f] %vm8317, 0.0
    %v8362 = vsel %vm6779, %v8286, %v8285
    %v8363 = vsel %vm6781, %v8287, %v8362
    %v8364 = vsel %vm6783, %v8288, %v8363
    %v8365 = vsel %vm6779, %v8290, %v8289
    %v8366 = vsel %vm6781, %v8291, %v8365
    %v8367 = vsel %vm6783, %v8292, %v8366
    %v8368 = vsel %vm6779, %v8294, %v8293
    %v8369 = vsel %vm6781, %v8295, %v8368
    %v8370 = vsel %vm6783, %v8296, %v8369
    %v8371 = vsel %vm6779, %v8298, %v8297
    %v8372 = vsel %vm6781, %v8299, %v8371
    %v8373 = vsel %vm6783, %v8300, %v8372
    %v8374 = vsel %vm6779, %v8302, %v8301
    %v8375 = vsel %vm6781, %v8303, %v8374
    %v8376 = vsel %vm6783, %v8304, %v8375
    %v8377 = vsel %vm6779, %v8306, %v8305
    %v8378 = vsel %vm6781, %v8307, %v8377
    %v8379 = vsel %vm6783, %v8308, %v8378
    %v8380 = vsel %vm6779, %v8310, %v8309
    %v8381 = vsel %vm6781, %v8311, %v8380
    %v8382 = vsel %vm6783, %v8312, %v8381
    %v8383 = vsel %vm6779, %v8314, %v8313
    %v8384 = vsel %vm6781, %v8315, %v8383
    %v8385 = vsel %vm6783, %v8316, %v8384
    %s8394 = scalar_lea.vmem [#allocation3], 8
    %vm8395 = vcmask 257024
    %8396 = vst.msk [vmem:[%s8394 + $0x1] sm:$0xf] %vm8395, %v8364
    %8397 = vst.msk [vmem:[%s8394 + $0x9] sm:$0xf] %vm8395, %v8367
    %8398 = vst.msk [vmem:[%s8394 + $0x11] sm:$0xf] %vm8395, %v8370
    %8399 = vst.msk [vmem:[%s8394 + $0x19] sm:$0xf] %vm8395, %v8373
    %8400 = vst.msk [vmem:[%s8394 + $0x31] sm:$0xf] %vm8395, %v8376
    %8401 = vst.msk [vmem:[%s8394 + $0x39] sm:$0xf] %vm8395, %v8379
    %8402 = vst.msk [vmem:[%s8394 + $0x41] sm:$0xf] %vm8395, %v8382
    %8403 = vst.msk [vmem:[%s8394 + $0x49] sm:$0xf] %vm8395, %v8385
    %v8404 = vld [vmem:[#allocation3] sm:$0xf]
    %v8405 = vld [vmem:[#allocation3 + $0x8] sm:$0xf]
    %v8406 = vld [vmem:[#allocation3 + $0x10] sm:$0xf]
    %v8407 = vld [vmem:[#allocation3 + $0x18] sm:$0xf]
    %v8408 = vld [vmem:[#allocation3 + $0x30] sm:$0xf]
    %v8409 = vld [vmem:[#allocation3 + $0x38] sm:$0xf]
    %v8410 = vld [vmem:[#allocation3 + $0x40] sm:$0xf]
    %v8411 = vld [vmem:[#allocation3 + $0x48] sm:$0xf]
    %v8412 = vld [vmem:[#allocation3 + $0x1] sm:$0xf]
    %v8413 = vld [vmem:[#allocation3 + $0x9] sm:$0xf]
    %v8414 = vld [vmem:[#allocation3 + $0x11] sm:$0xf]
    %v8415 = vld [vmem:[#allocation3 + $0x19] sm:$0xf]
    %v8416 = vld [vmem:[#allocation3 + $0x31] sm:$0xf]
    %v8417 = vld [vmem:[#allocation3 + $0x39] sm:$0xf]
    %v8418 = vld [vmem:[#allocation3 + $0x41] sm:$0xf]
    %v8419 = vld [vmem:[#allocation3 + $0x49] sm:$0xf]
    %v8420 = vld [vmem:[#allocation3 + $0x2] sm:$0xf]
    %v8421 = vld [vmem:[#allocation3 + $0xa] sm:$0xf]
    %v8422 = vld [vmem:[#allocation3 + $0x12] sm:$0xf]
    %v8423 = vld [vmem:[#allocation3 + $0x1a] sm:$0xf]
    %v8424 = vld [vmem:[#allocation3 + $0x32] sm:$0xf]
    %v8425 = vld [vmem:[#allocation3 + $0x3a] sm:$0xf]
    %v8426 = vld [vmem:[#allocation3 + $0x42] sm:$0xf]
    %v8427 = vld [vmem:[#allocation3 + $0x4a] sm:$0xf]
    %v8428 = vld [vmem:[%s8394] sm:$0xf]
    %v8429 = vld [vmem:[%s8394 + $0x8] sm:$0xf]
    %v8430 = vld [vmem:[%s8394 + $0x10] sm:$0xf]
    %v8431 = vld [vmem:[%s8394 + $0x18] sm:$0xf]
    %v8432 = vld [vmem:[%s8394 + $0x30] sm:$0xf]
    %v8433 = vld [vmem:[%s8394 + $0x38] sm:$0xf]
    %v8434 = vld [vmem:[%s8394 + $0x40] sm:$0xf]
    %v8435 = vld [vmem:[%s8394 + $0x48] sm:$0xf]
    %v8436 = vld [vmem:[%s8394 + $0x1] sm:$0xf]
    %v8437 = vld [vmem:[%s8394 + $0x9] sm:$0xf]
    %v8438 = vld [vmem:[%s8394 + $0x11] sm:$0xf]
    %v8439 = vld [vmem:[%s8394 + $0x19] sm:$0xf]
    %v8440 = vld [vmem:[%s8394 + $0x31] sm:$0xf]
    %v8441 = vld [vmem:[%s8394 + $0x39] sm:$0xf]
    %v8442 = vld [vmem:[%s8394 + $0x41] sm:$0xf]
    %v8443 = vld [vmem:[%s8394 + $0x49] sm:$0xf]
    %v8444 = vld [vmem:[%s8394 + $0x2] sm:$0xf]
    %v8445 = vld [vmem:[%s8394 + $0xa] sm:$0xf]
    %v8446 = vld [vmem:[%s8394 + $0x12] sm:$0xf]
    %v8447 = vld [vmem:[%s8394 + $0x1a] sm:$0xf]
    %v8448 = vld [vmem:[%s8394 + $0x32] sm:$0xf]
    %v8449 = vld [vmem:[%s8394 + $0x3a] sm:$0xf]
    %v8450 = vld [vmem:[%s8394 + $0x42] sm:$0xf]
    %v8451 = vld [vmem:[%s8394 + $0x4a] sm:$0xf]
    %s8452 = scalar_lea.vmem [#allocation3], 16
    %v8453 = vld [vmem:[%s8452] sm:$0xf]
    %v8454 = vld [vmem:[%s8452 + $0x8] sm:$0xf]
    %v8455 = vld [vmem:[%s8452 + $0x10] sm:$0xf]
    %v8456 = vld [vmem:[%s8452 + $0x18] sm:$0xf]
    %v8457 = vld [vmem:[%s8452 + $0x30] sm:$0xf]
    %v8458 = vld [vmem:[%s8452 + $0x38] sm:$0xf]
    %v8459 = vld [vmem:[%s8452 + $0x40] sm:$0xf]
    %v8460 = vld [vmem:[%s8452 + $0x48] sm:$0xf]
    %v8461 = vld [vmem:[%s8452 + $0x1] sm:$0xf]
    %v8462 = vld [vmem:[%s8452 + $0x9] sm:$0xf]
    %v8463 = vld [vmem:[%s8452 + $0x11] sm:$0xf]
    %v8464 = vld [vmem:[%s8452 + $0x19] sm:$0xf]
    %v8465 = vld [vmem:[%s8452 + $0x31] sm:$0xf]
    %v8466 = vld [vmem:[%s8452 + $0x39] sm:$0xf]
    %v8467 = vld [vmem:[%s8452 + $0x41] sm:$0xf]
    %v8468 = vld [vmem:[%s8452 + $0x49] sm:$0xf]
    %v8469 = vld [vmem:[%s8452 + $0x2] sm:$0xf]
    %v8470 = vld [vmem:[%s8452 + $0xa] sm:$0xf]
    %v8471 = vld [vmem:[%s8452 + $0x12] sm:$0xf]
    %v8472 = vld [vmem:[%s8452 + $0x1a] sm:$0xf]
    %v8473 = vld [vmem:[%s8452 + $0x32] sm:$0xf]
    %v8474 = vld [vmem:[%s8452 + $0x3a] sm:$0xf]
    %v8475 = vld [vmem:[%s8452 + $0x42] sm:$0xf]
    %v8476 = vld [vmem:[%s8452 + $0x4a] sm:$0xf]
    %8485 = vrot.lane.b32.xlu0 %v8412, 32
    %v8486 = vpop.permute.xlu0 %8485
    %8487 = vrot.lane.b32.xlu0 %v8413, 32
    %v8488 = vpop.permute.xlu0 %8487
    %8489 = vrot.lane.b32.xlu0 %v8414, 32
    %v8490 = vpop.permute.xlu0 %8489
    %8491 = vrot.lane.b32.xlu0 %v8415, 32
    %v8492 = vpop.permute.xlu0 %8491
    %8493 = vrot.lane.b32.xlu0 %v8416, 32
    %v8494 = vpop.permute.xlu0 %8493
    %8495 = vrot.lane.b32.xlu0 %v8417, 32
    %v8496 = vpop.permute.xlu0 %8495
    %8497 = vrot.lane.b32.xlu0 %v8418, 32
    %v8498 = vpop.permute.xlu0 %8497
    %8499 = vrot.lane.b32.xlu0 %v8419, 32
    %v8500 = vpop.permute.xlu0 %8499
    %8517 = vrot.lane.b32.xlu0 %v8420, 64
    %v8518 = vpop.permute.xlu0 %8517
    %8519 = vrot.lane.b32.xlu0 %v8421, 64
    %v8520 = vpop.permute.xlu0 %8519
    %8521 = vrot.lane.b32.xlu0 %v8422, 64
    %v8522 = vpop.permute.xlu0 %8521
    %8523 = vrot.lane.b32.xlu0 %v8423, 64
    %v8524 = vpop.permute.xlu0 %8523
    %8525 = vrot.lane.b32.xlu0 %v8424, 64
    %v8526 = vpop.permute.xlu0 %8525
    %8527 = vrot.lane.b32.xlu0 %v8425, 64
    %v8528 = vpop.permute.xlu0 %8527
    %8529 = vrot.lane.b32.xlu0 %v8426, 64
    %v8530 = vpop.permute.xlu0 %8529
    %8531 = vrot.lane.b32.xlu0 %v8427, 64
    %v8532 = vpop.permute.xlu0 %8531
    %8549 = vrot.lane.b32.xlu0 %v8428, 96
    %v8550 = vpop.permute.xlu0 %8549
    %8551 = vrot.lane.b32.xlu0 %v8429, 96
    %v8552 = vpop.permute.xlu0 %8551
    %8553 = vrot.lane.b32.xlu0 %v8430, 96
    %v8554 = vpop.permute.xlu0 %8553
    %8555 = vrot.lane.b32.xlu0 %v8431, 96
    %v8556 = vpop.permute.xlu0 %8555
    %8557 = vrot.lane.b32.xlu0 %v8432, 96
    %v8558 = vpop.permute.xlu0 %8557
    %8559 = vrot.lane.b32.xlu0 %v8433, 96
    %v8560 = vpop.permute.xlu0 %8559
    %8561 = vrot.lane.b32.xlu0 %v8434, 96
    %v8562 = vpop.permute.xlu0 %8561
    %8563 = vrot.lane.b32.xlu0 %v8435, 96
    %v8564 = vpop.permute.xlu0 %8563
    %8581 = vrot.lane.b32.xlu0 %v8444, 32
    %v8582 = vpop.permute.xlu0 %8581
    %8583 = vrot.lane.b32.xlu0 %v8445, 32
    %v8584 = vpop.permute.xlu0 %8583
    %8585 = vrot.lane.b32.xlu0 %v8446, 32
    %v8586 = vpop.permute.xlu0 %8585
    %8587 = vrot.lane.b32.xlu0 %v8447, 32
    %v8588 = vpop.permute.xlu0 %8587
    %8589 = vrot.lane.b32.xlu0 %v8448, 32
    %v8590 = vpop.permute.xlu0 %8589
    %8591 = vrot.lane.b32.xlu0 %v8449, 32
    %v8592 = vpop.permute.xlu0 %8591
    %8593 = vrot.lane.b32.xlu0 %v8450, 32
    %v8594 = vpop.permute.xlu0 %8593
    %8595 = vrot.lane.b32.xlu0 %v8451, 32
    %v8596 = vpop.permute.xlu0 %8595
    %8613 = vrot.lane.b32.xlu0 %v8453, 64
    %v8614 = vpop.permute.xlu0 %8613
    %8615 = vrot.lane.b32.xlu0 %v8454, 64
    %v8616 = vpop.permute.xlu0 %8615
    %8617 = vrot.lane.b32.xlu0 %v8455, 64
    %v8618 = vpop.permute.xlu0 %8617
    %8619 = vrot.lane.b32.xlu0 %v8456, 64
    %v8620 = vpop.permute.xlu0 %8619
    %8621 = vrot.lane.b32.xlu0 %v8457, 64
    %v8622 = vpop.permute.xlu0 %8621
    %8623 = vrot.lane.b32.xlu0 %v8458, 64
    %v8624 = vpop.permute.xlu0 %8623
    %8625 = vrot.lane.b32.xlu0 %v8459, 64
    %v8626 = vpop.permute.xlu0 %8625
    %8627 = vrot.lane.b32.xlu0 %v8460, 64
    %v8628 = vpop.permute.xlu0 %8627
    %8645 = vrot.lane.b32.xlu0 %v8461, 96
    %v8646 = vpop.permute.xlu0 %8645
    %8647 = vrot.lane.b32.xlu0 %v8462, 96
    %v8648 = vpop.permute.xlu0 %8647
    %8649 = vrot.lane.b32.xlu0 %v8463, 96
    %v8650 = vpop.permute.xlu0 %8649
    %8651 = vrot.lane.b32.xlu0 %v8464, 96
    %v8652 = vpop.permute.xlu0 %8651
    %8653 = vrot.lane.b32.xlu0 %v8465, 96
    %v8654 = vpop.permute.xlu0 %8653
    %8655 = vrot.lane.b32.xlu0 %v8466, 96
    %v8656 = vpop.permute.xlu0 %8655
    %8657 = vrot.lane.b32.xlu0 %v8467, 96
    %v8658 = vpop.permute.xlu0 %8657
    %8659 = vrot.lane.b32.xlu0 %v8468, 96
    %v8660 = vpop.permute.xlu0 %8659
    %v8669 = vsel %vm7540, %v8404, %v8486
    %v8670 = vsel %vm7540, %v8405, %v8488
    %v8671 = vsel %vm7540, %v8406, %v8490
    %v8672 = vsel %vm7540, %v8407, %v8492
    %v8673 = vsel %vm7540, %v8408, %v8494
    %v8674 = vsel %vm7540, %v8409, %v8496
    %v8675 = vsel %vm7540, %v8410, %v8498
    %v8676 = vsel %vm7540, %v8411, %v8500
    %v8677 = vsel %vm7574, %v8669, %v8518
    %v8678 = vsel %vm7574, %v8670, %v8520
    %v8679 = vsel %vm7574, %v8671, %v8522
    %v8680 = vsel %vm7574, %v8672, %v8524
    %v8681 = vsel %vm7574, %v8673, %v8526
    %v8682 = vsel %vm7574, %v8674, %v8528
    %v8683 = vsel %vm7574, %v8675, %v8530
    %v8684 = vsel %vm7574, %v8676, %v8532
    %v8685 = vsel %vm7608, %v8677, %v8550
    %v8686 = vsel %vm7608, %v8678, %v8552
    %v8687 = vsel %vm7608, %v8679, %v8554
    %v8688 = vsel %vm7608, %v8680, %v8556
    %v8689 = vsel %vm7608, %v8681, %v8558
    %v8690 = vsel %vm7608, %v8682, %v8560
    %v8691 = vsel %vm7608, %v8683, %v8562
    %v8692 = vsel %vm7608, %v8684, %v8564
    %v8693 = vsel %vm7540, %v8436, %v8582
    %v8694 = vsel %vm7540, %v8437, %v8584
    %v8695 = vsel %vm7540, %v8438, %v8586
    %v8696 = vsel %vm7540, %v8439, %v8588
    %v8697 = vsel %vm7540, %v8440, %v8590
    %v8698 = vsel %vm7540, %v8441, %v8592
    %v8699 = vsel %vm7540, %v8442, %v8594
    %v8700 = vsel %vm7540, %v8443, %v8596
    %v8701 = vsel %vm7574, %v8693, %v8614
    %v8702 = vsel %vm7574, %v8694, %v8616
    %v8703 = vsel %vm7574, %v8695, %v8618
    %v8704 = vsel %vm7574, %v8696, %v8620
    %v8705 = vsel %vm7574, %v8697, %v8622
    %v8706 = vsel %vm7574, %v8698, %v8624
    %v8707 = vsel %vm7574, %v8699, %v8626
    %v8708 = vsel %vm7574, %v8700, %v8628
    %v8709 = vsel %vm7608, %v8701, %v8646
    %v8710 = vsel %vm7608, %v8702, %v8648
    %v8711 = vsel %vm7608, %v8703, %v8650
    %v8712 = vsel %vm7608, %v8704, %v8652
    %v8713 = vsel %vm7608, %v8705, %v8654
    %v8714 = vsel %vm7608, %v8706, %v8656
    %v8715 = vsel %vm7608, %v8707, %v8658
    %v8716 = vsel %vm7608, %v8708, %v8660
    %v8741 = vcombine.low %v8685, %v8709
    %v8742 = vcombine.low %v8686, %v8710
    %v8743 = vcombine.low %v8687, %v8711
    %v8744 = vcombine.low %v8688, %v8712
    %v8745 = vcombine.low %v8689, %v8713
    %v8746 = vcombine.low %v8690, %v8714
    %v8747 = vcombine.low %v8691, %v8715
    %v8748 = vcombine.low %v8692, %v8716
    %v8749 = vld [vmem:[%s5] sm:$0xff]
    %v8750 = vld [vmem:[%s5 + $0x8] sm:$0xff]
    %v8751 = vld [vmem:[%s5 + $0x10] sm:$0xff]
    %v8752 = vld [vmem:[%s5 + $0x18] sm:$0xff]
    %v8753 = vld [vmem:[%s5 + $0x20] sm:$0xff]
    %v8754 = vld [vmem:[%s5 + $0x28] sm:$0xff]
    %v8755 = vld [vmem:[%s5 + $0x30] sm:$0xff]
    %v8756 = vld [vmem:[%s5 + $0x38] sm:$0xff]
    %v8757 = vld [vmem:[%s5 + $0x40] sm:$0xff]
    %v8758 = vld [vmem:[%s5 + $0x48] sm:$0xff]
    %v8759 = vld [vmem:[%s5 + $0x50] sm:$0xff]
    %v8760 = vld [vmem:[%s5 + $0x58] sm:$0xff]
    %v8761 = vld [vmem:[%s5 + $0x60] sm:$0xff]
    %v8762 = vld [vmem:[%s5 + $0x68] sm:$0xff]
    %v8763 = vld [vmem:[%s5 + $0x70] sm:$0xff]
    %v8764 = vld [vmem:[%s5 + $0x78] sm:$0xff]
    %v8765 = vld [vmem:[%s5 + $0x80] sm:$0xff]
    %v8766 = vld [vmem:[%s5 + $0x88] sm:$0xff]
    %v8767 = vld [vmem:[%s5 + $0x90] sm:$0xff]
    %v8768 = vld [vmem:[%s5 + $0x98] sm:$0xff]
    %v8769 = vld [vmem:[%s5 + $0xa0] sm:$0xff]
    %v8770 = vld [vmem:[%s5 + $0xa8] sm:$0xff]
    %v8771 = vld [vmem:[%s5 + $0xb0] sm:$0xff]
    %v8772 = vld [vmem:[%s5 + $0xb8] sm:$0xff]
    %v8773 = vld [vmem:[%s5 + $0xc0] sm:$0xff]
    %v8774 = vld [vmem:[%s5 + $0xc8] sm:$0xff]
    %v8775 = vld [vmem:[%s5 + $0xd0] sm:$0xff]
    %v8776 = vld [vmem:[%s5 + $0xd8] sm:$0xff]
    %v8777 = vld [vmem:[%s5 + $0xe0] sm:$0xff]
    %v8778 = vld [vmem:[%s5 + $0xe8] sm:$0xff]
    %v8779 = vld [vmem:[%s5 + $0xf0] sm:$0xff]
    %v8780 = vld [vmem:[%s5 + $0xf8] sm:$0xff]
    %v8781 = vld [vmem:[%s5 + $0x100] sm:$0xff]
    %v8782 = vld [vmem:[%s5 + $0x108] sm:$0xff]
    %v8783 = vld [vmem:[%s5 + $0x110] sm:$0xff]
    %v8784 = vld [vmem:[%s5 + $0x118] sm:$0xff]
    %v8785 = vld [vmem:[%s6] sm:$0x1]
    %v8787 = vlaneseq
    %v8788 = vshrl.u32 %v8787, 7
    %v8789 = vsub.s32 0, %v8788
    %v8790 = vrot.slane %v8785, %v8789
    %v8792 = vcombine.low %v8741, %v8742
    %v8793 = vcombine.high %v8741, %v8742
    %v8794 = vcombine.low %v8469, %v8470
    %v8795 = vcombine.low %v8743, %v8744
    %v8796 = vcombine.high %v8743, %v8744
    %v8797 = vcombine.low %v8471, %v8472
    %v8798 = vcombine.low %v8745, %v8746
    %v8799 = vcombine.high %v8745, %v8746
    %v8800 = vcombine.low %v8473, %v8474
    %v8801 = vcombine.low %v8747, %v8748
    %v8802 = vcombine.high %v8747, %v8748
    %v8803 = vcombine.low %v8475, %v8476
    %v8812 = vsel %vm7540, %v8794, 0
    %v8814 = vsel %vm7540, %v8797, 0
    %v8816 = vsel %vm7540, %v8800, 0
    %v8818 = vsel %vm7540, %v8803, 0
    %8820 = vmatprep.subr.mxu0 0.0
    %8821 = vmatpush1.msra.mxu0 %v8764
    %8822 = vmatprep.subr.mxu0 0.0
    %8823 = vmatpush1.msra.mxu0 %v8763
    %8824 = vmatprep.subr.mxu0 0.0
    %8825 = vmatpush1.msra.mxu0 %v8762
    %8826 = vmatprep.subr.mxu0 0.0
    %8827 = vmatpush1.msra.mxu0 %v8761
    %8828 = vmatprep.subr.mxu0 0.0
    %8829 = vmatpush1.msra.mxu0 %v8760
    %8830 = vmatprep.subr.mxu0 0.0
    %8831 = vmatpush1.msra.mxu0 %v8759
    %8832 = vmatprep.subr.mxu0 0.0
    %8833 = vmatpush1.msra.mxu0 %v8758
    %8834 = vmatprep.subr.mxu0 0.0
    %8835 = vmatpush1.msra.mxu0 %v8757
    %8836 = vmatprep.subr.mxu0 0.0
    %8837 = vmatpush1.msra.mxu0 %v8756
    %8838 = vmatprep.subr.mxu0 0.0
    %8839 = vmatpush1.msra.mxu0 %v8755
    %8840 = vmatprep.subr.mxu0 0.0
    %8841 = vmatpush1.msra.mxu0 %v8754
    %8842 = vmatprep.subr.mxu0 0.0
    %8843 = vmatpush1.msra.mxu0 %v8753
    %8844 = vmatprep.subr.mxu0 0.0
    %8845 = vmatpush1.msra.mxu0 %v8752
    %8846 = vmatprep.subr.mxu0 0.0
    %8847 = vmatpush1.msra.mxu0 %v8751
    %8848 = vmatprep.subr.mxu0 0.0
    %8849 = vmatpush1.msra.mxu0 %v8750
    %8850 = vmatprep.subr.mxu0 0.0
    %8851 = vmatpush1.msra.mxu0 %v8749
    %8852 = vmatprep.subr.mxu0 0.0
    %8853 = vmatpush2.msra.mxu0 %v8780
    %8854 = vmatprep.subr.mxu0 0.0
    %8855 = vmatpush2.msra.mxu0 %v8779
    %8856 = vmatprep.subr.mxu0 0.0
    %8857 = vmatpush2.msra.mxu0 %v8778
    %8858 = vmatprep.subr.mxu0 0.0
    %8859 = vmatpush2.msra.mxu0 %v8777
    %8860 = vmatprep.subr.mxu0 0.0
    %8861 = vmatpush2.msra.mxu0 %v8776
    %8862 = vmatprep.subr.mxu0 0.0
    %8863 = vmatpush2.msra.mxu0 %v8775
    %8864 = vmatprep.subr.mxu0 0.0
    %8865 = vmatpush2.msra.mxu0 %v8774
    %8866 = vmatprep.subr.mxu0 0.0
    %8867 = vmatpush2.msra.mxu0 %v8773
    %8868 = vmatprep.subr.mxu0 0.0
    %8869 = vmatpush2.msra.mxu0 %v8772
    %8870 = vmatprep.subr.mxu0 0.0
    %8871 = vmatpush2.msra.mxu0 %v8771
    %8872 = vmatprep.subr.mxu0 0.0
    %8873 = vmatpush2.msra.mxu0 %v8770
    %8874 = vmatprep.subr.mxu0 0.0
    %8875 = vmatpush2.msra.mxu0 %v8769
    %8876 = vmatprep.subr.mxu0 0.0
    %8877 = vmatpush2.msra.mxu0 %v8768
    %8878 = vmatprep.subr.mxu0 0.0
    %8879 = vmatpush2.msra.mxu0 %v8767
    %8880 = vmatprep.subr.mxu0 0.0
    %8881 = vmatpush2.msra.mxu0 %v8766
    %8882 = vmatprep.subr.mxu0 0.0
    %8883 = vmatpush2.msra.mxu0 %v8765
    %8884 = vmatprep.mubr.f32.mxu0 %v8793
    %8885 = vmatmul.mubr.f32.gmra.mxu0 %v8792
    %v8886 = vpop.f32.mrf.mxu0
    %v8887 = vadd.f32 %v8790, %v8886
    %v8888 = vpop.f32.mrf.mxu0
    %8889 = vmatprep.mubr.f32.mxu0 %v8796
    %8890 = vmatmul.mubr.f32.gmra.mxu0 %v8795
    %v8891 = vpop.f32.mrf.mxu0
    %v8892 = vadd.f32 %v8790, %v8891
    %v8893 = vpop.f32.mrf.mxu0
    %8894 = vmatprep.mubr.f32.mxu0 %v8799
    %8895 = vmatmul.mubr.f32.gmra.mxu0 %v8798
    %v8896 = vpop.f32.mrf.mxu0
    %v8897 = vadd.f32 %v8790, %v8896
    %v8898 = vpop.f32.mrf.mxu0
    %8899 = vmatprep.mubr.f32.mxu0 %v8802
    %8900 = vmatmul.mubr.f32.gmra.mxu0 %v8801
    %v8901 = vpop.f32.mrf.mxu0
    %v8902 = vadd.f32 %v8790, %v8901
    %v8903 = vpop.f32.mrf.mxu0
    %8904 = vdwg.mxu0
    %8905 = vmatprep.subr.mxu0 0.0
    %8906 = vmatpush1.msra.mxu0 0.0
    %8907 = vmatprep.subr.mxu0 0.0
    %8908 = vmatpush1.msra.mxu0 0.0
    %8909 = vmatprep.subr.mxu0 0.0
    %8910 = vmatpush1.msra.mxu0 0.0
    %8911 = vmatprep.subr.mxu0 0.0
    %8912 = vmatpush1.msra.mxu0 0.0
    %8913 = vmatprep.subr.mxu0 0.0
    %8914 = vmatpush1.msra.mxu0 0.0
    %8915 = vmatprep.subr.mxu0 0.0
    %8916 = vmatpush1.msra.mxu0 0.0
    %8917 = vmatprep.subr.mxu0 0.0
    %8918 = vmatpush1.msra.mxu0 0.0
    %8919 = vmatprep.subr.mxu0 0.0
    %8920 = vmatpush1.msra.mxu0 0.0
    %8921 = vmatprep.subr.mxu0 0.0
    %8922 = vmatpush1.msra.mxu0 0.0
    %8923 = vmatprep.subr.mxu0 0.0
    %8924 = vmatpush1.msra.mxu0 0.0
    %8925 = vmatprep.subr.mxu0 0.0
    %8926 = vmatpush1.msra.mxu0 0.0
    %8927 = vmatprep.subr.mxu0 0.0
    %8928 = vmatpush1.msra.mxu0 0.0
    %8929 = vmatprep.subr.mxu0 0.0
    %8930 = vmatpush1.msra.mxu0 %v8784
    %8931 = vmatprep.subr.mxu0 0.0
    %8932 = vmatpush1.msra.mxu0 %v8783
    %8933 = vmatprep.subr.mxu0 0.0
    %8934 = vmatpush1.msra.mxu0 %v8782
    %8935 = vmatprep.subr.mxu0 0.0
    %8936 = vmatpush1.msra.mxu0 %v8781
    %8937 = vmatprep.subr.mxu0 0.0
    %8938 = vmatpush2.msra.mxu0 0.0
    %8939 = vmatprep.subr.mxu0 0.0
    %8940 = vmatpush2.msra.mxu0 0.0
    %8941 = vmatprep.subr.mxu0 0.0
    %8942 = vmatpush2.msra.mxu0 0.0
    %8943 = vmatprep.subr.mxu0 0.0
    %8944 = vmatpush2.msra.mxu0 0.0
    %8945 = vmatprep.subr.mxu0 0.0
    %8946 = vmatpush2.msra.mxu0 0.0
    %8947 = vmatprep.subr.mxu0 0.0
    %8948 = vmatpush2.msra.mxu0 0.0
    %8949 = vmatprep.subr.mxu0 0.0
    %8950 = vmatpush2.msra.mxu0 0.0
    %8951 = vmatprep.subr.mxu0 0.0
    %8952 = vmatpush2.msra.mxu0 0.0
    %8953 = vmatprep.subr.mxu0 0.0
    %8954 = vmatpush2.msra.mxu0 0.0
    %8955 = vmatprep.subr.mxu0 0.0
    %8956 = vmatpush2.msra.mxu0 0.0
    %8957 = vmatprep.subr.mxu0 0.0
    %8958 = vmatpush2.msra.mxu0 0.0
    %8959 = vmatprep.subr.mxu0 0.0
    %8960 = vmatpush2.msra.mxu0 0.0
    %8961 = vmatprep.subr.mxu0 0.0
    %8962 = vmatpush2.msra.mxu0 0.0
    %8963 = vmatprep.subr.mxu0 0.0
    %8964 = vmatpush2.msra.mxu0 0.0
    %8965 = vmatprep.subr.mxu0 0.0
    %8966 = vmatpush2.msra.mxu0 0.0
    %8967 = vmatprep.subr.mxu0 0.0
    %8968 = vmatpush2.msra.mxu0 0.0
    %8969 = vmatprep.mubr.f32.mxu0 0.0
    %8970 = vmatmul.mubr.f32.gmra.mxu0 %v8812
    %v8971 = vpop.f32.mrf.mxu0
    %v8972 = vadd.f32 %v8887, %v8971
    %v8973 = vpop.f32.mrf.mxu0
    %8974 = vmatprep.mubr.f32.mxu0 0.0
    %8975 = vmatmul.mubr.f32.gmra.mxu0 %v8814
    %v8976 = vpop.f32.mrf.mxu0
    %v8977 = vadd.f32 %v8892, %v8976
    %v8978 = vpop.f32.mrf.mxu0
    %8979 = vmatprep.mubr.f32.mxu0 0.0
    %8980 = vmatmul.mubr.f32.gmra.mxu0 %v8816
    %v8981 = vpop.f32.mrf.mxu0
    %v8982 = vadd.f32 %v8897, %v8981
    %v8983 = vpop.f32.mrf.mxu0
    %8984 = vmatprep.mubr.f32.mxu0 0.0
    %8985 = vmatmul.mubr.f32.gmra.mxu0 %v8818
    %v8986 = vpop.f32.mrf.mxu0
    %v8987 = vadd.f32 %v8902, %v8986
    %v8988 = vpop.f32.mrf.mxu0
    %8989 = vdwg.mxu0
    %v8994 = vcombine.high %v8972, %v8972
    %v8995 = vcombine.high %v8977, %v8977
    %v8996 = vcombine.high %v8982, %v8982
    %v8997 = vcombine.high %v8987, %v8987
    %vm9002 = vcmask 519168
    %v9003 = vsel %vm9002, %v8972, -inf
    %v9004 = vsel %vm9002, %v8994, -inf
    %v9005 = vmax.f32 %v9003, %v9004
    %v9006 = vsel %vm9002, %v8977, -inf
    %v9007 = vsel %vm9002, %v8995, -inf
    %v9008 = vmax.f32 %v9006, %v9007
    %v9009 = vsel %vm9002, %v8982, -inf
    %v9010 = vsel %vm9002, %v8996, -inf
    %v9011 = vmax.f32 %v9009, %v9010
    %v9012 = vsel %vm9002, %v8987, -inf
    %v9013 = vsel %vm9002, %v8997, -inf
    %v9014 = vmax.f32 %v9012, %v9013
    %v9020 = vunpack.c.l.s4 1983009808
    %v9021 = vunpack.c.0.s8 %v9020
    %v9022 = vlaneseq
    %v9023 = vshrl.u32 %v9022, 7
    %v9024 = vsub.s32 %v9021, %v9023
    %v9025 = vrot.slane %v9005, %v9024
    %v9026 = vcombine.high %v9025, %v9025
    %v9028 = vunpack.c.l.s4 1983009808
    %v9029 = vunpack.c.0.s8 %v9028
    %v9030 = vlaneseq
    %v9031 = vshrl.u32 %v9030, 7
    %v9032 = vsub.s32 %v9029, %v9031
    %v9033 = vrot.slane %v9008, %v9032
    %v9034 = vcombine.high %v9033, %v9033
    %v9036 = vunpack.c.l.s4 1983009808
    %v9037 = vunpack.c.0.s8 %v9036
    %v9038 = vlaneseq
    %v9039 = vshrl.u32 %v9038, 7
    %v9040 = vsub.s32 %v9037, %v9039
    %v9041 = vrot.slane %v9011, %v9040
    %v9042 = vcombine.high %v9041, %v9041
    %v9044 = vunpack.c.l.s4 1983009808
    %v9045 = vunpack.c.0.s8 %v9044
    %v9046 = vlaneseq
    %v9047 = vshrl.u32 %v9046, 7
    %v9048 = vsub.s32 %v9045, %v9047
    %v9049 = vrot.slane %v9014, %v9048
    %v9050 = vcombine.high %v9049, %v9049
    %vm9059 = vcmask 517120
    %v9060 = vsel %vm9059, %v9025, -inf
    %v9061 = vrot.slane %v9060, 4
    %v9062 = vmax.f32 %v9060, %v9061
    %v9063 = vrot.slane %v9062, 2
    %v9064 = vmax.f32 %v9062, %v9063
    %v9065 = vrot.slane %v9064, 1
    %v9066 = vmax.f32 %v9064, %v9065
    %v9067 = vsel %vm9059, %v9026, -inf
    %v9068 = vrot.slane %v9067, 4
    %v9069 = vmax.f32 %v9067, %v9068
    %v9070 = vrot.slane %v9069, 2
    %v9071 = vmax.f32 %v9069, %v9070
    %v9072 = vrot.slane %v9071, 1
    %v9073 = vmax.f32 %v9071, %v9072
    %v9074 = vsel %vm9059, %v9033, -inf
    %v9075 = vrot.slane %v9074, 4
    %v9076 = vmax.f32 %v9074, %v9075
    %v9077 = vrot.slane %v9076, 2
    %v9078 = vmax.f32 %v9076, %v9077
    %v9079 = vrot.slane %v9078, 1
    %v9080 = vmax.f32 %v9078, %v9079
    %v9081 = vsel %vm9059, %v9034, -inf
    %v9082 = vrot.slane %v9081, 4
    %v9083 = vmax.f32 %v9081, %v9082
    %v9084 = vrot.slane %v9083, 2
    %v9085 = vmax.f32 %v9083, %v9084
    %v9086 = vrot.slane %v9085, 1
    %v9087 = vmax.f32 %v9085, %v9086
    %v9088 = vsel %vm9059, %v9041, -inf
    %v9089 = vrot.slane %v9088, 4
    %v9090 = vmax.f32 %v9088, %v9089
    %v9091 = vrot.slane %v9090, 2
    %v9092 = vmax.f32 %v9090, %v9091
    %v9093 = vrot.slane %v9092, 1
    %v9094 = vmax.f32 %v9092, %v9093
    %v9095 = vsel %vm9059, %v9042, -inf
    %v9096 = vrot.slane %v9095, 4
    %v9097 = vmax.f32 %v9095, %v9096
    %v9098 = vrot.slane %v9097, 2
    %v9099 = vmax.f32 %v9097, %v9098
    %v9100 = vrot.slane %v9099, 1
    %v9101 = vmax.f32 %v9099, %v9100
    %v9102 = vsel %vm9059, %v9049, -inf
    %v9103 = vrot.slane %v9102, 4
    %v9104 = vmax.f32 %v9102, %v9103
    %v9105 = vrot.slane %v9104, 2
    %v9106 = vmax.f32 %v9104, %v9105
    %v9107 = vrot.slane %v9106, 1
    %v9108 = vmax.f32 %v9106, %v9107
    %v9109 = vsel %vm9059, %v9050, -inf
    %v9110 = vrot.slane %v9109, 4
    %v9111 = vmax.f32 %v9109, %v9110
    %v9112 = vrot.slane %v9111, 2
    %v9113 = vmax.f32 %v9111, %v9112
    %v9114 = vrot.slane %v9113, 1
    %v9115 = vmax.f32 %v9113, %v9114
    %v9116 = vmax.f32 %v9066, 0.0
    %v9117 = vmax.f32 %v9073, 0.0
    %v9118 = vmax.f32 %v9080, 0.0
    %v9119 = vmax.f32 %v9087, 0.0
    %v9120 = vmax.f32 %v9094, 0.0
    %v9121 = vmax.f32 %v9101, 0.0
    %v9122 = vmax.f32 %v9108, 0.0
    %v9123 = vmax.f32 %v9115, 0.0
    %9124 = vst.msk [vmem:[#allocation4] sm:$0xf] %vm9002, 0.0
    %9125 = vst.msk [vmem:[#allocation4 + $0x4] sm:$0xf] %vm9002, 0.0
    %9126 = vst.msk [vmem:[#allocation4 + $0x8] sm:$0xf] %vm9002, 0.0
    %9127 = vst.msk [vmem:[#allocation4 + $0xc] sm:$0xf] %vm9002, 0.0
    %9128 = vst.msk [vmem:[#allocation4 + $0x10] sm:$0xf] %vm9002, 0.0
    %9129 = vst.msk [vmem:[#allocation4 + $0x14] sm:$0xf] %vm9002, 0.0
    %9130 = vst.msk [vmem:[#allocation4 + $0x18] sm:$0xf] %vm9002, 0.0
    %9131 = vst.msk [vmem:[#allocation4 + $0x1c] sm:$0xf] %vm9002, 0.0
    %v9140 = vsel %vm6779, %v9117, %v9116
    %v9141 = vsel %vm6779, %v9119, %v9118
    %v9142 = vsel %vm6779, %v9121, %v9120
    %v9143 = vsel %vm6779, %v9123, %v9122
    %s9148 = scalar_lea.vmem [#allocation4], 4
    %9149 = vst.msk [vmem:[%s9148 + $0x1] sm:$0x3] %vm9059, %v9140
    %9150 = vst.msk [vmem:[%s9148 + $0x5] sm:$0x3] %vm9059, %v9141
    %9151 = vst.msk [vmem:[%s9148 + $0x11] sm:$0x3] %vm9059, %v9142
    %9152 = vst.msk [vmem:[%s9148 + $0x15] sm:$0x3] %vm9059, %v9143
    %v9153 = vld [vmem:[#allocation4] sm:$0x3]
    %v9154 = vld [vmem:[#allocation4 + $0x4] sm:$0x3]
    %v9155 = vld [vmem:[#allocation4 + $0x10] sm:$0x3]
    %v9156 = vld [vmem:[#allocation4 + $0x14] sm:$0x3]
    %v9157 = vld [vmem:[#allocation4 + $0x1] sm:$0x3]
    %v9158 = vld [vmem:[#allocation4 + $0x5] sm:$0x3]
    %v9159 = vld [vmem:[#allocation4 + $0x11] sm:$0x3]
    %v9160 = vld [vmem:[#allocation4 + $0x15] sm:$0x3]
    %v9161 = vld [vmem:[#allocation4 + $0x2] sm:$0x3]
    %v9162 = vld [vmem:[#allocation4 + $0x6] sm:$0x3]
    %v9163 = vld [vmem:[#allocation4 + $0x12] sm:$0x3]
    %v9164 = vld [vmem:[#allocation4 + $0x16] sm:$0x3]
    %v9165 = vld [vmem:[%s9148] sm:$0x3]
    %v9166 = vld [vmem:[%s9148 + $0x4] sm:$0x3]
    %v9167 = vld [vmem:[%s9148 + $0x10] sm:$0x3]
    %v9168 = vld [vmem:[%s9148 + $0x14] sm:$0x3]
    %v9169 = vld [vmem:[%s9148 + $0x1] sm:$0x3]
    %v9170 = vld [vmem:[%s9148 + $0x5] sm:$0x3]
    %v9171 = vld [vmem:[%s9148 + $0x11] sm:$0x3]
    %v9172 = vld [vmem:[%s9148 + $0x15] sm:$0x3]
    %v9173 = vld [vmem:[%s9148 + $0x2] sm:$0x3]
    %v9174 = vld [vmem:[%s9148 + $0x6] sm:$0x3]
    %v9175 = vld [vmem:[%s9148 + $0x12] sm:$0x3]
    %v9176 = vld [vmem:[%s9148 + $0x16] sm:$0x3]
    %s9177 = scalar_lea.vmem [#allocation4], 8
    %v9178 = vld [vmem:[%s9177] sm:$0x3]
    %v9179 = vld [vmem:[%s9177 + $0x4] sm:$0x3]
    %v9180 = vld [vmem:[%s9177 + $0x10] sm:$0x3]
    %v9181 = vld [vmem:[%s9177 + $0x14] sm:$0x3]
    %v9182 = vld [vmem:[%s9177 + $0x1] sm:$0x3]
    %v9183 = vld [vmem:[%s9177 + $0x5] sm:$0x3]
    %v9184 = vld [vmem:[%s9177 + $0x11] sm:$0x3]
    %v9185 = vld [vmem:[%s9177 + $0x15] sm:$0x3]
    %v9186 = vld [vmem:[%s9177 + $0x2] sm:$0x3]
    %v9187 = vld [vmem:[%s9177 + $0x6] sm:$0x3]
    %v9188 = vld [vmem:[%s9177 + $0x12] sm:$0x3]
    %v9189 = vld [vmem:[%s9177 + $0x16] sm:$0x3]
    %9194 = vrot.lane.b32.xlu0 %v9157, 64
    %v9195 = vpop.permute.xlu0 %9194
    %9196 = vrot.lane.b32.xlu0 %v9158, 64
    %v9197 = vpop.permute.xlu0 %9196
    %9198 = vrot.lane.b32.xlu0 %v9159, 64
    %v9199 = vpop.permute.xlu0 %9198
    %9200 = vrot.lane.b32.xlu0 %v9160, 64
    %v9201 = vpop.permute.xlu0 %9200
    %9210 = vrot.lane.b32.xlu0 %v9165, 64
    %v9211 = vpop.permute.xlu0 %9210
    %9212 = vrot.lane.b32.xlu0 %v9166, 64
    %v9213 = vpop.permute.xlu0 %9212
    %9214 = vrot.lane.b32.xlu0 %v9167, 64
    %v9215 = vpop.permute.xlu0 %9214
    %9216 = vrot.lane.b32.xlu0 %v9168, 64
    %v9217 = vpop.permute.xlu0 %9216
    %9226 = vrot.lane.b32.xlu0 %v9173, 64
    %v9227 = vpop.permute.xlu0 %9226
    %9228 = vrot.lane.b32.xlu0 %v9174, 64
    %v9229 = vpop.permute.xlu0 %9228
    %9230 = vrot.lane.b32.xlu0 %v9175, 64
    %v9231 = vpop.permute.xlu0 %9230
    %9232 = vrot.lane.b32.xlu0 %v9176, 64
    %v9233 = vpop.permute.xlu0 %9232
    %9242 = vrot.lane.b32.xlu0 %v9182, 64
    %v9243 = vpop.permute.xlu0 %9242
    %9244 = vrot.lane.b32.xlu0 %v9183, 64
    %v9245 = vpop.permute.xlu0 %9244
    %9246 = vrot.lane.b32.xlu0 %v9184, 64
    %v9247 = vpop.permute.xlu0 %9246
    %9248 = vrot.lane.b32.xlu0 %v9185, 64
    %v9249 = vpop.permute.xlu0 %9248
    %v9254 = vsel %vm7574, %v9153, %v9195
    %v9255 = vsel %vm7574, %v9154, %v9197
    %v9256 = vsel %vm7574, %v9155, %v9199
    %v9257 = vsel %vm7574, %v9156, %v9201
    %v9258 = vsel %vm7574, %v9161, %v9211
    %v9259 = vsel %vm7574, %v9162, %v9213
    %v9260 = vsel %vm7574, %v9163, %v9215
    %v9261 = vsel %vm7574, %v9164, %v9217
    %v9262 = vsel %vm7574, %v9169, %v9227
    %v9263 = vsel %vm7574, %v9170, %v9229
    %v9264 = vsel %vm7574, %v9171, %v9231
    %v9265 = vsel %vm7574, %v9172, %v9233
    %v9266 = vsel %vm7574, %v9178, %v9243
    %v9267 = vsel %vm7574, %v9179, %v9245
    %v9268 = vsel %vm7574, %v9180, %v9247
    %v9269 = vsel %vm7574, %v9181, %v9249
    %v9290 = vcombine.low %v9254, %v9258
    %v9291 = vcombine.low %v9262, %v9266
    %v9293 = vunpack.c.l.s4 1983009808
    %v9294 = vunpack.c.0.s8 %v9293
    %v9295 = vlaneseq
    %v9296 = vshrl.u32 %v9295, 7
    %v9297 = vsub.s32 %v9294, %v9296
    %v9298 = vrot.slane %v9290, %v9297
    %v9300 = vunpack.c.l.s4 1983009808
    %v9301 = vunpack.c.0.s8 %v9300
    %v9302 = vlaneseq
    %v9303 = vshrl.u32 %v9302, 7
    %v9304 = vsub.s32 %v9301, %v9303
    %v9305 = vrot.slane %v9291, %v9304
    %v9306 = vcombine.low %v9298, %v9305
    %v9308 = vunpack.c.l.s4 1983009808
    %v9309 = vunpack.c.0.s8 %v9308
    %v9310 = vlaneseq
    %v9311 = vshrl.u32 %v9310, 7
    %v9312 = vsub.s32 %v9309, %v9311
    %v9313 = vrot.slane %v9186, %v9312
    %v9314 = vcombine.low %v9255, %v9259
    %v9315 = vcombine.low %v9263, %v9267
    %v9317 = vunpack.c.l.s4 1983009808
    %v9318 = vunpack.c.0.s8 %v9317
    %v9319 = vlaneseq
    %v9320 = vshrl.u32 %v9319, 7
    %v9321 = vsub.s32 %v9318, %v9320
    %v9322 = vrot.slane %v9314, %v9321
    %v9324 = vunpack.c.l.s4 1983009808
    %v9325 = vunpack.c.0.s8 %v9324
    %v9326 = vlaneseq
    %v9327 = vshrl.u32 %v9326, 7
    %v9328 = vsub.s32 %v9325, %v9327
    %v9329 = vrot.slane %v9315, %v9328
    %v9330 = vcombine.low %v9322, %v9329
    %v9332 = vunpack.c.l.s4 1983009808
    %v9333 = vunpack.c.0.s8 %v9332
    %v9334 = vlaneseq
    %v9335 = vshrl.u32 %v9334, 7
    %v9336 = vsub.s32 %v9333, %v9335
    %v9337 = vrot.slane %v9187, %v9336
    %v9338 = vcombine.low %v9256, %v9260
    %v9339 = vcombine.low %v9264, %v9268
    %v9341 = vunpack.c.l.s4 1983009808
    %v9342 = vunpack.c.0.s8 %v9341
    %v9343 = vlaneseq
    %v9344 = vshrl.u32 %v9343, 7
    %v9345 = vsub.s32 %v9342, %v9344
    %v9346 = vrot.slane %v9338, %v9345
    %v9348 = vunpack.c.l.s4 1983009808
    %v9349 = vunpack.c.0.s8 %v9348
    %v9350 = vlaneseq
    %v9351 = vshrl.u32 %v9350, 7
    %v9352 = vsub.s32 %v9349, %v9351
    %v9353 = vrot.slane %v9339, %v9352
    %v9354 = vcombine.low %v9346, %v9353
    %v9356 = vunpack.c.l.s4 1983009808
    %v9357 = vunpack.c.0.s8 %v9356
    %v9358 = vlaneseq
    %v9359 = vshrl.u32 %v9358, 7
    %v9360 = vsub.s32 %v9357, %v9359
    %v9361 = vrot.slane %v9188, %v9360
    %v9362 = vcombine.low %v9257, %v9261
    %v9363 = vcombine.low %v9265, %v9269
    %v9365 = vunpack.c.l.s4 1983009808
    %v9366 = vunpack.c.0.s8 %v9365
    %v9367 = vlaneseq
    %v9368 = vshrl.u32 %v9367, 7
    %v9369 = vsub.s32 %v9366, %v9368
    %v9370 = vrot.slane %v9362, %v9369
    %v9372 = vunpack.c.l.s4 1983009808
    %v9373 = vunpack.c.0.s8 %v9372
    %v9374 = vlaneseq
    %v9375 = vshrl.u32 %v9374, 7
    %v9376 = vsub.s32 %v9373, %v9375
    %v9377 = vrot.slane %v9363, %v9376
    %v9378 = vcombine.low %v9370, %v9377
    %v9380 = vunpack.c.l.s4 1983009808
    %v9381 = vunpack.c.0.s8 %v9380
    %v9382 = vlaneseq
    %v9383 = vshrl.u32 %v9382, 7
    %v9384 = vsub.s32 %v9381, %v9383
    %v9385 = vrot.slane %v9189, %v9384
    %v9386 = vld [vmem:[%s7] sm:$0xff]
    %v9387 = vld [vmem:[%s7 + $0x8] sm:$0xff]
    %v9388 = vld [vmem:[%s7 + $0x10] sm:$0xff]
    %v9389 = vld [vmem:[%s7 + $0x18] sm:$0xff]
    %v9390 = vld [vmem:[%s7 + $0x20] sm:$0xff]
    %v9391 = vld [vmem:[%s7 + $0x28] sm:$0xff]
    %v9392 = vld [vmem:[%s7 + $0x30] sm:$0xff]
    %v9393 = vld [vmem:[%s7 + $0x38] sm:$0xff]
    %v9394 = vld [vmem:[%s7 + $0x40] sm:$0xff]
    %v9395 = vld [vmem:[%s7 + $0x48] sm:$0xff]
    %v9396 = vld [vmem:[%s7 + $0x50] sm:$0xff]
    %v9397 = vld [vmem:[%s7 + $0x58] sm:$0xff]
    %v9398 = vld [vmem:[%s7 + $0x60] sm:$0xff]
    %v9399 = vld [vmem:[%s7 + $0x68] sm:$0xff]
    %v9400 = vld [vmem:[%s7 + $0x70] sm:$0xff]
    %v9401 = vld [vmem:[%s7 + $0x78] sm:$0xff]
    %v9402 = vld [vmem:[%s7 + $0x80] sm:$0xff]
    %v9403 = vld [vmem:[%s7 + $0x88] sm:$0xff]
    %v9404 = vld [vmem:[%s7 + $0x90] sm:$0xff]
    %v9405 = vld [vmem:[%s7 + $0x98] sm:$0xff]
    %v9406 = vld [vmem:[%s7 + $0xa0] sm:$0xff]
    %v9407 = vld [vmem:[%s7 + $0xa8] sm:$0xff]
    %v9408 = vld [vmem:[%s7 + $0xb0] sm:$0xff]
    %v9409 = vld [vmem:[%s7 + $0xb8] sm:$0xff]
    %v9410 = vld [vmem:[%s7 + $0xc0] sm:$0xff]
    %v9411 = vld [vmem:[%s7 + $0xc8] sm:$0xff]
    %v9412 = vld [vmem:[%s7 + $0xd0] sm:$0xff]
    %v9413 = vld [vmem:[%s7 + $0xd8] sm:$0xff]
    %v9414 = vld [vmem:[%s7 + $0xe0] sm:$0xff]
    %v9415 = vld [vmem:[%s7 + $0xe8] sm:$0xff]
    %v9416 = vld [vmem:[%s7 + $0xf0] sm:$0xff]
    %v9417 = vld [vmem:[%s7 + $0xf8] sm:$0xff]
    %v9418 = vld [vmem:[%s7 + $0x100] sm:$0xff]
    %v9419 = vld [vmem:[%s7 + $0x108] sm:$0xff]
    %v9420 = vld [vmem:[%s7 + $0x110] sm:$0xff]
    %v9421 = vld [vmem:[%s7 + $0x118] sm:$0xff]
    %v9422 = vld [vmem:[%s7 + $0x120] sm:$0xff]
    %v9423 = vld [vmem:[%s7 + $0x128] sm:$0xff]
    %v9424 = vld [vmem:[%s7 + $0x130] sm:$0xff]
    %v9425 = vld [vmem:[%s7 + $0x138] sm:$0xff]
    %v9426 = vld [vmem:[%s7 + $0x140] sm:$0xff]
    %v9427 = vld [vmem:[%s7 + $0x148] sm:$0xff]
    %v9428 = vld [vmem:[%s7 + $0x150] sm:$0xff]
    %v9429 = vld [vmem:[%s7 + $0x158] sm:$0xff]
    %v9430 = vld [vmem:[%s7 + $0x160] sm:$0xff]
    %v9431 = vld [vmem:[%s7 + $0x168] sm:$0xff]
    %v9432 = vld [vmem:[%s7 + $0x170] sm:$0xff]
    %v9433 = vld [vmem:[%s7 + $0x178] sm:$0xff]
    %v9434 = vld [vmem:[%s7 + $0x180] sm:$0xff]
    %v9435 = vld [vmem:[%s7 + $0x188] sm:$0xff]
    %v9436 = vld [vmem:[%s7 + $0x190] sm:$0xff]
    %v9437 = vld [vmem:[%s7 + $0x198] sm:$0xff]
    %v9438 = vld [vmem:[%s7 + $0x1a0] sm:$0xff]
    %v9439 = vld [vmem:[%s7 + $0x1a8] sm:$0xff]
    %v9440 = vld [vmem:[%s7 + $0x1b0] sm:$0xff]
    %v9441 = vld [vmem:[%s7 + $0x1b8] sm:$0xff]
    %v9442 = vld [vmem:[%s7 + $0x1c0] sm:$0xff]
    %v9443 = vld [vmem:[%s7 + $0x1c8] sm:$0xff]
    %v9444 = vld [vmem:[%s7 + $0x1d0] sm:$0xff]
    %v9445 = vld [vmem:[%s7 + $0x1d8] sm:$0xff]
    %v9446 = vld [vmem:[%s7 + $0x1e0] sm:$0xff]
    %v9447 = vld [vmem:[%s7 + $0x1e8] sm:$0xff]
    %v9448 = vld [vmem:[%s7 + $0x1f0] sm:$0xff]
    %v9449 = vld [vmem:[%s7 + $0x1f8] sm:$0xff]
    %v9450 = vld [vmem:[%s7 + $0x200] sm:$0xff]
    %v9451 = vld [vmem:[%s7 + $0x208] sm:$0xff]
    %v9452 = vld [vmem:[%s7 + $0x210] sm:$0xff]
    %v9453 = vld [vmem:[%s7 + $0x218] sm:$0xff]
    %v9454 = vld [vmem:[%s7 + $0x220] sm:$0xff]
    %v9455 = vld [vmem:[%s7 + $0x228] sm:$0xff]
    %v9456 = vld [vmem:[%s7 + $0x230] sm:$0xff]
    %v9457 = vld [vmem:[%s7 + $0x238] sm:$0xff]
    %v9458 = vld [vmem:[%s8] sm:$0x1]
    %v9460 = vlaneseq
    %v9461 = vshrl.u32 %v9460, 7
    %v9462 = vsub.s32 0, %v9461
    %v9463 = vrot.slane %v9458, %v9462
    %v9465 = vcombine.low %v9306, %v9330
    %v9466 = vcombine.high %v9306, %v9330
    %v9467 = vcombine.low %v9354, %v9378
    %v9468 = vcombine.high %v9354, %v9378
    %v9470 = vunpack.c.l.s4 1983009808
    %v9471 = vunpack.c.0.s8 %v9470
    %v9472 = vlaneseq
    %v9473 = vshrl.u32 %v9472, 7
    %v9474 = vsub.s32 %v9471, %v9473
    %v9475 = vrot.slane %v9465, %v9474
    %v9477 = vunpack.c.l.s4 1983009808
    %v9478 = vunpack.c.0.s8 %v9477
    %v9479 = vlaneseq
    %v9480 = vshrl.u32 %v9479, 7
    %v9481 = vsub.s32 %v9478, %v9480
    %v9482 = vrot.slane %v9466, %v9481
    %v9484 = vunpack.c.l.s4 1983009808
    %v9485 = vunpack.c.0.s8 %v9484
    %v9486 = vlaneseq
    %v9487 = vshrl.u32 %v9486, 7
    %v9488 = vsub.s32 %v9485, %v9487
    %v9489 = vrot.slane %v9467, %v9488
    %v9491 = vunpack.c.l.s4 1983009808
    %v9492 = vunpack.c.0.s8 %v9491
    %v9493 = vlaneseq
    %v9494 = vshrl.u32 %v9493, 7
    %v9495 = vsub.s32 %v9492, %v9494
    %v9496 = vrot.slane %v9468, %v9495
    %v9497 = vcombine.low %v9475, %v9489
    %v9498 = vcombine.high %v9475, %v9489
    %v9499 = vcombine.low %v9482, %v9496
    %v9500 = vcombine.high %v9482, %v9496
    %v9501 = vcombine.low %v9313, %v9337
    %v9502 = vcombine.low %v9361, %v9385
    %v9504 = vunpack.c.l.s4 1983009808
    %v9505 = vunpack.c.0.s8 %v9504
    %v9506 = vlaneseq
    %v9507 = vshrl.u32 %v9506, 7
    %v9508 = vsub.s32 %v9505, %v9507
    %v9509 = vrot.slane %v9501, %v9508
    %v9511 = vunpack.c.l.s4 1983009808
    %v9512 = vunpack.c.0.s8 %v9511
    %v9513 = vlaneseq
    %v9514 = vshrl.u32 %v9513, 7
    %v9515 = vsub.s32 %v9512, %v9514
    %v9516 = vrot.slane %v9502, %v9515
    %v9517 = vcombine.low %v9509, %v9516
    %v9522 = vsel %vm7574, %v9517, 0
    %9524 = vmatprep.subr.mxu0 0.0
    %9525 = vmatpush1.msra.mxu0 %v9401
    %9526 = vmatprep.subr.mxu0 0.0
    %9527 = vmatpush1.msra.mxu0 %v9400
    %9528 = vmatprep.subr.mxu0 0.0
    %9529 = vmatpush1.msra.mxu0 %v9399
    %9530 = vmatprep.subr.mxu0 0.0
    %9531 = vmatpush1.msra.mxu0 %v9398
    %9532 = vmatprep.subr.mxu0 0.0
    %9533 = vmatpush1.msra.mxu0 %v9397
    %9534 = vmatprep.subr.mxu0 0.0
    %9535 = vmatpush1.msra.mxu0 %v9396
    %9536 = vmatprep.subr.mxu0 0.0
    %9537 = vmatpush1.msra.mxu0 %v9395
    %9538 = vmatprep.subr.mxu0 0.0
    %9539 = vmatpush1.msra.mxu0 %v9394
    %9540 = vmatprep.subr.mxu0 0.0
    %9541 = vmatpush1.msra.mxu0 %v9393
    %9542 = vmatprep.subr.mxu0 0.0
    %9543 = vmatpush1.msra.mxu0 %v9392
    %9544 = vmatprep.subr.mxu0 0.0
    %9545 = vmatpush1.msra.mxu0 %v9391
    %9546 = vmatprep.subr.mxu0 0.0
    %9547 = vmatpush1.msra.mxu0 %v9390
    %9548 = vmatprep.subr.mxu0 0.0
    %9549 = vmatpush1.msra.mxu0 %v9389
    %9550 = vmatprep.subr.mxu0 0.0
    %9551 = vmatpush1.msra.mxu0 %v9388
    %9552 = vmatprep.subr.mxu0 0.0
    %9553 = vmatpush1.msra.mxu0 %v9387
    %9554 = vmatprep.subr.mxu0 0.0
    %9555 = vmatpush1.msra.mxu0 %v9386
    %9556 = vmatprep.subr.mxu0 0.0
    %9557 = vmatpush2.msra.mxu0 %v9417
    %9558 = vmatprep.subr.mxu0 0.0
    %9559 = vmatpush2.msra.mxu0 %v9416
    %9560 = vmatprep.subr.mxu0 0.0
    %9561 = vmatpush2.msra.mxu0 %v9415
    %9562 = vmatprep.subr.mxu0 0.0
    %9563 = vmatpush2.msra.mxu0 %v9414
    %9564 = vmatprep.subr.mxu0 0.0
    %9565 = vmatpush2.msra.mxu0 %v9413
    %9566 = vmatprep.subr.mxu0 0.0
    %9567 = vmatpush2.msra.mxu0 %v9412
    %9568 = vmatprep.subr.mxu0 0.0
    %9569 = vmatpush2.msra.mxu0 %v9411
    %9570 = vmatprep.subr.mxu0 0.0
    %9571 = vmatpush2.msra.mxu0 %v9410
    %9572 = vmatprep.subr.mxu0 0.0
    %9573 = vmatpush2.msra.mxu0 %v9409
    %9574 = vmatprep.subr.mxu0 0.0
    %9575 = vmatpush2.msra.mxu0 %v9408
    %9576 = vmatprep.subr.mxu0 0.0
    %9577 = vmatpush2.msra.mxu0 %v9407
    %9578 = vmatprep.subr.mxu0 0.0
    %9579 = vmatpush2.msra.mxu0 %v9406
    %9580 = vmatprep.subr.mxu0 0.0
    %9581 = vmatpush2.msra.mxu0 %v9405
    %9582 = vmatprep.subr.mxu0 0.0
    %9583 = vmatpush2.msra.mxu0 %v9404
    %9584 = vmatprep.subr.mxu0 0.0
    %9585 = vmatpush2.msra.mxu0 %v9403
    %9586 = vmatprep.subr.mxu0 0.0
    %9587 = vmatpush2.msra.mxu0 %v9402
    %9588 = vmatprep.mubr.f32.mxu0 %v9498
    %9589 = vmatmul.mubr.f32.gmra.mxu0 %v9497
    %v9590 = vpop.f32.mrf.mxu0
    %v9591 = vadd.f32 %v9463, %v9590
    %v9592 = vpop.f32.mrf.mxu0
    %9593 = vdwg.mxu0
    %9594 = vmatprep.subr.mxu0 0.0
    %9595 = vmatpush1.msra.mxu0 %v9433
    %9596 = vmatprep.subr.mxu0 0.0
    %9597 = vmatpush1.msra.mxu0 %v9432
    %9598 = vmatprep.subr.mxu0 0.0
    %9599 = vmatpush1.msra.mxu0 %v9431
    %9600 = vmatprep.subr.mxu0 0.0
    %9601 = vmatpush1.msra.mxu0 %v9430
    %9602 = vmatprep.subr.mxu0 0.0
    %9603 = vmatpush1.msra.mxu0 %v9429
    %9604 = vmatprep.subr.mxu0 0.0
    %9605 = vmatpush1.msra.mxu0 %v9428
    %9606 = vmatprep.subr.mxu0 0.0
    %9607 = vmatpush1.msra.mxu0 %v9427
    %9608 = vmatprep.subr.mxu0 0.0
    %9609 = vmatpush1.msra.mxu0 %v9426
    %9610 = vmatprep.subr.mxu0 0.0
    %9611 = vmatpush1.msra.mxu0 %v9425
    %9612 = vmatprep.subr.mxu0 0.0
    %9613 = vmatpush1.msra.mxu0 %v9424
    %9614 = vmatprep.subr.mxu0 0.0
    %9615 = vmatpush1.msra.mxu0 %v9423
    %9616 = vmatprep.subr.mxu0 0.0
    %9617 = vmatpush1.msra.mxu0 %v9422
    %9618 = vmatprep.subr.mxu0 0.0
    %9619 = vmatpush1.msra.mxu0 %v9421
    %9620 = vmatprep.subr.mxu0 0.0
    %9621 = vmatpush1.msra.mxu0 %v9420
    %9622 = vmatprep.subr.mxu0 0.0
    %9623 = vmatpush1.msra.mxu0 %v9419
    %9624 = vmatprep.subr.mxu0 0.0
    %9625 = vmatpush1.msra.mxu0 %v9418
    %9626 = vmatprep.subr.mxu0 0.0
    %9627 = vmatpush2.msra.mxu0 %v9449
    %9628 = vmatprep.subr.mxu0 0.0
    %9629 = vmatpush2.msra.mxu0 %v9448
    %9630 = vmatprep.subr.mxu0 0.0
    %9631 = vmatpush2.msra.mxu0 %v9447
    %9632 = vmatprep.subr.mxu0 0.0
    %9633 = vmatpush2.msra.mxu0 %v9446
    %9634 = vmatprep.subr.mxu0 0.0
    %9635 = vmatpush2.msra.mxu0 %v9445
    %9636 = vmatprep.subr.mxu0 0.0
    %9637 = vmatpush2.msra.mxu0 %v9444
    %9638 = vmatprep.subr.mxu0 0.0
    %9639 = vmatpush2.msra.mxu0 %v9443
    %9640 = vmatprep.subr.mxu0 0.0
    %9641 = vmatpush2.msra.mxu0 %v9442
    %9642 = vmatprep.subr.mxu0 0.0
    %9643 = vmatpush2.msra.mxu0 %v9441
    %9644 = vmatprep.subr.mxu0 0.0
    %9645 = vmatpush2.msra.mxu0 %v9440
    %9646 = vmatprep.subr.mxu0 0.0
    %9647 = vmatpush2.msra.mxu0 %v9439
    %9648 = vmatprep.subr.mxu0 0.0
    %9649 = vmatpush2.msra.mxu0 %v9438
    %9650 = vmatprep.subr.mxu0 0.0
    %9651 = vmatpush2.msra.mxu0 %v9437
    %9652 = vmatprep.subr.mxu0 0.0
    %9653 = vmatpush2.msra.mxu0 %v9436
    %9654 = vmatprep.subr.mxu0 0.0
    %9655 = vmatpush2.msra.mxu0 %v9435
    %9656 = vmatprep.subr.mxu0 0.0
    %9657 = vmatpush2.msra.mxu0 %v9434
    %9658 = vmatprep.mubr.f32.mxu0 %v9500
    %9659 = vmatmul.mubr.f32.gmra.mxu0 %v9499
    %v9660 = vpop.f32.mrf.mxu0
    %v9661 = vadd.f32 %v9591, %v9660
    %v9662 = vpop.f32.mrf.mxu0
    %9663 = vdwg.mxu0
    %9664 = vmatprep.subr.mxu0 0.0
    %9665 = vmatpush1.msra.mxu0 0.0
    %9666 = vmatprep.subr.mxu0 0.0
    %9667 = vmatpush1.msra.mxu0 0.0
    %9668 = vmatprep.subr.mxu0 0.0
    %9669 = vmatpush1.msra.mxu0 0.0
    %9670 = vmatprep.subr.mxu0 0.0
    %9671 = vmatpush1.msra.mxu0 0.0
    %9672 = vmatprep.subr.mxu0 0.0
    %9673 = vmatpush1.msra.mxu0 0.0
    %9674 = vmatprep.subr.mxu0 0.0
    %9675 = vmatpush1.msra.mxu0 0.0
    %9676 = vmatprep.subr.mxu0 0.0
    %9677 = vmatpush1.msra.mxu0 0.0
    %9678 = vmatprep.subr.mxu0 0.0
    %9679 = vmatpush1.msra.mxu0 0.0
    %9680 = vmatprep.subr.mxu0 0.0
    %9681 = vmatpush1.msra.mxu0 %v9457
    %9682 = vmatprep.subr.mxu0 0.0
    %9683 = vmatpush1.msra.mxu0 %v9456
    %9684 = vmatprep.subr.mxu0 0.0
    %9685 = vmatpush1.msra.mxu0 %v9455
    %9686 = vmatprep.subr.mxu0 0.0
    %9687 = vmatpush1.msra.mxu0 %v9454
    %9688 = vmatprep.subr.mxu0 0.0
    %9689 = vmatpush1.msra.mxu0 %v9453
    %9690 = vmatprep.subr.mxu0 0.0
    %9691 = vmatpush1.msra.mxu0 %v9452
    %9692 = vmatprep.subr.mxu0 0.0
    %9693 = vmatpush1.msra.mxu0 %v9451
    %9694 = vmatprep.subr.mxu0 0.0
    %9695 = vmatpush1.msra.mxu0 %v9450
    %9696 = vmatprep.subr.mxu0 0.0
    %9697 = vmatpush2.msra.mxu0 0.0
    %9698 = vmatprep.subr.mxu0 0.0
    %9699 = vmatpush2.msra.mxu0 0.0
    %9700 = vmatprep.subr.mxu0 0.0
    %9701 = vmatpush2.msra.mxu0 0.0
    %9702 = vmatprep.subr.mxu0 0.0
    %9703 = vmatpush2.msra.mxu0 0.0
    %9704 = vmatprep.subr.mxu0 0.0
    %9705 = vmatpush2.msra.mxu0 0.0
    %9706 = vmatprep.subr.mxu0 0.0
    %9707 = vmatpush2.msra.mxu0 0.0
    %9708 = vmatprep.subr.mxu0 0.0
    %9709 = vmatpush2.msra.mxu0 0.0
    %9710 = vmatprep.subr.mxu0 0.0
    %9711 = vmatpush2.msra.mxu0 0.0
    %9712 = vmatprep.subr.mxu0 0.0
    %9713 = vmatpush2.msra.mxu0 0.0
    %9714 = vmatprep.subr.mxu0 0.0
    %9715 = vmatpush2.msra.mxu0 0.0
    %9716 = vmatprep.subr.mxu0 0.0
    %9717 = vmatpush2.msra.mxu0 0.0
    %9718 = vmatprep.subr.mxu0 0.0
    %9719 = vmatpush2.msra.mxu0 0.0
    %9720 = vmatprep.subr.mxu0 0.0
    %9721 = vmatpush2.msra.mxu0 0.0
    %9722 = vmatprep.subr.mxu0 0.0
    %9723 = vmatpush2.msra.mxu0 0.0
    %9724 = vmatprep.subr.mxu0 0.0
    %9725 = vmatpush2.msra.mxu0 0.0
    %9726 = vmatprep.subr.mxu0 0.0
    %9727 = vmatpush2.msra.mxu0 0.0
    %9728 = vmatprep.mubr.f32.mxu0 0.0
    %9729 = vmatmul.mubr.f32.gmra.mxu0 %v9522
    %v9730 = vpop.f32.mrf.mxu0
    %v9731 = vadd.f32 %v9661, %v9730
    %v9732 = vpop.f32.mrf.mxu0
    %9733 = vdwg.mxu0
    %v9735 = vcombine.high %v9731, %v9731
    %v9737 = vunpack.c.l.s4 1983009808
    %v9738 = vunpack.c.0.s8 %v9737
    %v9739 = vlaneseq
    %v9740 = vshrl.u32 %v9739, 7
    %v9741 = vsub.s32 %v9738, %v9740
    %v9742 = vrot.slane %v9731, %v9741
    %v9744 = vunpack.c.l.s4 1983009808
    %v9745 = vunpack.c.0.s8 %v9744
    %v9746 = vlaneseq
    %v9747 = vshrl.u32 %v9746, 7
    %v9748 = vsub.s32 %v9745, %v9747
    %v9749 = vrot.slane %v9735, %v9748
    %v9750 = vcombine.high %v9742, %v9742
    %v9751 = vcombine.high %v9749, %v9749
    %vm9756 = vcmask 1041408
    %v9757 = vsel %vm9756, %v9742, -inf
    %v9758 = vsel %vm9756, %v9750, -inf
    %v9759 = vmax.f32 %v9757, %v9758
    %v9760 = vsel %vm9756, %v9749, -inf
    %v9761 = vsel %vm9756, %v9751, -inf
    %v9762 = vmax.f32 %v9760, %v9761
    %v9763 = vsel %vm9756, %v9759, -inf
    %v9764 = vrot.slane %v9763, 4
    %v9765 = vmax.f32 %v9763, %v9764
    %v9766 = vrot.slane %v9765, 2
    %v9767 = vmax.f32 %v9765, %v9766
    %v9768 = vrot.slane %v9767, 1
    %v9769 = vmax.f32 %v9767, %v9768
    %v9770 = vsel %vm9756, %v9762, -inf
    %v9771 = vrot.slane %v9770, 4
    %v9772 = vmax.f32 %v9770, %v9771
    %v9773 = vrot.slane %v9772, 2
    %v9774 = vmax.f32 %v9772, %v9773
    %v9775 = vrot.slane %v9774, 1
    %v9776 = vmax.f32 %v9774, %v9775
    %v9777 = vmax.f32 %v9769, 0.0
    %v9778 = vmax.f32 %v9776, 0.0
    %v9779 = vmul.f32 %v9777, %v9777
    %v9780 = vmul.f32 %v9778, %v9778
    %v9783 = vsel %vm6779, %v9780, %v9779
    %v9785 = vsel %vm9756, %v9783, 0.0
    %9786 = vadd.xlane.f32.xlu0 %v9785
    %v9787 = vpop.xlane.xlu0 %9786
    %v9788 = vmax.f32 %v9787, 1e-24
    %v9789 = vrsqrt.pop %v9788
    %v9791 = vrot.slane %v9789, 1
    %v9794 = vmul.f32 %v9777, %v9789
    %v9795 = vmul.f32 %v9778, %v9791
    %v9798 = vrot.slane %v9795, 7
    %v9799 = vsel %vm6779, %v9798, %v9794
    %9801 = vst [vmem:[#allocation5] sm:$0x3] %v9799
    // Predicated region
    $region38: #{cnn_forward.1} parent=1 // pred_check
      _
    $region39: #{cnn_forward.1} parent=1 // pred_check_branch
      %9803 = sbr.rel (0) target = $region41
    $region40: #{cnn_forward.1} parent=1 // pred_region
      %s9805 = ssub.s32 32, 32
      %9806 = vsyncadd [#allocation6], %s9805
      %s9808 = sshll.u32 [#allocation5], 4
      %s9809 = int_to_ptr.vmem [resolvable:$true] %s9808
      %9811 = dma.vmem_to_hbm [thread:$0]  %s9809, 32, %s9, [#allocation6]
    $region41: #{cnn_forward.1} parent=1 // pred_fallthru
      _
    // Predicated region
    $region42: #{cnn_forward.1} parent=1 // pred_check
      _
    $region43: #{cnn_forward.1} parent=1 // pred_check_branch
      %9813 = sbr.rel (0) target = $region45
    $region44: #{cnn_forward.1} parent=1 // pred_region
      %9814 = dma.done [#allocation6], 32
    $region45: #{cnn_forward.1} parent=1 // pred_fallthru
      _
    %9815 = vsyncpa [#allocation6], 1

</llo_original>
